<compile_context>
chip_gen: v6e
topology: v6e:2x2x1
jax: 0.10.0
libtpu: 0.0.40
codegen_flags: <defaults>
</compile_context>

<pallas_src>
import functools

import jax
import jax.numpy as jnp
from jax.experimental import pallas as pl
from jax.experimental.pallas import tpu as pltpu


# ----------------------------- small helpers -----------------------------

def _round_up(x, m):
    return ((x + m - 1) // m) * m


def _pad2(x, rows, cols):
    r, c = x.shape
    if r == rows and c == cols:
        return x
    return jnp.pad(x, ((0, rows - r), (0, cols - c)))


def _bn_fold(gamma, beta, rm, rv, eps=1e-5):
    s = gamma / jnp.sqrt(rv + eps)
    return s, beta - rm * s


# ----------------------------- Pallas kernels -----------------------------

def _gemm_bn_htanh_kernel(a_ref, w_ref, sc_ref, sh_ref, o_ref, acc_ref):
    # Tiled (im2col-patches @ conv-weights) with folded BatchNorm + Hardtanh(0,20)
    # epilogue on the last K step.  Operands bf16, accumulation/epilogue f32,
    # bf16 output (values clamped to [0,20] so bf16 is safe).
    k = pl.program_id(2)

    @pl.when(k == 0)
    def _():
        acc_ref[...] = jnp.zeros_like(acc_ref)

    acc_ref[...] += jnp.dot(a_ref[...], w_ref[...], preferred_element_type=jnp.float32)

    @pl.when(k == pl.num_programs(2) - 1)
    def _():
        o_ref[...] = jnp.clip(acc_ref[...] * sc_ref[...] + sh_ref[...],
                              0.0, 20.0).astype(o_ref.dtype)


def _bn_relu_gemm_kernel(a_ref, asc_ref, ash_ref, w_ref, b_ref, o_ref, acc_ref):
    # Fused BatchNorm1d(eval)+ReLU prologue on bf16-streamed activations (upcast to
    # f32 for the affine), then the GRU input projection for both directions
    # (bf16 MXU, f32 accumulation, bias added on the last K step).
    k = pl.program_id(2)

    @pl.when(k == 0)
    def _():
        acc_ref[...] = jnp.zeros_like(acc_ref)

    a = jnp.maximum(a_ref[...].astype(jnp.float32) * asc_ref[...] + ash_ref[...], 0.0)
    acc_ref[...] += jnp.dot(a.astype(jnp.bfloat16), w_ref[...],
                            preferred_element_type=jnp.float32)

    @pl.when(k == pl.num_programs(2) - 1)
    def _():
        o_ref[...] = (acc_ref[...] + b_ref[...]).astype(o_ref.dtype)


def _fc_logsoftmax_kernel(a_ref, w_ref, o_ref, *, valid_n):
    logits = jnp.dot(a_ref[...], w_ref[...], preferred_element_type=jnp.float32)
    col = jax.lax.broadcasted_iota(jnp.int32, logits.shape, 1)
    logits = jnp.where(col < valid_n, logits, -1e30)      # mask pad columns
    m = jnp.max(logits, axis=-1, keepdims=True)
    s = logits - m
    lse = jnp.log(jnp.sum(jnp.exp(s), axis=-1, keepdims=True))
    # log_softmax is idempotent -> the double application collapses to one.
    o_ref[...] = s - lse


def _bigru_kernel(len_ref, xgf_ref, xgb_ref, whh_ref, bhh_ref, of_ref, ob_ref, h_ref,
                  *, tb, nblk, H):
    # Fused bidirectional GRU recurrence.  Grid iterates over blocks of `tb`
    # timesteps; both directions advance in the same body (the backward direction
    # reads time blocks with a reversed index_map and walks the block in reverse).
    # Gate layout along the last axis of xg: [fwd r|z|n | bwd r|z|n], each H wide.
    # Hidden states persist in f32 VMEM scratch; positions t >= length keep h and
    # emit zeros (pack/pad semantics for right-padded sequences).
    s = pl.program_id(0)

    @pl.when(s == 0)
    def _():
        h_ref[...] = jnp.zeros_like(h_ref)

    lens = len_ref[...]                                    # (Bp, 1) int32

    def cell(xg_row, h, d):
        # One merged (Bp,H)@(H,3H) bf16 matmul per direction per step (f32 acc).
        g = jnp.dot(h.astype(jnp.bfloat16), whh_ref[d],
                    preferred_element_type=jnp.float32) + bhh_ref[d]   # (Bp, 3H)
        o = 3 * H * d
        xr = xg_row[:, o:o + H]
        xz = xg_row[:, o + H:o + 2 * H]
        xn = xg_row[:, o + 2 * H:o + 3 * H]
        r = jax.nn.sigmoid(xr + g[:, 0:H])
        z = jax.nn.sigmoid(xz + g[:, H:2 * H])
        n = jnp.tanh(xn + r * g[:, 2 * H:3 * H])
        return (1.0 - z) * n + z * h

    h_f = h_ref[0]
    h_b = h_ref[1]
    t0_f = s * tb
    t0_b = (nblk - 1 - s) * tb

    # Fully unrolled time block (static indices -> cheapest addressing).
    for i in range(tb):
        j = tb - 1 - i
        valid_f = (t0_f + i) < lens                        # (Bp, 1) bool
        valid_b = (t0_b + j) < lens

        hf_new = cell(xgf_ref[i], h_f, 0)
        hb_new = cell(xgb_ref[j], h_b, 1)

        h_f = jnp.where(valid_f, hf_new, h_f)
        h_b = jnp.where(valid_b, hb_new, h_b)
        of_ref[i] = jnp.where(valid_f, h_f, 0.0).astype(of_ref.dtype)
        ob_ref[j] = jnp.where(valid_b, h_b, 0.0).astype(ob_ref.dtype)

    h_ref[0] = h_f
    h_ref[1] = h_b


# ----------------------------- kernel wrappers -----------------------------

def _tiles(M, N, K, tm, tn, tk):
    Mp = _round_up(M, 8);   tm = min(tm, Mp); Mp = _round_up(Mp, tm)
    Np = _round_up(N, 128); tn = min(tn, Np); Np = _round_up(Np, tn)
    Kp = _round_up(K, 128); tk = min(tk, Kp); Kp = _round_up(Kp, tk)
    return Mp, Np, Kp, tm, tn, tk


def conv_gemm_bn_htanh(patches, wflat, scale, shift, *, tm=512, tn=256, tk=1024):
    # bf16 patches/weights, f32 accumulation, bf16 output.
    M, K = patches.shape
    N = wflat.shape[1]
    Mp, Np, Kp, tm, tn, tk = _tiles(M, N, K, tm, tn, tk)
    a_p = _pad2(patches.astype(jnp.bfloat16), Mp, Kp)
    w_p = _pad2(wflat.astype(jnp.bfloat16), Kp, Np)
    sc_p = _pad2(scale.reshape(1, N).astype(jnp.float32), 1, Np)
    sh_p = _pad2(shift.reshape(1, N).astype(jnp.float32), 1, Np)
    out = pl.pallas_call(
        _gemm_bn_htanh_kernel,
        out_shape=jax.ShapeDtypeStruct((Mp, Np), jnp.bfloat16),
        grid=(Mp // tm, Np // tn, Kp // tk),
        in_specs=[
            pl.BlockSpec((tm, tk), lambda i, j, k: (i, k)),
            pl.BlockSpec((tk, tn), lambda i, j, k: (k, j)),
            pl.BlockSpec((1, tn), lambda i, j, k: (0, j)),
            pl.BlockSpec((1, tn), lambda i, j, k: (0, j)),
        ],
        out_specs=pl.BlockSpec((tm, tn), lambda i, j, k: (i, j)),
        scratch_shapes=[pltpu.VMEM((tm, tn), jnp.float32)],
        compiler_params=pltpu.CompilerParams(
            dimension_semantics=("parallel", "parallel", "arbitrary")),
    )(a_p, w_p, sc_p, sh_p)
    return out[:M, :N]


def bn_relu_gemm(a, a_scale, a_shift, w, b, *, tm=512, tn=256, tk=1024):
    # a streamed in bf16 (halves the dominant HBM read); BN/ReLU applied in f32
    # in-kernel; output f32 (feeds the GRU gate nonlinearities).
    M, K = a.shape
    N = w.shape[1]
    Mp, Np, Kp, tm, tn, tk = _tiles(M, N, K, tm, tn, tk)
    a_p = _pad2(a.astype(jnp.bfloat16), Mp, Kp)
    asc = _pad2(a_scale.reshape(1, K).astype(jnp.float32), 1, Kp)
    ash = _pad2(a_shift.reshape(1, K).astype(jnp.float32), 1, Kp)
    w_p = _pad2(w.astype(jnp.bfloat16), Kp, Np)
    b_p = _pad2(b.reshape(1, N).astype(jnp.float32), 1, Np)
    out = pl.pallas_call(
        _bn_relu_gemm_kernel,
        out_shape=jax.ShapeDtypeStruct((Mp, Np), jnp.float32),
        grid=(Mp // tm, Np // tn, Kp // tk),
        in_specs=[
            pl.BlockSpec((tm, tk), lambda i, j, k: (i, k)),
            pl.BlockSpec((1, tk), lambda i, j, k: (0, k)),
            pl.BlockSpec((1, tk), lambda i, j, k: (0, k)),
            pl.BlockSpec((tk, tn), lambda i, j, k: (k, j)),
            pl.BlockSpec((1, tn), lambda i, j, k: (0, j)),
        ],
        out_specs=pl.BlockSpec((tm, tn), lambda i, j, k: (i, j)),
        scratch_shapes=[pltpu.VMEM((tm, tn), jnp.float32)],
        compiler_params=pltpu.CompilerParams(
            dimension_semantics=("parallel", "parallel", "arbitrary")),
    )(a_p, asc, ash, w_p, b_p)
    return out[:M, :N]


def fc_logsoftmax(a, w, n_tokens, *, tm=512):
    M, K = a.shape
    N = w.shape[1]
    Np = _round_up(N, 128)
    Mp = _round_up(M, 8); tm = min(tm, Mp); Mp = _round_up(Mp, tm)
    a_p = _pad2(a.astype(jnp.bfloat16), Mp, K)
    w_p = _pad2(w.astype(jnp.bfloat16), K, Np)
    out = pl.pallas_call(
        functools.partial(_fc_logsoftmax_kernel, valid_n=N),
        out_shape=jax.ShapeDtypeStruct((Mp, Np), jnp.float32),
        grid=(Mp // tm,),
        in_specs=[
            pl.BlockSpec((tm, K), lambda i: (i, 0)),
            pl.BlockSpec((K, Np), lambda i: (0, 0)),
        ],
        out_specs=pl.BlockSpec((tm, Np), lambda i: (i, 0)),
        compiler_params=pltpu.CompilerParams(dimension_semantics=("parallel",)),
    )(a_p, w_p)
    return out[:M, :N]


def bigru_scan(xg, lens, whh, bhh, tb):
    # xg:   (Tpad, Bp, 6H) f32 time-major pre-computed input gates (x@W_ih^T+b_ih),
    #       columns ordered [fwd r|z|n | bwd r|z|n].  Passed twice (fwd / reversed
    #       time index_map) so no transpose or split copy is materialized.
    # lens: (Bp, 1) int32 sequence lengths (0 for padded batch rows).
    # whh:  (2, H, 3H) bf16 per-direction merged W_hh^T; bhh: (2, 1, 3H) f32.
    Tpad, Bp, sixH = xg.shape
    H = sixH // 6
    nblk = Tpad // tb
    out_f, out_b = pl.pallas_call(
        functools.partial(_bigru_kernel, tb=tb, nblk=nblk, H=H),
        out_shape=(jax.ShapeDtypeStruct((Tpad, Bp, H), jnp.bfloat16),
                   jax.ShapeDtypeStruct((Tpad, Bp, H), jnp.bfloat16)),
        grid=(nblk,),
        in_specs=[
            pl.BlockSpec((Bp, 1), lambda s: (0, 0)),                       # lengths
            pl.BlockSpec((tb, Bp, sixH), lambda s: (s, 0, 0)),             # fwd view
            pl.BlockSpec((tb, Bp, sixH), lambda s: (nblk - 1 - s, 0, 0)),  # bwd view
            pl.BlockSpec((2, H, 3 * H), lambda s: (0, 0, 0)),              # W_hh (bf16)
            pl.BlockSpec((2, 1, 3 * H), lambda s: (0, 0, 0)),              # b_hh
        ],
        out_specs=(
            pl.BlockSpec((tb, Bp, H), lambda s: (s, 0, 0)),
            pl.BlockSpec((tb, Bp, H), lambda s: (nblk - 1 - s, 0, 0)),
        ),
        scratch_shapes=[pltpu.VMEM((2, Bp, H), jnp.float32)],
        compiler_params=pltpu.CompilerParams(dimension_semantics=("arbitrary",)),
    )(lens, xg, xg, whh, bhh)
    return out_f, out_b


# ----------------------------- plain-JAX glue -----------------------------

def im2col_nhwc(x, kh, kw, sh, sw, ph, pw):
    # x: (B, H, W, C) bf16 -> patches (B*Ho*Wo, kh*kw*C) with (kh, kw, c) ordering.
    B, H, W, C = x.shape
    xp = jnp.pad(x, ((0, 0), (ph, ph), (pw, pw), (0, 0)))
    Ho = (H + 2 * ph - kh) // sh + 1
    Wo = (W + 2 * pw - kw) // sw + 1
    I = jnp.arange(Ho)[:, None, None, None] * sh + jnp.arange(kh)[None, None, :, None]
    J = jnp.arange(Wo)[None, :, None, None] * sw + jnp.arange(kw)[None, None, None, :]
    I = jnp.broadcast_to(I, (Ho, Wo, kh, kw))
    J = jnp.broadcast_to(J, (Ho, Wo, kh, kw))
    patches = xp[:, I, J, :]                               # (B, Ho, Wo, kh, kw, C)
    return patches.reshape(B * Ho * Wo, kh * kw * C), Ho, Wo


def conv_block(x, w, bn, kh, kw, sh, sw, ph, pw):
    # NHWC in, NHWC out, bf16 end-to-end (values clamped to [0,20] by hardtanh).
    B = x.shape[0]
    Cout = w.shape[0]
    patches, Ho, Wo = im2col_nhwc(x.astype(jnp.bfloat16), kh, kw, sh, sw, ph, pw)
    wflat = w.transpose(2, 3, 1, 0).reshape(-1, Cout)      # (kh*kw*Cin, Cout)
    s, t = _bn_fold(*bn)
    out = conv_gemm_bn_htanh(patches, wflat, s, t)
    return out.reshape(B, Ho, Wo, Cout)


def conv_seq_len(lengths):
    # time axis: conv1 k=11, s=2, p=5 ; conv2 k=11, s=1, p=5
    l1 = (lengths + 2 * 5 - 11) // 2 + 1
    l2 = (l1 + 2 * 5 - 11) // 1 + 1
    return l2


def rnn_block_tm(x, lens_pad, layer, hidden, tb):
    # x: (Tpad, Bp, D) bf16 time-major.  BN -> ReLU -> biGRU -> sum of directions.
    Tpad, Bp, D = x.shape
    s, sh = _bn_fold(*layer['bn'])
    w_ih = jnp.concatenate([layer['fwd']['w_ih'].T, layer['bwd']['w_ih'].T], axis=1)  # (D, 6H)
    b_ih = jnp.concatenate([layer['fwd']['b_ih'], layer['bwd']['b_ih']], axis=0)      # (6H,)

    xg = bn_relu_gemm(x.reshape(Tpad * Bp, D), s, sh, w_ih, b_ih)                     # (Tpad*Bp, 6H)
    xg = xg.reshape(Tpad, Bp, 6 * hidden)          # free reshape, no transpose

    whh = jnp.stack([layer['fwd']['w_hh'].T,
                     layer['bwd']['w_hh'].T]).astype(jnp.bfloat16)                    # (2, H, 3H)
    bhh = jnp.stack([layer['fwd']['b_hh'].reshape(1, 3 * hidden),
                     layer['bwd']['b_hh'].reshape(1, 3 * hidden)]).astype(jnp.float32)  # (2, 1, 3H)

    out_f, out_b = bigru_scan(xg, lens_pad, whh, bhh, tb)
    return (out_f + out_b).astype(jnp.bfloat16)                                       # (Tpad, Bp, H)


def deepspeech2_forward(params, spectrogram, spectrogram_length, hidden, n_tokens, tb=8):
    B, n_feats, T = spectrogram.shape
    x = spectrogram[:, :, :, None].astype(jnp.bfloat16)    # NHWC: (B, F, T, 1)
    x = conv_block(x, params['conv1_w'], params['bn1'], 41, 11, 2, 2, 20, 5)
    x = conv_block(x, params['conv2_w'], params['bn2'], 21, 11, 2, 1, 10, 5)
    _, Fp, Tp, C = x.shape

    # Single layout change: NHWC -> time-major (T', B, C*F') with PyTorch's
    # view(B, C*F', T').permute(0,2,1) feature ordering (index c*F' + f).
    outputs = x.transpose(2, 0, 3, 1).reshape(Tp, B, C * Fp)
    output_lengths = conv_seq_len(spectrogram_length)

    # Pad time to a multiple of tb and batch to a multiple of 8 once; the padded
    # batch rows get length 0 and stay masked inside the GRU kernel.
    Tpad = _round_up(Tp, tb)
    Bp = _round_up(B, 8)
    outputs = jnp.pad(outputs, ((0, Tpad - Tp), (0, Bp - B), (0, 0)))
    lens_pad = jnp.pad(output_lengths.astype(jnp.int32), (0, Bp - B)).reshape(Bp, 1)

    for layer in params['rnn']:
        outputs = rnn_block_tm(outputs, lens_pad, layer, hidden, tb)

    outputs = outputs[:Tp, :B]                              # drop time/batch padding
    lp = fc_logsoftmax(outputs.reshape(Tp * B, hidden), params['fc_w'].T, n_tokens)
    log_probs = lp.reshape(Tp, B, n_tokens).transpose(1, 0, 2)
    return {'log_probs': log_probs, 'log_probs_length': output_lengths}


# ----------------------------- parameter init -----------------------------

def init_params(key, n_feats, n_tokens, hidden, num_rnn_layers):
    keys = iter(jax.random.split(key, 256))

    def nrm(shape, scale):
        return jax.random.normal(next(keys), shape, jnp.float32) * scale

    def bn(d):
        return (1.0 + 0.1 * nrm((d,), 1.0),            # gamma
                0.1 * nrm((d,), 1.0),                   # beta
                0.1 * nrm((d,), 1.0),                   # running_mean
                1.0 + 0.1 * jnp.abs(nrm((d,), 1.0)))    # running_var

    params = {
        'conv1_w': nrm((32, 1, 41, 11), (1 * 41 * 11) ** -0.5),
        'bn1': bn(32),
        'conv2_w': nrm((32, 32, 21, 11), (32 * 21 * 11) ** -0.5),
        'bn2': bn(32),
    }

    f_out = (n_feats + 2 * 20 - 41) // 2 + 1
    f_out = (f_out + 2 * 10 - 21) // 2 + 1
    d0 = 32 * f_out                                    # Convolution.get_ouput_size(n_feats)

    params['rnn'] = []
    for i in range(num_rnn_layers):
        d = d0 if i == 0 else hidden
        layer = {'bn': bn(d)}
        k = hidden ** -0.5
        for dirn in ('fwd', 'bwd'):
            layer[dirn] = {
                'w_ih': nrm((3 * hidden, d), k),
                'w_hh': nrm((3 * hidden, hidden), k),
                'b_ih': nrm((3 * hidden,), k),
                'b_hh': nrm((3 * hidden,), k),
            }
        params['rnn'].append(layer)

    params['fc_w'] = nrm((n_tokens, hidden), hidden ** -0.5)
    return params


# ----------------------------- main -----------------------------

if __name__ == "__main__":
    B, n_feats, T = 2, 16, 16
    n_tokens, hidden, num_rnn_layers = 28, 32, 2

    key = jax.random.PRNGKey(0)
    k_param, k_spec = jax.random.split(key)
    params = init_params(k_param, n_feats, n_tokens, hidden, num_rnn_layers)

    spectrogram = jax.random.normal(k_spec, (B, n_feats, T), jnp.float32)
    spectrogram_length = jnp.array([16, 12], dtype=jnp.int32)

    fwd = jax.jit(functools.partial(deepspeech2_forward, hidden=hidden, n_tokens=n_tokens))
    out = fwd(params, spectrogram, spectrogram_length)
    jax.block_until_ready(out['log_probs'])
    jax.block_until_ready(out['log_probs_length'])

    assert out['log_probs'].shape == (B, 8, n_tokens)
    assert out['log_probs_length'].shape == (B,)
    assert bool(jnp.all(jnp.isfinite(out['log_probs'])))
    assert bool(jnp.allclose(jnp.exp(out['log_probs']).sum(-1), 1.0, atol=1e-3))
    # TODO(synk): dropout_p is a no-op in eval mode and is intentionally not modeled.
    print("KERNEL_OK")
</pallas_src>

<mosaic_0001>
module attributes {stable_mosaic.version = 11 : i64} {
  func.func @_gemm_bn_htanh_kernel(%arg0: i32, %arg1: i32, %arg2: i32, %arg3: memref<128x512xbf16, #tpu.memory_space<vmem>>, %arg4: memref<512x128xbf16, #tpu.memory_space<vmem>>, %arg5: memref<1x128xf32, #tpu.memory_space<vmem>>, %arg6: memref<1x128xf32, #tpu.memory_space<vmem>>, %arg7: memref<128x128xbf16, #tpu.memory_space<vmem>>, %arg8: memref<128x128xf32, #tpu.memory_space<vmem>>) attributes {dimension_semantics = [#tpu.dimension_semantics<parallel>, #tpu.dimension_semantics<parallel>, #tpu.dimension_semantics<arbitrary>], iteration_bounds = array<i64: 1, 1, 1>, scalar_prefetch = 0 : i64, scratch_operands = 1 : i64, tpu.core_type = #tpu.core_type<tc>, window_params = [{transform_indices = @transform_0, window_bounds = array<i64: 128, 512>}, {transform_indices = @transform_1, window_bounds = array<i64: 512, 128>}, {transform_indices = @transform_2, window_bounds = array<i64: 1, 128>}, {transform_indices = @transform_3, window_bounds = array<i64: 1, 128>}, {transform_indices = @transform_4, window_bounds = array<i64: 128, 128>}]} {
    %c0_i32 = arith.constant 0 : i32
    %0 = arith.cmpi eq, %arg2, %c0_i32 : i32
    %1 = arith.extui %0 : i1 to i32
    %c0_i32_0 = arith.constant 0 : i32
    %2 = arith.cmpi ne, %1, %c0_i32_0 : i32
    scf.if %2 {
      %cst_10 = arith.constant 0.000000e+00 : f32
      %12 = vector.broadcast %cst_10 : f32 to vector<128x128xf32>
      %c0_11 = arith.constant 0 : index
      %c0_12 = arith.constant 0 : index
      %13 = vector.load %arg8[%c0_11, %c0_12] : memref<128x128xf32, #tpu.memory_space<vmem>>, vector<128x128xf32>
      tpu.vector_store %arg8[%c0_11, %c0_12], %12 {strides = array<i32>} : memref<128x128xf32, #tpu.memory_space<vmem>>, vector<128x128xf32>,
    } else {
    }
    %c0 = arith.constant 0 : index
    %c0_1 = arith.constant 0 : index
    %3 = vector.load %arg8[%c0, %c0_1] : memref<128x128xf32, #tpu.memory_space<vmem>>, vector<128x128xf32>
    %c0_2 = arith.constant 0 : index
    %c0_3 = arith.constant 0 : index
    %4 = vector.load %arg3[%c0_2, %c0_3] : memref<128x512xbf16, #tpu.memory_space<vmem>>, vector<128x512xbf16>
    %c0_4 = arith.constant 0 : index
    %c0_5 = arith.constant 0 : index
    %5 = vector.load %arg4[%c0_4, %c0_5] : memref<512x128xbf16, #tpu.memory_space<vmem>>, vector<512x128xbf16>
    %cst = arith.constant dense<0.000000e+00> : vector<128x128xf32>
    %6 = tpu.matmul %4, %5, %cst {dimension_numbers = #tpu.dot_dimension_numbers<[1], [0], [0], [1], [0, 0, 1, 1], [], []>} : vector<128x512xbf16>, vector<512x128xbf16>, vector<128x128xf32> -> vector<128x128xf32>
    %7 = arith.addf %3, %6 : vector<128x128xf32>
    %c0_6 = arith.constant 0 : index
    %c0_7 = arith.constant 0 : index
    %8 = vector.load %arg8[%c0_6, %c0_7] : memref<128x128xf32, #tpu.memory_space<vmem>>, vector<128x128xf32>
    tpu.vector_store %arg8[%c0_6, %c0_7], %7 {strides = array<i32>} : memref<128x128xf32, #tpu.memory_space<vmem>>, vector<128x128xf32>,
    %c0_i32_8 = arith.constant 0 : i32
    %9 = arith.cmpi eq, %arg2, %c0_i32_8 : i32
    %10 = arith.extui %9 : i1 to i32
    %c0_i32_9 = arith.constant 0 : i32
    %11 = arith.cmpi ne, %10, %c0_i32_9 : i32
    scf.if %11 {
      %c0_10 = arith.constant 0 : index
      %c0_11 = arith.constant 0 : index
      %12 = vector.load %arg8[%c0_10, %c0_11] : memref<128x128xf32, #tpu.memory_space<vmem>>, vector<128x128xf32>
      %c0_12 = arith.constant 0 : index
      %c0_13 = arith.constant 0 : index
      %13 = vector.load %arg5[%c0_12, %c0_13] : memref<1x128xf32, #tpu.memory_space<vmem>>, vector<1x128xf32>
      %14 = vector.broadcast %13 : vector<1x128xf32> to vector<128x128xf32>
      %15 = arith.mulf %12, %14 : vector<128x128xf32>
      %c0_14 = arith.constant 0 : index
      %c0_15 = arith.constant 0 : index
      %16 = vector.load %arg6[%c0_14, %c0_15] : memref<1x128xf32, #tpu.memory_space<vmem>>, vector<1x128xf32>
      %17 = vector.broadcast %16 : vector<1x128xf32> to vector<128x128xf32>
      %18 = arith.addf %15, %17 : vector<128x128xf32>
      %cst_16 = arith.constant 0.000000e+00 : f32
      %cst_17 = arith.constant 2.000000e+01 : f32
      %19 = vector.broadcast %cst_16 : f32 to vector<128x128xf32>
      %20 = arith.maximumf %19, %18 : vector<128x128xf32>
      %21 = vector.broadcast %cst_17 : f32 to vector<128x128xf32>
      %22 = arith.minimumf %21, %20 : vector<128x128xf32>
      %23 = arith.truncf %22 : vector<128x128xf32> to vector<128x128xbf16>
      %c0_18 = arith.constant 0 : index
      %c0_19 = arith.constant 0 : index
      %24 = vector.load %arg7[%c0_18, %c0_19] : memref<128x128xbf16, #tpu.memory_space<vmem>>, vector<128x128xbf16>
      tpu.vector_store %arg7[%c0_18, %c0_19], %23 {strides = array<i32>} : memref<128x128xbf16, #tpu.memory_space<vmem>>, vector<128x128xbf16>,
    } else {
    }
    return
  }
  func.func @transform_0(%arg0: i32, %arg1: i32, %arg2: i32) -> (i32, i32) {
    %c0_i32 = arith.constant 0 : i32
    return %arg0, %arg2 : i32, i32
  }
  func.func @transform_1(%arg0: i32, %arg1: i32, %arg2: i32) -> (i32, i32) {
    %c0_i32 = arith.constant 0 : i32
    return %arg2, %arg1 : i32, i32
  }
  func.func @transform_2(%arg0: i32, %arg1: i32, %arg2: i32) -> (i32, i32) {
    %c0_i32 = arith.constant 0 : i32
    %c0_i32_0 = arith.constant 0 : i32
    return %c0_i32, %arg1 : i32, i32
  }
  func.func @transform_3(%arg0: i32, %arg1: i32, %arg2: i32) -> (i32, i32) {
    %c0_i32 = arith.constant 0 : i32
    %c0_i32_0 = arith.constant 0 : i32
    return %c0_i32, %arg1 : i32, i32
  }
  func.func @transform_4(%arg0: i32, %arg1: i32, %arg2: i32) -> (i32, i32) {
    %c0_i32 = arith.constant 0 : i32
    return %arg0, %arg1 : i32, i32
  }
}

module attributes {stable_mosaic.version = 11 : i64} {
  func.func @_gemm_bn_htanh_kernel(%arg0: i32, %arg1: i32, %arg2: i32, %arg3: memref<64x1024xbf16, #tpu.memory_space<vmem>>, %arg4: memref<1024x128xbf16, #tpu.memory_space<vmem>>, %arg5: memref<1x128xf32, #tpu.memory_space<vmem>>, %arg6: memref<1x128xf32, #tpu.memory_space<vmem>>, %arg7: memref<64x128xbf16, #tpu.memory_space<vmem>>, %arg8: memref<64x128xf32, #tpu.memory_space<vmem>>) attributes {dimension_semantics = [#tpu.dimension_semantics<parallel>, #tpu.dimension_semantics<parallel>, #tpu.dimension_semantics<arbitrary>], iteration_bounds = array<i64: 1, 1, 8>, scalar_prefetch = 0 : i64, scratch_operands = 1 : i64, tpu.core_type = #tpu.core_type<tc>, window_params = [{transform_indices = @transform_0, window_bounds = array<i64: 64, 1024>}, {transform_indices = @transform_1, window_bounds = array<i64: 1024, 128>}, {transform_indices = @transform_2, window_bounds = array<i64: 1, 128>}, {transform_indices = @transform_3, window_bounds = array<i64: 1, 128>}, {transform_indices = @transform_4, window_bounds = array<i64: 64, 128>}]} {
    %c0_i32 = arith.constant 0 : i32
    %0 = arith.cmpi eq, %arg2, %c0_i32 : i32
    %1 = arith.extui %0 : i1 to i32
    %c0_i32_0 = arith.constant 0 : i32
    %2 = arith.cmpi ne, %1, %c0_i32_0 : i32
    scf.if %2 {
      %cst_9 = arith.constant 0.000000e+00 : f32
      %12 = vector.broadcast %cst_9 : f32 to vector<64x128xf32>
      %c0_10 = arith.constant 0 : index
      %c0_11 = arith.constant 0 : index
      %13 = vector.load %arg8[%c0_10, %c0_11] : memref<64x128xf32, #tpu.memory_space<vmem>>, vector<64x128xf32>
      tpu.vector_store %arg8[%c0_10, %c0_11], %12 {strides = array<i32>} : memref<64x128xf32, #tpu.memory_space<vmem>>, vector<64x128xf32>,
    } else {
    }
    %c0 = arith.constant 0 : index
    %c0_1 = arith.constant 0 : index
    %3 = vector.load %arg8[%c0, %c0_1] : memref<64x128xf32, #tpu.memory_space<vmem>>, vector<64x128xf32>
    %c0_2 = arith.constant 0 : index
    %c0_3 = arith.constant 0 : index
    %4 = vector.load %arg3[%c0_2, %c0_3] : memref<64x1024xbf16, #tpu.memory_space<vmem>>, vector<64x1024xbf16>
    %c0_4 = arith.constant 0 : index
    %c0_5 = arith.constant 0 : index
    %5 = vector.load %arg4[%c0_4, %c0_5] : memref<1024x128xbf16, #tpu.memory_space<vmem>>, vector<1024x128xbf16>
    %cst = arith.constant dense<0.000000e+00> : vector<64x128xf32>
    %6 = tpu.matmul %4, %5, %cst {dimension_numbers = #tpu.dot_dimension_numbers<[1], [0], [0], [1], [0, 0, 1, 1], [], []>} : vector<64x1024xbf16>, vector<1024x128xbf16>, vector<64x128xf32> -> vector<64x128xf32>
    %7 = arith.addf %3, %6 : vector<64x128xf32>
    %c0_6 = arith.constant 0 : index
    %c0_7 = arith.constant 0 : index
    %8 = vector.load %arg8[%c0_6, %c0_7] : memref<64x128xf32, #tpu.memory_space<vmem>>, vector<64x128xf32>
    tpu.vector_store %arg8[%c0_6, %c0_7], %7 {strides = array<i32>} : memref<64x128xf32, #tpu.memory_space<vmem>>, vector<64x128xf32>,
    %c7_i32 = arith.constant 7 : i32
    %9 = arith.cmpi eq, %arg2, %c7_i32 : i32
    %10 = arith.extui %9 : i1 to i32
    %c0_i32_8 = arith.constant 0 : i32
    %11 = arith.cmpi ne, %10, %c0_i32_8 : i32
    scf.if %11 {
      %c0_9 = arith.constant 0 : index
      %c0_10 = arith.constant 0 : index
      %12 = vector.load %arg8[%c0_9, %c0_10] : memref<64x128xf32, #tpu.memory_space<vmem>>, vector<64x128xf32>
      %c0_11 = arith.constant 0 : index
      %c0_12 = arith.constant 0 : index
      %13 = vector.load %arg5[%c0_11, %c0_12] : memref<1x128xf32, #tpu.memory_space<vmem>>, vector<1x128xf32>
      %14 = vector.broadcast %13 : vector<1x128xf32> to vector<64x128xf32>
      %15 = arith.mulf %12, %14 : vector<64x128xf32>
      %c0_13 = arith.constant 0 : index
      %c0_14 = arith.constant 0 : index
      %16 = vector.load %arg6[%c0_13, %c0_14] : memref<1x128xf32, #tpu.memory_space<vmem>>, vector<1x128xf32>
      %17 = vector.broadcast %16 : vector<1x128xf32> to vector<64x128xf32>
      %18 = arith.addf %15, %17 : vector<64x128xf32>
      %cst_15 = arith.constant 0.000000e+00 : f32
      %cst_16 = arith.constant 2.000000e+01 : f32
      %19 = vector.broadcast %cst_15 : f32 to vector<64x128xf32>
      %20 = arith.maximumf %19, %18 : vector<64x128xf32>
      %21 = vector.broadcast %cst_16 : f32 to vector<64x128xf32>
      %22 = arith.minimumf %21, %20 : vector<64x128xf32>
      %23 = arith.truncf %22 : vector<64x128xf32> to vector<64x128xbf16>
      %c0_17 = arith.constant 0 : index
      %c0_18 = arith.constant 0 : index
      %24 = vector.load %arg7[%c0_17, %c0_18] : memref<64x128xbf16, #tpu.memory_space<vmem>>, vector<64x128xbf16>
      tpu.vector_store %arg7[%c0_17, %c0_18], %23 {strides = array<i32>} : memref<64x128xbf16, #tpu.memory_space<vmem>>, vector<64x128xbf16>,
    } else {
    }
    return
  }
  func.func @transform_0(%arg0: i32, %arg1: i32, %arg2: i32) -> (i32, i32) {
    %c0_i32 = arith.constant 0 : i32
    return %arg0, %arg2 : i32, i32
  }
  func.func @transform_1(%arg0: i32, %arg1: i32, %arg2: i32) -> (i32, i32) {
    %c0_i32 = arith.constant 0 : i32
    return %arg2, %arg1 : i32, i32
  }
  func.func @transform_2(%arg0: i32, %arg1: i32, %arg2: i32) -> (i32, i32) {
    %c0_i32 = arith.constant 0 : i32
    %c0_i32_0 = arith.constant 0 : i32
    return %c0_i32, %arg1 : i32, i32
  }
  func.func @transform_3(%arg0: i32, %arg1: i32, %arg2: i32) -> (i32, i32) {
    %c0_i32 = arith.constant 0 : i32
    %c0_i32_0 = arith.constant 0 : i32
    return %c0_i32, %arg1 : i32, i32
  }
  func.func @transform_4(%arg0: i32, %arg1: i32, %arg2: i32) -> (i32, i32) {
    %c0_i32 = arith.constant 0 : i32
    return %arg0, %arg1 : i32, i32
  }
}

module attributes {stable_mosaic.version = 11 : i64} {
  func.func @_bn_relu_gemm_kernel(%arg0: i32, %arg1: i32, %arg2: i32, %arg3: memref<64x128xbf16, #tpu.memory_space<vmem>>, %arg4: memref<1x128xf32, #tpu.memory_space<vmem>>, %arg5: memref<1x128xf32, #tpu.memory_space<vmem>>, %arg6: memref<128x256xbf16, #tpu.memory_space<vmem>>, %arg7: memref<1x256xf32, #tpu.memory_space<vmem>>, %arg8: memref<64x256xf32, #tpu.memory_space<vmem>>, %arg9: memref<64x256xf32, #tpu.memory_space<vmem>>) attributes {dimension_semantics = [#tpu.dimension_semantics<parallel>, #tpu.dimension_semantics<parallel>, #tpu.dimension_semantics<arbitrary>], iteration_bounds = array<i64: 1, 1, 1>, scalar_prefetch = 0 : i64, scratch_operands = 1 : i64, tpu.core_type = #tpu.core_type<tc>, window_params = [{transform_indices = @transform_0, window_bounds = array<i64: 64, 128>}, {transform_indices = @transform_1, window_bounds = array<i64: 1, 128>}, {transform_indices = @transform_2, window_bounds = array<i64: 1, 128>}, {transform_indices = @transform_3, window_bounds = array<i64: 128, 256>}, {transform_indices = @transform_4, window_bounds = array<i64: 1, 256>}, {transform_indices = @transform_5, window_bounds = array<i64: 64, 256>}]} {
    %c0_i32 = arith.constant 0 : i32
    %0 = arith.cmpi eq, %arg2, %c0_i32 : i32
    %1 = arith.extui %0 : i1 to i32
    %c0_i32_0 = arith.constant 0 : i32
    %2 = arith.cmpi ne, %1, %c0_i32_0 : i32
    scf.if %2 {
      %cst_15 = arith.constant 0.000000e+00 : f32
      %22 = vector.broadcast %cst_15 : f32 to vector<64x256xf32>
      %c0_16 = arith.constant 0 : index
      %c0_17 = arith.constant 0 : index
      %23 = vector.load %arg9[%c0_16, %c0_17] : memref<64x256xf32, #tpu.memory_space<vmem>>, vector<64x256xf32>
      tpu.vector_store %arg9[%c0_16, %c0_17], %22 {strides = array<i32>} : memref<64x256xf32, #tpu.memory_space<vmem>>, vector<64x256xf32>,
    } else {
    }
    %c0 = arith.constant 0 : index
    %c0_1 = arith.constant 0 : index
    %3 = vector.load %arg3[%c0, %c0_1] : memref<64x128xbf16, #tpu.memory_space<vmem>>, vector<64x128xbf16>
    %4 = arith.extf %3 : vector<64x128xbf16> to vector<64x128xf32>
    %c0_2 = arith.constant 0 : index
    %c0_3 = arith.constant 0 : index
    %5 = vector.load %arg4[%c0_2, %c0_3] : memref<1x128xf32, #tpu.memory_space<vmem>>, vector<1x128xf32>
    %6 = vector.broadcast %5 : vector<1x128xf32> to vector<64x128xf32>
    %7 = arith.mulf %4, %6 : vector<64x128xf32>
    %c0_4 = arith.constant 0 : index
    %c0_5 = arith.constant 0 : index
    %8 = vector.load %arg5[%c0_4, %c0_5] : memref<1x128xf32, #tpu.memory_space<vmem>>, vector<1x128xf32>
    %9 = vector.broadcast %8 : vector<1x128xf32> to vector<64x128xf32>
    %10 = arith.addf %7, %9 : vector<64x128xf32>
    %cst = arith.constant 0.000000e+00 : f32
    %11 = vector.broadcast %cst : f32 to vector<64x128xf32>
    %12 = arith.maximumf %10, %11 : vector<64x128xf32>
    %c0_6 = arith.constant 0 : index
    %c0_7 = arith.constant 0 : index
    %13 = vector.load %arg9[%c0_6, %c0_7] : memref<64x256xf32, #tpu.memory_space<vmem>>, vector<64x256xf32>
    %14 = arith.truncf %12 : vector<64x128xf32> to vector<64x128xbf16>
    %c0_8 = arith.constant 0 : index
    %c0_9 = arith.constant 0 : index
    %15 = vector.load %arg6[%c0_8, %c0_9] : memref<128x256xbf16, #tpu.memory_space<vmem>>, vector<128x256xbf16>
    %cst_10 = arith.constant dense<0.000000e+00> : vector<64x256xf32>
    %16 = tpu.matmul %14, %15, %cst_10 {dimension_numbers = #tpu.dot_dimension_numbers<[1], [0], [0], [1], [0, 0, 1, 1], [], []>} : vector<64x128xbf16>, vector<128x256xbf16>, vector<64x256xf32> -> vector<64x256xf32>
    %17 = arith.addf %13, %16 : vector<64x256xf32>
    %c0_11 = arith.constant 0 : index
    %c0_12 = arith.constant 0 : index
    %18 = vector.load %arg9[%c0_11, %c0_12] : memref<64x256xf32, #tpu.memory_space<vmem>>, vector<64x256xf32>
    tpu.vector_store %arg9[%c0_11, %c0_12], %17 {strides = array<i32>} : memref<64x256xf32, #tpu.memory_space<vmem>>, vector<64x256xf32>,
    %c0_i32_13 = arith.constant 0 : i32
    %19 = arith.cmpi eq, %arg2, %c0_i32_13 : i32
    %20 = arith.extui %19 : i1 to i32
    %c0_i32_14 = arith.constant 0 : i32
    %21 = arith.cmpi ne, %20, %c0_i32_14 : i32
    scf.if %21 {
      %c0_15 = arith.constant 0 : index
      %c0_16 = arith.constant 0 : index
      %22 = vector.load %arg9[%c0_15, %c0_16] : memref<64x256xf32, #tpu.memory_space<vmem>>, vector<64x256xf32>
      %c0_17 = arith.constant 0 : index
      %c0_18 = arith.constant 0 : index
      %23 = vector.load %arg7[%c0_17, %c0_18] : memref<1x256xf32, #tpu.memory_space<vmem>>, vector<1x256xf32>
      %24 = vector.broadcast %23 : vector<1x256xf32> to vector<64x256xf32>
      %25 = arith.addf %22, %24 : vector<64x256xf32>
      %c0_19 = arith.constant 0 : index
      %c0_20 = arith.constant 0 : index
      %26 = vector.load %arg8[%c0_19, %c0_20] : memref<64x256xf32, #tpu.memory_space<vmem>>, vector<64x256xf32>
      tpu.vector_store %arg8[%c0_19, %c0_20], %25 {strides = array<i32>} : memref<64x256xf32, #tpu.memory_space<vmem>>, vector<64x256xf32>,
    } else {
    }
    return
  }
  func.func @transform_0(%arg0: i32, %arg1: i32, %arg2: i32) -> (i32, i32) {
    %c0_i32 = arith.constant 0 : i32
    return %arg0, %arg2 : i32, i32
  }
  func.func @transform_1(%arg0: i32, %arg1: i32, %arg2: i32) -> (i32, i32) {
    %c0_i32 = arith.constant 0 : i32
    %c0_i32_0 = arith.constant 0 : i32
    return %c0_i32, %arg2 : i32, i32
  }
  func.func @transform_2(%arg0: i32, %arg1: i32, %arg2: i32) -> (i32, i32) {
    %c0_i32 = arith.constant 0 : i32
    %c0_i32_0 = arith.constant 0 : i32
    return %c0_i32, %arg2 : i32, i32
  }
  func.func @transform_3(%arg0: i32, %arg1: i32, %arg2: i32) -> (i32, i32) {
    %c0_i32 = arith.constant 0 : i32
    return %arg2, %arg1 : i32, i32
  }
  func.func @transform_4(%arg0: i32, %arg1: i32, %arg2: i32) -> (i32, i32) {
    %c0_i32 = arith.constant 0 : i32
    %c0_i32_0 = arith.constant 0 : i32
    return %c0_i32, %arg1 : i32, i32
  }
  func.func @transform_5(%arg0: i32, %arg1: i32, %arg2: i32) -> (i32, i32) {
    %c0_i32 = arith.constant 0 : i32
    return %arg0, %arg1 : i32, i32
  }
}

module attributes {stable_mosaic.version = 11 : i64} {
  func.func @_bigru_kernel(%arg0: i32, %arg1: memref<8x1xi32, #tpu.memory_space<vmem>>, %arg2: memref<8x8x192xf32, #tpu.memory_space<vmem>>, %arg3: memref<8x8x192xf32, #tpu.memory_space<vmem>>, %arg4: memref<2x32x96xbf16, #tpu.memory_space<vmem>>, %arg5: memref<2x1x96xf32, #tpu.memory_space<vmem>>, %arg6: memref<8x8x32xbf16, #tpu.memory_space<vmem>>, %arg7: memref<8x8x32xbf16, #tpu.memory_space<vmem>>, %arg8: memref<2x8x32xf32, #tpu.memory_space<vmem>>) attributes {dimension_semantics = [#tpu.dimension_semantics<arbitrary>], iteration_bounds = array<i64: 1>, scalar_prefetch = 0 : i64, scratch_operands = 1 : i64, tpu.core_type = #tpu.core_type<tc>, window_params = [{pipeline_mode = #tpu.pipeline_mode<synchronous>, transform_indices = @transform_0, window_bounds = array<i64: 8, 1>}, {transform_indices = @transform_1, window_bounds = array<i64: 8, 8, 192>}, {transform_indices = @transform_2, window_bounds = array<i64: 8, 8, 192>}, {pipeline_mode = #tpu.pipeline_mode<synchronous>, transform_indices = @transform_3, window_bounds = array<i64: 2, 32, 96>}, {pipeline_mode = #tpu.pipeline_mode<synchronous>, transform_indices = @transform_4, window_bounds = array<i64: 2, 1, 96>}, {transform_indices = @transform_5, window_bounds = array<i64: 8, 8, 32>}, {transform_indices = @transform_6, window_bounds = array<i64: 8, 8, 32>}]} {
    %c0_i32 = arith.constant 0 : i32
    %0 = arith.cmpi eq, %arg0, %c0_i32 : i32
    %1 = arith.extui %0 : i1 to i32
    %c0_i32_0 = arith.constant 0 : i32
    %2 = arith.cmpi ne, %1, %c0_i32_0 : i32
    scf.if %2 {
      %cst_289 = arith.constant 0.000000e+00 : f32
      %817 = vector.broadcast %cst_289 : f32 to vector<2x8x32xf32>
      %c0_290 = arith.constant 0 : index
      %c0_291 = arith.constant 0 : index
      %c0_292 = arith.constant 0 : index
      %818 = vector.load %arg8[%c0_290, %c0_291, %c0_292] : memref<2x8x32xf32, #tpu.memory_space<vmem>>, vector<2x8x32xf32>
      tpu.vector_store %arg8[%c0_290, %c0_291, %c0_292], %817 {strides = array<i32>} : memref<2x8x32xf32, #tpu.memory_space<vmem>>, vector<2x8x32xf32>,
    } else {
    }
    %c0 = arith.constant 0 : index
    %c0_1 = arith.constant 0 : index
    %3 = vector.load %arg1[%c0, %c0_1] : memref<8x1xi32, #tpu.memory_space<vmem>>, vector<8x1xi32>
    %c0_2 = arith.constant 0 : index
    %c0_3 = arith.constant 0 : index
    %c0_4 = arith.constant 0 : index
    %4 = vector.load %arg8[%c0_2, %c0_3, %c0_4] : memref<2x8x32xf32, #tpu.memory_space<vmem>>, vector<1x8x32xf32>
    %5 = vector.shape_cast %4 : vector<1x8x32xf32> to vector<8x32xf32>
    %c1 = arith.constant 1 : index
    %c0_5 = arith.constant 0 : index
    %c0_6 = arith.constant 0 : index
    %6 = vector.load %arg8[%c1, %c0_5, %c0_6] : memref<2x8x32xf32, #tpu.memory_space<vmem>>, vector<1x8x32xf32>
    %7 = vector.shape_cast %6 : vector<1x8x32xf32> to vector<8x32xf32>
    %c8_i32 = arith.constant 8 : i32
    %8 = arith.muli %arg0, %c8_i32 : i32
    %c0_i32_7 = arith.constant 0 : i32
    %9 = arith.subi %c0_i32_7, %arg0 : i32
    %c8_i32_8 = arith.constant 8 : i32
    %10 = arith.muli %9, %c8_i32_8 : i32
    %c0_i32_9 = arith.constant 0 : i32
    %11 = arith.addi %8, %c0_i32_9 : i32
    %12 = vector.broadcast %11 : i32 to vector<8x1xi32>
    %13 = arith.cmpi slt, %12, %3 : vector<8x1xi32>
    %c7_i32 = arith.constant 7 : i32
    %14 = arith.addi %10, %c7_i32 : i32
    %15 = vector.broadcast %14 : i32 to vector<8x1xi32>
    %16 = arith.cmpi slt, %15, %3 : vector<8x1xi32>
    %c0_10 = arith.constant 0 : index
    %c0_11 = arith.constant 0 : index
    %c0_12 = arith.constant 0 : index
    %17 = vector.load %arg2[%c0_10, %c0_11, %c0_12] : memref<8x8x192xf32, #tpu.memory_space<vmem>>, vector<1x8x192xf32>
    %18 = vector.shape_cast %17 : vector<1x8x192xf32> to vector<8x192xf32>
    %19 = arith.truncf %5 : vector<8x32xf32> to vector<8x32xbf16>
    %c0_13 = arith.constant 0 : index
    %c0_14 = arith.constant 0 : index
    %c0_15 = arith.constant 0 : index
    %20 = vector.load %arg4[%c0_13, %c0_14, %c0_15] : memref<2x32x96xbf16, #tpu.memory_space<vmem>>, vector<1x32x96xbf16>
    %21 = vector.shape_cast %20 : vector<1x32x96xbf16> to vector<32x96xbf16>
    %cst = arith.constant dense<0.000000e+00> : vector<8x96xf32>
    %22 = tpu.matmul %19, %21, %cst {dimension_numbers = #tpu.dot_dimension_numbers<[1], [0], [0], [1], [0, 0, 1, 1], [], []>} : vector<8x32xbf16>, vector<32x96xbf16>, vector<8x96xf32> -> vector<8x96xf32>
    %c0_16 = arith.constant 0 : index
    %c0_17 = arith.constant 0 : index
    %c0_18 = arith.constant 0 : index
    %23 = vector.load %arg5[%c0_16, %c0_17, %c0_18] : memref<2x1x96xf32, #tpu.memory_space<vmem>>, vector<1x1x96xf32>
    %24 = vector.shape_cast %23 : vector<1x1x96xf32> to vector<1x96xf32>
    %25 = vector.broadcast %24 : vector<1x96xf32> to vector<8x96xf32>
    %26 = arith.addf %22, %25 : vector<8x96xf32>
    %27 = vector.extract_strided_slice %18 {offsets = [0, 0], sizes = [8, 32], strides = [1, 1]} : vector<8x192xf32> to vector<8x32xf32>
    %28 = vector.extract_strided_slice %18 {offsets = [0, 32], sizes = [8, 32], strides = [1, 1]} : vector<8x192xf32> to vector<8x32xf32>
    %29 = vector.extract_strided_slice %18 {offsets = [0, 64], sizes = [8, 32], strides = [1, 1]} : vector<8x192xf32> to vector<8x32xf32>
    %30 = vector.extract_strided_slice %26 {offsets = [0, 0], sizes = [8, 32], strides = [1, 1]} : vector<8x96xf32> to vector<8x32xf32>
    %31 = arith.addf %27, %30 : vector<8x32xf32>
    %32 = arith.negf %31 : vector<8x32xf32>
    %33 = math.exp %32 : vector<8x32xf32>
    %cst_19 = arith.constant 1.000000e+00 : f32
    %34 = vector.broadcast %cst_19 : f32 to vector<8x32xf32>
    %35 = arith.addf %34, %33 : vector<8x32xf32>
    %36 = arith.divf %34, %35 : vector<8x32xf32>
    %37 = vector.extract_strided_slice %26 {offsets = [0, 32], sizes = [8, 32], strides = [1, 1]} : vector<8x96xf32> to vector<8x32xf32>
    %38 = arith.addf %28, %37 : vector<8x32xf32>
    %39 = arith.negf %38 : vector<8x32xf32>
    %40 = math.exp %39 : vector<8x32xf32>
    %cst_20 = arith.constant 1.000000e+00 : f32
    %41 = vector.broadcast %cst_20 : f32 to vector<8x32xf32>
    %42 = arith.addf %41, %40 : vector<8x32xf32>
    %43 = arith.divf %41, %42 : vector<8x32xf32>
    %44 = vector.extract_strided_slice %26 {offsets = [0, 64], sizes = [8, 32], strides = [1, 1]} : vector<8x96xf32> to vector<8x32xf32>
    %45 = arith.mulf %36, %44 : vector<8x32xf32>
    %46 = arith.addf %29, %45 : vector<8x32xf32>
    %47 = math.tanh %46 : vector<8x32xf32>
    %cst_21 = arith.constant 1.000000e+00 : f32
    %48 = vector.broadcast %cst_21 : f32 to vector<8x32xf32>
    %49 = arith.subf %48, %43 : vector<8x32xf32>
    %50 = arith.mulf %49, %47 : vector<8x32xf32>
    %51 = arith.mulf %43, %5 : vector<8x32xf32>
    %52 = arith.addf %50, %51 : vector<8x32xf32>
    %c7 = arith.constant 7 : index
    %c0_22 = arith.constant 0 : index
    %c0_23 = arith.constant 0 : index
    %53 = vector.load %arg3[%c7, %c0_22, %c0_23] : memref<8x8x192xf32, #tpu.memory_space<vmem>>, vector<1x8x192xf32>
    %54 = vector.shape_cast %53 : vector<1x8x192xf32> to vector<8x192xf32>
    %55 = arith.truncf %7 : vector<8x32xf32> to vector<8x32xbf16>
    %c1_24 = arith.constant 1 : index
    %c0_25 = arith.constant 0 : index
    %c0_26 = arith.constant 0 : index
    %56 = vector.load %arg4[%c1_24, %c0_25, %c0_26] : memref<2x32x96xbf16, #tpu.memory_space<vmem>>, vector<1x32x96xbf16>
    %57 = vector.shape_cast %56 : vector<1x32x96xbf16> to vector<32x96xbf16>
    %cst_27 = arith.constant dense<0.000000e+00> : vector<8x96xf32>
    %58 = tpu.matmul %55, %57, %cst_27 {dimension_numbers = #tpu.dot_dimension_numbers<[1], [0], [0], [1], [0, 0, 1, 1], [], []>} : vector<8x32xbf16>, vector<32x96xbf16>, vector<8x96xf32> -> vector<8x96xf32>
    %c1_28 = arith.constant 1 : index
    %c0_29 = arith.constant 0 : index
    %c0_30 = arith.constant 0 : index
    %59 = vector.load %arg5[%c1_28, %c0_29, %c0_30] : memref<2x1x96xf32, #tpu.memory_space<vmem>>, vector<1x1x96xf32>
    %60 = vector.shape_cast %59 : vector<1x1x96xf32> to vector<1x96xf32>
    %61 = vector.broadcast %60 : vector<1x96xf32> to vector<8x96xf32>
    %62 = arith.addf %58, %61 : vector<8x96xf32>
    %63 = vector.extract_strided_slice %54 {offsets = [0, 96], sizes = [8, 32], strides = [1, 1]} : vector<8x192xf32> to vector<8x32xf32>
    %64 = vector.extract_strided_slice %54 {offsets = [0, 128], sizes = [8, 32], strides = [1, 1]} : vector<8x192xf32> to vector<8x32xf32>
    %65 = vector.extract_strided_slice %54 {offsets = [0, 160], sizes = [8, 32], strides = [1, 1]} : vector<8x192xf32> to vector<8x32xf32>
    %66 = vector.extract_strided_slice %62 {offsets = [0, 0], sizes = [8, 32], strides = [1, 1]} : vector<8x96xf32> to vector<8x32xf32>
    %67 = arith.addf %63, %66 : vector<8x32xf32>
    %68 = arith.negf %67 : vector<8x32xf32>
    %69 = math.exp %68 : vector<8x32xf32>
    %cst_31 = arith.constant 1.000000e+00 : f32
    %70 = vector.broadcast %cst_31 : f32 to vector<8x32xf32>
    %71 = arith.addf %70, %69 : vector<8x32xf32>
    %72 = arith.divf %70, %71 : vector<8x32xf32>
    %73 = vector.extract_strided_slice %62 {offsets = [0, 32], sizes = [8, 32], strides = [1, 1]} : vector<8x96xf32> to vector<8x32xf32>
    %74 = arith.addf %64, %73 : vector<8x32xf32>
    %75 = arith.negf %74 : vector<8x32xf32>
    %76 = math.exp %75 : vector<8x32xf32>
    %cst_32 = arith.constant 1.000000e+00 : f32
    %77 = vector.broadcast %cst_32 : f32 to vector<8x32xf32>
    %78 = arith.addf %77, %76 : vector<8x32xf32>
    %79 = arith.divf %77, %78 : vector<8x32xf32>
    %80 = vector.extract_strided_slice %62 {offsets = [0, 64], sizes = [8, 32], strides = [1, 1]} : vector<8x96xf32> to vector<8x32xf32>
    %81 = arith.mulf %72, %80 : vector<8x32xf32>
    %82 = arith.addf %65, %81 : vector<8x32xf32>
    %83 = math.tanh %82 : vector<8x32xf32>
    %cst_33 = arith.constant 1.000000e+00 : f32
    %84 = vector.broadcast %cst_33 : f32 to vector<8x32xf32>
    %85 = arith.subf %84, %79 : vector<8x32xf32>
    %86 = arith.mulf %85, %83 : vector<8x32xf32>
    %87 = arith.mulf %79, %7 : vector<8x32xf32>
    %88 = arith.addf %86, %87 : vector<8x32xf32>
    %89 = vector.shape_cast %13 : vector<8x1xi1> to vector<8x1xi1>
    %90 = vector.broadcast %89 : vector<8x1xi1> to vector<8x32xi1>
    %91 = arith.select %90, %52, %5 : vector<8x32xi1>, vector<8x32xf32>
    %92 = vector.shape_cast %16 : vector<8x1xi1> to vector<8x1xi1>
    %93 = vector.broadcast %92 : vector<8x1xi1> to vector<8x32xi1>
    %94 = arith.select %93, %88, %7 : vector<8x32xi1>, vector<8x32xf32>
    %cst_34 = arith.constant 0.000000e+00 : f32
    %95 = vector.shape_cast %13 : vector<8x1xi1> to vector<8x1xi1>
    %96 = vector.broadcast %95 : vector<8x1xi1> to vector<8x32xi1>
    %97 = vector.broadcast %cst_34 : f32 to vector<8x32xf32>
    %98 = arith.select %96, %91, %97 : vector<8x32xi1>, vector<8x32xf32>
    %99 = arith.truncf %98 : vector<8x32xf32> to vector<8x32xbf16>
    %c0_35 = arith.constant 0 : index
    %c0_36 = arith.constant 0 : index
    %c0_37 = arith.constant 0 : index
    %100 = vector.load %arg6[%c0_35, %c0_36, %c0_37] : memref<8x8x32xbf16, #tpu.memory_space<vmem>>, vector<1x8x32xbf16>
    %101 = vector.shape_cast %100 : vector<1x8x32xbf16> to vector<8x32xbf16>
    %102 = vector.shape_cast %99 : vector<8x32xbf16> to vector<1x8x32xbf16>
    tpu.vector_store %arg6[%c0_35, %c0_36, %c0_37], %102 {strides = array<i32>} : memref<8x8x32xbf16, #tpu.memory_space<vmem>>, vector<1x8x32xbf16>,
    %cst_38 = arith.constant 0.000000e+00 : f32
    %103 = vector.shape_cast %16 : vector<8x1xi1> to vector<8x1xi1>
    %104 = vector.broadcast %103 : vector<8x1xi1> to vector<8x32xi1>
    %105 = vector.broadcast %cst_38 : f32 to vector<8x32xf32>
    %106 = arith.select %104, %94, %105 : vector<8x32xi1>, vector<8x32xf32>
    %107 = arith.truncf %106 : vector<8x32xf32> to vector<8x32xbf16>
    %c7_39 = arith.constant 7 : index
    %c0_40 = arith.constant 0 : index
    %c0_41 = arith.constant 0 : index
    %108 = vector.load %arg7[%c7_39, %c0_40, %c0_41] : memref<8x8x32xbf16, #tpu.memory_space<vmem>>, vector<1x8x32xbf16>
    %109 = vector.shape_cast %108 : vector<1x8x32xbf16> to vector<8x32xbf16>
    %110 = vector.shape_cast %107 : vector<8x32xbf16> to vector<1x8x32xbf16>
    tpu.vector_store %arg7[%c7_39, %c0_40, %c0_41], %110 {strides = array<i32>} : memref<8x8x32xbf16, #tpu.memory_space<vmem>>, vector<1x8x32xbf16>,
    %c1_i32 = arith.constant 1 : i32
    %111 = arith.addi %8, %c1_i32 : i32
    %112 = vector.broadcast %111 : i32 to vector<8x1xi32>
    %113 = arith.cmpi slt, %112, %3 : vector<8x1xi32>
    %c6_i32 = arith.constant 6 : i32
    %114 = arith.addi %10, %c6_i32 : i32
    %115 = vector.broadcast %114 : i32 to vector<8x1xi32>
    %116 = arith.cmpi slt, %115, %3 : vector<8x1xi32>
    %c1_42 = arith.constant 1 : index
    %c0_43 = arith.constant 0 : index
    %c0_44 = arith.constant 0 : index
    %117 = vector.load %arg2[%c1_42, %c0_43, %c0_44] : memref<8x8x192xf32, #tpu.memory_space<vmem>>, vector<1x8x192xf32>
    %118 = vector.shape_cast %117 : vector<1x8x192xf32> to vector<8x192xf32>
    %119 = arith.truncf %91 : vector<8x32xf32> to vector<8x32xbf16>
    %c0_45 = arith.constant 0 : index
    %c0_46 = arith.constant 0 : index
    %c0_47 = arith.constant 0 : index
    %120 = vector.load %arg4[%c0_45, %c0_46, %c0_47] : memref<2x32x96xbf16, #tpu.memory_space<vmem>>, vector<1x32x96xbf16>
    %121 = vector.shape_cast %120 : vector<1x32x96xbf16> to vector<32x96xbf16>
    %cst_48 = arith.constant dense<0.000000e+00> : vector<8x96xf32>
    %122 = tpu.matmul %119, %121, %cst_48 {dimension_numbers = #tpu.dot_dimension_numbers<[1], [0], [0], [1], [0, 0, 1, 1], [], []>} : vector<8x32xbf16>, vector<32x96xbf16>, vector<8x96xf32> -> vector<8x96xf32>
    %c0_49 = arith.constant 0 : index
    %c0_50 = arith.constant 0 : index
    %c0_51 = arith.constant 0 : index
    %123 = vector.load %arg5[%c0_49, %c0_50, %c0_51] : memref<2x1x96xf32, #tpu.memory_space<vmem>>, vector<1x1x96xf32>
    %124 = vector.shape_cast %123 : vector<1x1x96xf32> to vector<1x96xf32>
    %125 = vector.broadcast %124 : vector<1x96xf32> to vector<8x96xf32>
    %126 = arith.addf %122, %125 : vector<8x96xf32>
    %127 = vector.extract_strided_slice %118 {offsets = [0, 0], sizes = [8, 32], strides = [1, 1]} : vector<8x192xf32> to vector<8x32xf32>
    %128 = vector.extract_strided_slice %118 {offsets = [0, 32], sizes = [8, 32], strides = [1, 1]} : vector<8x192xf32> to vector<8x32xf32>
    %129 = vector.extract_strided_slice %118 {offsets = [0, 64], sizes = [8, 32], strides = [1, 1]} : vector<8x192xf32> to vector<8x32xf32>
    %130 = vector.extract_strided_slice %126 {offsets = [0, 0], sizes = [8, 32], strides = [1, 1]} : vector<8x96xf32> to vector<8x32xf32>
    %131 = arith.addf %127, %130 : vector<8x32xf32>
    %132 = arith.negf %131 : vector<8x32xf32>
    %133 = math.exp %132 : vector<8x32xf32>
    %cst_52 = arith.constant 1.000000e+00 : f32
    %134 = vector.broadcast %cst_52 : f32 to vector<8x32xf32>
    %135 = arith.addf %134, %133 : vector<8x32xf32>
    %136 = arith.divf %134, %135 : vector<8x32xf32>
    %137 = vector.extract_strided_slice %126 {offsets = [0, 32], sizes = [8, 32], strides = [1, 1]} : vector<8x96xf32> to vector<8x32xf32>
    %138 = arith.addf %128, %137 : vector<8x32xf32>
    %139 = arith.negf %138 : vector<8x32xf32>
    %140 = math.exp %139 : vector<8x32xf32>
    %cst_53 = arith.constant 1.000000e+00 : f32
    %141 = vector.broadcast %cst_53 : f32 to vector<8x32xf32>
    %142 = arith.addf %141, %140 : vector<8x32xf32>
    %143 = arith.divf %141, %142 : vector<8x32xf32>
    %144 = vector.extract_strided_slice %126 {offsets = [0, 64], sizes = [8, 32], strides = [1, 1]} : vector<8x96xf32> to vector<8x32xf32>
    %145 = arith.mulf %136, %144 : vector<8x32xf32>
    %146 = arith.addf %129, %145 : vector<8x32xf32>
    %147 = math.tanh %146 : vector<8x32xf32>
    %cst_54 = arith.constant 1.000000e+00 : f32
    %148 = vector.broadcast %cst_54 : f32 to vector<8x32xf32>
    %149 = arith.subf %148, %143 : vector<8x32xf32>
    %150 = arith.mulf %149, %147 : vector<8x32xf32>
    %151 = arith.mulf %143, %91 : vector<8x32xf32>
    %152 = arith.addf %150, %151 : vector<8x32xf32>
    %c6 = arith.constant 6 : index
    %c0_55 = arith.constant 0 : index
    %c0_56 = arith.constant 0 : index
    %153 = vector.load %arg3[%c6, %c0_55, %c0_56] : memref<8x8x192xf32, #tpu.memory_space<vmem>>, vector<1x8x192xf32>
    %154 = vector.shape_cast %153 : vector<1x8x192xf32> to vector<8x192xf32>
    %155 = arith.truncf %94 : vector<8x32xf32> to vector<8x32xbf16>
    %c1_57 = arith.constant 1 : index
    %c0_58 = arith.constant 0 : index
    %c0_59 = arith.constant 0 : index
    %156 = vector.load %arg4[%c1_57, %c0_58, %c0_59] : memref<2x32x96xbf16, #tpu.memory_space<vmem>>, vector<1x32x96xbf16>
    %157 = vector.shape_cast %156 : vector<1x32x96xbf16> to vector<32x96xbf16>
    %cst_60 = arith.constant dense<0.000000e+00> : vector<8x96xf32>
    %158 = tpu.matmul %155, %157, %cst_60 {dimension_numbers = #tpu.dot_dimension_numbers<[1], [0], [0], [1], [0, 0, 1, 1], [], []>} : vector<8x32xbf16>, vector<32x96xbf16>, vector<8x96xf32> -> vector<8x96xf32>
    %c1_61 = arith.constant 1 : index
    %c0_62 = arith.constant 0 : index
    %c0_63 = arith.constant 0 : index
    %159 = vector.load %arg5[%c1_61, %c0_62, %c0_63] : memref<2x1x96xf32, #tpu.memory_space<vmem>>, vector<1x1x96xf32>
    %160 = vector.shape_cast %159 : vector<1x1x96xf32> to vector<1x96xf32>
    %161 = vector.broadcast %160 : vector<1x96xf32> to vector<8x96xf32>
    %162 = arith.addf %158, %161 : vector<8x96xf32>
    %163 = vector.extract_strided_slice %154 {offsets = [0, 96], sizes = [8, 32], strides = [1, 1]} : vector<8x192xf32> to vector<8x32xf32>
    %164 = vector.extract_strided_slice %154 {offsets = [0, 128], sizes = [8, 32], strides = [1, 1]} : vector<8x192xf32> to vector<8x32xf32>
    %165 = vector.extract_strided_slice %154 {offsets = [0, 160], sizes = [8, 32], strides = [1, 1]} : vector<8x192xf32> to vector<8x32xf32>
    %166 = vector.extract_strided_slice %162 {offsets = [0, 0], sizes = [8, 32], strides = [1, 1]} : vector<8x96xf32> to vector<8x32xf32>
    %167 = arith.addf %163, %166 : vector<8x32xf32>
    %168 = arith.negf %167 : vector<8x32xf32>
    %169 = math.exp %168 : vector<8x32xf32>
    %cst_64 = arith.constant 1.000000e+00 : f32
    %170 = vector.broadcast %cst_64 : f32 to vector<8x32xf32>
    %171 = arith.addf %170, %169 : vector<8x32xf32>
    %172 = arith.divf %170, %171 : vector<8x32xf32>
    %173 = vector.extract_strided_slice %162 {offsets = [0, 32], sizes = [8, 32], strides = [1, 1]} : vector<8x96xf32> to vector<8x32xf32>
    %174 = arith.addf %164, %173 : vector<8x32xf32>
    %175 = arith.negf %174 : vector<8x32xf32>
    %176 = math.exp %175 : vector<8x32xf32>
    %cst_65 = arith.constant 1.000000e+00 : f32
    %177 = vector.broadcast %cst_65 : f32 to vector<8x32xf32>
    %178 = arith.addf %177, %176 : vector<8x32xf32>
    %179 = arith.divf %177, %178 : vector<8x32xf32>
    %180 = vector.extract_strided_slice %162 {offsets = [0, 64], sizes = [8, 32], strides = [1, 1]} : vector<8x96xf32> to vector<8x32xf32>
    %181 = arith.mulf %172, %180 : vector<8x32xf32>
    %182 = arith.addf %165, %181 : vector<8x32xf32>
    %183 = math.tanh %182 : vector<8x32xf32>
    %cst_66 = arith.constant 1.000000e+00 : f32
    %184 = vector.broadcast %cst_66 : f32 to vector<8x32xf32>
    %185 = arith.subf %184, %179 : vector<8x32xf32>
    %186 = arith.mulf %185, %183 : vector<8x32xf32>
    %187 = arith.mulf %179, %94 : vector<8x32xf32>
    %188 = arith.addf %186, %187 : vector<8x32xf32>
    %189 = vector.shape_cast %113 : vector<8x1xi1> to vector<8x1xi1>
    %190 = vector.broadcast %189 : vector<8x1xi1> to vector<8x32xi1>
    %191 = arith.select %190, %152, %91 : vector<8x32xi1>, vector<8x32xf32>
    %192 = vector.shape_cast %116 : vector<8x1xi1> to vector<8x1xi1>
    %193 = vector.broadcast %192 : vector<8x1xi1> to vector<8x32xi1>
    %194 = arith.select %193, %188, %94 : vector<8x32xi1>, vector<8x32xf32>
    %cst_67 = arith.constant 0.000000e+00 : f32
    %195 = vector.shape_cast %113 : vector<8x1xi1> to vector<8x1xi1>
    %196 = vector.broadcast %195 : vector<8x1xi1> to vector<8x32xi1>
    %197 = vector.broadcast %cst_67 : f32 to vector<8x32xf32>
    %198 = arith.select %196, %191, %197 : vector<8x32xi1>, vector<8x32xf32>
    %199 = arith.truncf %198 : vector<8x32xf32> to vector<8x32xbf16>
    %c1_68 = arith.constant 1 : index
    %c0_69 = arith.constant 0 : index
    %c0_70 = arith.constant 0 : index
    %200 = vector.load %arg6[%c1_68, %c0_69, %c0_70] : memref<8x8x32xbf16, #tpu.memory_space<vmem>>, vector<1x8x32xbf16>
    %201 = vector.shape_cast %200 : vector<1x8x32xbf16> to vector<8x32xbf16>
    %202 = vector.shape_cast %199 : vector<8x32xbf16> to vector<1x8x32xbf16>
    tpu.vector_store %arg6[%c1_68, %c0_69, %c0_70], %202 {strides = array<i32>} : memref<8x8x32xbf16, #tpu.memory_space<vmem>>, vector<1x8x32xbf16>,
    %cst_71 = arith.constant 0.000000e+00 : f32
    %203 = vector.shape_cast %116 : vector<8x1xi1> to vector<8x1xi1>
    %204 = vector.broadcast %203 : vector<8x1xi1> to vector<8x32xi1>
    %205 = vector.broadcast %cst_71 : f32 to vector<8x32xf32>
    %206 = arith.select %204, %194, %205 : vector<8x32xi1>, vector<8x32xf32>
    %207 = arith.truncf %206 : vector<8x32xf32> to vector<8x32xbf16>
    %c6_72 = arith.constant 6 : index
    %c0_73 = arith.constant 0 : index
    %c0_74 = arith.constant 0 : index
    %208 = vector.load %arg7[%c6_72, %c0_73, %c0_74] : memref<8x8x32xbf16, #tpu.memory_space<vmem>>, vector<1x8x32xbf16>
    %209 = vector.shape_cast %208 : vector<1x8x32xbf16> to vector<8x32xbf16>
    %210 = vector.shape_cast %207 : vector<8x32xbf16> to vector<1x8x32xbf16>
    tpu.vector_store %arg7[%c6_72, %c0_73, %c0_74], %210 {strides = array<i32>} : memref<8x8x32xbf16, #tpu.memory_space<vmem>>, vector<1x8x32xbf16>,
    %c2_i32 = arith.constant 2 : i32
    %211 = arith.addi %8, %c2_i32 : i32
    %212 = vector.broadcast %211 : i32 to vector<8x1xi32>
    %213 = arith.cmpi slt, %212, %3 : vector<8x1xi32>
    %c5_i32 = arith.constant 5 : i32
    %214 = arith.addi %10, %c5_i32 : i32
    %215 = vector.broadcast %214 : i32 to vector<8x1xi32>
    %216 = arith.cmpi slt, %215, %3 : vector<8x1xi32>
    %c2 = arith.constant 2 : index
    %c0_75 = arith.constant 0 : index
    %c0_76 = arith.constant 0 : index
    %217 = vector.load %arg2[%c2, %c0_75, %c0_76] : memref<8x8x192xf32, #tpu.memory_space<vmem>>, vector<1x8x192xf32>
    %218 = vector.shape_cast %217 : vector<1x8x192xf32> to vector<8x192xf32>
    %219 = arith.truncf %191 : vector<8x32xf32> to vector<8x32xbf16>
    %c0_77 = arith.constant 0 : index
    %c0_78 = arith.constant 0 : index
    %c0_79 = arith.constant 0 : index
    %220 = vector.load %arg4[%c0_77, %c0_78, %c0_79] : memref<2x32x96xbf16, #tpu.memory_space<vmem>>, vector<1x32x96xbf16>
    %221 = vector.shape_cast %220 : vector<1x32x96xbf16> to vector<32x96xbf16>
    %cst_80 = arith.constant dense<0.000000e+00> : vector<8x96xf32>
    %222 = tpu.matmul %219, %221, %cst_80 {dimension_numbers = #tpu.dot_dimension_numbers<[1], [0], [0], [1], [0, 0, 1, 1], [], []>} : vector<8x32xbf16>, vector<32x96xbf16>, vector<8x96xf32> -> vector<8x96xf32>
    %c0_81 = arith.constant 0 : index
    %c0_82 = arith.constant 0 : index
    %c0_83 = arith.constant 0 : index
    %223 = vector.load %arg5[%c0_81, %c0_82, %c0_83] : memref<2x1x96xf32, #tpu.memory_space<vmem>>, vector<1x1x96xf32>
    %224 = vector.shape_cast %223 : vector<1x1x96xf32> to vector<1x96xf32>
    %225 = vector.broadcast %224 : vector<1x96xf32> to vector<8x96xf32>
    %226 = arith.addf %222, %225 : vector<8x96xf32>
    %227 = vector.extract_strided_slice %218 {offsets = [0, 0], sizes = [8, 32], strides = [1, 1]} : vector<8x192xf32> to vector<8x32xf32>
    %228 = vector.extract_strided_slice %218 {offsets = [0, 32], sizes = [8, 32], strides = [1, 1]} : vector<8x192xf32> to vector<8x32xf32>
    %229 = vector.extract_strided_slice %218 {offsets = [0, 64], sizes = [8, 32], strides = [1, 1]} : vector<8x192xf32> to vector<8x32xf32>
    %230 = vector.extract_strided_slice %226 {offsets = [0, 0], sizes = [8, 32], strides = [1, 1]} : vector<8x96xf32> to vector<8x32xf32>
    %231 = arith.addf %227, %230 : vector<8x32xf32>
    %232 = arith.negf %231 : vector<8x32xf32>
    %233 = math.exp %232 : vector<8x32xf32>
    %cst_84 = arith.constant 1.000000e+00 : f32
    %234 = vector.broadcast %cst_84 : f32 to vector<8x32xf32>
    %235 = arith.addf %234, %233 : vector<8x32xf32>
    %236 = arith.divf %234, %235 : vector<8x32xf32>
    %237 = vector.extract_strided_slice %226 {offsets = [0, 32], sizes = [8, 32], strides = [1, 1]} : vector<8x96xf32> to vector<8x32xf32>
    %238 = arith.addf %228, %237 : vector<8x32xf32>
    %239 = arith.negf %238 : vector<8x32xf32>
    %240 = math.exp %239 : vector<8x32xf32>
    %cst_85 = arith.constant 1.000000e+00 : f32
    %241 = vector.broadcast %cst_85 : f32 to vector<8x32xf32>
    %242 = arith.addf %241, %240 : vector<8x32xf32>
    %243 = arith.divf %241, %242 : vector<8x32xf32>
    %244 = vector.extract_strided_slice %226 {offsets = [0, 64], sizes = [8, 32], strides = [1, 1]} : vector<8x96xf32> to vector<8x32xf32>
    %245 = arith.mulf %236, %244 : vector<8x32xf32>
    %246 = arith.addf %229, %245 : vector<8x32xf32>
    %247 = math.tanh %246 : vector<8x32xf32>
    %cst_86 = arith.constant 1.000000e+00 : f32
    %248 = vector.broadcast %cst_86 : f32 to vector<8x32xf32>
    %249 = arith.subf %248, %243 : vector<8x32xf32>
    %250 = arith.mulf %249, %247 : vector<8x32xf32>
    %251 = arith.mulf %243, %191 : vector<8x32xf32>
    %252 = arith.addf %250, %251 : vector<8x32xf32>
    %c5 = arith.constant 5 : index
    %c0_87 = arith.constant 0 : index
    %c0_88 = arith.constant 0 : index
    %253 = vector.load %arg3[%c5, %c0_87, %c0_88] : memref<8x8x192xf32, #tpu.memory_space<vmem>>, vector<1x8x192xf32>
    %254 = vector.shape_cast %253 : vector<1x8x192xf32> to vector<8x192xf32>
    %255 = arith.truncf %194 : vector<8x32xf32> to vector<8x32xbf16>
    %c1_89 = arith.constant 1 : index
    %c0_90 = arith.constant 0 : index
    %c0_91 = arith.constant 0 : index
    %256 = vector.load %arg4[%c1_89, %c0_90, %c0_91] : memref<2x32x96xbf16, #tpu.memory_space<vmem>>, vector<1x32x96xbf16>
    %257 = vector.shape_cast %256 : vector<1x32x96xbf16> to vector<32x96xbf16>
    %cst_92 = arith.constant dense<0.000000e+00> : vector<8x96xf32>
    %258 = tpu.matmul %255, %257, %cst_92 {dimension_numbers = #tpu.dot_dimension_numbers<[1], [0], [0], [1], [0, 0, 1, 1], [], []>} : vector<8x32xbf16>, vector<32x96xbf16>, vector<8x96xf32> -> vector<8x96xf32>
    %c1_93 = arith.constant 1 : index
    %c0_94 = arith.constant 0 : index
    %c0_95 = arith.constant 0 : index
    %259 = vector.load %arg5[%c1_93, %c0_94, %c0_95] : memref<2x1x96xf32, #tpu.memory_space<vmem>>, vector<1x1x96xf32>
    %260 = vector.shape_cast %259 : vector<1x1x96xf32> to vector<1x96xf32>
    %261 = vector.broadcast %260 : vector<1x96xf32> to vector<8x96xf32>
    %262 = arith.addf %258, %261 : vector<8x96xf32>
    %263 = vector.extract_strided_slice %254 {offsets = [0, 96], sizes = [8, 32], strides = [1, 1]} : vector<8x192xf32> to vector<8x32xf32>
    %264 = vector.extract_strided_slice %254 {offsets = [0, 128], sizes = [8, 32], strides = [1, 1]} : vector<8x192xf32> to vector<8x32xf32>
    %265 = vector.extract_strided_slice %254 {offsets = [0, 160], sizes = [8, 32], strides = [1, 1]} : vector<8x192xf32> to vector<8x32xf32>
    %266 = vector.extract_strided_slice %262 {offsets = [0, 0], sizes = [8, 32], strides = [1, 1]} : vector<8x96xf32> to vector<8x32xf32>
    %267 = arith.addf %263, %266 : vector<8x32xf32>
    %268 = arith.negf %267 : vector<8x32xf32>
    %269 = math.exp %268 : vector<8x32xf32>
    %cst_96 = arith.constant 1.000000e+00 : f32
    %270 = vector.broadcast %cst_96 : f32 to vector<8x32xf32>
    %271 = arith.addf %270, %269 : vector<8x32xf32>
    %272 = arith.divf %270, %271 : vector<8x32xf32>
    %273 = vector.extract_strided_slice %262 {offsets = [0, 32], sizes = [8, 32], strides = [1, 1]} : vector<8x96xf32> to vector<8x32xf32>
    %274 = arith.addf %264, %273 : vector<8x32xf32>
    %275 = arith.negf %274 : vector<8x32xf32>
    %276 = math.exp %275 : vector<8x32xf32>
    %cst_97 = arith.constant 1.000000e+00 : f32
    %277 = vector.broadcast %cst_97 : f32 to vector<8x32xf32>
    %278 = arith.addf %277, %276 : vector<8x32xf32>
    %279 = arith.divf %277, %278 : vector<8x32xf32>
    %280 = vector.extract_strided_slice %262 {offsets = [0, 64], sizes = [8, 32], strides = [1, 1]} : vector<8x96xf32> to vector<8x32xf32>
    %281 = arith.mulf %272, %280 : vector<8x32xf32>
    %282 = arith.addf %265, %281 : vector<8x32xf32>
    %283 = math.tanh %282 : vector<8x32xf32>
    %cst_98 = arith.constant 1.000000e+00 : f32
    %284 = vector.broadcast %cst_98 : f32 to vector<8x32xf32>
    %285 = arith.subf %284, %279 : vector<8x32xf32>
    %286 = arith.mulf %285, %283 : vector<8x32xf32>
    %287 = arith.mulf %279, %194 : vector<8x32xf32>
    %288 = arith.addf %286, %287 : vector<8x32xf32>
    %289 = vector.shape_cast %213 : vector<8x1xi1> to vector<8x1xi1>
    %290 = vector.broadcast %289 : vector<8x1xi1> to vector<8x32xi1>
    %291 = arith.select %290, %252, %191 : vector<8x32xi1>, vector<8x32xf32>
    %292 = vector.shape_cast %216 : vector<8x1xi1> to vector<8x1xi1>
    %293 = vector.broadcast %292 : vector<8x1xi1> to vector<8x32xi1>
    %294 = arith.select %293, %288, %194 : vector<8x32xi1>, vector<8x32xf32>
    %cst_99 = arith.constant 0.000000e+00 : f32
    %295 = vector.shape_cast %213 : vector<8x1xi1> to vector<8x1xi1>
    %296 = vector.broadcast %295 : vector<8x1xi1> to vector<8x32xi1>
    %297 = vector.broadcast %cst_99 : f32 to vector<8x32xf32>
    %298 = arith.select %296, %291, %297 : vector<8x32xi1>, vector<8x32xf32>
    %299 = arith.truncf %298 : vector<8x32xf32> to vector<8x32xbf16>
    %c2_100 = arith.constant 2 : index
    %c0_101 = arith.constant 0 : index
    %c0_102 = arith.constant 0 : index
    %300 = vector.load %arg6[%c2_100, %c0_101, %c0_102] : memref<8x8x32xbf16, #tpu.memory_space<vmem>>, vector<1x8x32xbf16>
    %301 = vector.shape_cast %300 : vector<1x8x32xbf16> to vector<8x32xbf16>
    %302 = vector.shape_cast %299 : vector<8x32xbf16> to vector<1x8x32xbf16>
    tpu.vector_store %arg6[%c2_100, %c0_101, %c0_102], %302 {strides = array<i32>} : memref<8x8x32xbf16, #tpu.memory_space<vmem>>, vector<1x8x32xbf16>,
    %cst_103 = arith.constant 0.000000e+00 : f32
    %303 = vector.shape_cast %216 : vector<8x1xi1> to vector<8x1xi1>
    %304 = vector.broadcast %303 : vector<8x1xi1> to vector<8x32xi1>
    %305 = vector.broadcast %cst_103 : f32 to vector<8x32xf32>
    %306 = arith.select %304, %294, %305 : vector<8x32xi1>, vector<8x32xf32>
    %307 = arith.truncf %306 : vector<8x32xf32> to vector<8x32xbf16>
    %c5_104 = arith.constant 5 : index
    %c0_105 = arith.constant 0 : index
    %c0_106 = arith.constant 0 : index
    %308 = vector.load %arg7[%c5_104, %c0_105, %c0_106] : memref<8x8x32xbf16, #tpu.memory_space<vmem>>, vector<1x8x32xbf16>
    %309 = vector.shape_cast %308 : vector<1x8x32xbf16> to vector<8x32xbf16>
    %310 = vector.shape_cast %307 : vector<8x32xbf16> to vector<1x8x32xbf16>
    tpu.vector_store %arg7[%c5_104, %c0_105, %c0_106], %310 {strides = array<i32>} : memref<8x8x32xbf16, #tpu.memory_space<vmem>>, vector<1x8x32xbf16>,
    %c3_i32 = arith.constant 3 : i32
    %311 = arith.addi %8, %c3_i32 : i32
    %312 = vector.broadcast %311 : i32 to vector<8x1xi32>
    %313 = arith.cmpi slt, %312, %3 : vector<8x1xi32>
    %c4_i32 = arith.constant 4 : i32
    %314 = arith.addi %10, %c4_i32 : i32
    %315 = vector.broadcast %314 : i32 to vector<8x1xi32>
    %316 = arith.cmpi slt, %315, %3 : vector<8x1xi32>
    %c3 = arith.constant 3 : index
    %c0_107 = arith.constant 0 : index
    %c0_108 = arith.constant 0 : index
    %317 = vector.load %arg2[%c3, %c0_107, %c0_108] : memref<8x8x192xf32, #tpu.memory_space<vmem>>, vector<1x8x192xf32>
    %318 = vector.shape_cast %317 : vector<1x8x192xf32> to vector<8x192xf32>
    %319 = arith.truncf %291 : vector<8x32xf32> to vector<8x32xbf16>
    %c0_109 = arith.constant 0 : index
    %c0_110 = arith.constant 0 : index
    %c0_111 = arith.constant 0 : index
    %320 = vector.load %arg4[%c0_109, %c0_110, %c0_111] : memref<2x32x96xbf16, #tpu.memory_space<vmem>>, vector<1x32x96xbf16>
    %321 = vector.shape_cast %320 : vector<1x32x96xbf16> to vector<32x96xbf16>
    %cst_112 = arith.constant dense<0.000000e+00> : vector<8x96xf32>
    %322 = tpu.matmul %319, %321, %cst_112 {dimension_numbers = #tpu.dot_dimension_numbers<[1], [0], [0], [1], [0, 0, 1, 1], [], []>} : vector<8x32xbf16>, vector<32x96xbf16>, vector<8x96xf32> -> vector<8x96xf32>
    %c0_113 = arith.constant 0 : index
    %c0_114 = arith.constant 0 : index
    %c0_115 = arith.constant 0 : index
    %323 = vector.load %arg5[%c0_113, %c0_114, %c0_115] : memref<2x1x96xf32, #tpu.memory_space<vmem>>, vector<1x1x96xf32>
    %324 = vector.shape_cast %323 : vector<1x1x96xf32> to vector<1x96xf32>
    %325 = vector.broadcast %324 : vector<1x96xf32> to vector<8x96xf32>
    %326 = arith.addf %322, %325 : vector<8x96xf32>
    %327 = vector.extract_strided_slice %318 {offsets = [0, 0], sizes = [8, 32], strides = [1, 1]} : vector<8x192xf32> to vector<8x32xf32>
    %328 = vector.extract_strided_slice %318 {offsets = [0, 32], sizes = [8, 32], strides = [1, 1]} : vector<8x192xf32> to vector<8x32xf32>
    %329 = vector.extract_strided_slice %318 {offsets = [0, 64], sizes = [8, 32], strides = [1, 1]} : vector<8x192xf32> to vector<8x32xf32>
    %330 = vector.extract_strided_slice %326 {offsets = [0, 0], sizes = [8, 32], strides = [1, 1]} : vector<8x96xf32> to vector<8x32xf32>
    %331 = arith.addf %327, %330 : vector<8x32xf32>
    %332 = arith.negf %331 : vector<8x32xf32>
    %333 = math.exp %332 : vector<8x32xf32>
    %cst_116 = arith.constant 1.000000e+00 : f32
    %334 = vector.broadcast %cst_116 : f32 to vector<8x32xf32>
    %335 = arith.addf %334, %333 : vector<8x32xf32>
    %336 = arith.divf %334, %335 : vector<8x32xf32>
    %337 = vector.extract_strided_slice %326 {offsets = [0, 32], sizes = [8, 32], strides = [1, 1]} : vector<8x96xf32> to vector<8x32xf32>
    %338 = arith.addf %328, %337 : vector<8x32xf32>
    %339 = arith.negf %338 : vector<8x32xf32>
    %340 = math.exp %339 : vector<8x32xf32>
    %cst_117 = arith.constant 1.000000e+00 : f32
    %341 = vector.broadcast %cst_117 : f32 to vector<8x32xf32>
    %342 = arith.addf %341, %340 : vector<8x32xf32>
    %343 = arith.divf %341, %342 : vector<8x32xf32>
    %344 = vector.extract_strided_slice %326 {offsets = [0, 64], sizes = [8, 32], strides = [1, 1]} : vector<8x96xf32> to vector<8x32xf32>
    %345 = arith.mulf %336, %344 : vector<8x32xf32>
    %346 = arith.addf %329, %345 : vector<8x32xf32>
    %347 = math.tanh %346 : vector<8x32xf32>
    %cst_118 = arith.constant 1.000000e+00 : f32
    %348 = vector.broadcast %cst_118 : f32 to vector<8x32xf32>
    %349 = arith.subf %348, %343 : vector<8x32xf32>
    %350 = arith.mulf %349, %347 : vector<8x32xf32>
    %351 = arith.mulf %343, %291 : vector<8x32xf32>
    %352 = arith.addf %350, %351 : vector<8x32xf32>
    %c4 = arith.constant 4 : index
    %c0_119 = arith.constant 0 : index
    %c0_120 = arith.constant 0 : index
    %353 = vector.load %arg3[%c4, %c0_119, %c0_120] : memref<8x8x192xf32, #tpu.memory_space<vmem>>, vector<1x8x192xf32>
    %354 = vector.shape_cast %353 : vector<1x8x192xf32> to vector<8x192xf32>
    %355 = arith.truncf %294 : vector<8x32xf32> to vector<8x32xbf16>
    %c1_121 = arith.constant 1 : index
    %c0_122 = arith.constant 0 : index
    %c0_123 = arith.constant 0 : index
    %356 = vector.load %arg4[%c1_121, %c0_122, %c0_123] : memref<2x32x96xbf16, #tpu.memory_space<vmem>>, vector<1x32x96xbf16>
    %357 = vector.shape_cast %356 : vector<1x32x96xbf16> to vector<32x96xbf16>
    %cst_124 = arith.constant dense<0.000000e+00> : vector<8x96xf32>
    %358 = tpu.matmul %355, %357, %cst_124 {dimension_numbers = #tpu.dot_dimension_numbers<[1], [0], [0], [1], [0, 0, 1, 1], [], []>} : vector<8x32xbf16>, vector<32x96xbf16>, vector<8x96xf32> -> vector<8x96xf32>
    %c1_125 = arith.constant 1 : index
    %c0_126 = arith.constant 0 : index
    %c0_127 = arith.constant 0 : index
    %359 = vector.load %arg5[%c1_125, %c0_126, %c0_127] : memref<2x1x96xf32, #tpu.memory_space<vmem>>, vector<1x1x96xf32>
    %360 = vector.shape_cast %359 : vector<1x1x96xf32> to vector<1x96xf32>
    %361 = vector.broadcast %360 : vector<1x96xf32> to vector<8x96xf32>
    %362 = arith.addf %358, %361 : vector<8x96xf32>
    %363 = vector.extract_strided_slice %354 {offsets = [0, 96], sizes = [8, 32], strides = [1, 1]} : vector<8x192xf32> to vector<8x32xf32>
    %364 = vector.extract_strided_slice %354 {offsets = [0, 128], sizes = [8, 32], strides = [1, 1]} : vector<8x192xf32> to vector<8x32xf32>
    %365 = vector.extract_strided_slice %354 {offsets = [0, 160], sizes = [8, 32], strides = [1, 1]} : vector<8x192xf32> to vector<8x32xf32>
    %366 = vector.extract_strided_slice %362 {offsets = [0, 0], sizes = [8, 32], strides = [1, 1]} : vector<8x96xf32> to vector<8x32xf32>
    %367 = arith.addf %363, %366 : vector<8x32xf32>
    %368 = arith.negf %367 : vector<8x32xf32>
    %369 = math.exp %368 : vector<8x32xf32>
    %cst_128 = arith.constant 1.000000e+00 : f32
    %370 = vector.broadcast %cst_128 : f32 to vector<8x32xf32>
    %371 = arith.addf %370, %369 : vector<8x32xf32>
    %372 = arith.divf %370, %371 : vector<8x32xf32>
    %373 = vector.extract_strided_slice %362 {offsets = [0, 32], sizes = [8, 32], strides = [1, 1]} : vector<8x96xf32> to vector<8x32xf32>
    %374 = arith.addf %364, %373 : vector<8x32xf32>
    %375 = arith.negf %374 : vector<8x32xf32>
    %376 = math.exp %375 : vector<8x32xf32>
    %cst_129 = arith.constant 1.000000e+00 : f32
    %377 = vector.broadcast %cst_129 : f32 to vector<8x32xf32>
    %378 = arith.addf %377, %376 : vector<8x32xf32>
    %379 = arith.divf %377, %378 : vector<8x32xf32>
    %380 = vector.extract_strided_slice %362 {offsets = [0, 64], sizes = [8, 32], strides = [1, 1]} : vector<8x96xf32> to vector<8x32xf32>
    %381 = arith.mulf %372, %380 : vector<8x32xf32>
    %382 = arith.addf %365, %381 : vector<8x32xf32>
    %383 = math.tanh %382 : vector<8x32xf32>
    %cst_130 = arith.constant 1.000000e+00 : f32
    %384 = vector.broadcast %cst_130 : f32 to vector<8x32xf32>
    %385 = arith.subf %384, %379 : vector<8x32xf32>
    %386 = arith.mulf %385, %383 : vector<8x32xf32>
    %387 = arith.mulf %379, %294 : vector<8x32xf32>
    %388 = arith.addf %386, %387 : vector<8x32xf32>
    %389 = vector.shape_cast %313 : vector<8x1xi1> to vector<8x1xi1>
    %390 = vector.broadcast %389 : vector<8x1xi1> to vector<8x32xi1>
    %391 = arith.select %390, %352, %291 : vector<8x32xi1>, vector<8x32xf32>
    %392 = vector.shape_cast %316 : vector<8x1xi1> to vector<8x1xi1>
    %393 = vector.broadcast %392 : vector<8x1xi1> to vector<8x32xi1>
    %394 = arith.select %393, %388, %294 : vector<8x32xi1>, vector<8x32xf32>
    %cst_131 = arith.constant 0.000000e+00 : f32
    %395 = vector.shape_cast %313 : vector<8x1xi1> to vector<8x1xi1>
    %396 = vector.broadcast %395 : vector<8x1xi1> to vector<8x32xi1>
    %397 = vector.broadcast %cst_131 : f32 to vector<8x32xf32>
    %398 = arith.select %396, %391, %397 : vector<8x32xi1>, vector<8x32xf32>
    %399 = arith.truncf %398 : vector<8x32xf32> to vector<8x32xbf16>
    %c3_132 = arith.constant 3 : index
    %c0_133 = arith.constant 0 : index
    %c0_134 = arith.constant 0 : index
    %400 = vector.load %arg6[%c3_132, %c0_133, %c0_134] : memref<8x8x32xbf16, #tpu.memory_space<vmem>>, vector<1x8x32xbf16>
    %401 = vector.shape_cast %400 : vector<1x8x32xbf16> to vector<8x32xbf16>
    %402 = vector.shape_cast %399 : vector<8x32xbf16> to vector<1x8x32xbf16>
    tpu.vector_store %arg6[%c3_132, %c0_133, %c0_134], %402 {strides = array<i32>} : memref<8x8x32xbf16, #tpu.memory_space<vmem>>, vector<1x8x32xbf16>,
    %cst_135 = arith.constant 0.000000e+00 : f32
    %403 = vector.shape_cast %316 : vector<8x1xi1> to vector<8x1xi1>
    %404 = vector.broadcast %403 : vector<8x1xi1> to vector<8x32xi1>
    %405 = vector.broadcast %cst_135 : f32 to vector<8x32xf32>
    %406 = arith.select %404, %394, %405 : vector<8x32xi1>, vector<8x32xf32>
    %407 = arith.truncf %406 : vector<8x32xf32> to vector<8x32xbf16>
    %c4_136 = arith.constant 4 : index
    %c0_137 = arith.constant 0 : index
    %c0_138 = arith.constant 0 : index
    %408 = vector.load %arg7[%c4_136, %c0_137, %c0_138] : memref<8x8x32xbf16, #tpu.memory_space<vmem>>, vector<1x8x32xbf16>
    %409 = vector.shape_cast %408 : vector<1x8x32xbf16> to vector<8x32xbf16>
    %410 = vector.shape_cast %407 : vector<8x32xbf16> to vector<1x8x32xbf16>
    tpu.vector_store %arg7[%c4_136, %c0_137, %c0_138], %410 {strides = array<i32>} : memref<8x8x32xbf16, #tpu.memory_space<vmem>>, vector<1x8x32xbf16>,
    %c4_i32_139 = arith.constant 4 : i32
    %411 = arith.addi %8, %c4_i32_139 : i32
    %412 = vector.broadcast %411 : i32 to vector<8x1xi32>
    %413 = arith.cmpi slt, %412, %3 : vector<8x1xi32>
    %c3_i32_140 = arith.constant 3 : i32
    %414 = arith.addi %10, %c3_i32_140 : i32
    %415 = vector.broadcast %414 : i32 to vector<8x1xi32>
    %416 = arith.cmpi slt, %415, %3 : vector<8x1xi32>
    %c4_141 = arith.constant 4 : index
    %c0_142 = arith.constant 0 : index
    %c0_143 = arith.constant 0 : index
    %417 = vector.load %arg2[%c4_141, %c0_142, %c0_143] : memref<8x8x192xf32, #tpu.memory_space<vmem>>, vector<1x8x192xf32>
    %418 = vector.shape_cast %417 : vector<1x8x192xf32> to vector<8x192xf32>
    %419 = arith.truncf %391 : vector<8x32xf32> to vector<8x32xbf16>
    %c0_144 = arith.constant 0 : index
    %c0_145 = arith.constant 0 : index
    %c0_146 = arith.constant 0 : index
    %420 = vector.load %arg4[%c0_144, %c0_145, %c0_146] : memref<2x32x96xbf16, #tpu.memory_space<vmem>>, vector<1x32x96xbf16>
    %421 = vector.shape_cast %420 : vector<1x32x96xbf16> to vector<32x96xbf16>
    %cst_147 = arith.constant dense<0.000000e+00> : vector<8x96xf32>
    %422 = tpu.matmul %419, %421, %cst_147 {dimension_numbers = #tpu.dot_dimension_numbers<[1], [0], [0], [1], [0, 0, 1, 1], [], []>} : vector<8x32xbf16>, vector<32x96xbf16>, vector<8x96xf32> -> vector<8x96xf32>
    %c0_148 = arith.constant 0 : index
    %c0_149 = arith.constant 0 : index
    %c0_150 = arith.constant 0 : index
    %423 = vector.load %arg5[%c0_148, %c0_149, %c0_150] : memref<2x1x96xf32, #tpu.memory_space<vmem>>, vector<1x1x96xf32>
    %424 = vector.shape_cast %423 : vector<1x1x96xf32> to vector<1x96xf32>
    %425 = vector.broadcast %424 : vector<1x96xf32> to vector<8x96xf32>
    %426 = arith.addf %422, %425 : vector<8x96xf32>
    %427 = vector.extract_strided_slice %418 {offsets = [0, 0], sizes = [8, 32], strides = [1, 1]} : vector<8x192xf32> to vector<8x32xf32>
    %428 = vector.extract_strided_slice %418 {offsets = [0, 32], sizes = [8, 32], strides = [1, 1]} : vector<8x192xf32> to vector<8x32xf32>
    %429 = vector.extract_strided_slice %418 {offsets = [0, 64], sizes = [8, 32], strides = [1, 1]} : vector<8x192xf32> to vector<8x32xf32>
    %430 = vector.extract_strided_slice %426 {offsets = [0, 0], sizes = [8, 32], strides = [1, 1]} : vector<8x96xf32> to vector<8x32xf32>
    %431 = arith.addf %427, %430 : vector<8x32xf32>
    %432 = arith.negf %431 : vector<8x32xf32>
    %433 = math.exp %432 : vector<8x32xf32>
    %cst_151 = arith.constant 1.000000e+00 : f32
    %434 = vector.broadcast %cst_151 : f32 to vector<8x32xf32>
    %435 = arith.addf %434, %433 : vector<8x32xf32>
    %436 = arith.divf %434, %435 : vector<8x32xf32>
    %437 = vector.extract_strided_slice %426 {offsets = [0, 32], sizes = [8, 32], strides = [1, 1]} : vector<8x96xf32> to vector<8x32xf32>
    %438 = arith.addf %428, %437 : vector<8x32xf32>
    %439 = arith.negf %438 : vector<8x32xf32>
    %440 = math.exp %439 : vector<8x32xf32>
    %cst_152 = arith.constant 1.000000e+00 : f32
    %441 = vector.broadcast %cst_152 : f32 to vector<8x32xf32>
    %442 = arith.addf %441, %440 : vector<8x32xf32>
    %443 = arith.divf %441, %442 : vector<8x32xf32>
    %444 = vector.extract_strided_slice %426 {offsets = [0, 64], sizes = [8, 32], strides = [1, 1]} : vector<8x96xf32> to vector<8x32xf32>
    %445 = arith.mulf %436, %444 : vector<8x32xf32>
    %446 = arith.addf %429, %445 : vector<8x32xf32>
    %447 = math.tanh %446 : vector<8x32xf32>
    %cst_153 = arith.constant 1.000000e+00 : f32
    %448 = vector.broadcast %cst_153 : f32 to vector<8x32xf32>
    %449 = arith.subf %448, %443 : vector<8x32xf32>
    %450 = arith.mulf %449, %447 : vector<8x32xf32>
    %451 = arith.mulf %443, %391 : vector<8x32xf32>
    %452 = arith.addf %450, %451 : vector<8x32xf32>
    %c3_154 = arith.constant 3 : index
    %c0_155 = arith.constant 0 : index
    %c0_156 = arith.constant 0 : index
    %453 = vector.load %arg3[%c3_154, %c0_155, %c0_156] : memref<8x8x192xf32, #tpu.memory_space<vmem>>, vector<1x8x192xf32>
    %454 = vector.shape_cast %453 : vector<1x8x192xf32> to vector<8x192xf32>
    %455 = arith.truncf %394 : vector<8x32xf32> to vector<8x32xbf16>
    %c1_157 = arith.constant 1 : index
    %c0_158 = arith.constant 0 : index
    %c0_159 = arith.constant 0 : index
    %456 = vector.load %arg4[%c1_157, %c0_158, %c0_159] : memref<2x32x96xbf16, #tpu.memory_space<vmem>>, vector<1x32x96xbf16>
    %457 = vector.shape_cast %456 : vector<1x32x96xbf16> to vector<32x96xbf16>
    %cst_160 = arith.constant dense<0.000000e+00> : vector<8x96xf32>
    %458 = tpu.matmul %455, %457, %cst_160 {dimension_numbers = #tpu.dot_dimension_numbers<[1], [0], [0], [1], [0, 0, 1, 1], [], []>} : vector<8x32xbf16>, vector<32x96xbf16>, vector<8x96xf32> -> vector<8x96xf32>
    %c1_161 = arith.constant 1 : index
    %c0_162 = arith.constant 0 : index
    %c0_163 = arith.constant 0 : index
    %459 = vector.load %arg5[%c1_161, %c0_162, %c0_163] : memref<2x1x96xf32, #tpu.memory_space<vmem>>, vector<1x1x96xf32>
    %460 = vector.shape_cast %459 : vector<1x1x96xf32> to vector<1x96xf32>
    %461 = vector.broadcast %460 : vector<1x96xf32> to vector<8x96xf32>
    %462 = arith.addf %458, %461 : vector<8x96xf32>
    %463 = vector.extract_strided_slice %454 {offsets = [0, 96], sizes = [8, 32], strides = [1, 1]} : vector<8x192xf32> to vector<8x32xf32>
    %464 = vector.extract_strided_slice %454 {offsets = [0, 128], sizes = [8, 32], strides = [1, 1]} : vector<8x192xf32> to vector<8x32xf32>
    %465 = vector.extract_strided_slice %454 {offsets = [0, 160], sizes = [8, 32], strides = [1, 1]} : vector<8x192xf32> to vector<8x32xf32>
    %466 = vector.extract_strided_slice %462 {offsets = [0, 0], sizes = [8, 32], strides = [1, 1]} : vector<8x96xf32> to vector<8x32xf32>
    %467 = arith.addf %463, %466 : vector<8x32xf32>
    %468 = arith.negf %467 : vector<8x32xf32>
    %469 = math.exp %468 : vector<8x32xf32>
    %cst_164 = arith.constant 1.000000e+00 : f32
    %470 = vector.broadcast %cst_164 : f32 to vector<8x32xf32>
    %471 = arith.addf %470, %469 : vector<8x32xf32>
    %472 = arith.divf %470, %471 : vector<8x32xf32>
    %473 = vector.extract_strided_slice %462 {offsets = [0, 32], sizes = [8, 32], strides = [1, 1]} : vector<8x96xf32> to vector<8x32xf32>
    %474 = arith.addf %464, %473 : vector<8x32xf32>
    %475 = arith.negf %474 : vector<8x32xf32>
    %476 = math.exp %475 : vector<8x32xf32>
    %cst_165 = arith.constant 1.000000e+00 : f32
    %477 = vector.broadcast %cst_165 : f32 to vector<8x32xf32>
    %478 = arith.addf %477, %476 : vector<8x32xf32>
    %479 = arith.divf %477, %478 : vector<8x32xf32>
    %480 = vector.extract_strided_slice %462 {offsets = [0, 64], sizes = [8, 32], strides = [1, 1]} : vector<8x96xf32> to vector<8x32xf32>
    %481 = arith.mulf %472, %480 : vector<8x32xf32>
    %482 = arith.addf %465, %481 : vector<8x32xf32>
    %483 = math.tanh %482 : vector<8x32xf32>
    %cst_166 = arith.constant 1.000000e+00 : f32
    %484 = vector.broadcast %cst_166 : f32 to vector<8x32xf32>
    %485 = arith.subf %484, %479 : vector<8x32xf32>
    %486 = arith.mulf %485, %483 : vector<8x32xf32>
    %487 = arith.mulf %479, %394 : vector<8x32xf32>
    %488 = arith.addf %486, %487 : vector<8x32xf32>
    %489 = vector.shape_cast %413 : vector<8x1xi1> to vector<8x1xi1>
    %490 = vector.broadcast %489 : vector<8x1xi1> to vector<8x32xi1>
    %491 = arith.select %490, %452, %391 : vector<8x32xi1>, vector<8x32xf32>
    %492 = vector.shape_cast %416 : vector<8x1xi1> to vector<8x1xi1>
    %493 = vector.broadcast %492 : vector<8x1xi1> to vector<8x32xi1>
    %494 = arith.select %493, %488, %394 : vector<8x32xi1>, vector<8x32xf32>
    %cst_167 = arith.constant 0.000000e+00 : f32
    %495 = vector.shape_cast %413 : vector<8x1xi1> to vector<8x1xi1>
    %496 = vector.broadcast %495 : vector<8x1xi1> to vector<8x32xi1>
    %497 = vector.broadcast %cst_167 : f32 to vector<8x32xf32>
    %498 = arith.select %496, %491, %497 : vector<8x32xi1>, vector<8x32xf32>
    %499 = arith.truncf %498 : vector<8x32xf32> to vector<8x32xbf16>
    %c4_168 = arith.constant 4 : index
    %c0_169 = arith.constant 0 : index
    %c0_170 = arith.constant 0 : index
    %500 = vector.load %arg6[%c4_168, %c0_169, %c0_170] : memref<8x8x32xbf16, #tpu.memory_space<vmem>>, vector<1x8x32xbf16>
    %501 = vector.shape_cast %500 : vector<1x8x32xbf16> to vector<8x32xbf16>
    %502 = vector.shape_cast %499 : vector<8x32xbf16> to vector<1x8x32xbf16>
    tpu.vector_store %arg6[%c4_168, %c0_169, %c0_170], %502 {strides = array<i32>} : memref<8x8x32xbf16, #tpu.memory_space<vmem>>, vector<1x8x32xbf16>,
    %cst_171 = arith.constant 0.000000e+00 : f32
    %503 = vector.shape_cast %416 : vector<8x1xi1> to vector<8x1xi1>
    %504 = vector.broadcast %503 : vector<8x1xi1> to vector<8x32xi1>
    %505 = vector.broadcast %cst_171 : f32 to vector<8x32xf32>
    %506 = arith.select %504, %494, %505 : vector<8x32xi1>, vector<8x32xf32>
    %507 = arith.truncf %506 : vector<8x32xf32> to vector<8x32xbf16>
    %c3_172 = arith.constant 3 : index
    %c0_173 = arith.constant 0 : index
    %c0_174 = arith.constant 0 : index
    %508 = vector.load %arg7[%c3_172, %c0_173, %c0_174] : memref<8x8x32xbf16, #tpu.memory_space<vmem>>, vector<1x8x32xbf16>
    %509 = vector.shape_cast %508 : vector<1x8x32xbf16> to vector<8x32xbf16>
    %510 = vector.shape_cast %507 : vector<8x32xbf16> to vector<1x8x32xbf16>
    tpu.vector_store %arg7[%c3_172, %c0_173, %c0_174], %510 {strides = array<i32>} : memref<8x8x32xbf16, #tpu.memory_space<vmem>>, vector<1x8x32xbf16>,
    %c5_i32_175 = arith.constant 5 : i32
    %511 = arith.addi %8, %c5_i32_175 : i32
    %512 = vector.broadcast %511 : i32 to vector<8x1xi32>
    %513 = arith.cmpi slt, %512, %3 : vector<8x1xi32>
    %c2_i32_176 = arith.constant 2 : i32
    %514 = arith.addi %10, %c2_i32_176 : i32
    %515 = vector.broadcast %514 : i32 to vector<8x1xi32>
    %516 = arith.cmpi slt, %515, %3 : vector<8x1xi32>
    %c5_177 = arith.constant 5 : index
    %c0_178 = arith.constant 0 : index
    %c0_179 = arith.constant 0 : index
    %517 = vector.load %arg2[%c5_177, %c0_178, %c0_179] : memref<8x8x192xf32, #tpu.memory_space<vmem>>, vector<1x8x192xf32>
    %518 = vector.shape_cast %517 : vector<1x8x192xf32> to vector<8x192xf32>
    %519 = arith.truncf %491 : vector<8x32xf32> to vector<8x32xbf16>
    %c0_180 = arith.constant 0 : index
    %c0_181 = arith.constant 0 : index
    %c0_182 = arith.constant 0 : index
    %520 = vector.load %arg4[%c0_180, %c0_181, %c0_182] : memref<2x32x96xbf16, #tpu.memory_space<vmem>>, vector<1x32x96xbf16>
    %521 = vector.shape_cast %520 : vector<1x32x96xbf16> to vector<32x96xbf16>
    %cst_183 = arith.constant dense<0.000000e+00> : vector<8x96xf32>
    %522 = tpu.matmul %519, %521, %cst_183 {dimension_numbers = #tpu.dot_dimension_numbers<[1], [0], [0], [1], [0, 0, 1, 1], [], []>} : vector<8x32xbf16>, vector<32x96xbf16>, vector<8x96xf32> -> vector<8x96xf32>
    %c0_184 = arith.constant 0 : index
    %c0_185 = arith.constant 0 : index
    %c0_186 = arith.constant 0 : index
    %523 = vector.load %arg5[%c0_184, %c0_185, %c0_186] : memref<2x1x96xf32, #tpu.memory_space<vmem>>, vector<1x1x96xf32>
    %524 = vector.shape_cast %523 : vector<1x1x96xf32> to vector<1x96xf32>
    %525 = vector.broadcast %524 : vector<1x96xf32> to vector<8x96xf32>
    %526 = arith.addf %522, %525 : vector<8x96xf32>
    %527 = vector.extract_strided_slice %518 {offsets = [0, 0], sizes = [8, 32], strides = [1, 1]} : vector<8x192xf32> to vector<8x32xf32>
    %528 = vector.extract_strided_slice %518 {offsets = [0, 32], sizes = [8, 32], strides = [1, 1]} : vector<8x192xf32> to vector<8x32xf32>
    %529 = vector.extract_strided_slice %518 {offsets = [0, 64], sizes = [8, 32], strides = [1, 1]} : vector<8x192xf32> to vector<8x32xf32>
    %530 = vector.extract_strided_slice %526 {offsets = [0, 0], sizes = [8, 32], strides = [1, 1]} : vector<8x96xf32> to vector<8x32xf32>
    %531 = arith.addf %527, %530 : vector<8x32xf32>
    %532 = arith.negf %531 : vector<8x32xf32>
    %533 = math.exp %532 : vector<8x32xf32>
    %cst_187 = arith.constant 1.000000e+00 : f32
    %534 = vector.broadcast %cst_187 : f32 to vector<8x32xf32>
    %535 = arith.addf %534, %533 : vector<8x32xf32>
    %536 = arith.divf %534, %535 : vector<8x32xf32>
    %537 = vector.extract_strided_slice %526 {offsets = [0, 32], sizes = [8, 32], strides = [1, 1]} : vector<8x96xf32> to vector<8x32xf32>
    %538 = arith.addf %528, %537 : vector<8x32xf32>
    %539 = arith.negf %538 : vector<8x32xf32>
    %540 = math.exp %539 : vector<8x32xf32>
    %cst_188 = arith.constant 1.000000e+00 : f32
    %541 = vector.broadcast %cst_188 : f32 to vector<8x32xf32>
    %542 = arith.addf %541, %540 : vector<8x32xf32>
    %543 = arith.divf %541, %542 : vector<8x32xf32>
    %544 = vector.extract_strided_slice %526 {offsets = [0, 64], sizes = [8, 32], strides = [1, 1]} : vector<8x96xf32> to vector<8x32xf32>
    %545 = arith.mulf %536, %544 : vector<8x32xf32>
    %546 = arith.addf %529, %545 : vector<8x32xf32>
    %547 = math.tanh %546 : vector<8x32xf32>
    %cst_189 = arith.constant 1.000000e+00 : f32
    %548 = vector.broadcast %cst_189 : f32 to vector<8x32xf32>
    %549 = arith.subf %548, %543 : vector<8x32xf32>
    %550 = arith.mulf %549, %547 : vector<8x32xf32>
    %551 = arith.mulf %543, %491 : vector<8x32xf32>
    %552 = arith.addf %550, %551 : vector<8x32xf32>
    %c2_190 = arith.constant 2 : index
    %c0_191 = arith.constant 0 : index
    %c0_192 = arith.constant 0 : index
    %553 = vector.load %arg3[%c2_190, %c0_191, %c0_192] : memref<8x8x192xf32, #tpu.memory_space<vmem>>, vector<1x8x192xf32>
    %554 = vector.shape_cast %553 : vector<1x8x192xf32> to vector<8x192xf32>
    %555 = arith.truncf %494 : vector<8x32xf32> to vector<8x32xbf16>
    %c1_193 = arith.constant 1 : index
    %c0_194 = arith.constant 0 : index
    %c0_195 = arith.constant 0 : index
    %556 = vector.load %arg4[%c1_193, %c0_194, %c0_195] : memref<2x32x96xbf16, #tpu.memory_space<vmem>>, vector<1x32x96xbf16>
    %557 = vector.shape_cast %556 : vector<1x32x96xbf16> to vector<32x96xbf16>
    %cst_196 = arith.constant dense<0.000000e+00> : vector<8x96xf32>
    %558 = tpu.matmul %555, %557, %cst_196 {dimension_numbers = #tpu.dot_dimension_numbers<[1], [0], [0], [1], [0, 0, 1, 1], [], []>} : vector<8x32xbf16>, vector<32x96xbf16>, vector<8x96xf32> -> vector<8x96xf32>
    %c1_197 = arith.constant 1 : index
    %c0_198 = arith.constant 0 : index
    %c0_199 = arith.constant 0 : index
    %559 = vector.load %arg5[%c1_197, %c0_198, %c0_199] : memref<2x1x96xf32, #tpu.memory_space<vmem>>, vector<1x1x96xf32>
    %560 = vector.shape_cast %559 : vector<1x1x96xf32> to vector<1x96xf32>
    %561 = vector.broadcast %560 : vector<1x96xf32> to vector<8x96xf32>
    %562 = arith.addf %558, %561 : vector<8x96xf32>
    %563 = vector.extract_strided_slice %554 {offsets = [0, 96], sizes = [8, 32], strides = [1, 1]} : vector<8x192xf32> to vector<8x32xf32>
    %564 = vector.extract_strided_slice %554 {offsets = [0, 128], sizes = [8, 32], strides = [1, 1]} : vector<8x192xf32> to vector<8x32xf32>
    %565 = vector.extract_strided_slice %554 {offsets = [0, 160], sizes = [8, 32], strides = [1, 1]} : vector<8x192xf32> to vector<8x32xf32>
    %566 = vector.extract_strided_slice %562 {offsets = [0, 0], sizes = [8, 32], strides = [1, 1]} : vector<8x96xf32> to vector<8x32xf32>
    %567 = arith.addf %563, %566 : vector<8x32xf32>
    %568 = arith.negf %567 : vector<8x32xf32>
    %569 = math.exp %568 : vector<8x32xf32>
    %cst_200 = arith.constant 1.000000e+00 : f32
    %570 = vector.broadcast %cst_200 : f32 to vector<8x32xf32>
    %571 = arith.addf %570, %569 : vector<8x32xf32>
    %572 = arith.divf %570, %571 : vector<8x32xf32>
    %573 = vector.extract_strided_slice %562 {offsets = [0, 32], sizes = [8, 32], strides = [1, 1]} : vector<8x96xf32> to vector<8x32xf32>
    %574 = arith.addf %564, %573 : vector<8x32xf32>
    %575 = arith.negf %574 : vector<8x32xf32>
    %576 = math.exp %575 : vector<8x32xf32>
    %cst_201 = arith.constant 1.000000e+00 : f32
    %577 = vector.broadcast %cst_201 : f32 to vector<8x32xf32>
    %578 = arith.addf %577, %576 : vector<8x32xf32>
    %579 = arith.divf %577, %578 : vector<8x32xf32>
    %580 = vector.extract_strided_slice %562 {offsets = [0, 64], sizes = [8, 32], strides = [1, 1]} : vector<8x96xf32> to vector<8x32xf32>
    %581 = arith.mulf %572, %580 : vector<8x32xf32>
    %582 = arith.addf %565, %581 : vector<8x32xf32>
    %583 = math.tanh %582 : vector<8x32xf32>
    %cst_202 = arith.constant 1.000000e+00 : f32
    %584 = vector.broadcast %cst_202 : f32 to vector<8x32xf32>
    %585 = arith.subf %584, %579 : vector<8x32xf32>
    %586 = arith.mulf %585, %583 : vector<8x32xf32>
    %587 = arith.mulf %579, %494 : vector<8x32xf32>
    %588 = arith.addf %586, %587 : vector<8x32xf32>
    %589 = vector.shape_cast %513 : vector<8x1xi1> to vector<8x1xi1>
    %590 = vector.broadcast %589 : vector<8x1xi1> to vector<8x32xi1>
    %591 = arith.select %590, %552, %491 : vector<8x32xi1>, vector<8x32xf32>
    %592 = vector.shape_cast %516 : vector<8x1xi1> to vector<8x1xi1>
    %593 = vector.broadcast %592 : vector<8x1xi1> to vector<8x32xi1>
    %594 = arith.select %593, %588, %494 : vector<8x32xi1>, vector<8x32xf32>
    %cst_203 = arith.constant 0.000000e+00 : f32
    %595 = vector.shape_cast %513 : vector<8x1xi1> to vector<8x1xi1>
    %596 = vector.broadcast %595 : vector<8x1xi1> to vector<8x32xi1>
    %597 = vector.broadcast %cst_203 : f32 to vector<8x32xf32>
    %598 = arith.select %596, %591, %597 : vector<8x32xi1>, vector<8x32xf32>
    %599 = arith.truncf %598 : vector<8x32xf32> to vector<8x32xbf16>
    %c5_204 = arith.constant 5 : index
    %c0_205 = arith.constant 0 : index
    %c0_206 = arith.constant 0 : index
    %600 = vector.load %arg6[%c5_204, %c0_205, %c0_206] : memref<8x8x32xbf16, #tpu.memory_space<vmem>>, vector<1x8x32xbf16>
    %601 = vector.shape_cast %600 : vector<1x8x32xbf16> to vector<8x32xbf16>
    %602 = vector.shape_cast %599 : vector<8x32xbf16> to vector<1x8x32xbf16>
    tpu.vector_store %arg6[%c5_204, %c0_205, %c0_206], %602 {strides = array<i32>} : memref<8x8x32xbf16, #tpu.memory_space<vmem>>, vector<1x8x32xbf16>,
    %cst_207 = arith.constant 0.000000e+00 : f32
    %603 = vector.shape_cast %516 : vector<8x1xi1> to vector<8x1xi1>
    %604 = vector.broadcast %603 : vector<8x1xi1> to vector<8x32xi1>
    %605 = vector.broadcast %cst_207 : f32 to vector<8x32xf32>
    %606 = arith.select %604, %594, %605 : vector<8x32xi1>, vector<8x32xf32>
    %607 = arith.truncf %606 : vector<8x32xf32> to vector<8x32xbf16>
    %c2_208 = arith.constant 2 : index
    %c0_209 = arith.constant 0 : index
    %c0_210 = arith.constant 0 : index
    %608 = vector.load %arg7[%c2_208, %c0_209, %c0_210] : memref<8x8x32xbf16, #tpu.memory_space<vmem>>, vector<1x8x32xbf16>
    %609 = vector.shape_cast %608 : vector<1x8x32xbf16> to vector<8x32xbf16>
    %610 = vector.shape_cast %607 : vector<8x32xbf16> to vector<1x8x32xbf16>
    tpu.vector_store %arg7[%c2_208, %c0_209, %c0_210], %610 {strides = array<i32>} : memref<8x8x32xbf16, #tpu.memory_space<vmem>>, vector<1x8x32xbf16>,
    %c6_i32_211 = arith.constant 6 : i32
    %611 = arith.addi %8, %c6_i32_211 : i32
    %612 = vector.broadcast %611 : i32 to vector<8x1xi32>
    %613 = arith.cmpi slt, %612, %3 : vector<8x1xi32>
    %c1_i32_212 = arith.constant 1 : i32
    %614 = arith.addi %10, %c1_i32_212 : i32
    %615 = vector.broadcast %614 : i32 to vector<8x1xi32>
    %616 = arith.cmpi slt, %615, %3 : vector<8x1xi32>
    %c6_213 = arith.constant 6 : index
    %c0_214 = arith.constant 0 : index
    %c0_215 = arith.constant 0 : index
    %617 = vector.load %arg2[%c6_213, %c0_214, %c0_215] : memref<8x8x192xf32, #tpu.memory_space<vmem>>, vector<1x8x192xf32>
    %618 = vector.shape_cast %617 : vector<1x8x192xf32> to vector<8x192xf32>
    %619 = arith.truncf %591 : vector<8x32xf32> to vector<8x32xbf16>
    %c0_216 = arith.constant 0 : index
    %c0_217 = arith.constant 0 : index
    %c0_218 = arith.constant 0 : index
    %620 = vector.load %arg4[%c0_216, %c0_217, %c0_218] : memref<2x32x96xbf16, #tpu.memory_space<vmem>>, vector<1x32x96xbf16>
    %621 = vector.shape_cast %620 : vector<1x32x96xbf16> to vector<32x96xbf16>
    %cst_219 = arith.constant dense<0.000000e+00> : vector<8x96xf32>
    %622 = tpu.matmul %619, %621, %cst_219 {dimension_numbers = #tpu.dot_dimension_numbers<[1], [0], [0], [1], [0, 0, 1, 1], [], []>} : vector<8x32xbf16>, vector<32x96xbf16>, vector<8x96xf32> -> vector<8x96xf32>
    %c0_220 = arith.constant 0 : index
    %c0_221 = arith.constant 0 : index
    %c0_222 = arith.constant 0 : index
    %623 = vector.load %arg5[%c0_220, %c0_221, %c0_222] : memref<2x1x96xf32, #tpu.memory_space<vmem>>, vector<1x1x96xf32>
    %624 = vector.shape_cast %623 : vector<1x1x96xf32> to vector<1x96xf32>
    %625 = vector.broadcast %624 : vector<1x96xf32> to vector<8x96xf32>
    %626 = arith.addf %622, %625 : vector<8x96xf32>
    %627 = vector.extract_strided_slice %618 {offsets = [0, 0], sizes = [8, 32], strides = [1, 1]} : vector<8x192xf32> to vector<8x32xf32>
    %628 = vector.extract_strided_slice %618 {offsets = [0, 32], sizes = [8, 32], strides = [1, 1]} : vector<8x192xf32> to vector<8x32xf32>
    %629 = vector.extract_strided_slice %618 {offsets = [0, 64], sizes = [8, 32], strides = [1, 1]} : vector<8x192xf32> to vector<8x32xf32>
    %630 = vector.extract_strided_slice %626 {offsets = [0, 0], sizes = [8, 32], strides = [1, 1]} : vector<8x96xf32> to vector<8x32xf32>
    %631 = arith.addf %627, %630 : vector<8x32xf32>
    %632 = arith.negf %631 : vector<8x32xf32>
    %633 = math.exp %632 : vector<8x32xf32>
    %cst_223 = arith.constant 1.000000e+00 : f32
    %634 = vector.broadcast %cst_223 : f32 to vector<8x32xf32>
    %635 = arith.addf %634, %633 : vector<8x32xf32>
    %636 = arith.divf %634, %635 : vector<8x32xf32>
    %637 = vector.extract_strided_slice %626 {offsets = [0, 32], sizes = [8, 32], strides = [1, 1]} : vector<8x96xf32> to vector<8x32xf32>
    %638 = arith.addf %628, %637 : vector<8x32xf32>
    %639 = arith.negf %638 : vector<8x32xf32>
    %640 = math.exp %639 : vector<8x32xf32>
    %cst_224 = arith.constant 1.000000e+00 : f32
    %641 = vector.broadcast %cst_224 : f32 to vector<8x32xf32>
    %642 = arith.addf %641, %640 : vector<8x32xf32>
    %643 = arith.divf %641, %642 : vector<8x32xf32>
    %644 = vector.extract_strided_slice %626 {offsets = [0, 64], sizes = [8, 32], strides = [1, 1]} : vector<8x96xf32> to vector<8x32xf32>
    %645 = arith.mulf %636, %644 : vector<8x32xf32>
    %646 = arith.addf %629, %645 : vector<8x32xf32>
    %647 = math.tanh %646 : vector<8x32xf32>
    %cst_225 = arith.constant 1.000000e+00 : f32
    %648 = vector.broadcast %cst_225 : f32 to vector<8x32xf32>
    %649 = arith.subf %648, %643 : vector<8x32xf32>
    %650 = arith.mulf %649, %647 : vector<8x32xf32>
    %651 = arith.mulf %643, %591 : vector<8x32xf32>
    %652 = arith.addf %650, %651 : vector<8x32xf32>
    %c1_226 = arith.constant 1 : index
    %c0_227 = arith.constant 0 : index
    %c0_228 = arith.constant 0 : index
    %653 = vector.load %arg3[%c1_226, %c0_227, %c0_228] : memref<8x8x192xf32, #tpu.memory_space<vmem>>, vector<1x8x192xf32>
    %654 = vector.shape_cast %653 : vector<1x8x192xf32> to vector<8x192xf32>
    %655 = arith.truncf %594 : vector<8x32xf32> to vector<8x32xbf16>
    %c1_229 = arith.constant 1 : index
    %c0_230 = arith.constant 0 : index
    %c0_231 = arith.constant 0 : index
    %656 = vector.load %arg4[%c1_229, %c0_230, %c0_231] : memref<2x32x96xbf16, #tpu.memory_space<vmem>>, vector<1x32x96xbf16>
    %657 = vector.shape_cast %656 : vector<1x32x96xbf16> to vector<32x96xbf16>
    %cst_232 = arith.constant dense<0.000000e+00> : vector<8x96xf32>
    %658 = tpu.matmul %655, %657, %cst_232 {dimension_numbers = #tpu.dot_dimension_numbers<[1], [0], [0], [1], [0, 0, 1, 1], [], []>} : vector<8x32xbf16>, vector<32x96xbf16>, vector<8x96xf32> -> vector<8x96xf32>
    %c1_233 = arith.constant 1 : index
    %c0_234 = arith.constant 0 : index
    %c0_235 = arith.constant 0 : index
    %659 = vector.load %arg5[%c1_233, %c0_234, %c0_235] : memref<2x1x96xf32, #tpu.memory_space<vmem>>, vector<1x1x96xf32>
    %660 = vector.shape_cast %659 : vector<1x1x96xf32> to vector<1x96xf32>
    %661 = vector.broadcast %660 : vector<1x96xf32> to vector<8x96xf32>
    %662 = arith.addf %658, %661 : vector<8x96xf32>
    %663 = vector.extract_strided_slice %654 {offsets = [0, 96], sizes = [8, 32], strides = [1, 1]} : vector<8x192xf32> to vector<8x32xf32>
    %664 = vector.extract_strided_slice %654 {offsets = [0, 128], sizes = [8, 32], strides = [1, 1]} : vector<8x192xf32> to vector<8x32xf32>
    %665 = vector.extract_strided_slice %654 {offsets = [0, 160], sizes = [8, 32], strides = [1, 1]} : vector<8x192xf32> to vector<8x32xf32>
    %666 = vector.extract_strided_slice %662 {offsets = [0, 0], sizes = [8, 32], strides = [1, 1]} : vector<8x96xf32> to vector<8x32xf32>
    %667 = arith.addf %663, %666 : vector<8x32xf32>
    %668 = arith.negf %667 : vector<8x32xf32>
    %669 = math.exp %668 : vector<8x32xf32>
    %cst_236 = arith.constant 1.000000e+00 : f32
    %670 = vector.broadcast %cst_236 : f32 to vector<8x32xf32>
    %671 = arith.addf %670, %669 : vector<8x32xf32>
    %672 = arith.divf %670, %671 : vector<8x32xf32>
    %673 = vector.extract_strided_slice %662 {offsets = [0, 32], sizes = [8, 32], strides = [1, 1]} : vector<8x96xf32> to vector<8x32xf32>
    %674 = arith.addf %664, %673 : vector<8x32xf32>
    %675 = arith.negf %674 : vector<8x32xf32>
    %676 = math.exp %675 : vector<8x32xf32>
    %cst_237 = arith.constant 1.000000e+00 : f32
    %677 = vector.broadcast %cst_237 : f32 to vector<8x32xf32>
    %678 = arith.addf %677, %676 : vector<8x32xf32>
    %679 = arith.divf %677, %678 : vector<8x32xf32>
    %680 = vector.extract_strided_slice %662 {offsets = [0, 64], sizes = [8, 32], strides = [1, 1]} : vector<8x96xf32> to vector<8x32xf32>
    %681 = arith.mulf %672, %680 : vector<8x32xf32>
    %682 = arith.addf %665, %681 : vector<8x32xf32>
    %683 = math.tanh %682 : vector<8x32xf32>
    %cst_238 = arith.constant 1.000000e+00 : f32
    %684 = vector.broadcast %cst_238 : f32 to vector<8x32xf32>
    %685 = arith.subf %684, %679 : vector<8x32xf32>
    %686 = arith.mulf %685, %683 : vector<8x32xf32>
    %687 = arith.mulf %679, %594 : vector<8x32xf32>
    %688 = arith.addf %686, %687 : vector<8x32xf32>
    %689 = vector.shape_cast %613 : vector<8x1xi1> to vector<8x1xi1>
    %690 = vector.broadcast %689 : vector<8x1xi1> to vector<8x32xi1>
    %691 = arith.select %690, %652, %591 : vector<8x32xi1>, vector<8x32xf32>
    %692 = vector.shape_cast %616 : vector<8x1xi1> to vector<8x1xi1>
    %693 = vector.broadcast %692 : vector<8x1xi1> to vector<8x32xi1>
    %694 = arith.select %693, %688, %594 : vector<8x32xi1>, vector<8x32xf32>
    %cst_239 = arith.constant 0.000000e+00 : f32
    %695 = vector.shape_cast %613 : vector<8x1xi1> to vector<8x1xi1>
    %696 = vector.broadcast %695 : vector<8x1xi1> to vector<8x32xi1>
    %697 = vector.broadcast %cst_239 : f32 to vector<8x32xf32>
    %698 = arith.select %696, %691, %697 : vector<8x32xi1>, vector<8x32xf32>
    %699 = arith.truncf %698 : vector<8x32xf32> to vector<8x32xbf16>
    %c6_240 = arith.constant 6 : index
    %c0_241 = arith.constant 0 : index
    %c0_242 = arith.constant 0 : index
    %700 = vector.load %arg6[%c6_240, %c0_241, %c0_242] : memref<8x8x32xbf16, #tpu.memory_space<vmem>>, vector<1x8x32xbf16>
    %701 = vector.shape_cast %700 : vector<1x8x32xbf16> to vector<8x32xbf16>
    %702 = vector.shape_cast %699 : vector<8x32xbf16> to vector<1x8x32xbf16>
    tpu.vector_store %arg6[%c6_240, %c0_241, %c0_242], %702 {strides = array<i32>} : memref<8x8x32xbf16, #tpu.memory_space<vmem>>, vector<1x8x32xbf16>,
    %cst_243 = arith.constant 0.000000e+00 : f32
    %703 = vector.shape_cast %616 : vector<8x1xi1> to vector<8x1xi1>
    %704 = vector.broadcast %703 : vector<8x1xi1> to vector<8x32xi1>
    %705 = vector.broadcast %cst_243 : f32 to vector<8x32xf32>
    %706 = arith.select %704, %694, %705 : vector<8x32xi1>, vector<8x32xf32>
    %707 = arith.truncf %706 : vector<8x32xf32> to vector<8x32xbf16>
    %c1_244 = arith.constant 1 : index
    %c0_245 = arith.constant 0 : index
    %c0_246 = arith.constant 0 : index
    %708 = vector.load %arg7[%c1_244, %c0_245, %c0_246] : memref<8x8x32xbf16, #tpu.memory_space<vmem>>, vector<1x8x32xbf16>
    %709 = vector.shape_cast %708 : vector<1x8x32xbf16> to vector<8x32xbf16>
    %710 = vector.shape_cast %707 : vector<8x32xbf16> to vector<1x8x32xbf16>
    tpu.vector_store %arg7[%c1_244, %c0_245, %c0_246], %710 {strides = array<i32>} : memref<8x8x32xbf16, #tpu.memory_space<vmem>>, vector<1x8x32xbf16>,
    %c7_i32_247 = arith.constant 7 : i32
    %711 = arith.addi %8, %c7_i32_247 : i32
    %712 = vector.broadcast %711 : i32 to vector<8x1xi32>
    %713 = arith.cmpi slt, %712, %3 : vector<8x1xi32>
    %c0_i32_248 = arith.constant 0 : i32
    %714 = arith.addi %10, %c0_i32_248 : i32
    %715 = vector.broadcast %714 : i32 to vector<8x1xi32>
    %716 = arith.cmpi slt, %715, %3 : vector<8x1xi32>
    %c7_249 = arith.constant 7 : index
    %c0_250 = arith.constant 0 : index
    %c0_251 = arith.constant 0 : index
    %717 = vector.load %arg2[%c7_249, %c0_250, %c0_251] : memref<8x8x192xf32, #tpu.memory_space<vmem>>, vector<1x8x192xf32>
    %718 = vector.shape_cast %717 : vector<1x8x192xf32> to vector<8x192xf32>
    %719 = arith.truncf %691 : vector<8x32xf32> to vector<8x32xbf16>
    %c0_252 = arith.constant 0 : index
    %c0_253 = arith.constant 0 : index
    %c0_254 = arith.constant 0 : index
    %720 = vector.load %arg4[%c0_252, %c0_253, %c0_254] : memref<2x32x96xbf16, #tpu.memory_space<vmem>>, vector<1x32x96xbf16>
    %721 = vector.shape_cast %720 : vector<1x32x96xbf16> to vector<32x96xbf16>
    %cst_255 = arith.constant dense<0.000000e+00> : vector<8x96xf32>
    %722 = tpu.matmul %719, %721, %cst_255 {dimension_numbers = #tpu.dot_dimension_numbers<[1], [0], [0], [1], [0, 0, 1, 1], [], []>} : vector<8x32xbf16>, vector<32x96xbf16>, vector<8x96xf32> -> vector<8x96xf32>
    %c0_256 = arith.constant 0 : index
    %c0_257 = arith.constant 0 : index
    %c0_258 = arith.constant 0 : index
    %723 = vector.load %arg5[%c0_256, %c0_257, %c0_258] : memref<2x1x96xf32, #tpu.memory_space<vmem>>, vector<1x1x96xf32>
    %724 = vector.shape_cast %723 : vector<1x1x96xf32> to vector<1x96xf32>
    %725 = vector.broadcast %724 : vector<1x96xf32> to vector<8x96xf32>
    %726 = arith.addf %722, %725 : vector<8x96xf32>
    %727 = vector.extract_strided_slice %718 {offsets = [0, 0], sizes = [8, 32], strides = [1, 1]} : vector<8x192xf32> to vector<8x32xf32>
    %728 = vector.extract_strided_slice %718 {offsets = [0, 32], sizes = [8, 32], strides = [1, 1]} : vector<8x192xf32> to vector<8x32xf32>
    %729 = vector.extract_strided_slice %718 {offsets = [0, 64], sizes = [8, 32], strides = [1, 1]} : vector<8x192xf32> to vector<8x32xf32>
    %730 = vector.extract_strided_slice %726 {offsets = [0, 0], sizes = [8, 32], strides = [1, 1]} : vector<8x96xf32> to vector<8x32xf32>
    %731 = arith.addf %727, %730 : vector<8x32xf32>
    %732 = arith.negf %731 : vector<8x32xf32>
    %733 = math.exp %732 : vector<8x32xf32>
    %cst_259 = arith.constant 1.000000e+00 : f32
    %734 = vector.broadcast %cst_259 : f32 to vector<8x32xf32>
    %735 = arith.addf %734, %733 : vector<8x32xf32>
    %736 = arith.divf %734, %735 : vector<8x32xf32>
    %737 = vector.extract_strided_slice %726 {offsets = [0, 32], sizes = [8, 32], strides = [1, 1]} : vector<8x96xf32> to vector<8x32xf32>
    %738 = arith.addf %728, %737 : vector<8x32xf32>
    %739 = arith.negf %738 : vector<8x32xf32>
    %740 = math.exp %739 : vector<8x32xf32>
    %cst_260 = arith.constant 1.000000e+00 : f32
    %741 = vector.broadcast %cst_260 : f32 to vector<8x32xf32>
    %742 = arith.addf %741, %740 : vector<8x32xf32>
    %743 = arith.divf %741, %742 : vector<8x32xf32>
    %744 = vector.extract_strided_slice %726 {offsets = [0, 64], sizes = [8, 32], strides = [1, 1]} : vector<8x96xf32> to vector<8x32xf32>
    %745 = arith.mulf %736, %744 : vector<8x32xf32>
    %746 = arith.addf %729, %745 : vector<8x32xf32>
    %747 = math.tanh %746 : vector<8x32xf32>
    %cst_261 = arith.constant 1.000000e+00 : f32
    %748 = vector.broadcast %cst_261 : f32 to vector<8x32xf32>
    %749 = arith.subf %748, %743 : vector<8x32xf32>
    %750 = arith.mulf %749, %747 : vector<8x32xf32>
    %751 = arith.mulf %743, %691 : vector<8x32xf32>
    %752 = arith.addf %750, %751 : vector<8x32xf32>
    %c0_262 = arith.constant 0 : index
    %c0_263 = arith.constant 0 : index
    %c0_264 = arith.constant 0 : index
    %753 = vector.load %arg3[%c0_262, %c0_263, %c0_264] : memref<8x8x192xf32, #tpu.memory_space<vmem>>, vector<1x8x192xf32>
    %754 = vector.shape_cast %753 : vector<1x8x192xf32> to vector<8x192xf32>
    %755 = arith.truncf %694 : vector<8x32xf32> to vector<8x32xbf16>
    %c1_265 = arith.constant 1 : index
    %c0_266 = arith.constant 0 : index
    %c0_267 = arith.constant 0 : index
    %756 = vector.load %arg4[%c1_265, %c0_266, %c0_267] : memref<2x32x96xbf16, #tpu.memory_space<vmem>>, vector<1x32x96xbf16>
    %757 = vector.shape_cast %756 : vector<1x32x96xbf16> to vector<32x96xbf16>
    %cst_268 = arith.constant dense<0.000000e+00> : vector<8x96xf32>
    %758 = tpu.matmul %755, %757, %cst_268 {dimension_numbers = #tpu.dot_dimension_numbers<[1], [0], [0], [1], [0, 0, 1, 1], [], []>} : vector<8x32xbf16>, vector<32x96xbf16>, vector<8x96xf32> -> vector<8x96xf32>
    %c1_269 = arith.constant 1 : index
    %c0_270 = arith.constant 0 : index
    %c0_271 = arith.constant 0 : index
    %759 = vector.load %arg5[%c1_269, %c0_270, %c0_271] : memref<2x1x96xf32, #tpu.memory_space<vmem>>, vector<1x1x96xf32>
    %760 = vector.shape_cast %759 : vector<1x1x96xf32> to vector<1x96xf32>
    %761 = vector.broadcast %760 : vector<1x96xf32> to vector<8x96xf32>
    %762 = arith.addf %758, %761 : vector<8x96xf32>
    %763 = vector.extract_strided_slice %754 {offsets = [0, 96], sizes = [8, 32], strides = [1, 1]} : vector<8x192xf32> to vector<8x32xf32>
    %764 = vector.extract_strided_slice %754 {offsets = [0, 128], sizes = [8, 32], strides = [1, 1]} : vector<8x192xf32> to vector<8x32xf32>
    %765 = vector.extract_strided_slice %754 {offsets = [0, 160], sizes = [8, 32], strides = [1, 1]} : vector<8x192xf32> to vector<8x32xf32>
    %766 = vector.extract_strided_slice %762 {offsets = [0, 0], sizes = [8, 32], strides = [1, 1]} : vector<8x96xf32> to vector<8x32xf32>
    %767 = arith.addf %763, %766 : vector<8x32xf32>
    %768 = arith.negf %767 : vector<8x32xf32>
    %769 = math.exp %768 : vector<8x32xf32>
    %cst_272 = arith.constant 1.000000e+00 : f32
    %770 = vector.broadcast %cst_272 : f32 to vector<8x32xf32>
    %771 = arith.addf %770, %769 : vector<8x32xf32>
    %772 = arith.divf %770, %771 : vector<8x32xf32>
    %773 = vector.extract_strided_slice %762 {offsets = [0, 32], sizes = [8, 32], strides = [1, 1]} : vector<8x96xf32> to vector<8x32xf32>
    %774 = arith.addf %764, %773 : vector<8x32xf32>
    %775 = arith.negf %774 : vector<8x32xf32>
    %776 = math.exp %775 : vector<8x32xf32>
    %cst_273 = arith.constant 1.000000e+00 : f32
    %777 = vector.broadcast %cst_273 : f32 to vector<8x32xf32>
    %778 = arith.addf %777, %776 : vector<8x32xf32>
    %779 = arith.divf %777, %778 : vector<8x32xf32>
    %780 = vector.extract_strided_slice %762 {offsets = [0, 64], sizes = [8, 32], strides = [1, 1]} : vector<8x96xf32> to vector<8x32xf32>
    %781 = arith.mulf %772, %780 : vector<8x32xf32>
    %782 = arith.addf %765, %781 : vector<8x32xf32>
    %783 = math.tanh %782 : vector<8x32xf32>
    %cst_274 = arith.constant 1.000000e+00 : f32
    %784 = vector.broadcast %cst_274 : f32 to vector<8x32xf32>
    %785 = arith.subf %784, %779 : vector<8x32xf32>
    %786 = arith.mulf %785, %783 : vector<8x32xf32>
    %787 = arith.mulf %779, %694 : vector<8x32xf32>
    %788 = arith.addf %786, %787 : vector<8x32xf32>
    %789 = vector.shape_cast %713 : vector<8x1xi1> to vector<8x1xi1>
    %790 = vector.broadcast %789 : vector<8x1xi1> to vector<8x32xi1>
    %791 = arith.select %790, %752, %691 : vector<8x32xi1>, vector<8x32xf32>
    %792 = vector.shape_cast %716 : vector<8x1xi1> to vector<8x1xi1>
    %793 = vector.broadcast %792 : vector<8x1xi1> to vector<8x32xi1>
    %794 = arith.select %793, %788, %694 : vector<8x32xi1>, vector<8x32xf32>
    %cst_275 = arith.constant 0.000000e+00 : f32
    %795 = vector.shape_cast %713 : vector<8x1xi1> to vector<8x1xi1>
    %796 = vector.broadcast %795 : vector<8x1xi1> to vector<8x32xi1>
    %797 = vector.broadcast %cst_275 : f32 to vector<8x32xf32>
    %798 = arith.select %796, %791, %797 : vector<8x32xi1>, vector<8x32xf32>
    %799 = arith.truncf %798 : vector<8x32xf32> to vector<8x32xbf16>
    %c7_276 = arith.constant 7 : index
    %c0_277 = arith.constant 0 : index
    %c0_278 = arith.constant 0 : index
    %800 = vector.load %arg6[%c7_276, %c0_277, %c0_278] : memref<8x8x32xbf16, #tpu.memory_space<vmem>>, vector<1x8x32xbf16>
    %801 = vector.shape_cast %800 : vector<1x8x32xbf16> to vector<8x32xbf16>
    %802 = vector.shape_cast %799 : vector<8x32xbf16> to vector<1x8x32xbf16>
    tpu.vector_store %arg6[%c7_276, %c0_277, %c0_278], %802 {strides = array<i32>} : memref<8x8x32xbf16, #tpu.memory_space<vmem>>, vector<1x8x32xbf16>,
    %cst_279 = arith.constant 0.000000e+00 : f32
    %803 = vector.shape_cast %716 : vector<8x1xi1> to vector<8x1xi1>
    %804 = vector.broadcast %803 : vector<8x1xi1> to vector<8x32xi1>
    %805 = vector.broadcast %cst_279 : f32 to vector<8x32xf32>
    %806 = arith.select %804, %794, %805 : vector<8x32xi1>, vector<8x32xf32>
    %807 = arith.truncf %806 : vector<8x32xf32> to vector<8x32xbf16>
    %c0_280 = arith.constant 0 : index
    %c0_281 = arith.constant 0 : index
    %c0_282 = arith.constant 0 : index
    %808 = vector.load %arg7[%c0_280, %c0_281, %c0_282] : memref<8x8x32xbf16, #tpu.memory_space<vmem>>, vector<1x8x32xbf16>
    %809 = vector.shape_cast %808 : vector<1x8x32xbf16> to vector<8x32xbf16>
    %810 = vector.shape_cast %807 : vector<8x32xbf16> to vector<1x8x32xbf16>
    tpu.vector_store %arg7[%c0_280, %c0_281, %c0_282], %810 {strides = array<i32>} : memref<8x8x32xbf16, #tpu.memory_space<vmem>>, vector<1x8x32xbf16>,
    %c0_283 = arith.constant 0 : index
    %c0_284 = arith.constant 0 : index
    %c0_285 = arith.constant 0 : index
    %811 = vector.load %arg8[%c0_283, %c0_284, %c0_285] : memref<2x8x32xf32, #tpu.memory_space<vmem>>, vector<1x8x32xf32>
    %812 = vector.shape_cast %811 : vector<1x8x32xf32> to vector<8x32xf32>
    %813 = vector.shape_cast %791 : vector<8x32xf32> to vector<1x8x32xf32>
    tpu.vector_store %arg8[%c0_283, %c0_284, %c0_285], %813 {strides = array<i32>} : memref<2x8x32xf32, #tpu.memory_space<vmem>>, vector<1x8x32xf32>,
    %c1_286 = arith.constant 1 : index
    %c0_287 = arith.constant 0 : index
    %c0_288 = arith.constant 0 : index
    %814 = vector.load %arg8[%c1_286, %c0_287, %c0_288] : memref<2x8x32xf32, #tpu.memory_space<vmem>>, vector<1x8x32xf32>
    %815 = vector.shape_cast %814 : vector<1x8x32xf32> to vector<8x32xf32>
    %816 = vector.shape_cast %794 : vector<8x32xf32> to vector<1x8x32xf32>
    tpu.vector_store %arg8[%c1_286, %c0_287, %c0_288], %816 {strides = array<i32>} : memref<2x8x32xf32, #tpu.memory_space<vmem>>, vector<1x8x32xf32>,
    return
  }
  func.func @transform_0(%arg0: i32) -> (i32, i32) {
    %c0_i32 = arith.constant 0 : i32
    %c0_i32_0 = arith.constant 0 : i32
    %c0_i32_1 = arith.constant 0 : i32
    return %c0_i32, %c0_i32_0 : i32, i32
  }
  func.func @transform_1(%arg0: i32) -> (i32, i32, i32) {
    %c0_i32 = arith.constant 0 : i32
    %c0_i32_0 = arith.constant 0 : i32
    %c0_i32_1 = arith.constant 0 : i32
    return %arg0, %c0_i32, %c0_i32_0 : i32, i32, i32
  }
  func.func @transform_2(%arg0: i32) -> (i32, i32, i32) {
    %c0_i32 = arith.constant 0 : i32
    %0 = arith.subi %c0_i32, %arg0 : i32
    %c0_i32_0 = arith.constant 0 : i32
    %c0_i32_1 = arith.constant 0 : i32
    %c0_i32_2 = arith.constant 0 : i32
    return %0, %c0_i32_0, %c0_i32_1 : i32, i32, i32
  }
  func.func @transform_3(%arg0: i32) -> (i32, i32, i32) {
    %c0_i32 = arith.constant 0 : i32
    %c0_i32_0 = arith.constant 0 : i32
    %c0_i32_1 = arith.constant 0 : i32
    %c0_i32_2 = arith.constant 0 : i32
    return %c0_i32, %c0_i32_0, %c0_i32_1 : i32, i32, i32
  }
  func.func @transform_4(%arg0: i32) -> (i32, i32, i32) {
    %c0_i32 = arith.constant 0 : i32
    %c0_i32_0 = arith.constant 0 : i32
    %c0_i32_1 = arith.constant 0 : i32
    %c0_i32_2 = arith.constant 0 : i32
    return %c0_i32, %c0_i32_0, %c0_i32_1 : i32, i32, i32
  }
  func.func @transform_5(%arg0: i32) -> (i32, i32, i32) {
    %c0_i32 = arith.constant 0 : i32
    %c0_i32_0 = arith.constant 0 : i32
    %c0_i32_1 = arith.constant 0 : i32
    return %arg0, %c0_i32, %c0_i32_0 : i32, i32, i32
  }
  func.func @transform_6(%arg0: i32) -> (i32, i32, i32) {
    %c0_i32 = arith.constant 0 : i32
    %0 = arith.subi %c0_i32, %arg0 : i32
    %c0_i32_0 = arith.constant 0 : i32
    %c0_i32_1 = arith.constant 0 : i32
    %c0_i32_2 = arith.constant 0 : i32
    return %0, %c0_i32_0, %c0_i32_1 : i32, i32, i32
  }
}

module attributes {stable_mosaic.version = 11 : i64} {
  func.func @_fc_logsoftmax_kernel(%arg0: i32, %arg1: memref<16x32xbf16, #tpu.memory_space<vmem>>, %arg2: memref<32x128xbf16, #tpu.memory_space<vmem>>, %arg3: memref<16x128xf32, #tpu.memory_space<vmem>>) attributes {dimension_semantics = [#tpu.dimension_semantics<parallel>], iteration_bounds = array<i64: 1>, scalar_prefetch = 0 : i64, scratch_operands = 0 : i64, tpu.core_type = #tpu.core_type<tc>, window_params = [{transform_indices = @transform_0, window_bounds = array<i64: 16, 32>}, {pipeline_mode = #tpu.pipeline_mode<synchronous>, transform_indices = @transform_1, window_bounds = array<i64: 32, 128>}, {transform_indices = @transform_2, window_bounds = array<i64: 16, 128>}]} {
    %c0 = arith.constant 0 : index
    %c0_0 = arith.constant 0 : index
    %0 = vector.load %arg1[%c0, %c0_0] : memref<16x32xbf16, #tpu.memory_space<vmem>>, vector<16x32xbf16>
    %c0_1 = arith.constant 0 : index
    %c0_2 = arith.constant 0 : index
    %1 = vector.load %arg2[%c0_1, %c0_2] : memref<32x128xbf16, #tpu.memory_space<vmem>>, vector<32x128xbf16>
    %cst = arith.constant dense<0.000000e+00> : vector<16x128xf32>
    %2 = tpu.matmul %0, %1, %cst {dimension_numbers = #tpu.dot_dimension_numbers<[1], [0], [0], [1], [0, 0, 1, 1], [], []>} : vector<16x32xbf16>, vector<32x128xbf16>, vector<16x128xf32> -> vector<16x128xf32>
    %3 = tpu.iota {dimensions = array<i32: 1>} : vector<16x128xi32>
    %c28_i32 = arith.constant 28 : i32
    %4 = vector.broadcast %c28_i32 : i32 to vector<16x128xi32>
    %5 = arith.cmpi slt, %3, %4 : vector<16x128xi32>
    %cst_3 = arith.constant -1.000000e+30 : f32
    %6 = vector.broadcast %cst_3 : f32 to vector<16x128xf32>
    %7 = arith.select %5, %2, %6 : vector<16x128xi1>, vector<16x128xf32>
    %cst_4 = arith.constant dense<0xFF800000> : vector<16xf32>
    %8 = vector.multi_reduction <maximumf>, %7, %cst_4 [1] : vector<16x128xf32> to vector<16xf32>
    %9 = vector.shape_cast %8 : vector<16xf32> to vector<16x1xf32>
    %10 = vector.broadcast %9 : vector<16x1xf32> to vector<16x128xf32>
    %11 = arith.subf %7, %10 : vector<16x128xf32>
    %12 = math.exp %11 : vector<16x128xf32>
    %cst_5 = arith.constant dense<0.000000e+00> : vector<16xf32>
    %13 = vector.multi_reduction <add>, %12, %cst_5 [1] : vector<16x128xf32> to vector<16xf32>
    %14 = vector.shape_cast %13 : vector<16xf32> to vector<16x1xf32>
    %15 = math.log %14 : vector<16x1xf32>
    %16 = vector.broadcast %15 : vector<16x1xf32> to vector<16x128xf32>
    %17 = arith.subf %11, %16 : vector<16x128xf32>
    %c0_6 = arith.constant 0 : index
    %c0_7 = arith.constant 0 : index
    %18 = vector.load %arg3[%c0_6, %c0_7] : memref<16x128xf32, #tpu.memory_space<vmem>>, vector<16x128xf32>
    tpu.vector_store %arg3[%c0_6, %c0_7], %17 {strides = array<i32>} : memref<16x128xf32, #tpu.memory_space<vmem>>, vector<16x128xf32>,
    return
  }
  func.func @transform_0(%arg0: i32) -> (i32, i32) {
    %c0_i32 = arith.constant 0 : i32
    %c0_i32_0 = arith.constant 0 : i32
    return %arg0, %c0_i32 : i32, i32
  }
  func.func @transform_1(%arg0: i32) -> (i32, i32) {
    %c0_i32 = arith.constant 0 : i32
    %c0_i32_0 = arith.constant 0 : i32
    %c0_i32_1 = arith.constant 0 : i32
    return %c0_i32, %c0_i32_0 : i32, i32
  }
  func.func @transform_2(%arg0: i32) -> (i32, i32) {
    %c0_i32 = arith.constant 0 : i32
    %c0_i32_0 = arith.constant 0 : i32
    return %arg0, %c0_i32 : i32, i32
  }
}

</mosaic_0001>

<llo_original>
// kernel: deepspeech2_forward.7
$region0: #{deepspeech2_forward.7}
  #allocation0 [shape = 'u32[]', space=smem, size = 0x4, offset = 0x4, fixed_abs, tag = 'smem constant byte address 0x4 - core index']
  #allocation1 [shape = 'u32[144,128]{1,0:T(1,128)}', space=vmem, size = 0x12000, scoped, tag = 'internal scratch']
  #allocation2 [shape = 'f32[128,128]{1,0:T(8,128)}', space=vmem, size = 0x10000, scoped, tag = 'scratch operand']
  %s0 = inlined_call_operand.vmem [shape: bf16[128,512], index: 0, kind: input, shape index: {}]
  %s1 = inlined_call_operand.vmem [shape: bf16[512,128], index: 1, kind: input, shape index: {}]
  %s2 = inlined_call_operand.vmem [shape: f32[1,128], index: 2, kind: input, shape index: {}]
  %s3 = inlined_call_operand.vmem [shape: f32[1,128], index: 3, kind: input, shape index: {}]
  %s4 = inlined_call_operand.vmem [shape: bf16[128,128], index: 4, kind: output, shape index: {}]
  %s5 = sld [smem:[#allocation0]]
  $region34: #{deepspeech2_forward.7} parent=0
    _
  %s7 = ssub.s32 1, %s5
  %s8 = scalar_select 0, %s7, %s5
  // Predicated region
  $region2: #{deepspeech2_forward.7} parent=0 // pred_check
    _
  $region3: #{deepspeech2_forward.7} parent=0 // pred_check_branch
    %10 = sbr.rel (0) target = $region5
  $region4: #{deepspeech2_forward.7} parent=0 // pred_region
    _
  $region5: #{deepspeech2_forward.7} parent=0 // pred_fallthru
    _
  // Predicated region
  $region6: #{deepspeech2_forward.7} parent=0 // pred_check
    _
  $region7: #{deepspeech2_forward.7} parent=0 // pred_check_branch
    %12 = sbr.rel (0) target = $region9
  $region8: #{deepspeech2_forward.7} parent=0 // pred_region
    _
  $region9: #{deepspeech2_forward.7} parent=0 // pred_fallthru
    _
  // Predicated region
  $region10: #{deepspeech2_forward.7} parent=0 // pred_check
    _
  $region11: #{deepspeech2_forward.7} parent=0 // pred_check_branch
    %14 = sbr.rel (0) target = $region13
  $region12: #{deepspeech2_forward.7} parent=0 // pred_region
    _
  $region13: #{deepspeech2_forward.7} parent=0 // pred_fallthru
    _
  // Predicated region
  $region14: #{deepspeech2_forward.7} parent=0 // pred_check
    _
  $region15: #{deepspeech2_forward.7} parent=0 // pred_check_branch
    %16 = sbr.rel (0) target = $region17
  $region16: #{deepspeech2_forward.7} parent=0 // pred_region
    _
  $region17: #{deepspeech2_forward.7} parent=0 // pred_fallthru
    _
  %p18 = scmp.eq.s32.totalorder 0, 0
  // Predicated region
  $region18: #{deepspeech2_forward.7} parent=0 // pred_check
    %p19 = pneg %p18
  $region19: #{deepspeech2_forward.7} parent=0 // pred_check_branch
    %21 = sbr.rel (%p19) target = $region21
  $region20: #{deepspeech2_forward.7} parent=0 // pred_region
    %22 = vst [vmem:[#allocation2] sm:$0xff] 0.0
    %23 = vst [vmem:[#allocation2 + $0x8] sm:$0xff] 0.0
    %24 = vst [vmem:[#allocation2 + $0x10] sm:$0xff] 0.0
    %25 = vst [vmem:[#allocation2 + $0x18] sm:$0xff] 0.0
    %26 = vst [vmem:[#allocation2 + $0x20] sm:$0xff] 0.0
    %27 = vst [vmem:[#allocation2 + $0x28] sm:$0xff] 0.0
    %28 = vst [vmem:[#allocation2 + $0x30] sm:$0xff] 0.0
    %29 = vst [vmem:[#allocation2 + $0x38] sm:$0xff] 0.0
    %30 = vst [vmem:[#allocation2 + $0x40] sm:$0xff] 0.0
    %31 = vst [vmem:[#allocation2 + $0x48] sm:$0xff] 0.0
    %32 = vst [vmem:[#allocation2 + $0x50] sm:$0xff] 0.0
    %33 = vst [vmem:[#allocation2 + $0x58] sm:$0xff] 0.0
    %34 = vst [vmem:[#allocation2 + $0x60] sm:$0xff] 0.0
    %35 = vst [vmem:[#allocation2 + $0x68] sm:$0xff] 0.0
    %36 = vst [vmem:[#allocation2 + $0x70] sm:$0xff] 0.0
    %37 = vst [vmem:[#allocation2 + $0x78] sm:$0xff] 0.0
  $region21: #{deepspeech2_forward.7} parent=0 // pred_fallthru
    _
  %v38 = vld [vmem:[#allocation2] sm:$0xff]
  %v39 = vld [vmem:[#allocation2 + $0x8] sm:$0xff]
  %v40 = vld [vmem:[#allocation2 + $0x10] sm:$0xff]
  %v41 = vld [vmem:[#allocation2 + $0x18] sm:$0xff]
  %v42 = vld [vmem:[#allocation2 + $0x20] sm:$0xff]
  %v43 = vld [vmem:[#allocation2 + $0x28] sm:$0xff]
  %v44 = vld [vmem:[#allocation2 + $0x30] sm:$0xff]
  %v45 = vld [vmem:[#allocation2 + $0x38] sm:$0xff]
  %v46 = vld [vmem:[#allocation2 + $0x40] sm:$0xff]
  %v47 = vld [vmem:[#allocation2 + $0x48] sm:$0xff]
  %v48 = vld [vmem:[#allocation2 + $0x50] sm:$0xff]
  %v49 = vld [vmem:[#allocation2 + $0x58] sm:$0xff]
  %v50 = vld [vmem:[#allocation2 + $0x60] sm:$0xff]
  %v51 = vld [vmem:[#allocation2 + $0x68] sm:$0xff]
  %v52 = vld [vmem:[#allocation2 + $0x70] sm:$0xff]
  %v53 = vld [vmem:[#allocation2 + $0x78] sm:$0xff]
  %v54 = vld [vmem:[%s0] sm:$0xff]
  %v55 = vld [vmem:[%s0 + $0x8] sm:$0xff]
  %v56 = vld [vmem:[%s0 + $0x10] sm:$0xff]
  %v57 = vld [vmem:[%s0 + $0x18] sm:$0xff]
  %v58 = vld [vmem:[%s0 + $0x20] sm:$0xff]
  %v59 = vld [vmem:[%s0 + $0x28] sm:$0xff]
  %v60 = vld [vmem:[%s0 + $0x30] sm:$0xff]
  %v61 = vld [vmem:[%s0 + $0x38] sm:$0xff]
  %v62 = vld [vmem:[%s0 + $0x40] sm:$0xff]
  %v63 = vld [vmem:[%s0 + $0x48] sm:$0xff]
  %v64 = vld [vmem:[%s0 + $0x50] sm:$0xff]
  %v65 = vld [vmem:[%s0 + $0x58] sm:$0xff]
  %v66 = vld [vmem:[%s0 + $0x60] sm:$0xff]
  %v67 = vld [vmem:[%s0 + $0x68] sm:$0xff]
  %v68 = vld [vmem:[%s0 + $0x70] sm:$0xff]
  %v69 = vld [vmem:[%s0 + $0x78] sm:$0xff]
  %v70 = vld [vmem:[%s0 + $0x80] sm:$0xff]
  %v71 = vld [vmem:[%s0 + $0x88] sm:$0xff]
  %v72 = vld [vmem:[%s0 + $0x90] sm:$0xff]
  %v73 = vld [vmem:[%s0 + $0x98] sm:$0xff]
  %v74 = vld [vmem:[%s0 + $0xa0] sm:$0xff]
  %v75 = vld [vmem:[%s0 + $0xa8] sm:$0xff]
  %v76 = vld [vmem:[%s0 + $0xb0] sm:$0xff]
  %v77 = vld [vmem:[%s0 + $0xb8] sm:$0xff]
  %v78 = vld [vmem:[%s0 + $0xc0] sm:$0xff]
  %v79 = vld [vmem:[%s0 + $0xc8] sm:$0xff]
  %v80 = vld [vmem:[%s0 + $0xd0] sm:$0xff]
  %v81 = vld [vmem:[%s0 + $0xd8] sm:$0xff]
  %v82 = vld [vmem:[%s0 + $0xe0] sm:$0xff]
  %v83 = vld [vmem:[%s0 + $0xe8] sm:$0xff]
  %v84 = vld [vmem:[%s0 + $0xf0] sm:$0xff]
  %v85 = vld [vmem:[%s0 + $0xf8] sm:$0xff]
  %v86 = vld [vmem:[%s1] sm:$0xf]
  %v87 = vld [vmem:[%s1 + $0x4] sm:$0xf]
  %v88 = vld [vmem:[%s1 + $0x8] sm:$0xf]
  %v89 = vld [vmem:[%s1 + $0xc] sm:$0xf]
  %v90 = vld [vmem:[%s1 + $0x10] sm:$0xf]
  %v91 = vld [vmem:[%s1 + $0x14] sm:$0xf]
  %v92 = vld [vmem:[%s1 + $0x18] sm:$0xf]
  %v93 = vld [vmem:[%s1 + $0x1c] sm:$0xf]
  %v94 = vld [vmem:[%s1 + $0x20] sm:$0xf]
  %v95 = vld [vmem:[%s1 + $0x24] sm:$0xf]
  %v96 = vld [vmem:[%s1 + $0x28] sm:$0xf]
  %v97 = vld [vmem:[%s1 + $0x2c] sm:$0xf]
  %v98 = vld [vmem:[%s1 + $0x30] sm:$0xf]
  %v99 = vld [vmem:[%s1 + $0x34] sm:$0xf]
  %v100 = vld [vmem:[%s1 + $0x38] sm:$0xf]
  %v101 = vld [vmem:[%s1 + $0x3c] sm:$0xf]
  %v102 = vld [vmem:[%s1 + $0x40] sm:$0xf]
  %v103 = vld [vmem:[%s1 + $0x44] sm:$0xf]
  %v104 = vld [vmem:[%s1 + $0x48] sm:$0xf]
  %v105 = vld [vmem:[%s1 + $0x4c] sm:$0xf]
  %v106 = vld [vmem:[%s1 + $0x50] sm:$0xf]
  %v107 = vld [vmem:[%s1 + $0x54] sm:$0xf]
  %v108 = vld [vmem:[%s1 + $0x58] sm:$0xf]
  %v109 = vld [vmem:[%s1 + $0x5c] sm:$0xf]
  %v110 = vld [vmem:[%s1 + $0x60] sm:$0xf]
  %v111 = vld [vmem:[%s1 + $0x64] sm:$0xf]
  %v112 = vld [vmem:[%s1 + $0x68] sm:$0xf]
  %v113 = vld [vmem:[%s1 + $0x6c] sm:$0xf]
  %v114 = vld [vmem:[%s1 + $0x70] sm:$0xf]
  %v115 = vld [vmem:[%s1 + $0x74] sm:$0xf]
  %v116 = vld [vmem:[%s1 + $0x78] sm:$0xf]
  %v117 = vld [vmem:[%s1 + $0x7c] sm:$0xf]
  %v118 = vld [vmem:[%s1 + $0x80] sm:$0xf]
  %v119 = vld [vmem:[%s1 + $0x84] sm:$0xf]
  %v120 = vld [vmem:[%s1 + $0x88] sm:$0xf]
  %v121 = vld [vmem:[%s1 + $0x8c] sm:$0xf]
  %v122 = vld [vmem:[%s1 + $0x90] sm:$0xf]
  %v123 = vld [vmem:[%s1 + $0x94] sm:$0xf]
  %v124 = vld [vmem:[%s1 + $0x98] sm:$0xf]
  %v125 = vld [vmem:[%s1 + $0x9c] sm:$0xf]
  %v126 = vld [vmem:[%s1 + $0xa0] sm:$0xf]
  %v127 = vld [vmem:[%s1 + $0xa4] sm:$0xf]
  %v128 = vld [vmem:[%s1 + $0xa8] sm:$0xf]
  %v129 = vld [vmem:[%s1 + $0xac] sm:$0xf]
  %v130 = vld [vmem:[%s1 + $0xb0] sm:$0xf]
  %v131 = vld [vmem:[%s1 + $0xb4] sm:$0xf]
  %v132 = vld [vmem:[%s1 + $0xb8] sm:$0xf]
  %v133 = vld [vmem:[%s1 + $0xbc] sm:$0xf]
  %v134 = vld [vmem:[%s1 + $0xc0] sm:$0xf]
  %v135 = vld [vmem:[%s1 + $0xc4] sm:$0xf]
  %v136 = vld [vmem:[%s1 + $0xc8] sm:$0xf]
  %v137 = vld [vmem:[%s1 + $0xcc] sm:$0xf]
  %v138 = vld [vmem:[%s1 + $0xd0] sm:$0xf]
  %v139 = vld [vmem:[%s1 + $0xd4] sm:$0xf]
  %v140 = vld [vmem:[%s1 + $0xd8] sm:$0xf]
  %v141 = vld [vmem:[%s1 + $0xdc] sm:$0xf]
  %v142 = vld [vmem:[%s1 + $0xe0] sm:$0xf]
  %v143 = vld [vmem:[%s1 + $0xe4] sm:$0xf]
  %v144 = vld [vmem:[%s1 + $0xe8] sm:$0xf]
  %v145 = vld [vmem:[%s1 + $0xec] sm:$0xf]
  %v146 = vld [vmem:[%s1 + $0xf0] sm:$0xf]
  %v147 = vld [vmem:[%s1 + $0xf4] sm:$0xf]
  %v148 = vld [vmem:[%s1 + $0xf8] sm:$0xf]
  %v149 = vld [vmem:[%s1 + $0xfc] sm:$0xf]
  %v182 = vunpack.c.l.b16 %v54
  %v183 = vunpack.c.h.b16 %v54
  %v184 = vunpack.c.l.b16 %v55
  %v185 = vunpack.c.h.b16 %v55
  %v186 = vunpack.c.l.b16 %v56
  %v187 = vunpack.c.h.b16 %v56
  %v188 = vunpack.c.l.b16 %v57
  %v189 = vunpack.c.h.b16 %v57
  %v190 = vunpack.c.l.b16 %v58
  %v191 = vunpack.c.h.b16 %v58
  %v192 = vunpack.c.l.b16 %v59
  %v193 = vunpack.c.h.b16 %v59
  %v194 = vunpack.c.l.b16 %v60
  %v195 = vunpack.c.h.b16 %v60
  %v196 = vunpack.c.l.b16 %v61
  %v197 = vunpack.c.h.b16 %v61
  %v198 = vunpack.c.l.b16 %v62
  %v199 = vunpack.c.h.b16 %v62
  %v200 = vunpack.c.l.b16 %v63
  %v201 = vunpack.c.h.b16 %v63
  %v202 = vunpack.c.l.b16 %v64
  %v203 = vunpack.c.h.b16 %v64
  %v204 = vunpack.c.l.b16 %v65
  %v205 = vunpack.c.h.b16 %v65
  %v206 = vunpack.c.l.b16 %v66
  %v207 = vunpack.c.h.b16 %v66
  %v208 = vunpack.c.l.b16 %v67
  %v209 = vunpack.c.h.b16 %v67
  %v210 = vunpack.c.l.b16 %v68
  %v211 = vunpack.c.h.b16 %v68
  %v212 = vunpack.c.l.b16 %v69
  %v213 = vunpack.c.h.b16 %v69
  %v214 = vunpack.c.l.b16 %v70
  %v215 = vunpack.c.h.b16 %v70
  %v216 = vunpack.c.l.b16 %v71
  %v217 = vunpack.c.h.b16 %v71
  %v218 = vunpack.c.l.b16 %v72
  %v219 = vunpack.c.h.b16 %v72
  %v220 = vunpack.c.l.b16 %v73
  %v221 = vunpack.c.h.b16 %v73
  %v222 = vunpack.c.l.b16 %v74
  %v223 = vunpack.c.h.b16 %v74
  %v224 = vunpack.c.l.b16 %v75
  %v225 = vunpack.c.h.b16 %v75
  %v226 = vunpack.c.l.b16 %v76
  %v227 = vunpack.c.h.b16 %v76
  %v228 = vunpack.c.l.b16 %v77
  %v229 = vunpack.c.h.b16 %v77
  %v230 = vunpack.c.l.b16 %v78
  %v231 = vunpack.c.h.b16 %v78
  %v232 = vunpack.c.l.b16 %v79
  %v233 = vunpack.c.h.b16 %v79
  %v234 = vunpack.c.l.b16 %v80
  %v235 = vunpack.c.h.b16 %v80
  %v236 = vunpack.c.l.b16 %v81
  %v237 = vunpack.c.h.b16 %v81
  %v238 = vunpack.c.l.b16 %v82
  %v239 = vunpack.c.h.b16 %v82
  %v240 = vunpack.c.l.b16 %v83
  %v241 = vunpack.c.h.b16 %v83
  %v242 = vunpack.c.l.b16 %v84
  %v243 = vunpack.c.h.b16 %v84
  %v244 = vunpack.c.l.b16 %v85
  %v245 = vunpack.c.h.b16 %v85
  %v246 = vpack.c.b16 %v186, %v182
  %v247 = vpack.c.b16 %v187, %v183
  %v248 = vpack.c.b16 %v188, %v184
  %v249 = vpack.c.b16 %v189, %v185
  %v250 = vpack.c.b16 %v194, %v190
  %v251 = vpack.c.b16 %v195, %v191
  %v252 = vpack.c.b16 %v196, %v192
  %v253 = vpack.c.b16 %v197, %v193
  %v254 = vpack.c.b16 %v202, %v198
  %v255 = vpack.c.b16 %v203, %v199
  %v256 = vpack.c.b16 %v204, %v200
  %v257 = vpack.c.b16 %v205, %v201
  %v258 = vpack.c.b16 %v210, %v206
  %v259 = vpack.c.b16 %v211, %v207
  %v260 = vpack.c.b16 %v212, %v208
  %v261 = vpack.c.b16 %v213, %v209
  %v262 = vpack.c.b16 %v218, %v214
  %v263 = vpack.c.b16 %v219, %v215
  %v264 = vpack.c.b16 %v220, %v216
  %v265 = vpack.c.b16 %v221, %v217
  %v266 = vpack.c.b16 %v226, %v222
  %v267 = vpack.c.b16 %v227, %v223
  %v268 = vpack.c.b16 %v228, %v224
  %v269 = vpack.c.b16 %v229, %v225
  %v270 = vpack.c.b16 %v234, %v230
  %v271 = vpack.c.b16 %v235, %v231
  %v272 = vpack.c.b16 %v236, %v232
  %v273 = vpack.c.b16 %v237, %v233
  %v274 = vpack.c.b16 %v242, %v238
  %v275 = vpack.c.b16 %v243, %v239
  %v276 = vpack.c.b16 %v244, %v240
  %v277 = vpack.c.b16 %v245, %v241
  %v374 = vunpack.c.l.b16 %v86
  %v375 = vunpack.c.l.b16 %v87
  %v376 = vunpack.c.l.b16 %v88
  %v377 = vunpack.c.l.b16 %v89
  %v378 = vunpack.c.l.b16 %v90
  %v379 = vunpack.c.l.b16 %v91
  %v380 = vunpack.c.l.b16 %v92
  %v381 = vunpack.c.l.b16 %v93
  %v382 = vunpack.c.l.b16 %v94
  %v383 = vunpack.c.l.b16 %v95
  %v384 = vunpack.c.l.b16 %v96
  %v385 = vunpack.c.l.b16 %v97
  %v386 = vunpack.c.l.b16 %v98
  %v387 = vunpack.c.l.b16 %v99
  %v388 = vunpack.c.l.b16 %v100
  %v389 = vunpack.c.l.b16 %v101
  %v390 = vunpack.c.l.b16 %v102
  %v391 = vunpack.c.l.b16 %v103
  %v392 = vunpack.c.l.b16 %v104
  %v393 = vunpack.c.l.b16 %v105
  %v394 = vunpack.c.l.b16 %v106
  %v395 = vunpack.c.l.b16 %v107
  %v396 = vunpack.c.l.b16 %v108
  %v397 = vunpack.c.l.b16 %v109
  %v398 = vunpack.c.l.b16 %v110
  %v399 = vunpack.c.l.b16 %v111
  %v400 = vunpack.c.l.b16 %v112
  %v401 = vunpack.c.l.b16 %v113
  %v402 = vunpack.c.l.b16 %v114
  %v403 = vunpack.c.l.b16 %v115
  %v404 = vunpack.c.l.b16 %v116
  %v405 = vunpack.c.l.b16 %v117
  %v406 = vunpack.c.l.b16 %v118
  %v407 = vunpack.c.l.b16 %v119
  %v408 = vunpack.c.l.b16 %v120
  %v409 = vunpack.c.l.b16 %v121
  %v410 = vunpack.c.l.b16 %v122
  %v411 = vunpack.c.l.b16 %v123
  %v412 = vunpack.c.l.b16 %v124
  %v413 = vunpack.c.l.b16 %v125
  %v414 = vunpack.c.l.b16 %v126
  %v415 = vunpack.c.l.b16 %v127
  %v416 = vunpack.c.l.b16 %v128
  %v417 = vunpack.c.l.b16 %v129
  %v418 = vunpack.c.l.b16 %v130
  %v419 = vunpack.c.l.b16 %v131
  %v420 = vunpack.c.l.b16 %v132
  %v421 = vunpack.c.l.b16 %v133
  %v422 = vunpack.c.l.b16 %v134
  %v423 = vunpack.c.l.b16 %v135
  %v424 = vunpack.c.l.b16 %v136
  %v425 = vunpack.c.l.b16 %v137
  %v426 = vunpack.c.l.b16 %v138
  %v427 = vunpack.c.l.b16 %v139
  %v428 = vunpack.c.l.b16 %v140
  %v429 = vunpack.c.l.b16 %v141
  %v430 = vunpack.c.l.b16 %v142
  %v431 = vunpack.c.l.b16 %v143
  %v432 = vunpack.c.l.b16 %v144
  %v433 = vunpack.c.l.b16 %v145
  %v434 = vunpack.c.l.b16 %v146
  %v435 = vunpack.c.l.b16 %v147
  %v436 = vunpack.c.l.b16 %v148
  %v437 = vunpack.c.l.b16 %v149
  %v438 = vpack.c.b16 %v375, %v374
  %v439 = vpack.c.b16 %v377, %v376
  %v440 = vpack.c.b16 %v379, %v378
  %v441 = vpack.c.b16 %v381, %v380
  %v442 = vpack.c.b16 %v383, %v382
  %v443 = vpack.c.b16 %v385, %v384
  %v444 = vpack.c.b16 %v387, %v386
  %v445 = vpack.c.b16 %v389, %v388
  %v446 = vpack.c.b16 %v391, %v390
  %v447 = vpack.c.b16 %v393, %v392
  %v448 = vpack.c.b16 %v395, %v394
  %v449 = vpack.c.b16 %v397, %v396
  %v450 = vpack.c.b16 %v399, %v398
  %v451 = vpack.c.b16 %v401, %v400
  %v452 = vpack.c.b16 %v403, %v402
  %v453 = vpack.c.b16 %v405, %v404
  %v454 = vpack.c.b16 %v407, %v406
  %v455 = vpack.c.b16 %v409, %v408
  %v456 = vpack.c.b16 %v411, %v410
  %v457 = vpack.c.b16 %v413, %v412
  %v458 = vpack.c.b16 %v415, %v414
  %v459 = vpack.c.b16 %v417, %v416
  %v460 = vpack.c.b16 %v419, %v418
  %v461 = vpack.c.b16 %v421, %v420
  %v462 = vpack.c.b16 %v423, %v422
  %v463 = vpack.c.b16 %v425, %v424
  %v464 = vpack.c.b16 %v427, %v426
  %v465 = vpack.c.b16 %v429, %v428
  %v466 = vpack.c.b16 %v431, %v430
  %v467 = vpack.c.b16 %v433, %v432
  %v468 = vpack.c.b16 %v435, %v434
  %v469 = vpack.c.b16 %v437, %v436
  %502 = vmatprep.subr.bf16.mxu0 0
  %503 = vmatpush1.bf16.msra.mxu0 %v445
  %504 = vmatprep.subr.bf16.mxu0 0
  %505 = vmatpush1.bf16.msra.mxu0 %v444
  %506 = vmatprep.subr.bf16.mxu0 0
  %507 = vmatpush1.bf16.msra.mxu0 %v443
  %508 = vmatprep.subr.bf16.mxu0 0
  %509 = vmatpush1.bf16.msra.mxu0 %v442
  %510 = vmatprep.subr.bf16.mxu0 0
  %511 = vmatpush1.bf16.msra.mxu0 %v441
  %512 = vmatprep.subr.bf16.mxu0 0
  %513 = vmatpush1.bf16.msra.mxu0 %v440
  %514 = vmatprep.subr.bf16.mxu0 0
  %515 = vmatpush1.bf16.msra.mxu0 %v439
  %516 = vmatprep.subr.bf16.mxu0 0
  %517 = vmatpush1.bf16.msra.mxu0 %v438
  %518 = vmatprep.subr.bf16.mxu0 0
  %519 = vmatpush2.bf16.msra.mxu0 %v453
  %520 = vmatprep.subr.bf16.mxu0 0
  %521 = vmatpush2.bf16.msra.mxu0 %v452
  %522 = vmatprep.subr.bf16.mxu0 0
  %523 = vmatpush2.bf16.msra.mxu0 %v451
  %524 = vmatprep.subr.bf16.mxu0 0
  %525 = vmatpush2.bf16.msra.mxu0 %v450
  %526 = vmatprep.subr.bf16.mxu0 0
  %527 = vmatpush2.bf16.msra.mxu0 %v449
  %528 = vmatprep.subr.bf16.mxu0 0
  %529 = vmatpush2.bf16.msra.mxu0 %v448
  %530 = vmatprep.subr.bf16.mxu0 0
  %531 = vmatpush2.bf16.msra.mxu0 %v447
  %532 = vmatprep.subr.bf16.mxu0 0
  %533 = vmatpush2.bf16.msra.mxu0 %v446
  %534 = vmatprep.mubr.bf16.mxu0 %v247
  %535 = vmatmul.mubr.bf16.gmra.mxu0 %v246
  %v536 = vpop.f32.mrf.mxu0
  %v537 = vadd.f32 0.0, %v536
  %v538 = vpop.f32.mrf.mxu0
  %v539 = vpop.f32.mrf.mxu0
  %v540 = vadd.f32 0.0, %v539
  %v541 = vpop.f32.mrf.mxu0
  %542 = vmatprep.mubr.bf16.mxu0 %v251
  %543 = vmatmul.mubr.bf16.gmra.mxu0 %v250
  %v544 = vpop.f32.mrf.mxu0
  %v545 = vadd.f32 0.0, %v544
  %v546 = vpop.f32.mrf.mxu0
  %v547 = vpop.f32.mrf.mxu0
  %v548 = vadd.f32 0.0, %v547
  %v549 = vpop.f32.mrf.mxu0
  %550 = vmatprep.mubr.bf16.mxu0 %v255
  %551 = vmatmul.mubr.bf16.gmra.mxu0 %v254
  %v552 = vpop.f32.mrf.mxu0
  %v553 = vadd.f32 0.0, %v552
  %v554 = vpop.f32.mrf.mxu0
  %v555 = vpop.f32.mrf.mxu0
  %v556 = vadd.f32 0.0, %v555
  %v557 = vpop.f32.mrf.mxu0
  %558 = vmatprep.mubr.bf16.mxu0 %v259
  %559 = vmatmul.mubr.bf16.gmra.mxu0 %v258
  %v560 = vpop.f32.mrf.mxu0
  %v561 = vadd.f32 0.0, %v560
  %v562 = vpop.f32.mrf.mxu0
  %v563 = vpop.f32.mrf.mxu0
  %v564 = vadd.f32 0.0, %v563
  %v565 = vpop.f32.mrf.mxu0
  %566 = vmatprep.mubr.bf16.mxu0 %v263
  %567 = vmatmul.mubr.bf16.gmra.mxu0 %v262
  %v568 = vpop.f32.mrf.mxu0
  %v569 = vadd.f32 0.0, %v568
  %v570 = vpop.f32.mrf.mxu0
  %v571 = vpop.f32.mrf.mxu0
  %v572 = vadd.f32 0.0, %v571
  %v573 = vpop.f32.mrf.mxu0
  %574 = vmatprep.mubr.bf16.mxu0 %v267
  %575 = vmatmul.mubr.bf16.gmra.mxu0 %v266
  %v576 = vpop.f32.mrf.mxu0
  %v577 = vadd.f32 0.0, %v576
  %v578 = vpop.f32.mrf.mxu0
  %v579 = vpop.f32.mrf.mxu0
  %v580 = vadd.f32 0.0, %v579
  %v581 = vpop.f32.mrf.mxu0
  %582 = vmatprep.mubr.bf16.mxu0 %v271
  %583 = vmatmul.mubr.bf16.gmra.mxu0 %v270
  %v584 = vpop.f32.mrf.mxu0
  %v585 = vadd.f32 0.0, %v584
  %v586 = vpop.f32.mrf.mxu0
  %v587 = vpop.f32.mrf.mxu0
  %v588 = vadd.f32 0.0, %v587
  %v589 = vpop.f32.mrf.mxu0
  %590 = vmatprep.mubr.bf16.mxu0 %v275
  %591 = vmatmul.mubr.bf16.gmra.mxu0 %v274
  %v592 = vpop.f32.mrf.mxu0
  %v593 = vadd.f32 0.0, %v592
  %v594 = vpop.f32.mrf.mxu0
  %v595 = vpop.f32.mrf.mxu0
  %v596 = vadd.f32 0.0, %v595
  %v597 = vpop.f32.mrf.mxu0
  %598 = vdwg.mxu0
  %599 = vmatprep.subr.bf16.mxu0 0
  %600 = vmatpush1.bf16.msra.mxu0 %v461
  %601 = vmatprep.subr.bf16.mxu0 0
  %602 = vmatpush1.bf16.msra.mxu0 %v460
  %603 = vmatprep.subr.bf16.mxu0 0
  %604 = vmatpush1.bf16.msra.mxu0 %v459
  %605 = vmatprep.subr.bf16.mxu0 0
  %606 = vmatpush1.bf16.msra.mxu0 %v458
  %607 = vmatprep.subr.bf16.mxu0 0
  %608 = vmatpush1.bf16.msra.mxu0 %v457
  %609 = vmatprep.subr.bf16.mxu0 0
  %610 = vmatpush1.bf16.msra.mxu0 %v456
  %611 = vmatprep.subr.bf16.mxu0 0
  %612 = vmatpush1.bf16.msra.mxu0 %v455
  %613 = vmatprep.subr.bf16.mxu0 0
  %614 = vmatpush1.bf16.msra.mxu0 %v454
  %615 = vmatprep.subr.bf16.mxu0 0
  %616 = vmatpush2.bf16.msra.mxu0 %v469
  %617 = vmatprep.subr.bf16.mxu0 0
  %618 = vmatpush2.bf16.msra.mxu0 %v468
  %619 = vmatprep.subr.bf16.mxu0 0
  %620 = vmatpush2.bf16.msra.mxu0 %v467
  %621 = vmatprep.subr.bf16.mxu0 0
  %622 = vmatpush2.bf16.msra.mxu0 %v466
  %623 = vmatprep.subr.bf16.mxu0 0
  %624 = vmatpush2.bf16.msra.mxu0 %v465
  %625 = vmatprep.subr.bf16.mxu0 0
  %626 = vmatpush2.bf16.msra.mxu0 %v464
  %627 = vmatprep.subr.bf16.mxu0 0
  %628 = vmatpush2.bf16.msra.mxu0 %v463
  %629 = vmatprep.subr.bf16.mxu0 0
  %630 = vmatpush2.bf16.msra.mxu0 %v462
  %631 = vmatprep.mubr.bf16.mxu0 %v249
  %632 = vmatmul.mubr.bf16.gmra.mxu0 %v248
  %v633 = vpop.f32.mrf.mxu0
  %v634 = vadd.f32 %v537, %v633
  %v635 = vpop.f32.mrf.mxu0
  %v636 = vpop.f32.mrf.mxu0
  %v637 = vadd.f32 %v540, %v636
  %v638 = vpop.f32.mrf.mxu0
  %639 = vmatprep.mubr.bf16.mxu0 %v253
  %640 = vmatmul.mubr.bf16.gmra.mxu0 %v252
  %v641 = vpop.f32.mrf.mxu0
  %v642 = vadd.f32 %v545, %v641
  %v643 = vpop.f32.mrf.mxu0
  %v644 = vpop.f32.mrf.mxu0
  %v645 = vadd.f32 %v548, %v644
  %v646 = vpop.f32.mrf.mxu0
  %647 = vmatprep.mubr.bf16.mxu0 %v257
  %648 = vmatmul.mubr.bf16.gmra.mxu0 %v256
  %v649 = vpop.f32.mrf.mxu0
  %v650 = vadd.f32 %v553, %v649
  %v651 = vpop.f32.mrf.mxu0
  %v652 = vpop.f32.mrf.mxu0
  %v653 = vadd.f32 %v556, %v652
  %v654 = vpop.f32.mrf.mxu0
  %655 = vmatprep.mubr.bf16.mxu0 %v261
  %656 = vmatmul.mubr.bf16.gmra.mxu0 %v260
  %v657 = vpop.f32.mrf.mxu0
  %v658 = vadd.f32 %v561, %v657
  %v659 = vpop.f32.mrf.mxu0
  %v660 = vpop.f32.mrf.mxu0
  %v661 = vadd.f32 %v564, %v660
  %v662 = vpop.f32.mrf.mxu0
  %663 = vmatprep.mubr.bf16.mxu0 %v265
  %664 = vmatmul.mubr.bf16.gmra.mxu0 %v264
  %v665 = vpop.f32.mrf.mxu0
  %v666 = vadd.f32 %v569, %v665
  %v667 = vpop.f32.mrf.mxu0
  %v668 = vpop.f32.mrf.mxu0
  %v669 = vadd.f32 %v572, %v668
  %v670 = vpop.f32.mrf.mxu0
  %671 = vmatprep.mubr.bf16.mxu0 %v269
  %672 = vmatmul.mubr.bf16.gmra.mxu0 %v268
  %v673 = vpop.f32.mrf.mxu0
  %v674 = vadd.f32 %v577, %v673
  %v675 = vpop.f32.mrf.mxu0
  %v676 = vpop.f32.mrf.mxu0
  %v677 = vadd.f32 %v580, %v676
  %v678 = vpop.f32.mrf.mxu0
  %679 = vmatprep.mubr.bf16.mxu0 %v273
  %680 = vmatmul.mubr.bf16.gmra.mxu0 %v272
  %v681 = vpop.f32.mrf.mxu0
  %v682 = vadd.f32 %v585, %v681
  %v683 = vpop.f32.mrf.mxu0
  %v684 = vpop.f32.mrf.mxu0
  %v685 = vadd.f32 %v588, %v684
  %v686 = vpop.f32.mrf.mxu0
  %687 = vmatprep.mubr.bf16.mxu0 %v277
  %688 = vmatmul.mubr.bf16.gmra.mxu0 %v276
  %v689 = vpop.f32.mrf.mxu0
  %v690 = vadd.f32 %v593, %v689
  %v691 = vpop.f32.mrf.mxu0
  %v692 = vpop.f32.mrf.mxu0
  %v693 = vadd.f32 %v596, %v692
  %v694 = vpop.f32.mrf.mxu0
  %695 = vdwg.mxu0
  %v696 = vadd.f32 %v38, %v634
  %v697 = vadd.f32 %v39, %v637
  %v698 = vadd.f32 %v40, %v642
  %v699 = vadd.f32 %v41, %v645
  %v700 = vadd.f32 %v42, %v650
  %v701 = vadd.f32 %v43, %v653
  %v702 = vadd.f32 %v44, %v658
  %v703 = vadd.f32 %v45, %v661
  %v704 = vadd.f32 %v46, %v666
  %v705 = vadd.f32 %v47, %v669
  %v706 = vadd.f32 %v48, %v674
  %v707 = vadd.f32 %v49, %v677
  %v708 = vadd.f32 %v50, %v682
  %v709 = vadd.f32 %v51, %v685
  %v710 = vadd.f32 %v52, %v690
  %v711 = vadd.f32 %v53, %v693
  %712 = vst [vmem:[#allocation2] sm:$0xff] %v696
  %713 = vst [vmem:[#allocation2 + $0x8] sm:$0xff] %v697
  %714 = vst [vmem:[#allocation2 + $0x10] sm:$0xff] %v698
  %715 = vst [vmem:[#allocation2 + $0x18] sm:$0xff] %v699
  %716 = vst [vmem:[#allocation2 + $0x20] sm:$0xff] %v700
  %717 = vst [vmem:[#allocation2 + $0x28] sm:$0xff] %v701
  %718 = vst [vmem:[#allocation2 + $0x30] sm:$0xff] %v702
  %719 = vst [vmem:[#allocation2 + $0x38] sm:$0xff] %v703
  %720 = vst [vmem:[#allocation2 + $0x40] sm:$0xff] %v704
  %721 = vst [vmem:[#allocation2 + $0x48] sm:$0xff] %v705
  %722 = vst [vmem:[#allocation2 + $0x50] sm:$0xff] %v706
  %723 = vst [vmem:[#allocation2 + $0x58] sm:$0xff] %v707
  %724 = vst [vmem:[#allocation2 + $0x60] sm:$0xff] %v708
  %725 = vst [vmem:[#allocation2 + $0x68] sm:$0xff] %v709
  %726 = vst [vmem:[#allocation2 + $0x70] sm:$0xff] %v710
  %727 = vst [vmem:[#allocation2 + $0x78] sm:$0xff] %v711
  // Predicated region
  $region22: #{deepspeech2_forward.7} parent=0 // pred_check
    %p728 = pneg %p18
  $region23: #{deepspeech2_forward.7} parent=0 // pred_check_branch
    %730 = sbr.rel (%p728) target = $region25
  $region24: #{deepspeech2_forward.7} parent=0 // pred_region
    %v731 = vld [vmem:[#allocation2] sm:$0xff]
    %v732 = vld [vmem:[#allocation2 + $0x8] sm:$0xff]
    %v733 = vld [vmem:[#allocation2 + $0x10] sm:$0xff]
    %v734 = vld [vmem:[#allocation2 + $0x18] sm:$0xff]
    %v735 = vld [vmem:[#allocation2 + $0x20] sm:$0xff]
    %v736 = vld [vmem:[#allocation2 + $0x28] sm:$0xff]
    %v737 = vld [vmem:[#allocation2 + $0x30] sm:$0xff]
    %v738 = vld [vmem:[#allocation2 + $0x38] sm:$0xff]
    %v739 = vld [vmem:[#allocation2 + $0x40] sm:$0xff]
    %v740 = vld [vmem:[#allocation2 + $0x48] sm:$0xff]
    %v741 = vld [vmem:[#allocation2 + $0x50] sm:$0xff]
    %v742 = vld [vmem:[#allocation2 + $0x58] sm:$0xff]
    %v743 = vld [vmem:[#allocation2 + $0x60] sm:$0xff]
    %v744 = vld [vmem:[#allocation2 + $0x68] sm:$0xff]
    %v745 = vld [vmem:[#allocation2 + $0x70] sm:$0xff]
    %v746 = vld [vmem:[#allocation2 + $0x78] sm:$0xff]
    %v747 = vld [vmem:[%s2] sm:$0x1]
    %v749 = vlaneseq
    %v750 = vshrl.u32 %v749, 7
    %v751 = vsub.s32 0, %v750
    %v752 = vrot.slane %v747, %v751
    %v754 = vmul.f32 %v731, %v752
    %v755 = vmul.f32 %v732, %v752
    %v756 = vmul.f32 %v733, %v752
    %v757 = vmul.f32 %v734, %v752
    %v758 = vmul.f32 %v735, %v752
    %v759 = vmul.f32 %v736, %v752
    %v760 = vmul.f32 %v737, %v752
    %v761 = vmul.f32 %v738, %v752
    %v762 = vmul.f32 %v739, %v752
    %v763 = vmul.f32 %v740, %v752
    %v764 = vmul.f32 %v741, %v752
    %v765 = vmul.f32 %v742, %v752
    %v766 = vmul.f32 %v743, %v752
    %v767 = vmul.f32 %v744, %v752
    %v768 = vmul.f32 %v745, %v752
    %v769 = vmul.f32 %v746, %v752
    %v770 = vld [vmem:[%s3] sm:$0x1]
    %v772 = vlaneseq
    %v773 = vshrl.u32 %v772, 7
    %v774 = vsub.s32 0, %v773
    %v775 = vrot.slane %v770, %v774
    %v777 = vadd.f32 %v754, %v775
    %v778 = vadd.f32 %v755, %v775
    %v779 = vadd.f32 %v756, %v775
    %v780 = vadd.f32 %v757, %v775
    %v781 = vadd.f32 %v758, %v775
    %v782 = vadd.f32 %v759, %v775
    %v783 = vadd.f32 %v760, %v775
    %v784 = vadd.f32 %v761, %v775
    %v785 = vadd.f32 %v762, %v775
    %v786 = vadd.f32 %v763, %v775
    %v787 = vadd.f32 %v764, %v775
    %v788 = vadd.f32 %v765, %v775
    %v789 = vadd.f32 %v766, %v775
    %v790 = vadd.f32 %v767, %v775
    %v791 = vadd.f32 %v768, %v775
    %v792 = vadd.f32 %v769, %v775
    %v793 = vmax.f32 %v777, 0.0
    %v794 = vmax.f32 %v778, 0.0
    %v795 = vmax.f32 %v779, 0.0
    %v796 = vmax.f32 %v780, 0.0
    %v797 = vmax.f32 %v781, 0.0
    %v798 = vmax.f32 %v782, 0.0
    %v799 = vmax.f32 %v783, 0.0
    %v800 = vmax.f32 %v784, 0.0
    %v801 = vmax.f32 %v785, 0.0
    %v802 = vmax.f32 %v786, 0.0
    %v803 = vmax.f32 %v787, 0.0
    %v804 = vmax.f32 %v788, 0.0
    %v805 = vmax.f32 %v789, 0.0
    %v806 = vmax.f32 %v790, 0.0
    %v807 = vmax.f32 %v791, 0.0
    %v808 = vmax.f32 %v792, 0.0
    %v809 = vmin.f32 %v793, 20.0
    %v810 = vmin.f32 %v794, 20.0
    %v811 = vmin.f32 %v795, 20.0
    %v812 = vmin.f32 %v796, 20.0
    %v813 = vmin.f32 %v797, 20.0
    %v814 = vmin.f32 %v798, 20.0
    %v815 = vmin.f32 %v799, 20.0
    %v816 = vmin.f32 %v800, 20.0
    %v817 = vmin.f32 %v801, 20.0
    %v818 = vmin.f32 %v802, 20.0
    %v819 = vmin.f32 %v803, 20.0
    %v820 = vmin.f32 %v804, 20.0
    %v821 = vmin.f32 %v805, 20.0
    %v822 = vmin.f32 %v806, 20.0
    %v823 = vmin.f32 %v807, 20.0
    %v824 = vmin.f32 %v808, 20.0
    %v825 = vpack.c.bf16 %v810, %v809
    %v826 = vpack.c.bf16 %v812, %v811
    %v827 = vpack.c.bf16 %v814, %v813
    %v828 = vpack.c.bf16 %v816, %v815
    %v829 = vpack.c.bf16 %v818, %v817
    %v830 = vpack.c.bf16 %v820, %v819
    %v831 = vpack.c.bf16 %v822, %v821
    %v832 = vpack.c.bf16 %v824, %v823
    %v841 = vunpack.c.l.b16 %v825
    %v842 = vunpack.c.h.b16 %v825
    %v843 = vunpack.c.l.b16 %v826
    %v844 = vunpack.c.h.b16 %v826
    %v845 = vunpack.c.l.b16 %v827
    %v846 = vunpack.c.h.b16 %v827
    %v847 = vunpack.c.l.b16 %v828
    %v848 = vunpack.c.h.b16 %v828
    %v849 = vunpack.c.l.b16 %v829
    %v850 = vunpack.c.h.b16 %v829
    %v851 = vunpack.c.l.b16 %v830
    %v852 = vunpack.c.h.b16 %v830
    %v853 = vunpack.c.l.b16 %v831
    %v854 = vunpack.c.h.b16 %v831
    %v855 = vunpack.c.l.b16 %v832
    %v856 = vunpack.c.h.b16 %v832
    %v857 = vpack.c.b16 %v841, %v841
    %v858 = vpack.c.b16 %v842, %v842
    %v859 = vpack.c.b16 %v843, %v843
    %v860 = vpack.c.b16 %v844, %v844
    %v861 = vpack.c.b16 %v845, %v845
    %v862 = vpack.c.b16 %v846, %v846
    %v863 = vpack.c.b16 %v847, %v847
    %v864 = vpack.c.b16 %v848, %v848
    %v865 = vpack.c.b16 %v849, %v849
    %v866 = vpack.c.b16 %v850, %v850
    %v867 = vpack.c.b16 %v851, %v851
    %v868 = vpack.c.b16 %v852, %v852
    %v869 = vpack.c.b16 %v853, %v853
    %v870 = vpack.c.b16 %v854, %v854
    %v871 = vpack.c.b16 %v855, %v855
    %v872 = vpack.c.b16 %v856, %v856
    %889 = vst [vmem:[%s4] sm:$0xf] %v857
    %890 = vst [vmem:[%s4 + $0x4] sm:$0xf] %v858
    %891 = vst [vmem:[%s4 + $0x8] sm:$0xf] %v859
    %892 = vst [vmem:[%s4 + $0xc] sm:$0xf] %v860
    %893 = vst [vmem:[%s4 + $0x10] sm:$0xf] %v861
    %894 = vst [vmem:[%s4 + $0x14] sm:$0xf] %v862
    %895 = vst [vmem:[%s4 + $0x18] sm:$0xf] %v863
    %896 = vst [vmem:[%s4 + $0x1c] sm:$0xf] %v864
    %897 = vst [vmem:[%s4 + $0x20] sm:$0xf] %v865
    %898 = vst [vmem:[%s4 + $0x24] sm:$0xf] %v866
    %899 = vst [vmem:[%s4 + $0x28] sm:$0xf] %v867
    %900 = vst [vmem:[%s4 + $0x2c] sm:$0xf] %v868
    %901 = vst [vmem:[%s4 + $0x30] sm:$0xf] %v869
    %902 = vst [vmem:[%s4 + $0x34] sm:$0xf] %v870
    %903 = vst [vmem:[%s4 + $0x38] sm:$0xf] %v871
    %904 = vst [vmem:[%s4 + $0x3c] sm:$0xf] %v872
  $region25: #{deepspeech2_forward.7} parent=0 // pred_fallthru
    _
  // Predicated region
  $region26: #{deepspeech2_forward.7} parent=0 // pred_check
    _
  $region27: #{deepspeech2_forward.7} parent=0 // pred_check_branch
    %906 = sbr.rel (0) target = $region29
  $region28: #{deepspeech2_forward.7} parent=0 // pred_region
    _
  $region29: #{deepspeech2_forward.7} parent=0 // pred_fallthru
    _
  // Predicated region
  $region30: #{deepspeech2_forward.7} parent=0 // pred_check
    _
  $region31: #{deepspeech2_forward.7} parent=0 // pred_check_branch
    %908 = sbr.rel (0) target = $region33
  $region32: #{deepspeech2_forward.7} parent=0 // pred_region
    _
  $region33: #{deepspeech2_forward.7} parent=0 // pred_fallthru
    _

// kernel: deepspeech2_forward.8
$region0: #{deepspeech2_forward.8}
  #allocation0 [shape = 'u32[]', space=smem, size = 0x4, offset = 0x4, fixed_abs, tag = 'smem constant byte address 0x4 - core index']
  #allocation1 [shape = 'u32[144,128]{1,0:T(1,128)}', space=vmem, size = 0x12000, scoped, tag = 'internal scratch']
  #allocation2 [shape = 'f32[64,128]{1,0:T(8,128)}', space=vmem, size = 0x8000, scoped, tag = 'scratch operand']
  %s0 = inlined_call_operand.vmem [shape: bf16[64,8192], index: 0, kind: input, shape index: {}]
  %s1 = inlined_call_operand.vmem [shape: bf16[8192,128], index: 1, kind: input, shape index: {}]
  %s2 = inlined_call_operand.vmem [shape: f32[1,128], index: 2, kind: input, shape index: {}]
  %s3 = inlined_call_operand.vmem [shape: f32[1,128], index: 3, kind: input, shape index: {}]
  %s4 = inlined_call_operand.vmem [shape: bf16[64,128], index: 4, kind: output, shape index: {}]
  %s5 = sld [smem:[#allocation0]]
  $region80: #{deepspeech2_forward.8} parent=0
    _
  %s7 = ssub.s32 1, %s5
  %s8 = scalar_select 0, %s7, %s5
  $region1: #{deepspeech2_forward.8} parent=0
    #allocation3 [shape = 'u8[262144]{0}', space=vmem, size = 0x40000, scoped, tag = 'input window, operand 0']
    loop: start=0, step=1, limit=10
    $region2: #{deepspeech2_forward.8} parent=1 // loop_pre_header
      _
    $region3: #{deepspeech2_forward.8} parent=1 // loop_header
      %s10 = sphi 0, %s14
      %p11 = scmp.ge.s32.totalorder %s10, 10
      %s17 = sphi 0, %s36
      %s18 = sphi 0, %s32
      %s19 = sphi 0, %s28
      %s20 = sphi 0, %s17
      %s21 = sphi 0, %s18
      %s22 = sphi 0, %s19
      %s23 = sphi 0, %s20
      %s24 = sphi 0, %s21
      %s25 = sphi 0, %s22
      %s41 = sphi 0, %s43
      %s44 = sphi 0, %s41
      %s45 = sphi 0, %s44
      %s61 = sphi 0, %s45
      %s69 = sphi 0, %s71
      %s72 = sphi 0, %s69
      %s73 = sphi 0, %s72
      %s89 = sphi 0, %s73
      %s95 = sphi 0, %s97
      %s98 = sphi 0, %s95
      %s99 = sphi 0, %s98
      %s115 = sphi 0, %s99
      %s121 = sphi 0, %s123
      %s124 = sphi 0, %s121
      %s125 = sphi 0, %s124
      %s141 = sphi 0, %s125
      %s149 = sphi 0, %s151
      %s152 = sphi 0, %s149
      %s153 = sphi 0, %s152
      %s169 = sphi 0, %s153
    $region4: #{deepspeech2_forward.8} parent=1 // loop_header_branch
      %13 = sbr.rel (%p11) target = $region8
    $region5: #{deepspeech2_forward.8} parent=1 // loop_body
      %s15 = ssub.s32 %s10, 1
      %s16 = ssub.s32 %s10, 2
      %s26 = sadd.s32 1, %s19
      %p27 = scmp.ge.s32.totalorder %s26, 8
      %s28 = scalar_select %p27, 0, %s26
      %s29 = sadd.s32 1, %s18
      %s30 = scalar_select %p27, %s29, %s18
      %p31 = scmp.ge.s32.totalorder %s30, 1
      %s32 = scalar_select %p31, 0, %s30
      %s33 = sadd.s32 1, %s17
      %s34 = scalar_select %p31, %s33, %s17
      %p35 = scmp.ge.s32.totalorder %s34, 1
      %s36 = scalar_select %p35, 0, %s34
      %s37 = ssub.s32 %s17, %s36
      %s38 = ssub.s32 %s19, %s28
      %s39 = sor.u32 %s37, %s38
      %p40 = scmp.eq.s32.totalorder %s39, 0
      %s42 = sadd.s32 %s41, 1
      %s43 = scalar_select %p40, %s41, %s42
      %p46 = pneg %p40
      %p47 = scmp.eq.s32.totalorder %s10, 7
      %p48 = por %p46, %p47
      %p49 = scmp.ne.s32.totalorder %s41, %s44
      %p50 = scmp.eq.s32.totalorder %s10, 0
      %p51 = por %p49, %p50
      %p52 = scmp.ne.s32.totalorder %s41, %s44
      %p53 = scmp.eq.s32.totalorder %s15, 7
      %p54 = por %p52, %p53
      %p55 = scmp.ne.s32.totalorder %s44, %s45
      %p56 = scmp.eq.s32.totalorder %s15, 0
      %p57 = por %p55, %p56
      %p58 = scmp.ne.s32.totalorder %s44, %s45
      %p59 = scmp.eq.s32.totalorder %s16, 7
      %p60 = por %p58, %p59
      %p62 = scmp.ne.s32.totalorder %s45, %s61
      %p63 = scmp.eq.s32.totalorder %s16, 0
      %p64 = por %p62, %p63
      %s65 = ssub.s32 %s19, %s28
      %s66 = ssub.s32 %s18, %s32
      %s67 = sor.u32 %s65, %s66
      %p68 = scmp.eq.s32.totalorder %s67, 0
      %s70 = sadd.s32 %s69, 1
      %s71 = scalar_select %p68, %s69, %s70
      %p74 = pneg %p68
      %p75 = scmp.eq.s32.totalorder %s10, 7
      %p76 = por %p74, %p75
      %p77 = scmp.ne.s32.totalorder %s69, %s72
      %p78 = scmp.eq.s32.totalorder %s10, 0
      %p79 = por %p77, %p78
      %p80 = scmp.ne.s32.totalorder %s69, %s72
      %p81 = scmp.eq.s32.totalorder %s15, 7
      %p82 = por %p80, %p81
      %p83 = scmp.ne.s32.totalorder %s72, %s73
      %p84 = scmp.eq.s32.totalorder %s15, 0
      %p85 = por %p83, %p84
      %p86 = scmp.ne.s32.totalorder %s72, %s73
      %p87 = scmp.eq.s32.totalorder %s16, 7
      %p88 = por %p86, %p87
      %p90 = scmp.ne.s32.totalorder %s73, %s89
      %p91 = scmp.eq.s32.totalorder %s16, 0
      %p92 = por %p90, %p91
      %s93 = ssub.s32 %s18, %s32
      %p94 = scmp.eq.s32.totalorder %s93, 0
      %s96 = sadd.s32 %s95, 1
      %s97 = scalar_select %p94, %s95, %s96
      %p100 = pneg %p94
      %p101 = scmp.eq.s32.totalorder %s10, 7
      %p102 = por %p100, %p101
      %p103 = scmp.ne.s32.totalorder %s95, %s98
      %p104 = scmp.eq.s32.totalorder %s10, 0
      %p105 = por %p103, %p104
      %p106 = scmp.ne.s32.totalorder %s95, %s98
      %p107 = scmp.eq.s32.totalorder %s15, 7
      %p108 = por %p106, %p107
      %p109 = scmp.ne.s32.totalorder %s98, %s99
      %p110 = scmp.eq.s32.totalorder %s15, 0
      %p111 = por %p109, %p110
      %p112 = scmp.ne.s32.totalorder %s98, %s99
      %p113 = scmp.eq.s32.totalorder %s16, 7
      %p114 = por %p112, %p113
      %p116 = scmp.ne.s32.totalorder %s99, %s115
      %p117 = scmp.eq.s32.totalorder %s16, 0
      %p118 = por %p116, %p117
      %s119 = ssub.s32 %s18, %s32
      %p120 = scmp.eq.s32.totalorder %s119, 0
      %s122 = sadd.s32 %s121, 1
      %s123 = scalar_select %p120, %s121, %s122
      %p126 = pneg %p120
      %p127 = scmp.eq.s32.totalorder %s10, 7
      %p128 = por %p126, %p127
      %p129 = scmp.ne.s32.totalorder %s121, %s124
      %p130 = scmp.eq.s32.totalorder %s10, 0
      %p131 = por %p129, %p130
      %p132 = scmp.ne.s32.totalorder %s121, %s124
      %p133 = scmp.eq.s32.totalorder %s15, 7
      %p134 = por %p132, %p133
      %p135 = scmp.ne.s32.totalorder %s124, %s125
      %p136 = scmp.eq.s32.totalorder %s15, 0
      %p137 = por %p135, %p136
      %p138 = scmp.ne.s32.totalorder %s124, %s125
      %p139 = scmp.eq.s32.totalorder %s16, 7
      %p140 = por %p138, %p139
      %p142 = scmp.ne.s32.totalorder %s125, %s141
      %p143 = scmp.eq.s32.totalorder %s16, 0
      %p144 = por %p142, %p143
      %s145 = ssub.s32 %s17, %s36
      %s146 = ssub.s32 %s18, %s32
      %s147 = sor.u32 %s145, %s146
      %p148 = scmp.eq.s32.totalorder %s147, 0
      %s150 = sadd.s32 %s149, 1
      %s151 = scalar_select %p148, %s149, %s150
      %p154 = pneg %p148
      %p155 = scmp.eq.s32.totalorder %s10, 7
      %p156 = por %p154, %p155
      %p157 = scmp.ne.s32.totalorder %s149, %s152
      %p158 = scmp.eq.s32.totalorder %s10, 0
      %p159 = por %p157, %p158
      %p160 = scmp.ne.s32.totalorder %s149, %s152
      %p161 = scmp.eq.s32.totalorder %s15, 7
      %p162 = por %p160, %p161
      %p163 = scmp.ne.s32.totalorder %s152, %s153
      %p164 = scmp.eq.s32.totalorder %s15, 0
      %p165 = por %p163, %p164
      %p166 = scmp.ne.s32.totalorder %s152, %s153
      %p167 = scmp.eq.s32.totalorder %s16, 7
      %p168 = por %p166, %p167
      %p170 = scmp.ne.s32.totalorder %s153, %s169
      %p171 = scmp.eq.s32.totalorder %s16, 0
      %p172 = por %p170, %p171
      %p173 = scmp.le.s32.totalorder 1, %s10
      %p174 = scmp.lt.s32.totalorder %s10, 9
      %p175 = pnand %p173, %p174
      %p176 = pneg %p175
      // Predicated region
      $region9: #{deepspeech2_forward.8} parent=5 // pred_check
        _
      $region10: #{deepspeech2_forward.8} parent=5 // pred_check_branch
        %178 = sbr.rel (%p175) target = $region12
      $region11: #{deepspeech2_forward.8} parent=5 // pred_region
        %s179 = ssub.s32 %s10, 1
        // Predicated region
        $region13: #{deepspeech2_forward.8} parent=11 // pred_check
          %p180 = pneg %p111
        $region14: #{deepspeech2_forward.8} parent=11 // pred_check_branch
          %182 = sbr.rel (%p180) target = $region16
        $region15: #{deepspeech2_forward.8} parent=11 // pred_region
          %p183 = scmp.lt.s32.totalorder %s21, 0
          %s184 = scalar_select %p183, %s21, 0
          %s185 = scalar_lea.vmem %s2, %s184
        $region16: #{deepspeech2_forward.8} parent=11 // pred_fallthru
          _
        // Predicated region
        $region17: #{deepspeech2_forward.8} parent=11 // pred_check
          %p186 = pneg %p137
        $region18: #{deepspeech2_forward.8} parent=11 // pred_check_branch
          %188 = sbr.rel (%p186) target = $region20
        $region19: #{deepspeech2_forward.8} parent=11 // pred_region
          %p189 = scmp.lt.s32.totalorder %s21, 0
          %s190 = scalar_select %p189, %s21, 0
          %s191 = scalar_lea.vmem %s3, %s190
        $region20: #{deepspeech2_forward.8} parent=11 // pred_fallthru
          _
      $region12: #{deepspeech2_forward.8} parent=5 // pred_fallthru
        _
      %p192 = scmp.lt.s32.totalorder %s10, 8
      // Predicated region
      $region21: #{deepspeech2_forward.8} parent=5 // pred_check
        %p193 = pneg %p192
      $region22: #{deepspeech2_forward.8} parent=5 // pred_check_branch
        %195 = sbr.rel (%p193) target = $region24
      $region23: #{deepspeech2_forward.8} parent=5 // pred_region
        // Predicated region
        $region25: #{deepspeech2_forward.8} parent=23 // pred_check
          %p196 = pneg %p51
        $region26: #{deepspeech2_forward.8} parent=23 // pred_check_branch
          %198 = sbr.rel (%p196) target = $region28
        $region27: #{deepspeech2_forward.8} parent=23 // pred_region
          %s199 = sand.u32 %s41, 1
          %s200 = sand.u32 %s41, 1
          %s201 = smul.addr %s200, 256
          %s202 = scalar_lea.vmem [#allocation3], %s201
          %s203 = smul.u32 8, %s17
          %s204 = smul.u32 8, %s19
          %s205 = smul.addr %s203, 64
          %s206 = sadd.s32 %s204, %s205
          %s207 = smul.addr %s206, 4
          %s208 = scalar_lea.vmem %s0, %s207
          // Predicated region
          $region29: #{deepspeech2_forward.8} parent=27 // pred_check
            _
          $region30: #{deepspeech2_forward.8} parent=27 // pred_check_branch
            %210 = sbr.rel (0) target = $region32
          $region31: #{deepspeech2_forward.8} parent=27 // pred_region
            // Predicated region
            $region33: #{deepspeech2_forward.8} parent=31 // pred_check
              _
            $region34: #{deepspeech2_forward.8} parent=31 // pred_check_branch
              %212 = sbr.rel (0) target = $region36
            $region35: #{deepspeech2_forward.8} parent=31 // pred_region
              loop: start=0, step=1, limit=1
              $region37: #{deepspeech2_forward.8} parent=35 // loop_pre_header
                _
              $region38: #{deepspeech2_forward.8} parent=35 // loop_header
                %s214 = sphi 0, %s218
                %p215 = scmp.ge.s32.totalorder %s214, 1
                %s219 = sphi %s208, %s208
                %s220 = sphi %s202, %s202
              $region39: #{deepspeech2_forward.8} parent=35 // loop_header_branch
                %217 = sbr.rel (%p215) target = $region43
              $region40: #{deepspeech2_forward.8} parent=35 // loop_body
                %v221 = vld [vmem:[%s219] sm:$0xff]
                %222 = vst [vmem:[%s220] sm:$0xff] %v221
                %v223 = vld [vmem:[%s219 + $0x8] sm:$0xff]
                %224 = vst [vmem:[%s220 + $0x8] sm:$0xff] %v223
                %v225 = vld [vmem:[%s219 + $0x10] sm:$0xff]
                %226 = vst [vmem:[%s220 + $0x10] sm:$0xff] %v225
                %v227 = vld [vmem:[%s219 + $0x18] sm:$0xff]
                %228 = vst [vmem:[%s220 + $0x18] sm:$0xff] %v227
                %v229 = vld [vmem:[%s219 + $0x100] sm:$0xff]
                %230 = vst [vmem:[%s220 + $0x20] sm:$0xff] %v229
                %v231 = vld [vmem:[%s219 + $0x108] sm:$0xff]
                %232 = vst [vmem:[%s220 + $0x28] sm:$0xff] %v231
                %v233 = vld [vmem:[%s219 + $0x110] sm:$0xff]
                %234 = vst [vmem:[%s220 + $0x30] sm:$0xff] %v233
                %v235 = vld [vmem:[%s219 + $0x118] sm:$0xff]
                %236 = vst [vmem:[%s220 + $0x38] sm:$0xff] %v235
                %v237 = vld [vmem:[%s219 + $0x200] sm:$0xff]
                %238 = vst [vmem:[%s220 + $0x40] sm:$0xff] %v237
                %v239 = vld [vmem:[%s219 + $0x208] sm:$0xff]
                %240 = vst [vmem:[%s220 + $0x48] sm:$0xff] %v239
                %v241 = vld [vmem:[%s219 + $0x210] sm:$0xff]
                %242 = vst [vmem:[%s220 + $0x50] sm:$0xff] %v241
                %v243 = vld [vmem:[%s219 + $0x218] sm:$0xff]
                %244 = vst [vmem:[%s220 + $0x58] sm:$0xff] %v243
                %v245 = vld [vmem:[%s219 + $0x300] sm:$0xff]
                %246 = vst [vmem:[%s220 + $0x60] sm:$0xff] %v245
                %v247 = vld [vmem:[%s219 + $0x308] sm:$0xff]
                %248 = vst [vmem:[%s220 + $0x68] sm:$0xff] %v247
                %v249 = vld [vmem:[%s219 + $0x310] sm:$0xff]
                %250 = vst [vmem:[%s220 + $0x70] sm:$0xff] %v249
                %v251 = vld [vmem:[%s219 + $0x318] sm:$0xff]
                %252 = vst [vmem:[%s220 + $0x78] sm:$0xff] %v251
                %v253 = vld [vmem:[%s219 + $0x400] sm:$0xff]
                %254 = vst [vmem:[%s220 + $0x80] sm:$0xff] %v253
                %v255 = vld [vmem:[%s219 + $0x408] sm:$0xff]
                %256 = vst [vmem:[%s220 + $0x88] sm:$0xff] %v255
                %v257 = vld [vmem:[%s219 + $0x410] sm:$0xff]
                %258 = vst [vmem:[%s220 + $0x90] sm:$0xff] %v257
                %v259 = vld [vmem:[%s219 + $0x418] sm:$0xff]
                %260 = vst [vmem:[%s220 + $0x98] sm:$0xff] %v259
                %v261 = vld [vmem:[%s219 + $0x500] sm:$0xff]
                %262 = vst [vmem:[%s220 + $0xa0] sm:$0xff] %v261
                %v263 = vld [vmem:[%s219 + $0x508] sm:$0xff]
                %264 = vst [vmem:[%s220 + $0xa8] sm:$0xff] %v263
                %v265 = vld [vmem:[%s219 + $0x510] sm:$0xff]
                %266 = vst [vmem:[%s220 + $0xb0] sm:$0xff] %v265
                %v267 = vld [vmem:[%s219 + $0x518] sm:$0xff]
                %268 = vst [vmem:[%s220 + $0xb8] sm:$0xff] %v267
                %v269 = vld [vmem:[%s219 + $0x600] sm:$0xff]
                %270 = vst [vmem:[%s220 + $0xc0] sm:$0xff] %v269
                %v271 = vld [vmem:[%s219 + $0x608] sm:$0xff]
                %272 = vst [vmem:[%s220 + $0xc8] sm:$0xff] %v271
                %v273 = vld [vmem:[%s219 + $0x610] sm:$0xff]
                %274 = vst [vmem:[%s220 + $0xd0] sm:$0xff] %v273
                %v275 = vld [vmem:[%s219 + $0x618] sm:$0xff]
                %276 = vst [vmem:[%s220 + $0xd8] sm:$0xff] %v275
                %v277 = vld [vmem:[%s219 + $0x700] sm:$0xff]
                %278 = vst [vmem:[%s220 + $0xe0] sm:$0xff] %v277
                %v279 = vld [vmem:[%s219 + $0x708] sm:$0xff]
                %280 = vst [vmem:[%s220 + $0xe8] sm:$0xff] %v279
                %v281 = vld [vmem:[%s219 + $0x710] sm:$0xff]
                %282 = vst [vmem:[%s220 + $0xf0] sm:$0xff] %v281
                %v283 = vld [vmem:[%s219 + $0x718] sm:$0xff]
                %284 = vst [vmem:[%s220 + $0xf8] sm:$0xff] %v283
              $region41: #{deepspeech2_forward.8} parent=35 // loop_footer
                %s218 = sadd.s32 1, %s214
              $region42: #{deepspeech2_forward.8} parent=35 // loop_footer_branch
                %213 = sbr.rel target = $region38
              $region43: #{deepspeech2_forward.8} parent=35 // loop_exit
                _
            $region36: #{deepspeech2_forward.8} parent=31 // pred_fallthru
              _
            // Predicated region
            $region44: #{deepspeech2_forward.8} parent=31 // pred_check
              _
            $region45: #{deepspeech2_forward.8} parent=31 // pred_check_branch
              %286 = sbr.rel target = $region47
            $region46: #{deepspeech2_forward.8} parent=31 // pred_region
              _
            $region47: #{deepspeech2_forward.8} parent=31 // pred_fallthru
              _
          $region32: #{deepspeech2_forward.8} parent=27 // pred_fallthru
            _
          %287 = vnop
        $region28: #{deepspeech2_forward.8} parent=23 // pred_fallthru
          _
        // Predicated region
        $region48: #{deepspeech2_forward.8} parent=23 // pred_check
          %p288 = pneg %p79
        $region49: #{deepspeech2_forward.8} parent=23 // pred_check_branch
          %290 = sbr.rel (%p288) target = $region51
        $region50: #{deepspeech2_forward.8} parent=23 // pred_region
          %s291 = smul.u32 128, %s19
          %p292 = scmp.lt.s32.totalorder %s291, 1023
          %s293 = scalar_select %p292, %s291, 1023
          %p294 = scmp.lt.s32.totalorder %s18, 0
          %s295 = scalar_select %p294, %s18, 0
          %s296 = sadd.s32 %s295, %s293
          %s297 = smul.addr %s296, 4
          %s298 = scalar_lea.vmem %s1, %s297
          %s299 = smul.u32 128, %s19
        $region51: #{deepspeech2_forward.8} parent=23 // pred_fallthru
          _
      $region24: #{deepspeech2_forward.8} parent=5 // pred_fallthru
        _
      %p300 = scmp.le.s32.totalorder 1, %s10
      %p301 = scmp.lt.s32.totalorder %s10, 9
      %p302 = pnand %p300, %p301
      %p303 = pneg %p302
      // Predicated region
      $region52: #{deepspeech2_forward.8} parent=5 // pred_check
        _
      $region53: #{deepspeech2_forward.8} parent=5 // pred_check_branch
        %305 = sbr.rel (%p302) target = $region55
      $region54: #{deepspeech2_forward.8} parent=5 // pred_region
        %s306 = ssub.s32 %s10, 1
        %s307 = sand.u32 %s44, 1
        %s308 = sand.u32 %s44, 1
        %s309 = smul.addr %s308, 256
        %s310 = scalar_lea.vmem [#allocation3], %s309
        // Predicated region
        $region56: #{deepspeech2_forward.8} parent=54 // pred_check
          %p311 = pneg %p57
        $region57: #{deepspeech2_forward.8} parent=54 // pred_check_branch
          %313 = sbr.rel (%p311) target = $region59
        $region58: #{deepspeech2_forward.8} parent=54 // pred_region
          _
        $region59: #{deepspeech2_forward.8} parent=54 // pred_fallthru
          _
        %s314 = sand.u32 %s44, 1
        %s315 = sand.u32 %s44, 1
        %s316 = smul.addr %s315, 256
        %s317 = scalar_lea.vmem [#allocation3], %s316
        %p318 = pneg %p57
        %p319 = pneg %p54
        %s320 = smul.u32 128, %s22
        %p321 = scmp.lt.s32.totalorder %s320, 1023
        %s322 = scalar_select %p321, %s320, 1023
        %p323 = scmp.lt.s32.totalorder %s21, 0
        %s324 = scalar_select %p323, %s21, 0
        %s325 = sadd.s32 %s324, %s322
        %s326 = smul.addr %s325, 4
        %s327 = scalar_lea.vmem %s1, %s326
        %p328 = pneg %p85
        %p329 = pneg %p82
        %p330 = scmp.lt.s32.totalorder %s21, 0
        %s331 = scalar_select %p330, %s21, 0
        %s332 = scalar_lea.vmem %s2, %s331
        %p333 = pneg %p111
        %p334 = pneg %p108
        %p335 = scmp.lt.s32.totalorder %s21, 0
        %s336 = scalar_select %p335, %s21, 0
        %s337 = scalar_lea.vmem %s3, %s336
        %p338 = pneg %p137
        %p339 = pneg %p134
        %p340 = pneg %p165
        %p341 = pneg %p162
        %s342 = smul.u32 8, %s20
        %p343 = scmp.lt.s32.totalorder %s342, 7
        %s344 = scalar_select %p343, %s342, 7
        %p345 = scmp.lt.s32.totalorder %s21, 0
        %s346 = scalar_select %p345, %s21, 0
        %s347 = sadd.s32 %s346, %s344
        %s348 = smul.addr %s347, 4
        %s349 = scalar_lea.vmem %s4, %s348
        %s350 = smul.u32 8, %s20
        %s351 = smul.u32 8, %s22
        %s352 = smul.u32 128, %s22
        %p353 = scmp.lt.s32.totalorder %s352, 1023
        %s354 = scalar_select %p353, %s352, 1023
        %p355 = scmp.lt.s32.totalorder %s21, 0
        %s356 = scalar_select %p355, %s21, 0
        %s357 = sadd.s32 %s356, %s354
        %s358 = smul.addr %s357, 4
        %s359 = scalar_lea.vmem %s1, %s358
        %s360 = smul.u32 128, %s22
        %p361 = scmp.lt.s32.totalorder %s21, 0
        %s362 = scalar_select %p361, %s21, 0
        %s363 = scalar_lea.vmem %s2, %s362
        %p364 = scmp.lt.s32.totalorder %s21, 0
        %s365 = scalar_select %p364, %s21, 0
        %s366 = scalar_lea.vmem %s3, %s365
        %s367 = smul.u32 8, %s20
        %p368 = scmp.lt.s32.totalorder %s367, 7
        %s369 = scalar_select %p368, %s367, 7
        %p370 = scmp.lt.s32.totalorder %s21, 0
        %s371 = scalar_select %p370, %s21, 0
        %s372 = sadd.s32 %s371, %s369
        %s373 = smul.addr %s372, 4
        %s374 = scalar_lea.vmem %s4, %s373
        %s375 = smul.u32 8, %s20
        %p377 = scmp.eq.s32.totalorder %s22, 0
        // Predicated region
        $region60: #{deepspeech2_forward.8} parent=54 // pred_check
          %p378 = pneg %p377
        $region61: #{deepspeech2_forward.8} parent=54 // pred_check_branch
          %380 = sbr.rel (%p378) target = $region63
        $region62: #{deepspeech2_forward.8} parent=54 // pred_region
          %381 = vst [vmem:[#allocation2] sm:$0xff] 0.0
          %382 = vst [vmem:[#allocation2 + $0x8] sm:$0xff] 0.0
          %383 = vst [vmem:[#allocation2 + $0x10] sm:$0xff] 0.0
          %384 = vst [vmem:[#allocation2 + $0x18] sm:$0xff] 0.0
          %385 = vst [vmem:[#allocation2 + $0x20] sm:$0xff] 0.0
          %386 = vst [vmem:[#allocation2 + $0x28] sm:$0xff] 0.0
          %387 = vst [vmem:[#allocation2 + $0x30] sm:$0xff] 0.0
          %388 = vst [vmem:[#allocation2 + $0x38] sm:$0xff] 0.0
        $region63: #{deepspeech2_forward.8} parent=54 // pred_fallthru
          _
        %v389 = vld [vmem:[#allocation2] sm:$0xff]
        %v390 = vld [vmem:[#allocation2 + $0x8] sm:$0xff]
        %v391 = vld [vmem:[#allocation2 + $0x10] sm:$0xff]
        %v392 = vld [vmem:[#allocation2 + $0x18] sm:$0xff]
        %v393 = vld [vmem:[#allocation2 + $0x20] sm:$0xff]
        %v394 = vld [vmem:[#allocation2 + $0x28] sm:$0xff]
        %v395 = vld [vmem:[#allocation2 + $0x30] sm:$0xff]
        %v396 = vld [vmem:[#allocation2 + $0x38] sm:$0xff]
        %v397 = vld [vmem:[%s310] sm:$0xff]
        %v398 = vld [vmem:[%s310 + $0x8] sm:$0xff]
        %v399 = vld [vmem:[%s310 + $0x10] sm:$0xff]
        %v400 = vld [vmem:[%s310 + $0x18] sm:$0xff]
        %v401 = vld [vmem:[%s310 + $0x20] sm:$0xff]
        %v402 = vld [vmem:[%s310 + $0x28] sm:$0xff]
        %v403 = vld [vmem:[%s310 + $0x30] sm:$0xff]
        %v404 = vld [vmem:[%s310 + $0x38] sm:$0xff]
        %v405 = vld [vmem:[%s310 + $0x40] sm:$0xff]
        %v406 = vld [vmem:[%s310 + $0x48] sm:$0xff]
        %v407 = vld [vmem:[%s310 + $0x50] sm:$0xff]
        %v408 = vld [vmem:[%s310 + $0x58] sm:$0xff]
        %v409 = vld [vmem:[%s310 + $0x60] sm:$0xff]
        %v410 = vld [vmem:[%s310 + $0x68] sm:$0xff]
        %v411 = vld [vmem:[%s310 + $0x70] sm:$0xff]
        %v412 = vld [vmem:[%s310 + $0x78] sm:$0xff]
        %v413 = vld [vmem:[%s310 + $0x80] sm:$0xff]
        %v414 = vld [vmem:[%s310 + $0x88] sm:$0xff]
        %v415 = vld [vmem:[%s310 + $0x90] sm:$0xff]
        %v416 = vld [vmem:[%s310 + $0x98] sm:$0xff]
        %v417 = vld [vmem:[%s310 + $0xa0] sm:$0xff]
        %v418 = vld [vmem:[%s310 + $0xa8] sm:$0xff]
        %v419 = vld [vmem:[%s310 + $0xb0] sm:$0xff]
        %v420 = vld [vmem:[%s310 + $0xb8] sm:$0xff]
        %v421 = vld [vmem:[%s310 + $0xc0] sm:$0xff]
        %v422 = vld [vmem:[%s310 + $0xc8] sm:$0xff]
        %v423 = vld [vmem:[%s310 + $0xd0] sm:$0xff]
        %v424 = vld [vmem:[%s310 + $0xd8] sm:$0xff]
        %v425 = vld [vmem:[%s310 + $0xe0] sm:$0xff]
        %v426 = vld [vmem:[%s310 + $0xe8] sm:$0xff]
        %v427 = vld [vmem:[%s310 + $0xf0] sm:$0xff]
        %v428 = vld [vmem:[%s310 + $0xf8] sm:$0xff]
        %v429 = vld [vmem:[%s359] sm:$0xf]
        %v430 = vld [vmem:[%s359 + $0x4] sm:$0xf]
        %v431 = vld [vmem:[%s359 + $0x8] sm:$0xf]
        %v432 = vld [vmem:[%s359 + $0xc] sm:$0xf]
        %v433 = vld [vmem:[%s359 + $0x10] sm:$0xf]
        %v434 = vld [vmem:[%s359 + $0x14] sm:$0xf]
        %v435 = vld [vmem:[%s359 + $0x18] sm:$0xf]
        %v436 = vld [vmem:[%s359 + $0x1c] sm:$0xf]
        %v437 = vld [vmem:[%s359 + $0x20] sm:$0xf]
        %v438 = vld [vmem:[%s359 + $0x24] sm:$0xf]
        %v439 = vld [vmem:[%s359 + $0x28] sm:$0xf]
        %v440 = vld [vmem:[%s359 + $0x2c] sm:$0xf]
        %v441 = vld [vmem:[%s359 + $0x30] sm:$0xf]
        %v442 = vld [vmem:[%s359 + $0x34] sm:$0xf]
        %v443 = vld [vmem:[%s359 + $0x38] sm:$0xf]
        %v444 = vld [vmem:[%s359 + $0x3c] sm:$0xf]
        %v445 = vld [vmem:[%s359 + $0x40] sm:$0xf]
        %v446 = vld [vmem:[%s359 + $0x44] sm:$0xf]
        %v447 = vld [vmem:[%s359 + $0x48] sm:$0xf]
        %v448 = vld [vmem:[%s359 + $0x4c] sm:$0xf]
        %v449 = vld [vmem:[%s359 + $0x50] sm:$0xf]
        %v450 = vld [vmem:[%s359 + $0x54] sm:$0xf]
        %v451 = vld [vmem:[%s359 + $0x58] sm:$0xf]
        %v452 = vld [vmem:[%s359 + $0x5c] sm:$0xf]
        %v453 = vld [vmem:[%s359 + $0x60] sm:$0xf]
        %v454 = vld [vmem:[%s359 + $0x64] sm:$0xf]
        %v455 = vld [vmem:[%s359 + $0x68] sm:$0xf]
        %v456 = vld [vmem:[%s359 + $0x6c] sm:$0xf]
        %v457 = vld [vmem:[%s359 + $0x70] sm:$0xf]
        %v458 = vld [vmem:[%s359 + $0x74] sm:$0xf]
        %v459 = vld [vmem:[%s359 + $0x78] sm:$0xf]
        %v460 = vld [vmem:[%s359 + $0x7c] sm:$0xf]
        %v461 = vld [vmem:[%s359 + $0x80] sm:$0xf]
        %v462 = vld [vmem:[%s359 + $0x84] sm:$0xf]
        %v463 = vld [vmem:[%s359 + $0x88] sm:$0xf]
        %v464 = vld [vmem:[%s359 + $0x8c] sm:$0xf]
        %v465 = vld [vmem:[%s359 + $0x90] sm:$0xf]
        %v466 = vld [vmem:[%s359 + $0x94] sm:$0xf]
        %v467 = vld [vmem:[%s359 + $0x98] sm:$0xf]
        %v468 = vld [vmem:[%s359 + $0x9c] sm:$0xf]
        %v469 = vld [vmem:[%s359 + $0xa0] sm:$0xf]
        %v470 = vld [vmem:[%s359 + $0xa4] sm:$0xf]
        %v471 = vld [vmem:[%s359 + $0xa8] sm:$0xf]
        %v472 = vld [vmem:[%s359 + $0xac] sm:$0xf]
        %v473 = vld [vmem:[%s359 + $0xb0] sm:$0xf]
        %v474 = vld [vmem:[%s359 + $0xb4] sm:$0xf]
        %v475 = vld [vmem:[%s359 + $0xb8] sm:$0xf]
        %v476 = vld [vmem:[%s359 + $0xbc] sm:$0xf]
        %v477 = vld [vmem:[%s359 + $0xc0] sm:$0xf]
        %v478 = vld [vmem:[%s359 + $0xc4] sm:$0xf]
        %v479 = vld [vmem:[%s359 + $0xc8] sm:$0xf]
        %v480 = vld [vmem:[%s359 + $0xcc] sm:$0xf]
        %v481 = vld [vmem:[%s359 + $0xd0] sm:$0xf]
        %v482 = vld [vmem:[%s359 + $0xd4] sm:$0xf]
        %v483 = vld [vmem:[%s359 + $0xd8] sm:$0xf]
        %v484 = vld [vmem:[%s359 + $0xdc] sm:$0xf]
        %v485 = vld [vmem:[%s359 + $0xe0] sm:$0xf]
        %v486 = vld [vmem:[%s359 + $0xe4] sm:$0xf]
        %v487 = vld [vmem:[%s359 + $0xe8] sm:$0xf]
        %v488 = vld [vmem:[%s359 + $0xec] sm:$0xf]
        %v489 = vld [vmem:[%s359 + $0xf0] sm:$0xf]
        %v490 = vld [vmem:[%s359 + $0xf4] sm:$0xf]
        %v491 = vld [vmem:[%s359 + $0xf8] sm:$0xf]
        %v492 = vld [vmem:[%s359 + $0xfc] sm:$0xf]
        %v493 = vld [vmem:[%s359 + $0x100] sm:$0xf]
        %v494 = vld [vmem:[%s359 + $0x104] sm:$0xf]
        %v495 = vld [vmem:[%s359 + $0x108] sm:$0xf]
        %v496 = vld [vmem:[%s359 + $0x10c] sm:$0xf]
        %v497 = vld [vmem:[%s359 + $0x110] sm:$0xf]
        %v498 = vld [vmem:[%s359 + $0x114] sm:$0xf]
        %v499 = vld [vmem:[%s359 + $0x118] sm:$0xf]
        %v500 = vld [vmem:[%s359 + $0x11c] sm:$0xf]
        %v501 = vld [vmem:[%s359 + $0x120] sm:$0xf]
        %v502 = vld [vmem:[%s359 + $0x124] sm:$0xf]
        %v503 = vld [vmem:[%s359 + $0x128] sm:$0xf]
        %v504 = vld [vmem:[%s359 + $0x12c] sm:$0xf]
        %v505 = vld [vmem:[%s359 + $0x130] sm:$0xf]
        %v506 = vld [vmem:[%s359 + $0x134] sm:$0xf]
        %v507 = vld [vmem:[%s359 + $0x138] sm:$0xf]
        %v508 = vld [vmem:[%s359 + $0x13c] sm:$0xf]
        %v509 = vld [vmem:[%s359 + $0x140] sm:$0xf]
        %v510 = vld [vmem:[%s359 + $0x144] sm:$0xf]
        %v511 = vld [vmem:[%s359 + $0x148] sm:$0xf]
        %v512 = vld [vmem:[%s359 + $0x14c] sm:$0xf]
        %v513 = vld [vmem:[%s359 + $0x150] sm:$0xf]
        %v514 = vld [vmem:[%s359 + $0x154] sm:$0xf]
        %v515 = vld [vmem:[%s359 + $0x158] sm:$0xf]
        %v516 = vld [vmem:[%s359 + $0x15c] sm:$0xf]
        %v517 = vld [vmem:[%s359 + $0x160] sm:$0xf]
        %v518 = vld [vmem:[%s359 + $0x164] sm:$0xf]
        %v519 = vld [vmem:[%s359 + $0x168] sm:$0xf]
        %v520 = vld [vmem:[%s359 + $0x16c] sm:$0xf]
        %v521 = vld [vmem:[%s359 + $0x170] sm:$0xf]
        %v522 = vld [vmem:[%s359 + $0x174] sm:$0xf]
        %v523 = vld [vmem:[%s359 + $0x178] sm:$0xf]
        %v524 = vld [vmem:[%s359 + $0x17c] sm:$0xf]
        %v525 = vld [vmem:[%s359 + $0x180] sm:$0xf]
        %v526 = vld [vmem:[%s359 + $0x184] sm:$0xf]
        %v527 = vld [vmem:[%s359 + $0x188] sm:$0xf]
        %v528 = vld [vmem:[%s359 + $0x18c] sm:$0xf]
        %v529 = vld [vmem:[%s359 + $0x190] sm:$0xf]
        %v530 = vld [vmem:[%s359 + $0x194] sm:$0xf]
        %v531 = vld [vmem:[%s359 + $0x198] sm:$0xf]
        %v532 = vld [vmem:[%s359 + $0x19c] sm:$0xf]
        %v533 = vld [vmem:[%s359 + $0x1a0] sm:$0xf]
        %v534 = vld [vmem:[%s359 + $0x1a4] sm:$0xf]
        %v535 = vld [vmem:[%s359 + $0x1a8] sm:$0xf]
        %v536 = vld [vmem:[%s359 + $0x1ac] sm:$0xf]
        %v537 = vld [vmem:[%s359 + $0x1b0] sm:$0xf]
        %v538 = vld [vmem:[%s359 + $0x1b4] sm:$0xf]
        %v539 = vld [vmem:[%s359 + $0x1b8] sm:$0xf]
        %v540 = vld [vmem:[%s359 + $0x1bc] sm:$0xf]
        %v541 = vld [vmem:[%s359 + $0x1c0] sm:$0xf]
        %v542 = vld [vmem:[%s359 + $0x1c4] sm:$0xf]
        %v543 = vld [vmem:[%s359 + $0x1c8] sm:$0xf]
        %v544 = vld [vmem:[%s359 + $0x1cc] sm:$0xf]
        %v545 = vld [vmem:[%s359 + $0x1d0] sm:$0xf]
        %v546 = vld [vmem:[%s359 + $0x1d4] sm:$0xf]
        %v547 = vld [vmem:[%s359 + $0x1d8] sm:$0xf]
        %v548 = vld [vmem:[%s359 + $0x1dc] sm:$0xf]
        %v549 = vld [vmem:[%s359 + $0x1e0] sm:$0xf]
        %v550 = vld [vmem:[%s359 + $0x1e4] sm:$0xf]
        %v551 = vld [vmem:[%s359 + $0x1e8] sm:$0xf]
        %v552 = vld [vmem:[%s359 + $0x1ec] sm:$0xf]
        %v553 = vld [vmem:[%s359 + $0x1f0] sm:$0xf]
        %v554 = vld [vmem:[%s359 + $0x1f4] sm:$0xf]
        %v555 = vld [vmem:[%s359 + $0x1f8] sm:$0xf]
        %v556 = vld [vmem:[%s359 + $0x1fc] sm:$0xf]
        %v589 = vunpack.c.l.b16 %v397
        %v590 = vunpack.c.h.b16 %v397
        %v591 = vunpack.c.l.b16 %v398
        %v592 = vunpack.c.h.b16 %v398
        %v593 = vunpack.c.l.b16 %v399
        %v594 = vunpack.c.h.b16 %v399
        %v595 = vunpack.c.l.b16 %v400
        %v596 = vunpack.c.h.b16 %v400
        %v597 = vunpack.c.l.b16 %v401
        %v598 = vunpack.c.h.b16 %v401
        %v599 = vunpack.c.l.b16 %v402
        %v600 = vunpack.c.h.b16 %v402
        %v601 = vunpack.c.l.b16 %v403
        %v602 = vunpack.c.h.b16 %v403
        %v603 = vunpack.c.l.b16 %v404
        %v604 = vunpack.c.h.b16 %v404
        %v605 = vunpack.c.l.b16 %v405
        %v606 = vunpack.c.h.b16 %v405
        %v607 = vunpack.c.l.b16 %v406
        %v608 = vunpack.c.h.b16 %v406
        %v609 = vunpack.c.l.b16 %v407
        %v610 = vunpack.c.h.b16 %v407
        %v611 = vunpack.c.l.b16 %v408
        %v612 = vunpack.c.h.b16 %v408
        %v613 = vunpack.c.l.b16 %v409
        %v614 = vunpack.c.h.b16 %v409
        %v615 = vunpack.c.l.b16 %v410
        %v616 = vunpack.c.h.b16 %v410
        %v617 = vunpack.c.l.b16 %v411
        %v618 = vunpack.c.h.b16 %v411
        %v619 = vunpack.c.l.b16 %v412
        %v620 = vunpack.c.h.b16 %v412
        %v621 = vunpack.c.l.b16 %v413
        %v622 = vunpack.c.h.b16 %v413
        %v623 = vunpack.c.l.b16 %v414
        %v624 = vunpack.c.h.b16 %v414
        %v625 = vunpack.c.l.b16 %v415
        %v626 = vunpack.c.h.b16 %v415
        %v627 = vunpack.c.l.b16 %v416
        %v628 = vunpack.c.h.b16 %v416
        %v629 = vunpack.c.l.b16 %v417
        %v630 = vunpack.c.h.b16 %v417
        %v631 = vunpack.c.l.b16 %v418
        %v632 = vunpack.c.h.b16 %v418
        %v633 = vunpack.c.l.b16 %v419
        %v634 = vunpack.c.h.b16 %v419
        %v635 = vunpack.c.l.b16 %v420
        %v636 = vunpack.c.h.b16 %v420
        %v637 = vunpack.c.l.b16 %v421
        %v638 = vunpack.c.h.b16 %v421
        %v639 = vunpack.c.l.b16 %v422
        %v640 = vunpack.c.h.b16 %v422
        %v641 = vunpack.c.l.b16 %v423
        %v642 = vunpack.c.h.b16 %v423
        %v643 = vunpack.c.l.b16 %v424
        %v644 = vunpack.c.h.b16 %v424
        %v645 = vunpack.c.l.b16 %v425
        %v646 = vunpack.c.h.b16 %v425
        %v647 = vunpack.c.l.b16 %v426
        %v648 = vunpack.c.h.b16 %v426
        %v649 = vunpack.c.l.b16 %v427
        %v650 = vunpack.c.h.b16 %v427
        %v651 = vunpack.c.l.b16 %v428
        %v652 = vunpack.c.h.b16 %v428
        %v653 = vpack.c.b16 %v597, %v589
        %v654 = vpack.c.b16 %v598, %v590
        %v655 = vpack.c.b16 %v599, %v591
        %v656 = vpack.c.b16 %v600, %v592
        %v657 = vpack.c.b16 %v601, %v593
        %v658 = vpack.c.b16 %v602, %v594
        %v659 = vpack.c.b16 %v603, %v595
        %v660 = vpack.c.b16 %v604, %v596
        %v661 = vpack.c.b16 %v613, %v605
        %v662 = vpack.c.b16 %v614, %v606
        %v663 = vpack.c.b16 %v615, %v607
        %v664 = vpack.c.b16 %v616, %v608
        %v665 = vpack.c.b16 %v617, %v609
        %v666 = vpack.c.b16 %v618, %v610
        %v667 = vpack.c.b16 %v619, %v611
        %v668 = vpack.c.b16 %v620, %v612
        %v669 = vpack.c.b16 %v629, %v621
        %v670 = vpack.c.b16 %v630, %v622
        %v671 = vpack.c.b16 %v631, %v623
        %v672 = vpack.c.b16 %v632, %v624
        %v673 = vpack.c.b16 %v633, %v625
        %v674 = vpack.c.b16 %v634, %v626
        %v675 = vpack.c.b16 %v635, %v627
        %v676 = vpack.c.b16 %v636, %v628
        %v677 = vpack.c.b16 %v645, %v637
        %v678 = vpack.c.b16 %v646, %v638
        %v679 = vpack.c.b16 %v647, %v639
        %v680 = vpack.c.b16 %v648, %v640
        %v681 = vpack.c.b16 %v649, %v641
        %v682 = vpack.c.b16 %v650, %v642
        %v683 = vpack.c.b16 %v651, %v643
        %v684 = vpack.c.b16 %v652, %v644
        %v845 = vunpack.c.l.b16 %v429
        %v846 = vunpack.c.l.b16 %v430
        %v847 = vunpack.c.l.b16 %v431
        %v848 = vunpack.c.l.b16 %v432
        %v849 = vunpack.c.l.b16 %v433
        %v850 = vunpack.c.l.b16 %v434
        %v851 = vunpack.c.l.b16 %v435
        %v852 = vunpack.c.l.b16 %v436
        %v853 = vunpack.c.l.b16 %v437
        %v854 = vunpack.c.l.b16 %v438
        %v855 = vunpack.c.l.b16 %v439
        %v856 = vunpack.c.l.b16 %v440
        %v857 = vunpack.c.l.b16 %v441
        %v858 = vunpack.c.l.b16 %v442
        %v859 = vunpack.c.l.b16 %v443
        %v860 = vunpack.c.l.b16 %v444
        %v861 = vunpack.c.l.b16 %v445
        %v862 = vunpack.c.l.b16 %v446
        %v863 = vunpack.c.l.b16 %v447
        %v864 = vunpack.c.l.b16 %v448
        %v865 = vunpack.c.l.b16 %v449
        %v866 = vunpack.c.l.b16 %v450
        %v867 = vunpack.c.l.b16 %v451
        %v868 = vunpack.c.l.b16 %v452
        %v869 = vunpack.c.l.b16 %v453
        %v870 = vunpack.c.l.b16 %v454
        %v871 = vunpack.c.l.b16 %v455
        %v872 = vunpack.c.l.b16 %v456
        %v873 = vunpack.c.l.b16 %v457
        %v874 = vunpack.c.l.b16 %v458
        %v875 = vunpack.c.l.b16 %v459
        %v876 = vunpack.c.l.b16 %v460
        %v877 = vunpack.c.l.b16 %v461
        %v878 = vunpack.c.l.b16 %v462
        %v879 = vunpack.c.l.b16 %v463
        %v880 = vunpack.c.l.b16 %v464
        %v881 = vunpack.c.l.b16 %v465
        %v882 = vunpack.c.l.b16 %v466
        %v883 = vunpack.c.l.b16 %v467
        %v884 = vunpack.c.l.b16 %v468
        %v885 = vunpack.c.l.b16 %v469
        %v886 = vunpack.c.l.b16 %v470
        %v887 = vunpack.c.l.b16 %v471
        %v888 = vunpack.c.l.b16 %v472
        %v889 = vunpack.c.l.b16 %v473
        %v890 = vunpack.c.l.b16 %v474
        %v891 = vunpack.c.l.b16 %v475
        %v892 = vunpack.c.l.b16 %v476
        %v893 = vunpack.c.l.b16 %v477
        %v894 = vunpack.c.l.b16 %v478
        %v895 = vunpack.c.l.b16 %v479
        %v896 = vunpack.c.l.b16 %v480
        %v897 = vunpack.c.l.b16 %v481
        %v898 = vunpack.c.l.b16 %v482
        %v899 = vunpack.c.l.b16 %v483
        %v900 = vunpack.c.l.b16 %v484
        %v901 = vunpack.c.l.b16 %v485
        %v902 = vunpack.c.l.b16 %v486
        %v903 = vunpack.c.l.b16 %v487
        %v904 = vunpack.c.l.b16 %v488
        %v905 = vunpack.c.l.b16 %v489
        %v906 = vunpack.c.l.b16 %v490
        %v907 = vunpack.c.l.b16 %v491
        %v908 = vunpack.c.l.b16 %v492
        %v909 = vunpack.c.l.b16 %v493
        %v910 = vunpack.c.l.b16 %v494
        %v911 = vunpack.c.l.b16 %v495
        %v912 = vunpack.c.l.b16 %v496
        %v913 = vunpack.c.l.b16 %v497
        %v914 = vunpack.c.l.b16 %v498
        %v915 = vunpack.c.l.b16 %v499
        %v916 = vunpack.c.l.b16 %v500
        %v917 = vunpack.c.l.b16 %v501
        %v918 = vunpack.c.l.b16 %v502
        %v919 = vunpack.c.l.b16 %v503
        %v920 = vunpack.c.l.b16 %v504
        %v921 = vunpack.c.l.b16 %v505
        %v922 = vunpack.c.l.b16 %v506
        %v923 = vunpack.c.l.b16 %v507
        %v924 = vunpack.c.l.b16 %v508
        %v925 = vunpack.c.l.b16 %v509
        %v926 = vunpack.c.l.b16 %v510
        %v927 = vunpack.c.l.b16 %v511
        %v928 = vunpack.c.l.b16 %v512
        %v929 = vunpack.c.l.b16 %v513
        %v930 = vunpack.c.l.b16 %v514
        %v931 = vunpack.c.l.b16 %v515
        %v932 = vunpack.c.l.b16 %v516
        %v933 = vunpack.c.l.b16 %v517
        %v934 = vunpack.c.l.b16 %v518
        %v935 = vunpack.c.l.b16 %v519
        %v936 = vunpack.c.l.b16 %v520
        %v937 = vunpack.c.l.b16 %v521
        %v938 = vunpack.c.l.b16 %v522
        %v939 = vunpack.c.l.b16 %v523
        %v940 = vunpack.c.l.b16 %v524
        %v941 = vunpack.c.l.b16 %v525
        %v942 = vunpack.c.l.b16 %v526
        %v943 = vunpack.c.l.b16 %v527
        %v944 = vunpack.c.l.b16 %v528
        %v945 = vunpack.c.l.b16 %v529
        %v946 = vunpack.c.l.b16 %v530
        %v947 = vunpack.c.l.b16 %v531
        %v948 = vunpack.c.l.b16 %v532
        %v949 = vunpack.c.l.b16 %v533
        %v950 = vunpack.c.l.b16 %v534
        %v951 = vunpack.c.l.b16 %v535
        %v952 = vunpack.c.l.b16 %v536
        %v953 = vunpack.c.l.b16 %v537
        %v954 = vunpack.c.l.b16 %v538
        %v955 = vunpack.c.l.b16 %v539
        %v956 = vunpack.c.l.b16 %v540
        %v957 = vunpack.c.l.b16 %v541
        %v958 = vunpack.c.l.b16 %v542
        %v959 = vunpack.c.l.b16 %v543
        %v960 = vunpack.c.l.b16 %v544
        %v961 = vunpack.c.l.b16 %v545
        %v962 = vunpack.c.l.b16 %v546
        %v963 = vunpack.c.l.b16 %v547
        %v964 = vunpack.c.l.b16 %v548
        %v965 = vunpack.c.l.b16 %v549
        %v966 = vunpack.c.l.b16 %v550
        %v967 = vunpack.c.l.b16 %v551
        %v968 = vunpack.c.l.b16 %v552
        %v969 = vunpack.c.l.b16 %v553
        %v970 = vunpack.c.l.b16 %v554
        %v971 = vunpack.c.l.b16 %v555
        %v972 = vunpack.c.l.b16 %v556
        %v973 = vpack.c.b16 %v846, %v845
        %v974 = vpack.c.b16 %v848, %v847
        %v975 = vpack.c.b16 %v850, %v849
        %v976 = vpack.c.b16 %v852, %v851
        %v977 = vpack.c.b16 %v854, %v853
        %v978 = vpack.c.b16 %v856, %v855
        %v979 = vpack.c.b16 %v858, %v857
        %v980 = vpack.c.b16 %v860, %v859
        %v981 = vpack.c.b16 %v862, %v861
        %v982 = vpack.c.b16 %v864, %v863
        %v983 = vpack.c.b16 %v866, %v865
        %v984 = vpack.c.b16 %v868, %v867
        %v985 = vpack.c.b16 %v870, %v869
        %v986 = vpack.c.b16 %v872, %v871
        %v987 = vpack.c.b16 %v874, %v873
        %v988 = vpack.c.b16 %v876, %v875
        %v989 = vpack.c.b16 %v878, %v877
        %v990 = vpack.c.b16 %v880, %v879
        %v991 = vpack.c.b16 %v882, %v881
        %v992 = vpack.c.b16 %v884, %v883
        %v993 = vpack.c.b16 %v886, %v885
        %v994 = vpack.c.b16 %v888, %v887
        %v995 = vpack.c.b16 %v890, %v889
        %v996 = vpack.c.b16 %v892, %v891
        %v997 = vpack.c.b16 %v894, %v893
        %v998 = vpack.c.b16 %v896, %v895
        %v999 = vpack.c.b16 %v898, %v897
        %v1000 = vpack.c.b16 %v900, %v899
        %v1001 = vpack.c.b16 %v902, %v901
        %v1002 = vpack.c.b16 %v904, %v903
        %v1003 = vpack.c.b16 %v906, %v905
        %v1004 = vpack.c.b16 %v908, %v907
        %v1005 = vpack.c.b16 %v910, %v909
        %v1006 = vpack.c.b16 %v912, %v911
        %v1007 = vpack.c.b16 %v914, %v913
        %v1008 = vpack.c.b16 %v916, %v915
        %v1009 = vpack.c.b16 %v918, %v917
        %v1010 = vpack.c.b16 %v920, %v919
        %v1011 = vpack.c.b16 %v922, %v921
        %v1012 = vpack.c.b16 %v924, %v923
        %v1013 = vpack.c.b16 %v926, %v925
        %v1014 = vpack.c.b16 %v928, %v927
        %v1015 = vpack.c.b16 %v930, %v929
        %v1016 = vpack.c.b16 %v932, %v931
        %v1017 = vpack.c.b16 %v934, %v933
        %v1018 = vpack.c.b16 %v936, %v935
        %v1019 = vpack.c.b16 %v938, %v937
        %v1020 = vpack.c.b16 %v940, %v939
        %v1021 = vpack.c.b16 %v942, %v941
        %v1022 = vpack.c.b16 %v944, %v943
        %v1023 = vpack.c.b16 %v946, %v945
        %v1024 = vpack.c.b16 %v948, %v947
        %v1025 = vpack.c.b16 %v950, %v949
        %v1026 = vpack.c.b16 %v952, %v951
        %v1027 = vpack.c.b16 %v954, %v953
        %v1028 = vpack.c.b16 %v956, %v955
        %v1029 = vpack.c.b16 %v958, %v957
        %v1030 = vpack.c.b16 %v960, %v959
        %v1031 = vpack.c.b16 %v962, %v961
        %v1032 = vpack.c.b16 %v964, %v963
        %v1033 = vpack.c.b16 %v966, %v965
        %v1034 = vpack.c.b16 %v968, %v967
        %v1035 = vpack.c.b16 %v970, %v969
        %v1036 = vpack.c.b16 %v972, %v971
        %1101 = vmatprep.subr.bf16.mxu0 0
        %1102 = vmatpush1.bf16.msra.mxu0 %v980
        %1103 = vmatprep.subr.bf16.mxu0 0
        %1104 = vmatpush1.bf16.msra.mxu0 %v979
        %1105 = vmatprep.subr.bf16.mxu0 0
        %1106 = vmatpush1.bf16.msra.mxu0 %v978
        %1107 = vmatprep.subr.bf16.mxu0 0
        %1108 = vmatpush1.bf16.msra.mxu0 %v977
        %1109 = vmatprep.subr.bf16.mxu0 0
        %1110 = vmatpush1.bf16.msra.mxu0 %v976
        %1111 = vmatprep.subr.bf16.mxu0 0
        %1112 = vmatpush1.bf16.msra.mxu0 %v975
        %1113 = vmatprep.subr.bf16.mxu0 0
        %1114 = vmatpush1.bf16.msra.mxu0 %v974
        %1115 = vmatprep.subr.bf16.mxu0 0
        %1116 = vmatpush1.bf16.msra.mxu0 %v973
        %1117 = vmatprep.subr.bf16.mxu0 0
        %1118 = vmatpush2.bf16.msra.mxu0 %v988
        %1119 = vmatprep.subr.bf16.mxu0 0
        %1120 = vmatpush2.bf16.msra.mxu0 %v987
        %1121 = vmatprep.subr.bf16.mxu0 0
        %1122 = vmatpush2.bf16.msra.mxu0 %v986
        %1123 = vmatprep.subr.bf16.mxu0 0
        %1124 = vmatpush2.bf16.msra.mxu0 %v985
        %1125 = vmatprep.subr.bf16.mxu0 0
        %1126 = vmatpush2.bf16.msra.mxu0 %v984
        %1127 = vmatprep.subr.bf16.mxu0 0
        %1128 = vmatpush2.bf16.msra.mxu0 %v983
        %1129 = vmatprep.subr.bf16.mxu0 0
        %1130 = vmatpush2.bf16.msra.mxu0 %v982
        %1131 = vmatprep.subr.bf16.mxu0 0
        %1132 = vmatpush2.bf16.msra.mxu0 %v981
        %1133 = vmatprep.mubr.bf16.mxu0 %v654
        %1134 = vmatmul.mubr.bf16.gmra.mxu0 %v653
        %v1135 = vpop.f32.mrf.mxu0
        %v1136 = vadd.f32 0.0, %v1135
        %v1137 = vpop.f32.mrf.mxu0
        %v1138 = vpop.f32.mrf.mxu0
        %v1139 = vadd.f32 0.0, %v1138
        %v1140 = vpop.f32.mrf.mxu0
        %1141 = vmatprep.mubr.bf16.mxu0 %v662
        %1142 = vmatmul.mubr.bf16.gmra.mxu0 %v661
        %v1143 = vpop.f32.mrf.mxu0
        %v1144 = vadd.f32 0.0, %v1143
        %v1145 = vpop.f32.mrf.mxu0
        %v1146 = vpop.f32.mrf.mxu0
        %v1147 = vadd.f32 0.0, %v1146
        %v1148 = vpop.f32.mrf.mxu0
        %1149 = vmatprep.mubr.bf16.mxu0 %v670
        %1150 = vmatmul.mubr.bf16.gmra.mxu0 %v669
        %v1151 = vpop.f32.mrf.mxu0
        %v1152 = vadd.f32 0.0, %v1151
        %v1153 = vpop.f32.mrf.mxu0
        %v1154 = vpop.f32.mrf.mxu0
        %v1155 = vadd.f32 0.0, %v1154
        %v1156 = vpop.f32.mrf.mxu0
        %1157 = vmatprep.mubr.bf16.mxu0 %v678
        %1158 = vmatmul.mubr.bf16.gmra.mxu0 %v677
        %v1159 = vpop.f32.mrf.mxu0
        %v1160 = vadd.f32 0.0, %v1159
        %v1161 = vpop.f32.mrf.mxu0
        %v1162 = vpop.f32.mrf.mxu0
        %v1163 = vadd.f32 0.0, %v1162
        %v1164 = vpop.f32.mrf.mxu0
        %1165 = vdwg.mxu0
        %1166 = vmatprep.subr.bf16.mxu0 0
        %1167 = vmatpush1.bf16.msra.mxu0 %v996
        %1168 = vmatprep.subr.bf16.mxu0 0
        %1169 = vmatpush1.bf16.msra.mxu0 %v995
        %1170 = vmatprep.subr.bf16.mxu0 0
        %1171 = vmatpush1.bf16.msra.mxu0 %v994
        %1172 = vmatprep.subr.bf16.mxu0 0
        %1173 = vmatpush1.bf16.msra.mxu0 %v993
        %1174 = vmatprep.subr.bf16.mxu0 0
        %1175 = vmatpush1.bf16.msra.mxu0 %v992
        %1176 = vmatprep.subr.bf16.mxu0 0
        %1177 = vmatpush1.bf16.msra.mxu0 %v991
        %1178 = vmatprep.subr.bf16.mxu0 0
        %1179 = vmatpush1.bf16.msra.mxu0 %v990
        %1180 = vmatprep.subr.bf16.mxu0 0
        %1181 = vmatpush1.bf16.msra.mxu0 %v989
        %1182 = vmatprep.subr.bf16.mxu0 0
        %1183 = vmatpush2.bf16.msra.mxu0 %v1004
        %1184 = vmatprep.subr.bf16.mxu0 0
        %1185 = vmatpush2.bf16.msra.mxu0 %v1003
        %1186 = vmatprep.subr.bf16.mxu0 0
        %1187 = vmatpush2.bf16.msra.mxu0 %v1002
        %1188 = vmatprep.subr.bf16.mxu0 0
        %1189 = vmatpush2.bf16.msra.mxu0 %v1001
        %1190 = vmatprep.subr.bf16.mxu0 0
        %1191 = vmatpush2.bf16.msra.mxu0 %v1000
        %1192 = vmatprep.subr.bf16.mxu0 0
        %1193 = vmatpush2.bf16.msra.mxu0 %v999
        %1194 = vmatprep.subr.bf16.mxu0 0
        %1195 = vmatpush2.bf16.msra.mxu0 %v998
        %1196 = vmatprep.subr.bf16.mxu0 0
        %1197 = vmatpush2.bf16.msra.mxu0 %v997
        %1198 = vmatprep.mubr.bf16.mxu0 %v656
        %1199 = vmatmul.mubr.bf16.gmra.mxu0 %v655
        %v1200 = vpop.f32.mrf.mxu0
        %v1201 = vadd.f32 %v1136, %v1200
        %v1202 = vpop.f32.mrf.mxu0
        %v1203 = vpop.f32.mrf.mxu0
        %v1204 = vadd.f32 %v1139, %v1203
        %v1205 = vpop.f32.mrf.mxu0
        %1206 = vmatprep.mubr.bf16.mxu0 %v664
        %1207 = vmatmul.mubr.bf16.gmra.mxu0 %v663
        %v1208 = vpop.f32.mrf.mxu0
        %v1209 = vadd.f32 %v1144, %v1208
        %v1210 = vpop.f32.mrf.mxu0
        %v1211 = vpop.f32.mrf.mxu0
        %v1212 = vadd.f32 %v1147, %v1211
        %v1213 = vpop.f32.mrf.mxu0
        %1214 = vmatprep.mubr.bf16.mxu0 %v672
        %1215 = vmatmul.mubr.bf16.gmra.mxu0 %v671
        %v1216 = vpop.f32.mrf.mxu0
        %v1217 = vadd.f32 %v1152, %v1216
        %v1218 = vpop.f32.mrf.mxu0
        %v1219 = vpop.f32.mrf.mxu0
        %v1220 = vadd.f32 %v1155, %v1219
        %v1221 = vpop.f32.mrf.mxu0
        %1222 = vmatprep.mubr.bf16.mxu0 %v680
        %1223 = vmatmul.mubr.bf16.gmra.mxu0 %v679
        %v1224 = vpop.f32.mrf.mxu0
        %v1225 = vadd.f32 %v1160, %v1224
        %v1226 = vpop.f32.mrf.mxu0
        %v1227 = vpop.f32.mrf.mxu0
        %v1228 = vadd.f32 %v1163, %v1227
        %v1229 = vpop.f32.mrf.mxu0
        %1230 = vdwg.mxu0
        %1231 = vmatprep.subr.bf16.mxu0 0
        %1232 = vmatpush1.bf16.msra.mxu0 %v1012
        %1233 = vmatprep.subr.bf16.mxu0 0
        %1234 = vmatpush1.bf16.msra.mxu0 %v1011
        %1235 = vmatprep.subr.bf16.mxu0 0
        %1236 = vmatpush1.bf16.msra.mxu0 %v1010
        %1237 = vmatprep.subr.bf16.mxu0 0
        %1238 = vmatpush1.bf16.msra.mxu0 %v1009
        %1239 = vmatprep.subr.bf16.mxu0 0
        %1240 = vmatpush1.bf16.msra.mxu0 %v1008
        %1241 = vmatprep.subr.bf16.mxu0 0
        %1242 = vmatpush1.bf16.msra.mxu0 %v1007
        %1243 = vmatprep.subr.bf16.mxu0 0
        %1244 = vmatpush1.bf16.msra.mxu0 %v1006
        %1245 = vmatprep.subr.bf16.mxu0 0
        %1246 = vmatpush1.bf16.msra.mxu0 %v1005
        %1247 = vmatprep.subr.bf16.mxu0 0
        %1248 = vmatpush2.bf16.msra.mxu0 %v1020
        %1249 = vmatprep.subr.bf16.mxu0 0
        %1250 = vmatpush2.bf16.msra.mxu0 %v1019
        %1251 = vmatprep.subr.bf16.mxu0 0
        %1252 = vmatpush2.bf16.msra.mxu0 %v1018
        %1253 = vmatprep.subr.bf16.mxu0 0
        %1254 = vmatpush2.bf16.msra.mxu0 %v1017
        %1255 = vmatprep.subr.bf16.mxu0 0
        %1256 = vmatpush2.bf16.msra.mxu0 %v1016
        %1257 = vmatprep.subr.bf16.mxu0 0
        %1258 = vmatpush2.bf16.msra.mxu0 %v1015
        %1259 = vmatprep.subr.bf16.mxu0 0
        %1260 = vmatpush2.bf16.msra.mxu0 %v1014
        %1261 = vmatprep.subr.bf16.mxu0 0
        %1262 = vmatpush2.bf16.msra.mxu0 %v1013
        %1263 = vmatprep.mubr.bf16.mxu0 %v658
        %1264 = vmatmul.mubr.bf16.gmra.mxu0 %v657
        %v1265 = vpop.f32.mrf.mxu0
        %v1266 = vadd.f32 %v1201, %v1265
        %v1267 = vpop.f32.mrf.mxu0
        %v1268 = vpop.f32.mrf.mxu0
        %v1269 = vadd.f32 %v1204, %v1268
        %v1270 = vpop.f32.mrf.mxu0
        %1271 = vmatprep.mubr.bf16.mxu0 %v666
        %1272 = vmatmul.mubr.bf16.gmra.mxu0 %v665
        %v1273 = vpop.f32.mrf.mxu0
        %v1274 = vadd.f32 %v1209, %v1273
        %v1275 = vpop.f32.mrf.mxu0
        %v1276 = vpop.f32.mrf.mxu0
        %v1277 = vadd.f32 %v1212, %v1276
        %v1278 = vpop.f32.mrf.mxu0
        %1279 = vmatprep.mubr.bf16.mxu0 %v674
        %1280 = vmatmul.mubr.bf16.gmra.mxu0 %v673
        %v1281 = vpop.f32.mrf.mxu0
        %v1282 = vadd.f32 %v1217, %v1281
        %v1283 = vpop.f32.mrf.mxu0
        %v1284 = vpop.f32.mrf.mxu0
        %v1285 = vadd.f32 %v1220, %v1284
        %v1286 = vpop.f32.mrf.mxu0
        %1287 = vmatprep.mubr.bf16.mxu0 %v682
        %1288 = vmatmul.mubr.bf16.gmra.mxu0 %v681
        %v1289 = vpop.f32.mrf.mxu0
        %v1290 = vadd.f32 %v1225, %v1289
        %v1291 = vpop.f32.mrf.mxu0
        %v1292 = vpop.f32.mrf.mxu0
        %v1293 = vadd.f32 %v1228, %v1292
        %v1294 = vpop.f32.mrf.mxu0
        %1295 = vdwg.mxu0
        %1296 = vmatprep.subr.bf16.mxu0 0
        %1297 = vmatpush1.bf16.msra.mxu0 %v1028
        %1298 = vmatprep.subr.bf16.mxu0 0
        %1299 = vmatpush1.bf16.msra.mxu0 %v1027
        %1300 = vmatprep.subr.bf16.mxu0 0
        %1301 = vmatpush1.bf16.msra.mxu0 %v1026
        %1302 = vmatprep.subr.bf16.mxu0 0
        %1303 = vmatpush1.bf16.msra.mxu0 %v1025
        %1304 = vmatprep.subr.bf16.mxu0 0
        %1305 = vmatpush1.bf16.msra.mxu0 %v1024
        %1306 = vmatprep.subr.bf16.mxu0 0
        %1307 = vmatpush1.bf16.msra.mxu0 %v1023
        %1308 = vmatprep.subr.bf16.mxu0 0
        %1309 = vmatpush1.bf16.msra.mxu0 %v1022
        %1310 = vmatprep.subr.bf16.mxu0 0
        %1311 = vmatpush1.bf16.msra.mxu0 %v1021
        %1312 = vmatprep.subr.bf16.mxu0 0
        %1313 = vmatpush2.bf16.msra.mxu0 %v1036
        %1314 = vmatprep.subr.bf16.mxu0 0
        %1315 = vmatpush2.bf16.msra.mxu0 %v1035
        %1316 = vmatprep.subr.bf16.mxu0 0
        %1317 = vmatpush2.bf16.msra.mxu0 %v1034
        %1318 = vmatprep.subr.bf16.mxu0 0
        %1319 = vmatpush2.bf16.msra.mxu0 %v1033
        %1320 = vmatprep.subr.bf16.mxu0 0
        %1321 = vmatpush2.bf16.msra.mxu0 %v1032
        %1322 = vmatprep.subr.bf16.mxu0 0
        %1323 = vmatpush2.bf16.msra.mxu0 %v1031
        %1324 = vmatprep.subr.bf16.mxu0 0
        %1325 = vmatpush2.bf16.msra.mxu0 %v1030
        %1326 = vmatprep.subr.bf16.mxu0 0
        %1327 = vmatpush2.bf16.msra.mxu0 %v1029
        %1328 = vmatprep.mubr.bf16.mxu0 %v660
        %1329 = vmatmul.mubr.bf16.gmra.mxu0 %v659
        %v1330 = vpop.f32.mrf.mxu0
        %v1331 = vadd.f32 %v1266, %v1330
        %v1332 = vpop.f32.mrf.mxu0
        %v1333 = vpop.f32.mrf.mxu0
        %v1334 = vadd.f32 %v1269, %v1333
        %v1335 = vpop.f32.mrf.mxu0
        %1336 = vmatprep.mubr.bf16.mxu0 %v668
        %1337 = vmatmul.mubr.bf16.gmra.mxu0 %v667
        %v1338 = vpop.f32.mrf.mxu0
        %v1339 = vadd.f32 %v1274, %v1338
        %v1340 = vpop.f32.mrf.mxu0
        %v1341 = vpop.f32.mrf.mxu0
        %v1342 = vadd.f32 %v1277, %v1341
        %v1343 = vpop.f32.mrf.mxu0
        %1344 = vmatprep.mubr.bf16.mxu0 %v676
        %1345 = vmatmul.mubr.bf16.gmra.mxu0 %v675
        %v1346 = vpop.f32.mrf.mxu0
        %v1347 = vadd.f32 %v1282, %v1346
        %v1348 = vpop.f32.mrf.mxu0
        %v1349 = vpop.f32.mrf.mxu0
        %v1350 = vadd.f32 %v1285, %v1349
        %v1351 = vpop.f32.mrf.mxu0
        %1352 = vmatprep.mubr.bf16.mxu0 %v684
        %1353 = vmatmul.mubr.bf16.gmra.mxu0 %v683
        %v1354 = vpop.f32.mrf.mxu0
        %v1355 = vadd.f32 %v1290, %v1354
        %v1356 = vpop.f32.mrf.mxu0
        %v1357 = vpop.f32.mrf.mxu0
        %v1358 = vadd.f32 %v1293, %v1357
        %v1359 = vpop.f32.mrf.mxu0
        %1360 = vdwg.mxu0
        %v1361 = vadd.f32 %v389, %v1331
        %v1362 = vadd.f32 %v390, %v1334
        %v1363 = vadd.f32 %v391, %v1339
        %v1364 = vadd.f32 %v392, %v1342
        %v1365 = vadd.f32 %v393, %v1347
        %v1366 = vadd.f32 %v394, %v1350
        %v1367 = vadd.f32 %v395, %v1355
        %v1368 = vadd.f32 %v396, %v1358
        %1369 = vst [vmem:[#allocation2] sm:$0xff] %v1361
        %1370 = vst [vmem:[#allocation2 + $0x8] sm:$0xff] %v1362
        %1371 = vst [vmem:[#allocation2 + $0x10] sm:$0xff] %v1363
        %1372 = vst [vmem:[#allocation2 + $0x18] sm:$0xff] %v1364
        %1373 = vst [vmem:[#allocation2 + $0x20] sm:$0xff] %v1365
        %1374 = vst [vmem:[#allocation2 + $0x28] sm:$0xff] %v1366
        %1375 = vst [vmem:[#allocation2 + $0x30] sm:$0xff] %v1367
        %1376 = vst [vmem:[#allocation2 + $0x38] sm:$0xff] %v1368
        %p1377 = scmp.eq.s32.totalorder %s22, 7
        // Predicated region
        $region64: #{deepspeech2_forward.8} parent=54 // pred_check
          %p1378 = pneg %p1377
        $region65: #{deepspeech2_forward.8} parent=54 // pred_check_branch
          %1380 = sbr.rel (%p1378) target = $region67
        $region66: #{deepspeech2_forward.8} parent=54 // pred_region
          %v1381 = vld [vmem:[#allocation2] sm:$0xff]
          %v1382 = vld [vmem:[#allocation2 + $0x8] sm:$0xff]
          %v1383 = vld [vmem:[#allocation2 + $0x10] sm:$0xff]
          %v1384 = vld [vmem:[#allocation2 + $0x18] sm:$0xff]
          %v1385 = vld [vmem:[#allocation2 + $0x20] sm:$0xff]
          %v1386 = vld [vmem:[#allocation2 + $0x28] sm:$0xff]
          %v1387 = vld [vmem:[#allocation2 + $0x30] sm:$0xff]
          %v1388 = vld [vmem:[#allocation2 + $0x38] sm:$0xff]
          %v1389 = vld [vmem:[%s363] sm:$0x1]
          %v1391 = vlaneseq
          %v1392 = vshrl.u32 %v1391, 7
          %v1393 = vsub.s32 0, %v1392
          %v1394 = vrot.slane %v1389, %v1393
          %v1396 = vmul.f32 %v1381, %v1394
          %v1397 = vmul.f32 %v1382, %v1394
          %v1398 = vmul.f32 %v1383, %v1394
          %v1399 = vmul.f32 %v1384, %v1394
          %v1400 = vmul.f32 %v1385, %v1394
          %v1401 = vmul.f32 %v1386, %v1394
          %v1402 = vmul.f32 %v1387, %v1394
          %v1403 = vmul.f32 %v1388, %v1394
          %v1404 = vld [vmem:[%s366] sm:$0x1]
          %v1406 = vlaneseq
          %v1407 = vshrl.u32 %v1406, 7
          %v1408 = vsub.s32 0, %v1407
          %v1409 = vrot.slane %v1404, %v1408
          %v1411 = vadd.f32 %v1396, %v1409
          %v1412 = vadd.f32 %v1397, %v1409
          %v1413 = vadd.f32 %v1398, %v1409
          %v1414 = vadd.f32 %v1399, %v1409
          %v1415 = vadd.f32 %v1400, %v1409
          %v1416 = vadd.f32 %v1401, %v1409
          %v1417 = vadd.f32 %v1402, %v1409
          %v1418 = vadd.f32 %v1403, %v1409
          %v1419 = vmax.f32 %v1411, 0.0
          %v1420 = vmax.f32 %v1412, 0.0
          %v1421 = vmax.f32 %v1413, 0.0
          %v1422 = vmax.f32 %v1414, 0.0
          %v1423 = vmax.f32 %v1415, 0.0
          %v1424 = vmax.f32 %v1416, 0.0
          %v1425 = vmax.f32 %v1417, 0.0
          %v1426 = vmax.f32 %v1418, 0.0
          %v1427 = vmin.f32 %v1419, 20.0
          %v1428 = vmin.f32 %v1420, 20.0
          %v1429 = vmin.f32 %v1421, 20.0
          %v1430 = vmin.f32 %v1422, 20.0
          %v1431 = vmin.f32 %v1423, 20.0
          %v1432 = vmin.f32 %v1424, 20.0
          %v1433 = vmin.f32 %v1425, 20.0
          %v1434 = vmin.f32 %v1426, 20.0
          %v1435 = vpack.c.bf16 %v1428, %v1427
          %v1436 = vpack.c.bf16 %v1430, %v1429
          %v1437 = vpack.c.bf16 %v1432, %v1431
          %v1438 = vpack.c.bf16 %v1434, %v1433
          %v1443 = vunpack.c.l.b16 %v1435
          %v1444 = vunpack.c.h.b16 %v1435
          %v1445 = vunpack.c.l.b16 %v1436
          %v1446 = vunpack.c.h.b16 %v1436
          %v1447 = vunpack.c.l.b16 %v1437
          %v1448 = vunpack.c.h.b16 %v1437
          %v1449 = vunpack.c.l.b16 %v1438
          %v1450 = vunpack.c.h.b16 %v1438
          %v1451 = vpack.c.b16 %v1443, %v1443
          %v1452 = vpack.c.b16 %v1444, %v1444
          %v1453 = vpack.c.b16 %v1445, %v1445
          %v1454 = vpack.c.b16 %v1446, %v1446
          %v1455 = vpack.c.b16 %v1447, %v1447
          %v1456 = vpack.c.b16 %v1448, %v1448
          %v1457 = vpack.c.b16 %v1449, %v1449
          %v1458 = vpack.c.b16 %v1450, %v1450
          %1467 = vst [vmem:[%s374] sm:$0xf] %v1451
          %1468 = vst [vmem:[%s374 + $0x4] sm:$0xf] %v1452
          %1469 = vst [vmem:[%s374 + $0x8] sm:$0xf] %v1453
          %1470 = vst [vmem:[%s374 + $0xc] sm:$0xf] %v1454
          %1471 = vst [vmem:[%s374 + $0x10] sm:$0xf] %v1455
          %1472 = vst [vmem:[%s374 + $0x14] sm:$0xf] %v1456
          %1473 = vst [vmem:[%s374 + $0x18] sm:$0xf] %v1457
          %1474 = vst [vmem:[%s374 + $0x1c] sm:$0xf] %v1458
        $region67: #{deepspeech2_forward.8} parent=54 // pred_fallthru
          _
        %s1475 = smul.u32 8, %s20
        %p1476 = scmp.lt.s32.totalorder %s1475, 7
        %s1477 = scalar_select %p1476, %s1475, 7
        %p1478 = scmp.lt.s32.totalorder %s21, 0
        %s1479 = scalar_select %p1478, %s21, 0
        %s1480 = sadd.s32 %s1479, %s1477
        %s1481 = smul.addr %s1480, 4
        %s1482 = scalar_lea.vmem %s4, %s1481
        // Predicated region
        $region68: #{deepspeech2_forward.8} parent=54 // pred_check
          %p1483 = pneg %p162
        $region69: #{deepspeech2_forward.8} parent=54 // pred_check_branch
          %1485 = sbr.rel (%p1483) target = $region71
        $region70: #{deepspeech2_forward.8} parent=54 // pred_region
          %s1486 = smul.u32 8, %s20
        $region71: #{deepspeech2_forward.8} parent=54 // pred_fallthru
          _
        // Predicated region
        $region72: #{deepspeech2_forward.8} parent=54 // pred_check
          %p1487 = pneg %p162
        $region73: #{deepspeech2_forward.8} parent=54 // pred_check_branch
          %1489 = sbr.rel (%p1487) target = $region75
        $region74: #{deepspeech2_forward.8} parent=54 // pred_region
          %s1490 = smul.u32 8, %s20
          %p1491 = scmp.lt.s32.totalorder %s1490, 7
          %s1492 = scalar_select %p1491, %s1490, 7
          %p1493 = scmp.lt.s32.totalorder %s21, 0
          %s1494 = scalar_select %p1493, %s21, 0
          %s1495 = sadd.s32 %s1494, %s1492
          %s1496 = smul.addr %s1495, 4
          %s1497 = scalar_lea.vmem %s4, %s1496
        $region75: #{deepspeech2_forward.8} parent=54 // pred_fallthru
          _
      $region55: #{deepspeech2_forward.8} parent=5 // pred_fallthru
        _
      %p1498 = scmp.le.s32.totalorder 2, %s10
      // Predicated region
      $region76: #{deepspeech2_forward.8} parent=5 // pred_check
        %p1499 = pneg %p1498
      $region77: #{deepspeech2_forward.8} parent=5 // pred_check_branch
        %1501 = sbr.rel (%p1499) target = $region79
      $region78: #{deepspeech2_forward.8} parent=5 // pred_region
        %s1502 = ssub.s32 %s10, 2
      $region79: #{deepspeech2_forward.8} parent=5 // pred_fallthru
        _
    $region6: #{deepspeech2_forward.8} parent=1 // loop_footer
      %s14 = sadd.s32 1, %s10
    $region7: #{deepspeech2_forward.8} parent=1 // loop_footer_branch
      %9 = sbr.rel target = $region3
    $region8: #{deepspeech2_forward.8} parent=1 // loop_exit
      _

// kernel: deepspeech2_forward.9
$region0: #{deepspeech2_forward.9}
  #allocation0 [shape = 'u32[]', space=smem, size = 0x4, offset = 0x4, fixed_abs, tag = 'smem constant byte address 0x4 - core index']
  #allocation1 [shape = 'u32[144,128]{1,0:T(1,128)}', space=vmem, size = 0x12000, scoped, tag = 'internal scratch']
  #allocation2 [shape = 'f32[64,256]{1,0:T(8,128)}', space=vmem, size = 0x10000, scoped, tag = 'scratch operand']
  %s0 = inlined_call_operand.vmem [shape: bf16[64,128], index: 0, kind: input, shape index: {}]
  %s1 = inlined_call_operand.vmem [shape: f32[1,128], index: 1, kind: input, shape index: {}]
  %s2 = inlined_call_operand.vmem [shape: f32[1,128], index: 2, kind: input, shape index: {}]
  %s3 = inlined_call_operand.vmem [shape: bf16[128,256], index: 3, kind: input, shape index: {}]
  %s4 = inlined_call_operand.vmem [shape: f32[1,256], index: 4, kind: input, shape index: {}]
  %s5 = inlined_call_operand.vmem [shape: f32[64,256], index: 5, kind: output, shape index: {}]
  %s6 = sld [smem:[#allocation0]]
  $region38: #{deepspeech2_forward.9} parent=0
    _
  %s8 = ssub.s32 1, %s6
  %s9 = scalar_select 0, %s8, %s6
  // Predicated region
  $region2: #{deepspeech2_forward.9} parent=0 // pred_check
    _
  $region3: #{deepspeech2_forward.9} parent=0 // pred_check_branch
    %11 = sbr.rel (0) target = $region5
  $region4: #{deepspeech2_forward.9} parent=0 // pred_region
    _
  $region5: #{deepspeech2_forward.9} parent=0 // pred_fallthru
    _
  // Predicated region
  $region6: #{deepspeech2_forward.9} parent=0 // pred_check
    _
  $region7: #{deepspeech2_forward.9} parent=0 // pred_check_branch
    %13 = sbr.rel (0) target = $region9
  $region8: #{deepspeech2_forward.9} parent=0 // pred_region
    _
  $region9: #{deepspeech2_forward.9} parent=0 // pred_fallthru
    _
  // Predicated region
  $region10: #{deepspeech2_forward.9} parent=0 // pred_check
    _
  $region11: #{deepspeech2_forward.9} parent=0 // pred_check_branch
    %15 = sbr.rel (0) target = $region13
  $region12: #{deepspeech2_forward.9} parent=0 // pred_region
    _
  $region13: #{deepspeech2_forward.9} parent=0 // pred_fallthru
    _
  // Predicated region
  $region14: #{deepspeech2_forward.9} parent=0 // pred_check
    _
  $region15: #{deepspeech2_forward.9} parent=0 // pred_check_branch
    %17 = sbr.rel (0) target = $region17
  $region16: #{deepspeech2_forward.9} parent=0 // pred_region
    _
  $region17: #{deepspeech2_forward.9} parent=0 // pred_fallthru
    _
  // Predicated region
  $region18: #{deepspeech2_forward.9} parent=0 // pred_check
    _
  $region19: #{deepspeech2_forward.9} parent=0 // pred_check_branch
    %19 = sbr.rel (0) target = $region21
  $region20: #{deepspeech2_forward.9} parent=0 // pred_region
    _
  $region21: #{deepspeech2_forward.9} parent=0 // pred_fallthru
    _
  %p21 = scmp.eq.s32.totalorder 0, 0
  // Predicated region
  $region22: #{deepspeech2_forward.9} parent=0 // pred_check
    %p22 = pneg %p21
  $region23: #{deepspeech2_forward.9} parent=0 // pred_check_branch
    %24 = sbr.rel (%p22) target = $region25
  $region24: #{deepspeech2_forward.9} parent=0 // pred_region
    %25 = vst [vmem:[#allocation2] sm:$0xff] 0.0
    %26 = vst [vmem:[#allocation2 + $0x8] sm:$0xff] 0.0
    %27 = vst [vmem:[#allocation2 + $0x10] sm:$0xff] 0.0
    %28 = vst [vmem:[#allocation2 + $0x18] sm:$0xff] 0.0
    %29 = vst [vmem:[#allocation2 + $0x20] sm:$0xff] 0.0
    %30 = vst [vmem:[#allocation2 + $0x28] sm:$0xff] 0.0
    %31 = vst [vmem:[#allocation2 + $0x30] sm:$0xff] 0.0
    %32 = vst [vmem:[#allocation2 + $0x38] sm:$0xff] 0.0
    %33 = vst [vmem:[#allocation2 + $0x40] sm:$0xff] 0.0
    %34 = vst [vmem:[#allocation2 + $0x48] sm:$0xff] 0.0
    %35 = vst [vmem:[#allocation2 + $0x50] sm:$0xff] 0.0
    %36 = vst [vmem:[#allocation2 + $0x58] sm:$0xff] 0.0
    %37 = vst [vmem:[#allocation2 + $0x60] sm:$0xff] 0.0
    %38 = vst [vmem:[#allocation2 + $0x68] sm:$0xff] 0.0
    %39 = vst [vmem:[#allocation2 + $0x70] sm:$0xff] 0.0
    %40 = vst [vmem:[#allocation2 + $0x78] sm:$0xff] 0.0
  $region25: #{deepspeech2_forward.9} parent=0 // pred_fallthru
    _
  %v41 = vld [vmem:[%s0] sm:$0xf]
  %v42 = vld [vmem:[%s0 + $0x4] sm:$0xf]
  %v43 = vld [vmem:[%s0 + $0x8] sm:$0xf]
  %v44 = vld [vmem:[%s0 + $0xc] sm:$0xf]
  %v45 = vld [vmem:[%s0 + $0x10] sm:$0xf]
  %v46 = vld [vmem:[%s0 + $0x14] sm:$0xf]
  %v47 = vld [vmem:[%s0 + $0x18] sm:$0xf]
  %v48 = vld [vmem:[%s0 + $0x1c] sm:$0xf]
  %v49 = vunpack.c.l.bf16 %v41
  %v50 = vunpack.c.l.bf16 %v42
  %v51 = vunpack.c.l.bf16 %v43
  %v52 = vunpack.c.l.bf16 %v44
  %v53 = vunpack.c.l.bf16 %v45
  %v54 = vunpack.c.l.bf16 %v46
  %v55 = vunpack.c.l.bf16 %v47
  %v56 = vunpack.c.l.bf16 %v48
  %v57 = vld [vmem:[%s1] sm:$0x1]
  %v59 = vlaneseq
  %v60 = vshrl.u32 %v59, 7
  %v61 = vsub.s32 0, %v60
  %v62 = vrot.slane %v57, %v61
  %v64 = vmul.f32 %v49, %v62
  %v65 = vmul.f32 %v50, %v62
  %v66 = vmul.f32 %v51, %v62
  %v67 = vmul.f32 %v52, %v62
  %v68 = vmul.f32 %v53, %v62
  %v69 = vmul.f32 %v54, %v62
  %v70 = vmul.f32 %v55, %v62
  %v71 = vmul.f32 %v56, %v62
  %v72 = vld [vmem:[%s2] sm:$0x1]
  %v74 = vlaneseq
  %v75 = vshrl.u32 %v74, 7
  %v76 = vsub.s32 0, %v75
  %v77 = vrot.slane %v72, %v76
  %v79 = vadd.f32 %v64, %v77
  %v80 = vadd.f32 %v65, %v77
  %v81 = vadd.f32 %v66, %v77
  %v82 = vadd.f32 %v67, %v77
  %v83 = vadd.f32 %v68, %v77
  %v84 = vadd.f32 %v69, %v77
  %v85 = vadd.f32 %v70, %v77
  %v86 = vadd.f32 %v71, %v77
  %v87 = vmax.f32 %v79, 0.0
  %v88 = vmax.f32 %v80, 0.0
  %v89 = vmax.f32 %v81, 0.0
  %v90 = vmax.f32 %v82, 0.0
  %v91 = vmax.f32 %v83, 0.0
  %v92 = vmax.f32 %v84, 0.0
  %v93 = vmax.f32 %v85, 0.0
  %v94 = vmax.f32 %v86, 0.0
  %v95 = vld [vmem:[#allocation2] sm:$0xff]
  %v96 = vld [vmem:[#allocation2 + $0x8] sm:$0xff]
  %v97 = vld [vmem:[#allocation2 + $0x10] sm:$0xff]
  %v98 = vld [vmem:[#allocation2 + $0x18] sm:$0xff]
  %v99 = vld [vmem:[#allocation2 + $0x20] sm:$0xff]
  %v100 = vld [vmem:[#allocation2 + $0x28] sm:$0xff]
  %v101 = vld [vmem:[#allocation2 + $0x30] sm:$0xff]
  %v102 = vld [vmem:[#allocation2 + $0x38] sm:$0xff]
  %v103 = vld [vmem:[#allocation2 + $0x40] sm:$0xff]
  %v104 = vld [vmem:[#allocation2 + $0x48] sm:$0xff]
  %v105 = vld [vmem:[#allocation2 + $0x50] sm:$0xff]
  %v106 = vld [vmem:[#allocation2 + $0x58] sm:$0xff]
  %v107 = vld [vmem:[#allocation2 + $0x60] sm:$0xff]
  %v108 = vld [vmem:[#allocation2 + $0x68] sm:$0xff]
  %v109 = vld [vmem:[#allocation2 + $0x70] sm:$0xff]
  %v110 = vld [vmem:[#allocation2 + $0x78] sm:$0xff]
  %v111 = vpack.c.bf16 %v88, %v87
  %v112 = vpack.c.bf16 %v90, %v89
  %v113 = vpack.c.bf16 %v92, %v91
  %v114 = vpack.c.bf16 %v94, %v93
  %v115 = vld [vmem:[%s3] sm:$0xff]
  %v116 = vld [vmem:[%s3 + $0x8] sm:$0xff]
  %v117 = vld [vmem:[%s3 + $0x10] sm:$0xff]
  %v118 = vld [vmem:[%s3 + $0x18] sm:$0xff]
  %v119 = vld [vmem:[%s3 + $0x20] sm:$0xff]
  %v120 = vld [vmem:[%s3 + $0x28] sm:$0xff]
  %v121 = vld [vmem:[%s3 + $0x30] sm:$0xff]
  %v122 = vld [vmem:[%s3 + $0x38] sm:$0xff]
  %v123 = vld [vmem:[%s3 + $0x40] sm:$0xff]
  %v124 = vld [vmem:[%s3 + $0x48] sm:$0xff]
  %v125 = vld [vmem:[%s3 + $0x50] sm:$0xff]
  %v126 = vld [vmem:[%s3 + $0x58] sm:$0xff]
  %v127 = vld [vmem:[%s3 + $0x60] sm:$0xff]
  %v128 = vld [vmem:[%s3 + $0x68] sm:$0xff]
  %v129 = vld [vmem:[%s3 + $0x70] sm:$0xff]
  %v130 = vld [vmem:[%s3 + $0x78] sm:$0xff]
  %v147 = vunpack.c.l.b16 %v115
  %v148 = vunpack.c.h.b16 %v115
  %v149 = vunpack.c.l.b16 %v116
  %v150 = vunpack.c.h.b16 %v116
  %v151 = vunpack.c.l.b16 %v117
  %v152 = vunpack.c.h.b16 %v117
  %v153 = vunpack.c.l.b16 %v118
  %v154 = vunpack.c.h.b16 %v118
  %v155 = vunpack.c.l.b16 %v119
  %v156 = vunpack.c.h.b16 %v119
  %v157 = vunpack.c.l.b16 %v120
  %v158 = vunpack.c.h.b16 %v120
  %v159 = vunpack.c.l.b16 %v121
  %v160 = vunpack.c.h.b16 %v121
  %v161 = vunpack.c.l.b16 %v122
  %v162 = vunpack.c.h.b16 %v122
  %v163 = vunpack.c.l.b16 %v123
  %v164 = vunpack.c.h.b16 %v123
  %v165 = vunpack.c.l.b16 %v124
  %v166 = vunpack.c.h.b16 %v124
  %v167 = vunpack.c.l.b16 %v125
  %v168 = vunpack.c.h.b16 %v125
  %v169 = vunpack.c.l.b16 %v126
  %v170 = vunpack.c.h.b16 %v126
  %v171 = vunpack.c.l.b16 %v127
  %v172 = vunpack.c.h.b16 %v127
  %v173 = vunpack.c.l.b16 %v128
  %v174 = vunpack.c.h.b16 %v128
  %v175 = vunpack.c.l.b16 %v129
  %v176 = vunpack.c.h.b16 %v129
  %v177 = vunpack.c.l.b16 %v130
  %v178 = vunpack.c.h.b16 %v130
  %v179 = vpack.c.b16 %v149, %v147
  %v180 = vpack.c.b16 %v150, %v148
  %v181 = vpack.c.b16 %v153, %v151
  %v182 = vpack.c.b16 %v154, %v152
  %v183 = vpack.c.b16 %v157, %v155
  %v184 = vpack.c.b16 %v158, %v156
  %v185 = vpack.c.b16 %v161, %v159
  %v186 = vpack.c.b16 %v162, %v160
  %v187 = vpack.c.b16 %v165, %v163
  %v188 = vpack.c.b16 %v166, %v164
  %v189 = vpack.c.b16 %v169, %v167
  %v190 = vpack.c.b16 %v170, %v168
  %v191 = vpack.c.b16 %v173, %v171
  %v192 = vpack.c.b16 %v174, %v172
  %v193 = vpack.c.b16 %v177, %v175
  %v194 = vpack.c.b16 %v178, %v176
  %211 = vmatprep.subr.bf16.mxu0 %v194
  %212 = vmatpush1.bf16.msra.mxu0 %v193
  %213 = vmatprep.subr.bf16.mxu0 %v192
  %214 = vmatpush1.bf16.msra.mxu0 %v191
  %215 = vmatprep.subr.bf16.mxu0 %v190
  %216 = vmatpush1.bf16.msra.mxu0 %v189
  %217 = vmatprep.subr.bf16.mxu0 %v188
  %218 = vmatpush1.bf16.msra.mxu0 %v187
  %219 = vmatprep.subr.bf16.mxu0 %v186
  %220 = vmatpush1.bf16.msra.mxu0 %v185
  %221 = vmatprep.subr.bf16.mxu0 %v184
  %222 = vmatpush1.bf16.msra.mxu0 %v183
  %223 = vmatprep.subr.bf16.mxu0 %v182
  %224 = vmatpush1.bf16.msra.mxu0 %v181
  %225 = vmatprep.subr.bf16.mxu0 %v180
  %226 = vmatpush1.bf16.msra.mxu0 %v179
  %227 = vmatprep.subr.bf16.mxu0 0
  %228 = vmatpush2.bf16.msra.mxu0 0
  %229 = vmatprep.subr.bf16.mxu0 0
  %230 = vmatpush2.bf16.msra.mxu0 0
  %231 = vmatprep.subr.bf16.mxu0 0
  %232 = vmatpush2.bf16.msra.mxu0 0
  %233 = vmatprep.subr.bf16.mxu0 0
  %234 = vmatpush2.bf16.msra.mxu0 0
  %235 = vmatprep.subr.bf16.mxu0 0
  %236 = vmatpush2.bf16.msra.mxu0 0
  %237 = vmatprep.subr.bf16.mxu0 0
  %238 = vmatpush2.bf16.msra.mxu0 0
  %239 = vmatprep.subr.bf16.mxu0 0
  %240 = vmatpush2.bf16.msra.mxu0 0
  %241 = vmatprep.subr.bf16.mxu0 0
  %242 = vmatpush2.bf16.msra.mxu0 0
  %243 = vmatprep.mubr.bf16.mxu0 0
  %244 = vmatmul.mubr.bf16.gmra.mxu0 %v111
  %v245 = vpop.f32.mrf.mxu0
  %v246 = vadd.f32 0.0, %v245
  %v247 = vpop.f32.mrf.mxu0
  %v248 = vadd.f32 0.0, %v247
  %v249 = vpop.f32.mrf.mxu0
  %v250 = vadd.f32 0.0, %v249
  %v251 = vpop.f32.mrf.mxu0
  %v252 = vadd.f32 0.0, %v251
  %253 = vmatprep.mubr.bf16.mxu0 0
  %254 = vmatmul.mubr.bf16.gmra.mxu0 %v112
  %v255 = vpop.f32.mrf.mxu0
  %v256 = vadd.f32 0.0, %v255
  %v257 = vpop.f32.mrf.mxu0
  %v258 = vadd.f32 0.0, %v257
  %v259 = vpop.f32.mrf.mxu0
  %v260 = vadd.f32 0.0, %v259
  %v261 = vpop.f32.mrf.mxu0
  %v262 = vadd.f32 0.0, %v261
  %263 = vmatprep.mubr.bf16.mxu0 0
  %264 = vmatmul.mubr.bf16.gmra.mxu0 %v113
  %v265 = vpop.f32.mrf.mxu0
  %v266 = vadd.f32 0.0, %v265
  %v267 = vpop.f32.mrf.mxu0
  %v268 = vadd.f32 0.0, %v267
  %v269 = vpop.f32.mrf.mxu0
  %v270 = vadd.f32 0.0, %v269
  %v271 = vpop.f32.mrf.mxu0
  %v272 = vadd.f32 0.0, %v271
  %273 = vmatprep.mubr.bf16.mxu0 0
  %274 = vmatmul.mubr.bf16.gmra.mxu0 %v114
  %v275 = vpop.f32.mrf.mxu0
  %v276 = vadd.f32 0.0, %v275
  %v277 = vpop.f32.mrf.mxu0
  %v278 = vadd.f32 0.0, %v277
  %v279 = vpop.f32.mrf.mxu0
  %v280 = vadd.f32 0.0, %v279
  %v281 = vpop.f32.mrf.mxu0
  %v282 = vadd.f32 0.0, %v281
  %283 = vdwg.mxu0
  %v284 = vadd.f32 %v95, %v246
  %v285 = vadd.f32 %v96, %v248
  %v286 = vadd.f32 %v97, %v250
  %v287 = vadd.f32 %v98, %v252
  %v288 = vadd.f32 %v99, %v256
  %v289 = vadd.f32 %v100, %v258
  %v290 = vadd.f32 %v101, %v260
  %v291 = vadd.f32 %v102, %v262
  %v292 = vadd.f32 %v103, %v266
  %v293 = vadd.f32 %v104, %v268
  %v294 = vadd.f32 %v105, %v270
  %v295 = vadd.f32 %v106, %v272
  %v296 = vadd.f32 %v107, %v276
  %v297 = vadd.f32 %v108, %v278
  %v298 = vadd.f32 %v109, %v280
  %v299 = vadd.f32 %v110, %v282
  %300 = vst [vmem:[#allocation2] sm:$0xff] %v284
  %301 = vst [vmem:[#allocation2 + $0x8] sm:$0xff] %v285
  %302 = vst [vmem:[#allocation2 + $0x10] sm:$0xff] %v286
  %303 = vst [vmem:[#allocation2 + $0x18] sm:$0xff] %v287
  %304 = vst [vmem:[#allocation2 + $0x20] sm:$0xff] %v288
  %305 = vst [vmem:[#allocation2 + $0x28] sm:$0xff] %v289
  %306 = vst [vmem:[#allocation2 + $0x30] sm:$0xff] %v290
  %307 = vst [vmem:[#allocation2 + $0x38] sm:$0xff] %v291
  %308 = vst [vmem:[#allocation2 + $0x40] sm:$0xff] %v292
  %309 = vst [vmem:[#allocation2 + $0x48] sm:$0xff] %v293
  %310 = vst [vmem:[#allocation2 + $0x50] sm:$0xff] %v294
  %311 = vst [vmem:[#allocation2 + $0x58] sm:$0xff] %v295
  %312 = vst [vmem:[#allocation2 + $0x60] sm:$0xff] %v296
  %313 = vst [vmem:[#allocation2 + $0x68] sm:$0xff] %v297
  %314 = vst [vmem:[#allocation2 + $0x70] sm:$0xff] %v298
  %315 = vst [vmem:[#allocation2 + $0x78] sm:$0xff] %v299
  // Predicated region
  $region26: #{deepspeech2_forward.9} parent=0 // pred_check
    %p316 = pneg %p21
  $region27: #{deepspeech2_forward.9} parent=0 // pred_check_branch
    %318 = sbr.rel (%p316) target = $region29
  $region28: #{deepspeech2_forward.9} parent=0 // pred_region
    %v319 = vld [vmem:[#allocation2] sm:$0xff]
    %v320 = vld [vmem:[#allocation2 + $0x8] sm:$0xff]
    %v321 = vld [vmem:[#allocation2 + $0x10] sm:$0xff]
    %v322 = vld [vmem:[#allocation2 + $0x18] sm:$0xff]
    %v323 = vld [vmem:[#allocation2 + $0x20] sm:$0xff]
    %v324 = vld [vmem:[#allocation2 + $0x28] sm:$0xff]
    %v325 = vld [vmem:[#allocation2 + $0x30] sm:$0xff]
    %v326 = vld [vmem:[#allocation2 + $0x38] sm:$0xff]
    %v327 = vld [vmem:[#allocation2 + $0x40] sm:$0xff]
    %v328 = vld [vmem:[#allocation2 + $0x48] sm:$0xff]
    %v329 = vld [vmem:[#allocation2 + $0x50] sm:$0xff]
    %v330 = vld [vmem:[#allocation2 + $0x58] sm:$0xff]
    %v331 = vld [vmem:[#allocation2 + $0x60] sm:$0xff]
    %v332 = vld [vmem:[#allocation2 + $0x68] sm:$0xff]
    %v333 = vld [vmem:[#allocation2 + $0x70] sm:$0xff]
    %v334 = vld [vmem:[#allocation2 + $0x78] sm:$0xff]
    %v335 = vld [vmem:[%s4] sm:$0x3]
    %v337 = vlaneseq
    %v338 = vshrl.u32 %v337, 7
    %v339 = vsub.s32 0, %v338
    %v340 = vrot.slane %v335, %v339
    %v341 = vlaneseq
    %v342 = vshrl.u32 %v341, 7
    %v343 = vsub.s32 1, %v342
    %v344 = vrot.slane %v335, %v343
    %v347 = vadd.f32 %v319, %v340
    %v348 = vadd.f32 %v320, %v344
    %v349 = vadd.f32 %v321, %v340
    %v350 = vadd.f32 %v322, %v344
    %v351 = vadd.f32 %v323, %v340
    %v352 = vadd.f32 %v324, %v344
    %v353 = vadd.f32 %v325, %v340
    %v354 = vadd.f32 %v326, %v344
    %v355 = vadd.f32 %v327, %v340
    %v356 = vadd.f32 %v328, %v344
    %v357 = vadd.f32 %v329, %v340
    %v358 = vadd.f32 %v330, %v344
    %v359 = vadd.f32 %v331, %v340
    %v360 = vadd.f32 %v332, %v344
    %v361 = vadd.f32 %v333, %v340
    %v362 = vadd.f32 %v334, %v344
    %363 = vst [vmem:[%s5] sm:$0xff] %v347
    %364 = vst [vmem:[%s5 + $0x8] sm:$0xff] %v348
    %365 = vst [vmem:[%s5 + $0x10] sm:$0xff] %v349
    %366 = vst [vmem:[%s5 + $0x18] sm:$0xff] %v350
    %367 = vst [vmem:[%s5 + $0x20] sm:$0xff] %v351
    %368 = vst [vmem:[%s5 + $0x28] sm:$0xff] %v352
    %369 = vst [vmem:[%s5 + $0x30] sm:$0xff] %v353
    %370 = vst [vmem:[%s5 + $0x38] sm:$0xff] %v354
    %371 = vst [vmem:[%s5 + $0x40] sm:$0xff] %v355
    %372 = vst [vmem:[%s5 + $0x48] sm:$0xff] %v356
    %373 = vst [vmem:[%s5 + $0x50] sm:$0xff] %v357
    %374 = vst [vmem:[%s5 + $0x58] sm:$0xff] %v358
    %375 = vst [vmem:[%s5 + $0x60] sm:$0xff] %v359
    %376 = vst [vmem:[%s5 + $0x68] sm:$0xff] %v360
    %377 = vst [vmem:[%s5 + $0x70] sm:$0xff] %v361
    %378 = vst [vmem:[%s5 + $0x78] sm:$0xff] %v362
  $region29: #{deepspeech2_forward.9} parent=0 // pred_fallthru
    _
  // Predicated region
  $region30: #{deepspeech2_forward.9} parent=0 // pred_check
    _
  $region31: #{deepspeech2_forward.9} parent=0 // pred_check_branch
    %380 = sbr.rel (0) target = $region33
  $region32: #{deepspeech2_forward.9} parent=0 // pred_region
    _
  $region33: #{deepspeech2_forward.9} parent=0 // pred_fallthru
    _
  // Predicated region
  $region34: #{deepspeech2_forward.9} parent=0 // pred_check
    _
  $region35: #{deepspeech2_forward.9} parent=0 // pred_check_branch
    %382 = sbr.rel (0) target = $region37
  $region36: #{deepspeech2_forward.9} parent=0 // pred_region
    _
  $region37: #{deepspeech2_forward.9} parent=0 // pred_fallthru
    _

// kernel: deepspeech2_forward.13
$region0: #{deepspeech2_forward.13}
  #allocation0 [shape = 'u32[]', space=smem, size = 0x4, offset = 0x4, fixed_abs, tag = 'smem constant byte address 0x4 - core index']
  #allocation1 [shape = 'u32[144,128]{1,0:T(1,128)}', space=vmem, size = 0x12000, scoped, tag = 'internal scratch']
  %s0 = inlined_call_operand.vmem [shape: bf16[16,32], index: 0, kind: input, shape index: {}]
  %s1 = inlined_call_operand.vmem [shape: bf16[32,128], index: 1, kind: input, shape index: {}]
  %s2 = inlined_call_operand.vmem [shape: f32[16,128], index: 2, kind: output, shape index: {}]
  %s3 = sld [smem:[#allocation0]]
  $region18: #{deepspeech2_forward.13} parent=0
    _
  %s5 = ssub.s32 1, %s3
  %s6 = scalar_select 0, %s5, %s3
  // Predicated region
  $region2: #{deepspeech2_forward.13} parent=0 // pred_check
    _
  $region3: #{deepspeech2_forward.13} parent=0 // pred_check_branch
    %8 = sbr.rel (0) target = $region5
  $region4: #{deepspeech2_forward.13} parent=0 // pred_region
    _
  $region5: #{deepspeech2_forward.13} parent=0 // pred_fallthru
    _
  // Predicated region
  $region6: #{deepspeech2_forward.13} parent=0 // pred_check
    _
  $region7: #{deepspeech2_forward.13} parent=0 // pred_check_branch
    %10 = sbr.rel (0) target = $region9
  $region8: #{deepspeech2_forward.13} parent=0 // pred_region
    _
  $region9: #{deepspeech2_forward.13} parent=0 // pred_fallthru
    _
  %v12 = vld [vmem:[%s0] sm:$0xf]
  %v13 = vld [vmem:[%s0 + $0x4] sm:$0xf]
  %v14 = vld [vmem:[%s1] sm:$0xf]
  %v15 = vld [vmem:[%s1 + $0x4] sm:$0xf]
  %v16 = vld [vmem:[%s1 + $0x8] sm:$0xf]
  %v17 = vld [vmem:[%s1 + $0xc] sm:$0xf]
  %v20 = vunpack.c.l.b16 %v12
  %v21 = vunpack.c.l.b16 %v13
  %v22 = vpack.c.b16 %v21, %v20
  %v27 = vunpack.c.l.b16 %v14
  %v28 = vunpack.c.l.b16 %v15
  %v29 = vunpack.c.l.b16 %v16
  %v30 = vunpack.c.l.b16 %v17
  %v31 = vpack.c.b16 %v28, %v27
  %v32 = vpack.c.b16 %v30, %v29
  %vm35 = vcmask 261120
  %v37 = vsel %vm35, %v22, 0
  %39 = vmatprep.subr.bf16.mxu0 0
  %40 = vmatpush1.bf16.msra.mxu0 0
  %41 = vmatprep.subr.bf16.mxu0 0
  %42 = vmatpush1.bf16.msra.mxu0 0
  %43 = vmatprep.subr.bf16.mxu0 0
  %44 = vmatpush1.bf16.msra.mxu0 0
  %45 = vmatprep.subr.bf16.mxu0 0
  %46 = vmatpush1.bf16.msra.mxu0 0
  %47 = vmatprep.subr.bf16.mxu0 0
  %48 = vmatpush1.bf16.msra.mxu0 0
  %49 = vmatprep.subr.bf16.mxu0 0
  %50 = vmatpush1.bf16.msra.mxu0 0
  %51 = vmatprep.subr.bf16.mxu0 0
  %52 = vmatpush1.bf16.msra.mxu0 %v32
  %53 = vmatprep.subr.bf16.mxu0 0
  %54 = vmatpush1.bf16.msra.mxu0 %v31
  %55 = vmatprep.subr.bf16.mxu0 0
  %56 = vmatpush2.bf16.msra.mxu0 0
  %57 = vmatprep.subr.bf16.mxu0 0
  %58 = vmatpush2.bf16.msra.mxu0 0
  %59 = vmatprep.subr.bf16.mxu0 0
  %60 = vmatpush2.bf16.msra.mxu0 0
  %61 = vmatprep.subr.bf16.mxu0 0
  %62 = vmatpush2.bf16.msra.mxu0 0
  %63 = vmatprep.subr.bf16.mxu0 0
  %64 = vmatpush2.bf16.msra.mxu0 0
  %65 = vmatprep.subr.bf16.mxu0 0
  %66 = vmatpush2.bf16.msra.mxu0 0
  %67 = vmatprep.subr.bf16.mxu0 0
  %68 = vmatpush2.bf16.msra.mxu0 0
  %69 = vmatprep.subr.bf16.mxu0 0
  %70 = vmatpush2.bf16.msra.mxu0 0
  %71 = vmatprep.mubr.bf16.mxu0 0
  %72 = vmatmul.mubr.bf16.gmra.mxu0 %v37
  %v73 = vpop.f32.mrf.mxu0
  %v74 = vadd.f32 0.0, %v73
  %v75 = vpop.f32.mrf.mxu0
  %v76 = vpop.f32.mrf.mxu0
  %v77 = vadd.f32 0.0, %v76
  %v78 = vpop.f32.mrf.mxu0
  %79 = vdwg.mxu0
  %v80 = vlaneseq
  %v81 = vand.u32 %v80, 127
  %vm82 = vcmp.lt.s32.totalorder %v81, 28
  %v83 = vsel %vm82, %v74, -1e+30
  %v84 = vsel %vm82, %v77, -1e+30
  %85 = vmax.xlane.f32.xlu0 %v83
  %v86 = vpop.xlane.xlu0 %85
  %87 = vmax.xlane.f32.xlu0 %v84
  %v88 = vpop.xlane.xlu0 %87
  %v89 = vsub.f32 %v83, %v86
  %v90 = vsub.f32 %v84, %v88
  %v91 = vmul.f32 %v89, 1.442695
  %v92 = vpow.pop %v91
  %v93 = vmul.f32 %v90, 1.442695
  %v94 = vpow.pop %v93
  %95 = vadd.xlane.f32.xlu0 %v92
  %v96 = vpop.xlane.xlu0 %95
  %97 = vadd.xlane.f32.xlu0 %v94
  %v98 = vpop.xlane.xlu0 %97
  %v99 = vlog2.pop %v96
  %v100 = vmul.f32 %v99, 0.6931472
  %v101 = vlog2.pop %v98
  %v102 = vmul.f32 %v101, 0.6931472
  %v103 = vsub.f32 %v89, %v100
  %v104 = vsub.f32 %v90, %v102
  %105 = vst [vmem:[%s2] sm:$0xff] %v103
  %106 = vst [vmem:[%s2 + $0x8] sm:$0xff] %v104
  // Predicated region
  $region10: #{deepspeech2_forward.13} parent=0 // pred_check
    _
  $region11: #{deepspeech2_forward.13} parent=0 // pred_check_branch
    %108 = sbr.rel (0) target = $region13
  $region12: #{deepspeech2_forward.13} parent=0 // pred_region
    _
  $region13: #{deepspeech2_forward.13} parent=0 // pred_fallthru
    _
  // Predicated region
  $region14: #{deepspeech2_forward.13} parent=0 // pred_check
    _
  $region15: #{deepspeech2_forward.13} parent=0 // pred_check_branch
    %110 = sbr.rel (0) target = $region17
  $region16: #{deepspeech2_forward.13} parent=0 // pred_region
    _
  $region17: #{deepspeech2_forward.13} parent=0 // pred_fallthru
    _

// kernel: deepspeech2_forward.10
$region0: #{deepspeech2_forward.10}
  #allocation0 [shape = 'u32[]', space=smem, size = 0x4, offset = 0x4, fixed_abs, tag = 'smem constant byte address 0x4 - core index']
  #allocation1 [shape = 'u32[144,128]{1,0:T(1,128)}', space=vmem, size = 0x12000, scoped, tag = 'internal scratch']
  #allocation2 [shape = 'f32[2,8,32]{2,1,0:T(8,128)}', space=vmem, size = 0x2000, scoped, tag = 'scratch operand']
  %s0 = inlined_call_operand.vmem [shape: s32[8,1], index: 0, kind: input, shape index: {}]
  %s1 = inlined_call_operand.vmem [shape: f32[8,8,192], index: 1, kind: input, shape index: {}, may-alias: {1,2}]
  %s2 = inlined_call_operand.vmem [shape: f32[8,8,192], index: 2, kind: input, shape index: {}, may-alias: {1,2}]
  %s3 = inlined_call_operand.vmem [shape: bf16[2,32,96], index: 3, kind: input, shape index: {}]
  %s4 = inlined_call_operand.vmem [shape: f32[2,1,96], index: 4, kind: input, shape index: {}]
  %s5 = inlined_call_operand.vmem [shape: bf16[8,8,32], index: 5, kind: output, shape index: {0}]
  %s6 = inlined_call_operand.vmem [shape: bf16[8,8,32], index: 6, kind: output, shape index: {1}]
  %7 = xla_tuple %s5, %s6
  %s8 = sld [smem:[#allocation0]]
  $region42: #{deepspeech2_forward.10} parent=0
    _
  %s10 = ssub.s32 1, %s8
  %s11 = scalar_select 0, %s10, %s8
  // Predicated region
  $region2: #{deepspeech2_forward.10} parent=0 // pred_check
    _
  $region3: #{deepspeech2_forward.10} parent=0 // pred_check_branch
    %13 = sbr.rel (0) target = $region5
  $region4: #{deepspeech2_forward.10} parent=0 // pred_region
    _
  $region5: #{deepspeech2_forward.10} parent=0 // pred_fallthru
    _
  // Predicated region
  $region6: #{deepspeech2_forward.10} parent=0 // pred_check
    _
  $region7: #{deepspeech2_forward.10} parent=0 // pred_check_branch
    %15 = sbr.rel (0) target = $region9
  $region8: #{deepspeech2_forward.10} parent=0 // pred_region
    _
  $region9: #{deepspeech2_forward.10} parent=0 // pred_fallthru
    _
  // Predicated region
  $region10: #{deepspeech2_forward.10} parent=0 // pred_check
    _
  $region11: #{deepspeech2_forward.10} parent=0 // pred_check_branch
    %17 = sbr.rel (0) target = $region13
  $region12: #{deepspeech2_forward.10} parent=0 // pred_region
    %s18 = ssub.s32 0, 0
    %s19 = smul.u32 8, %s18
    %p20 = scmp.lt.s32.totalorder %s19, 7
    %s21 = scalar_select %p20, %s19, 7
    %s22 = smul.addr %s21, 2
    %s23 = smul.addr %s22, 8
    %s24 = scalar_lea.vmem %s2, %s23
    %s25 = ssub.s32 0, 0
    %s26 = smul.u32 8, %s25
  $region13: #{deepspeech2_forward.10} parent=0 // pred_fallthru
    _
  // Predicated region
  $region14: #{deepspeech2_forward.10} parent=0 // pred_check
    _
  $region15: #{deepspeech2_forward.10} parent=0 // pred_check_branch
    %28 = sbr.rel (0) target = $region17
  $region16: #{deepspeech2_forward.10} parent=0 // pred_region
    _
  $region17: #{deepspeech2_forward.10} parent=0 // pred_fallthru
    _
  // Predicated region
  $region18: #{deepspeech2_forward.10} parent=0 // pred_check
    _
  $region19: #{deepspeech2_forward.10} parent=0 // pred_check_branch
    %30 = sbr.rel (0) target = $region21
  $region20: #{deepspeech2_forward.10} parent=0 // pred_region
    _
  $region21: #{deepspeech2_forward.10} parent=0 // pred_fallthru
    _
  %s31 = ssub.s32 0, 0
  %s32 = smul.u32 8, %s31
  %p33 = scmp.lt.s32.totalorder %s32, 7
  %s34 = scalar_select %p33, %s32, 7
  %s35 = smul.addr %s34, 2
  %s36 = smul.addr %s35, 8
  %s37 = scalar_lea.vmem %s2, %s36
  %s38 = ssub.s32 0, 0
  %s39 = smul.u32 8, %s38
  %p40 = scmp.lt.s32.totalorder %s39, 7
  %s41 = scalar_select %p40, %s39, 7
  %s42 = smul.addr %s41, 4
  %s43 = scalar_lea.vmem %s6, %s42
  %s44 = ssub.s32 0, 0
  %s45 = smul.u32 8, %s44
  %p46 = scmp.lt.s32.totalorder %s45, 7
  %s47 = scalar_select %p46, %s45, 7
  %s48 = smul.addr %s47, 2
  %s49 = smul.addr %s48, 8
  %s50 = scalar_lea.vmem %s2, %s49
  %s51 = ssub.s32 0, 0
  %s52 = smul.u32 8, %s51
  %s53 = ssub.s32 0, 0
  %s54 = smul.u32 8, %s53
  %p55 = scmp.lt.s32.totalorder %s54, 7
  %s56 = scalar_select %p55, %s54, 7
  %s57 = smul.addr %s56, 4
  %s58 = scalar_lea.vmem %s6, %s57
  %s59 = ssub.s32 0, 0
  %s60 = smul.u32 8, %s59
  %p62 = scmp.eq.s32.totalorder 0, 0
  // Predicated region
  $region22: #{deepspeech2_forward.10} parent=0 // pred_check
    %p63 = pneg %p62
  $region23: #{deepspeech2_forward.10} parent=0 // pred_check_branch
    %65 = sbr.rel (%p63) target = $region25
  $region24: #{deepspeech2_forward.10} parent=0 // pred_region
    %vm66 = vcmask 261120
    %67 = vst.msk [vmem:[#allocation2] sm:$0xff] %vm66, 0.0
    %68 = vst.msk [vmem:[#allocation2 + $0x8] sm:$0xff] %vm66, 0.0
  $region25: #{deepspeech2_forward.10} parent=0 // pred_fallthru
    _
  %v69 = vld [vmem:[%s0] sm:$0xff]
  %v70 = vld [vmem:[#allocation2] sm:$0xff]
  %s71 = scalar_lea.vmem [#allocation2], 8
  %v72 = vld [vmem:[%s71] sm:$0xff]
  %s73 = smul.u32 0, 8
  %s74 = ssub.s32 0, 0
  %s75 = smul.u32 %s74, 8
  %v76 = vstv %s73
  %vm77 = vcmp.lt.s32.totalorder %v76, %v69
  %s78 = sadd.s32 %s75, 7
  %v79 = vstv %s78
  %vm80 = vcmp.lt.s32.totalorder %v79, %v69
  %v81 = vld [vmem:[%s1] sm:$0xff]
  %v82 = vpack.c.bf16 %v70, %v70
  %v83 = vld [vmem:[%s3] sm:$0xf]
  %v84 = vld [vmem:[%s3 + $0x4] sm:$0xf]
  %v85 = vld [vmem:[%s3 + $0x8] sm:$0xf]
  %v86 = vld [vmem:[%s3 + $0xc] sm:$0xf]
  %v87 = vld [vmem:[%s4] sm:$0x1]
  %v89 = vlaneseq
  %v90 = vshrl.u32 %v89, 7
  %v91 = vsub.s32 0, %v90
  %v92 = vrot.slane %v87, %v91
  %v98 = vunpack.c.l.b16 %v83
  %v99 = vunpack.c.l.b16 %v84
  %v100 = vunpack.c.l.b16 %v85
  %v101 = vunpack.c.l.b16 %v86
  %v102 = vpack.c.b16 %v99, %v98
  %v103 = vpack.c.b16 %v101, %v100
  %vm106 = vcmask 261120
  %v108 = vsel %vm106, %v82, 0
  %110 = vmatprep.subr.bf16.mxu0 0
  %111 = vmatpush1.bf16.msra.mxu0 0
  %112 = vmatprep.subr.bf16.mxu0 0
  %113 = vmatpush1.bf16.msra.mxu0 0
  %114 = vmatprep.subr.bf16.mxu0 0
  %115 = vmatpush1.bf16.msra.mxu0 0
  %116 = vmatprep.subr.bf16.mxu0 0
  %117 = vmatpush1.bf16.msra.mxu0 0
  %118 = vmatprep.subr.bf16.mxu0 0
  %119 = vmatpush1.bf16.msra.mxu0 0
  %120 = vmatprep.subr.bf16.mxu0 0
  %121 = vmatpush1.bf16.msra.mxu0 0
  %122 = vmatprep.subr.bf16.mxu0 0
  %123 = vmatpush1.bf16.msra.mxu0 %v103
  %124 = vmatprep.subr.bf16.mxu0 0
  %125 = vmatpush1.bf16.msra.mxu0 %v102
  %126 = vmatprep.subr.bf16.mxu0 0
  %127 = vmatpush2.bf16.msra.mxu0 0
  %128 = vmatprep.subr.bf16.mxu0 0
  %129 = vmatpush2.bf16.msra.mxu0 0
  %130 = vmatprep.subr.bf16.mxu0 0
  %131 = vmatpush2.bf16.msra.mxu0 0
  %132 = vmatprep.subr.bf16.mxu0 0
  %133 = vmatpush2.bf16.msra.mxu0 0
  %134 = vmatprep.subr.bf16.mxu0 0
  %135 = vmatpush2.bf16.msra.mxu0 0
  %136 = vmatprep.subr.bf16.mxu0 0
  %137 = vmatpush2.bf16.msra.mxu0 0
  %138 = vmatprep.subr.bf16.mxu0 0
  %139 = vmatpush2.bf16.msra.mxu0 0
  %140 = vmatprep.subr.bf16.mxu0 0
  %141 = vmatpush2.bf16.msra.mxu0 0
  %142 = vmatprep.mubr.bf16.mxu0 0
  %143 = vmatmul.mubr.bf16.gmra.mxu0 %v108
  %v144 = vpop.f32.mrf.mxu0
  %v145 = vadd.f32 %v92, %v144
  %v146 = vpop.f32.mrf.mxu0
  %v147 = vpop.f32.mrf.mxu0
  %v148 = vpop.f32.mrf.mxu0
  %149 = vdwg.mxu0
  %v150 = vadd.f32 %v81, %v145
  %v151 = vxor.u32 %v150, 2147483648
  %v152 = vmul.f32 %v151, 1.442695
  %v153 = vpow.pop %v152
  %v154 = vadd.f32 %v153, 1.0
  %v155 = vrcp.pop %v154
  %v156 = vmul.f32 1.0, %v155
  %158 = vrot.lane.b32.xlu0 %v145, 64
  %v159 = vpop.permute.xlu0 %158
  %v161 = vmul.f32 %v156, %v159
  %163 = vrot.lane.b32.xlu0 %v161, 64
  %v164 = vpop.permute.xlu0 %163
  %v166 = vadd.f32 %v81, %v164
  %v167 = vtanh.pop %v166
  %v168 = vsub.f32 1.0, %v156
  %170 = vrot.lane.b32.xlu0 %v167, 96
  %v171 = vpop.permute.xlu0 %170
  %v173 = vmul.f32 %v168, %v171
  %175 = vrot.lane.b32.xlu0 %v70, 32
  %v176 = vpop.permute.xlu0 %175
  %v178 = vmul.f32 %v156, %v176
  %v179 = vadd.f32 %v173, %v178
  %s180 = scalar_lea.vmem %s50, 112
  %v181 = vld [vmem:[%s180] sm:$0xff]
  %v182 = vld [vmem:[%s180 + $0x8] sm:$0xff]
  %v183 = vpack.c.bf16 %v72, %v72
  %s184 = scalar_lea.vmem %s3, 16
  %v185 = vld [vmem:[%s184] sm:$0xf]
  %v186 = vld [vmem:[%s184 + $0x4] sm:$0xf]
  %v187 = vld [vmem:[%s184 + $0x8] sm:$0xf]
  %v188 = vld [vmem:[%s184 + $0xc] sm:$0xf]
  %s189 = scalar_lea.vmem %s4, 1
  %v190 = vld [vmem:[%s189] sm:$0x1]
  %v192 = vlaneseq
  %v193 = vshrl.u32 %v192, 7
  %v194 = vsub.s32 0, %v193
  %v195 = vrot.slane %v190, %v194
  %v201 = vunpack.c.l.b16 %v185
  %v202 = vunpack.c.l.b16 %v186
  %v203 = vunpack.c.l.b16 %v187
  %v204 = vunpack.c.l.b16 %v188
  %v205 = vpack.c.b16 %v202, %v201
  %v206 = vpack.c.b16 %v204, %v203
  %v210 = vsel %vm106, %v183, 0
  %212 = vmatprep.subr.bf16.mxu0 0
  %213 = vmatpush1.bf16.msra.mxu0 0
  %214 = vmatprep.subr.bf16.mxu0 0
  %215 = vmatpush1.bf16.msra.mxu0 0
  %216 = vmatprep.subr.bf16.mxu0 0
  %217 = vmatpush1.bf16.msra.mxu0 0
  %218 = vmatprep.subr.bf16.mxu0 0
  %219 = vmatpush1.bf16.msra.mxu0 0
  %220 = vmatprep.subr.bf16.mxu0 0
  %221 = vmatpush1.bf16.msra.mxu0 0
  %222 = vmatprep.subr.bf16.mxu0 0
  %223 = vmatpush1.bf16.msra.mxu0 0
  %224 = vmatprep.subr.bf16.mxu0 0
  %225 = vmatpush1.bf16.msra.mxu0 %v206
  %226 = vmatprep.subr.bf16.mxu0 0
  %227 = vmatpush1.bf16.msra.mxu0 %v205
  %228 = vmatprep.subr.bf16.mxu0 0
  %229 = vmatpush2.bf16.msra.mxu0 0
  %230 = vmatprep.subr.bf16.mxu0 0
  %231 = vmatpush2.bf16.msra.mxu0 0
  %232 = vmatprep.subr.bf16.mxu0 0
  %233 = vmatpush2.bf16.msra.mxu0 0
  %234 = vmatprep.subr.bf16.mxu0 0
  %235 = vmatpush2.bf16.msra.mxu0 0
  %236 = vmatprep.subr.bf16.mxu0 0
  %237 = vmatpush2.bf16.msra.mxu0 0
  %238 = vmatprep.subr.bf16.mxu0 0
  %239 = vmatpush2.bf16.msra.mxu0 0
  %240 = vmatprep.subr.bf16.mxu0 0
  %241 = vmatpush2.bf16.msra.mxu0 0
  %242 = vmatprep.subr.bf16.mxu0 0
  %243 = vmatpush2.bf16.msra.mxu0 0
  %244 = vmatprep.mubr.bf16.mxu0 0
  %245 = vmatmul.mubr.bf16.gmra.mxu0 %v210
  %v246 = vpop.f32.mrf.mxu0
  %v247 = vadd.f32 %v195, %v246
  %v248 = vpop.f32.mrf.mxu0
  %v249 = vpop.f32.mrf.mxu0
  %v250 = vpop.f32.mrf.mxu0
  %251 = vdwg.mxu0
  %253 = vrot.lane.b32.xlu0 %v247, 96
  %v254 = vpop.permute.xlu0 %253
  %v256 = vadd.f32 %v181, %v254
  %v257 = vxor.u32 %v256, 2147483648
  %v258 = vmul.f32 %v257, 1.442695
  %v259 = vpow.pop %v258
  %v260 = vadd.f32 %v259, 1.0
  %v261 = vrcp.pop %v260
  %v262 = vmul.f32 1.0, %v261
  %v263 = vadd.f32 %v182, %v254
  %v264 = vxor.u32 %v263, 2147483648
  %v265 = vmul.f32 %v264, 1.442695
  %v266 = vpow.pop %v265
  %v267 = vadd.f32 %v266, 1.0
  %v268 = vrcp.pop %v267
  %v269 = vmul.f32 1.0, %v268
  %270 = vrot.lane.b32.xlu0 %v247, 32
  %v271 = vpop.permute.xlu0 %270
  %v273 = vmul.f32 %v262, %v271
  %275 = vrot.lane.b32.xlu0 %v273, 64
  %v276 = vpop.permute.xlu0 %275
  %v278 = vadd.f32 %v182, %v276
  %v279 = vtanh.pop %v278
  %v280 = vsub.f32 1.0, %v269
  %282 = vrot.lane.b32.xlu0 %v279, 96
  %v283 = vpop.permute.xlu0 %282
  %v285 = vmul.f32 %v280, %v283
  %v286 = vmul.f32 %v269, %v72
  %v287 = vadd.f32 %v285, %v286
  %v288 = vsel %vm77, 1, 0
  %289 = vset.pattern.permute.xlu0 0
  %290 = vperm.xlu0 %289, %v288
  %v291 = vpop.permute.xlu0 %290
  %vm292 = vcmp.eq.s32.totalorder %v291, 1
  %v293 = vsel %vm292, %v179, %v176
  %v294 = vsel %vm80, 1, 0
  %295 = vset.pattern.permute.xlu0 0
  %296 = vperm.xlu0 %295, %v294
  %v297 = vpop.permute.xlu0 %296
  %vm298 = vcmp.eq.s32.totalorder %v297, 1
  %v299 = vsel %vm298, %v287, %v72
  %v300 = vsel %vm292, %v179, 0.0
  %v301 = vpack.c.bf16 %v300, %v300
  %v303 = vunpack.c.l.b16 %v301
  %v304 = vpack.c.b16 %v303, %v303
  %305 = vrot.lane.b32.xlu0 %v304, 96
  %v306 = vpop.permute.xlu0 %305
  %vm308 = vcmask 257024
  %309 = vst.msk [vmem:[%s5] sm:$0xf] %vm308, %v306
  %v310 = vsel %vm298, %v287, 0.0
  %v311 = vpack.c.bf16 %v310, %v310
  %s312 = scalar_lea.vmem %s58, 28
  %313 = vst.msk [vmem:[%s312] sm:$0xf] %vm308, %v311
  %s314 = sadd.s32 %s73, 1
  %v315 = vstv %s314
  %vm316 = vcmp.lt.s32.totalorder %v315, %v69
  %s317 = sadd.s32 %s75, 6
  %v318 = vstv %s317
  %vm319 = vcmp.lt.s32.totalorder %v318, %v69
  %s320 = scalar_lea.vmem %s1, 16
  %v321 = vld [vmem:[%s320] sm:$0xff]
  %v322 = vpack.c.bf16 %v293, %v293
  %v323 = vld [vmem:[%s3] sm:$0xf]
  %v324 = vld [vmem:[%s3 + $0x4] sm:$0xf]
  %v325 = vld [vmem:[%s3 + $0x8] sm:$0xf]
  %v326 = vld [vmem:[%s3 + $0xc] sm:$0xf]
  %v327 = vld [vmem:[%s4] sm:$0x1]
  %v329 = vlaneseq
  %v330 = vshrl.u32 %v329, 7
  %v331 = vsub.s32 0, %v330
  %v332 = vrot.slane %v327, %v331
  %335 = vrot.lane.b32.xlu0 %v322, 96
  %v336 = vpop.permute.xlu0 %335
  %v341 = vunpack.c.l.b16 %v323
  %v342 = vunpack.c.l.b16 %v324
  %v343 = vunpack.c.l.b16 %v325
  %v344 = vunpack.c.l.b16 %v326
  %v345 = vpack.c.b16 %v342, %v341
  %v346 = vpack.c.b16 %v344, %v343
  %v350 = vsel %vm106, %v336, 0
  %352 = vmatprep.subr.bf16.mxu0 0
  %353 = vmatpush1.bf16.msra.mxu0 0
  %354 = vmatprep.subr.bf16.mxu0 0
  %355 = vmatpush1.bf16.msra.mxu0 0
  %356 = vmatprep.subr.bf16.mxu0 0
  %357 = vmatpush1.bf16.msra.mxu0 0
  %358 = vmatprep.subr.bf16.mxu0 0
  %359 = vmatpush1.bf16.msra.mxu0 0
  %360 = vmatprep.subr.bf16.mxu0 0
  %361 = vmatpush1.bf16.msra.mxu0 0
  %362 = vmatprep.subr.bf16.mxu0 0
  %363 = vmatpush1.bf16.msra.mxu0 0
  %364 = vmatprep.subr.bf16.mxu0 0
  %365 = vmatpush1.bf16.msra.mxu0 %v346
  %366 = vmatprep.subr.bf16.mxu0 0
  %367 = vmatpush1.bf16.msra.mxu0 %v345
  %368 = vmatprep.subr.bf16.mxu0 0
  %369 = vmatpush2.bf16.msra.mxu0 0
  %370 = vmatprep.subr.bf16.mxu0 0
  %371 = vmatpush2.bf16.msra.mxu0 0
  %372 = vmatprep.subr.bf16.mxu0 0
  %373 = vmatpush2.bf16.msra.mxu0 0
  %374 = vmatprep.subr.bf16.mxu0 0
  %375 = vmatpush2.bf16.msra.mxu0 0
  %376 = vmatprep.subr.bf16.mxu0 0
  %377 = vmatpush2.bf16.msra.mxu0 0
  %378 = vmatprep.subr.bf16.mxu0 0
  %379 = vmatpush2.bf16.msra.mxu0 0
  %380 = vmatprep.subr.bf16.mxu0 0
  %381 = vmatpush2.bf16.msra.mxu0 0
  %382 = vmatprep.subr.bf16.mxu0 0
  %383 = vmatpush2.bf16.msra.mxu0 0
  %384 = vmatprep.mubr.bf16.mxu0 0
  %385 = vmatmul.mubr.bf16.gmra.mxu0 %v350
  %v386 = vpop.f32.mrf.mxu0
  %v387 = vadd.f32 %v332, %v386
  %v388 = vpop.f32.mrf.mxu0
  %v389 = vpop.f32.mrf.mxu0
  %v390 = vpop.f32.mrf.mxu0
  %391 = vdwg.mxu0
  %v392 = vadd.f32 %v321, %v387
  %v393 = vxor.u32 %v392, 2147483648
  %v394 = vmul.f32 %v393, 1.442695
  %v395 = vpow.pop %v394
  %v396 = vadd.f32 %v395, 1.0
  %v397 = vrcp.pop %v396
  %v398 = vmul.f32 1.0, %v397
  %400 = vrot.lane.b32.xlu0 %v387, 64
  %v401 = vpop.permute.xlu0 %400
  %v403 = vmul.f32 %v398, %v401
  %405 = vrot.lane.b32.xlu0 %v403, 64
  %v406 = vpop.permute.xlu0 %405
  %v408 = vadd.f32 %v321, %v406
  %v409 = vtanh.pop %v408
  %v410 = vsub.f32 1.0, %v398
  %412 = vrot.lane.b32.xlu0 %v409, 96
  %v413 = vpop.permute.xlu0 %412
  %v415 = vmul.f32 %v410, %v413
  %v416 = vmul.f32 %v398, %v293
  %v417 = vadd.f32 %v415, %v416
  %s418 = scalar_lea.vmem %s50, 96
  %v419 = vld [vmem:[%s418] sm:$0xff]
  %v420 = vld [vmem:[%s418 + $0x8] sm:$0xff]
  %v421 = vpack.c.bf16 %v299, %v299
  %v422 = vld [vmem:[%s184] sm:$0xf]
  %v423 = vld [vmem:[%s184 + $0x4] sm:$0xf]
  %v424 = vld [vmem:[%s184 + $0x8] sm:$0xf]
  %v425 = vld [vmem:[%s184 + $0xc] sm:$0xf]
  %v426 = vld [vmem:[%s189] sm:$0x1]
  %v428 = vlaneseq
  %v429 = vshrl.u32 %v428, 7
  %v430 = vsub.s32 0, %v429
  %v431 = vrot.slane %v426, %v430
  %v437 = vunpack.c.l.b16 %v422
  %v438 = vunpack.c.l.b16 %v423
  %v439 = vunpack.c.l.b16 %v424
  %v440 = vunpack.c.l.b16 %v425
  %v441 = vpack.c.b16 %v438, %v437
  %v442 = vpack.c.b16 %v440, %v439
  %v446 = vsel %vm106, %v421, 0
  %448 = vmatprep.subr.bf16.mxu0 0
  %449 = vmatpush1.bf16.msra.mxu0 0
  %450 = vmatprep.subr.bf16.mxu0 0
  %451 = vmatpush1.bf16.msra.mxu0 0
  %452 = vmatprep.subr.bf16.mxu0 0
  %453 = vmatpush1.bf16.msra.mxu0 0
  %454 = vmatprep.subr.bf16.mxu0 0
  %455 = vmatpush1.bf16.msra.mxu0 0
  %456 = vmatprep.subr.bf16.mxu0 0
  %457 = vmatpush1.bf16.msra.mxu0 0
  %458 = vmatprep.subr.bf16.mxu0 0
  %459 = vmatpush1.bf16.msra.mxu0 0
  %460 = vmatprep.subr.bf16.mxu0 0
  %461 = vmatpush1.bf16.msra.mxu0 %v442
  %462 = vmatprep.subr.bf16.mxu0 0
  %463 = vmatpush1.bf16.msra.mxu0 %v441
  %464 = vmatprep.subr.bf16.mxu0 0
  %465 = vmatpush2.bf16.msra.mxu0 0
  %466 = vmatprep.subr.bf16.mxu0 0
  %467 = vmatpush2.bf16.msra.mxu0 0
  %468 = vmatprep.subr.bf16.mxu0 0
  %469 = vmatpush2.bf16.msra.mxu0 0
  %470 = vmatprep.subr.bf16.mxu0 0
  %471 = vmatpush2.bf16.msra.mxu0 0
  %472 = vmatprep.subr.bf16.mxu0 0
  %473 = vmatpush2.bf16.msra.mxu0 0
  %474 = vmatprep.subr.bf16.mxu0 0
  %475 = vmatpush2.bf16.msra.mxu0 0
  %476 = vmatprep.subr.bf16.mxu0 0
  %477 = vmatpush2.bf16.msra.mxu0 0
  %478 = vmatprep.subr.bf16.mxu0 0
  %479 = vmatpush2.bf16.msra.mxu0 0
  %480 = vmatprep.mubr.bf16.mxu0 0
  %481 = vmatmul.mubr.bf16.gmra.mxu0 %v446
  %v482 = vpop.f32.mrf.mxu0
  %v483 = vadd.f32 %v431, %v482
  %v484 = vpop.f32.mrf.mxu0
  %v485 = vpop.f32.mrf.mxu0
  %v486 = vpop.f32.mrf.mxu0
  %487 = vdwg.mxu0
  %489 = vrot.lane.b32.xlu0 %v483, 96
  %v490 = vpop.permute.xlu0 %489
  %v492 = vadd.f32 %v419, %v490
  %v493 = vxor.u32 %v492, 2147483648
  %v494 = vmul.f32 %v493, 1.442695
  %v495 = vpow.pop %v494
  %v496 = vadd.f32 %v495, 1.0
  %v497 = vrcp.pop %v496
  %v498 = vmul.f32 1.0, %v497
  %v499 = vadd.f32 %v420, %v490
  %v500 = vxor.u32 %v499, 2147483648
  %v501 = vmul.f32 %v500, 1.442695
  %v502 = vpow.pop %v501
  %v503 = vadd.f32 %v502, 1.0
  %v504 = vrcp.pop %v503
  %v505 = vmul.f32 1.0, %v504
  %506 = vrot.lane.b32.xlu0 %v483, 32
  %v507 = vpop.permute.xlu0 %506
  %v509 = vmul.f32 %v498, %v507
  %511 = vrot.lane.b32.xlu0 %v509, 64
  %v512 = vpop.permute.xlu0 %511
  %v514 = vadd.f32 %v420, %v512
  %v515 = vtanh.pop %v514
  %v516 = vsub.f32 1.0, %v505
  %518 = vrot.lane.b32.xlu0 %v515, 96
  %v519 = vpop.permute.xlu0 %518
  %v521 = vmul.f32 %v516, %v519
  %v522 = vmul.f32 %v505, %v299
  %v523 = vadd.f32 %v521, %v522
  %v524 = vsel %vm316, 1, 0
  %525 = vset.pattern.permute.xlu0 0
  %526 = vperm.xlu0 %525, %v524
  %v527 = vpop.permute.xlu0 %526
  %vm528 = vcmp.eq.s32.totalorder %v527, 1
  %v529 = vsel %vm528, %v417, %v293
  %v530 = vsel %vm319, 1, 0
  %531 = vset.pattern.permute.xlu0 0
  %532 = vperm.xlu0 %531, %v530
  %v533 = vpop.permute.xlu0 %532
  %vm534 = vcmp.eq.s32.totalorder %v533, 1
  %v535 = vsel %vm534, %v523, %v299
  %v536 = vsel %vm528, %v417, 0.0
  %v537 = vpack.c.bf16 %v536, %v536
  %v539 = vunpack.c.l.b16 %v537
  %v540 = vpack.c.b16 %v539, %v539
  %541 = vrot.lane.b32.xlu0 %v540, 96
  %v542 = vpop.permute.xlu0 %541
  %s544 = scalar_lea.vmem %s5, 4
  %545 = vst.msk [vmem:[%s544] sm:$0xf] %vm308, %v542
  %v546 = vsel %vm534, %v523, 0.0
  %v547 = vpack.c.bf16 %v546, %v546
  %s548 = scalar_lea.vmem %s58, 24
  %549 = vst.msk [vmem:[%s548] sm:$0xf] %vm308, %v547
  %s550 = sadd.s32 %s73, 2
  %v551 = vstv %s550
  %vm552 = vcmp.lt.s32.totalorder %v551, %v69
  %s553 = sadd.s32 %s75, 5
  %v554 = vstv %s553
  %vm555 = vcmp.lt.s32.totalorder %v554, %v69
  %s556 = scalar_lea.vmem %s1, 32
  %v557 = vld [vmem:[%s556] sm:$0xff]
  %v558 = vpack.c.bf16 %v529, %v529
  %v559 = vld [vmem:[%s3] sm:$0xf]
  %v560 = vld [vmem:[%s3 + $0x4] sm:$0xf]
  %v561 = vld [vmem:[%s3 + $0x8] sm:$0xf]
  %v562 = vld [vmem:[%s3 + $0xc] sm:$0xf]
  %v563 = vld [vmem:[%s4] sm:$0x1]
  %v565 = vlaneseq
  %v566 = vshrl.u32 %v565, 7
  %v567 = vsub.s32 0, %v566
  %v568 = vrot.slane %v563, %v567
  %571 = vrot.lane.b32.xlu0 %v558, 96
  %v572 = vpop.permute.xlu0 %571
  %v577 = vunpack.c.l.b16 %v559
  %v578 = vunpack.c.l.b16 %v560
  %v579 = vunpack.c.l.b16 %v561
  %v580 = vunpack.c.l.b16 %v562
  %v581 = vpack.c.b16 %v578, %v577
  %v582 = vpack.c.b16 %v580, %v579
  %v586 = vsel %vm106, %v572, 0
  %588 = vmatprep.subr.bf16.mxu0 0
  %589 = vmatpush1.bf16.msra.mxu0 0
  %590 = vmatprep.subr.bf16.mxu0 0
  %591 = vmatpush1.bf16.msra.mxu0 0
  %592 = vmatprep.subr.bf16.mxu0 0
  %593 = vmatpush1.bf16.msra.mxu0 0
  %594 = vmatprep.subr.bf16.mxu0 0
  %595 = vmatpush1.bf16.msra.mxu0 0
  %596 = vmatprep.subr.bf16.mxu0 0
  %597 = vmatpush1.bf16.msra.mxu0 0
  %598 = vmatprep.subr.bf16.mxu0 0
  %599 = vmatpush1.bf16.msra.mxu0 0
  %600 = vmatprep.subr.bf16.mxu0 0
  %601 = vmatpush1.bf16.msra.mxu0 %v582
  %602 = vmatprep.subr.bf16.mxu0 0
  %603 = vmatpush1.bf16.msra.mxu0 %v581
  %604 = vmatprep.subr.bf16.mxu0 0
  %605 = vmatpush2.bf16.msra.mxu0 0
  %606 = vmatprep.subr.bf16.mxu0 0
  %607 = vmatpush2.bf16.msra.mxu0 0
  %608 = vmatprep.subr.bf16.mxu0 0
  %609 = vmatpush2.bf16.msra.mxu0 0
  %610 = vmatprep.subr.bf16.mxu0 0
  %611 = vmatpush2.bf16.msra.mxu0 0
  %612 = vmatprep.subr.bf16.mxu0 0
  %613 = vmatpush2.bf16.msra.mxu0 0
  %614 = vmatprep.subr.bf16.mxu0 0
  %615 = vmatpush2.bf16.msra.mxu0 0
  %616 = vmatprep.subr.bf16.mxu0 0
  %617 = vmatpush2.bf16.msra.mxu0 0
  %618 = vmatprep.subr.bf16.mxu0 0
  %619 = vmatpush2.bf16.msra.mxu0 0
  %620 = vmatprep.mubr.bf16.mxu0 0
  %621 = vmatmul.mubr.bf16.gmra.mxu0 %v586
  %v622 = vpop.f32.mrf.mxu0
  %v623 = vadd.f32 %v568, %v622
  %v624 = vpop.f32.mrf.mxu0
  %v625 = vpop.f32.mrf.mxu0
  %v626 = vpop.f32.mrf.mxu0
  %627 = vdwg.mxu0
  %v628 = vadd.f32 %v557, %v623
  %v629 = vxor.u32 %v628, 2147483648
  %v630 = vmul.f32 %v629, 1.442695
  %v631 = vpow.pop %v630
  %v632 = vadd.f32 %v631, 1.0
  %v633 = vrcp.pop %v632
  %v634 = vmul.f32 1.0, %v633
  %636 = vrot.lane.b32.xlu0 %v623, 64
  %v637 = vpop.permute.xlu0 %636
  %v639 = vmul.f32 %v634, %v637
  %641 = vrot.lane.b32.xlu0 %v639, 64
  %v642 = vpop.permute.xlu0 %641
  %v644 = vadd.f32 %v557, %v642
  %v645 = vtanh.pop %v644
  %v646 = vsub.f32 1.0, %v634
  %648 = vrot.lane.b32.xlu0 %v645, 96
  %v649 = vpop.permute.xlu0 %648
  %v651 = vmul.f32 %v646, %v649
  %v652 = vmul.f32 %v634, %v529
  %v653 = vadd.f32 %v651, %v652
  %s654 = scalar_lea.vmem %s50, 80
  %v655 = vld [vmem:[%s654] sm:$0xff]
  %v656 = vld [vmem:[%s654 + $0x8] sm:$0xff]
  %v657 = vpack.c.bf16 %v535, %v535
  %v658 = vld [vmem:[%s184] sm:$0xf]
  %v659 = vld [vmem:[%s184 + $0x4] sm:$0xf]
  %v660 = vld [vmem:[%s184 + $0x8] sm:$0xf]
  %v661 = vld [vmem:[%s184 + $0xc] sm:$0xf]
  %v662 = vld [vmem:[%s189] sm:$0x1]
  %v664 = vlaneseq
  %v665 = vshrl.u32 %v664, 7
  %v666 = vsub.s32 0, %v665
  %v667 = vrot.slane %v662, %v666
  %v673 = vunpack.c.l.b16 %v658
  %v674 = vunpack.c.l.b16 %v659
  %v675 = vunpack.c.l.b16 %v660
  %v676 = vunpack.c.l.b16 %v661
  %v677 = vpack.c.b16 %v674, %v673
  %v678 = vpack.c.b16 %v676, %v675
  %v682 = vsel %vm106, %v657, 0
  %684 = vmatprep.subr.bf16.mxu0 0
  %685 = vmatpush1.bf16.msra.mxu0 0
  %686 = vmatprep.subr.bf16.mxu0 0
  %687 = vmatpush1.bf16.msra.mxu0 0
  %688 = vmatprep.subr.bf16.mxu0 0
  %689 = vmatpush1.bf16.msra.mxu0 0
  %690 = vmatprep.subr.bf16.mxu0 0
  %691 = vmatpush1.bf16.msra.mxu0 0
  %692 = vmatprep.subr.bf16.mxu0 0
  %693 = vmatpush1.bf16.msra.mxu0 0
  %694 = vmatprep.subr.bf16.mxu0 0
  %695 = vmatpush1.bf16.msra.mxu0 0
  %696 = vmatprep.subr.bf16.mxu0 0
  %697 = vmatpush1.bf16.msra.mxu0 %v678
  %698 = vmatprep.subr.bf16.mxu0 0
  %699 = vmatpush1.bf16.msra.mxu0 %v677
  %700 = vmatprep.subr.bf16.mxu0 0
  %701 = vmatpush2.bf16.msra.mxu0 0
  %702 = vmatprep.subr.bf16.mxu0 0
  %703 = vmatpush2.bf16.msra.mxu0 0
  %704 = vmatprep.subr.bf16.mxu0 0
  %705 = vmatpush2.bf16.msra.mxu0 0
  %706 = vmatprep.subr.bf16.mxu0 0
  %707 = vmatpush2.bf16.msra.mxu0 0
  %708 = vmatprep.subr.bf16.mxu0 0
  %709 = vmatpush2.bf16.msra.mxu0 0
  %710 = vmatprep.subr.bf16.mxu0 0
  %711 = vmatpush2.bf16.msra.mxu0 0
  %712 = vmatprep.subr.bf16.mxu0 0
  %713 = vmatpush2.bf16.msra.mxu0 0
  %714 = vmatprep.subr.bf16.mxu0 0
  %715 = vmatpush2.bf16.msra.mxu0 0
  %716 = vmatprep.mubr.bf16.mxu0 0
  %717 = vmatmul.mubr.bf16.gmra.mxu0 %v682
  %v718 = vpop.f32.mrf.mxu0
  %v719 = vadd.f32 %v667, %v718
  %v720 = vpop.f32.mrf.mxu0
  %v721 = vpop.f32.mrf.mxu0
  %v722 = vpop.f32.mrf.mxu0
  %723 = vdwg.mxu0
  %725 = vrot.lane.b32.xlu0 %v719, 96
  %v726 = vpop.permute.xlu0 %725
  %v728 = vadd.f32 %v655, %v726
  %v729 = vxor.u32 %v728, 2147483648
  %v730 = vmul.f32 %v729, 1.442695
  %v731 = vpow.pop %v730
  %v732 = vadd.f32 %v731, 1.0
  %v733 = vrcp.pop %v732
  %v734 = vmul.f32 1.0, %v733
  %v735 = vadd.f32 %v656, %v726
  %v736 = vxor.u32 %v735, 2147483648
  %v737 = vmul.f32 %v736, 1.442695
  %v738 = vpow.pop %v737
  %v739 = vadd.f32 %v738, 1.0
  %v740 = vrcp.pop %v739
  %v741 = vmul.f32 1.0, %v740
  %742 = vrot.lane.b32.xlu0 %v719, 32
  %v743 = vpop.permute.xlu0 %742
  %v745 = vmul.f32 %v734, %v743
  %747 = vrot.lane.b32.xlu0 %v745, 64
  %v748 = vpop.permute.xlu0 %747
  %v750 = vadd.f32 %v656, %v748
  %v751 = vtanh.pop %v750
  %v752 = vsub.f32 1.0, %v741
  %754 = vrot.lane.b32.xlu0 %v751, 96
  %v755 = vpop.permute.xlu0 %754
  %v757 = vmul.f32 %v752, %v755
  %v758 = vmul.f32 %v741, %v535
  %v759 = vadd.f32 %v757, %v758
  %v760 = vsel %vm552, 1, 0
  %761 = vset.pattern.permute.xlu0 0
  %762 = vperm.xlu0 %761, %v760
  %v763 = vpop.permute.xlu0 %762
  %vm764 = vcmp.eq.s32.totalorder %v763, 1
  %v765 = vsel %vm764, %v653, %v529
  %v766 = vsel %vm555, 1, 0
  %767 = vset.pattern.permute.xlu0 0
  %768 = vperm.xlu0 %767, %v766
  %v769 = vpop.permute.xlu0 %768
  %vm770 = vcmp.eq.s32.totalorder %v769, 1
  %v771 = vsel %vm770, %v759, %v535
  %v772 = vsel %vm764, %v653, 0.0
  %v773 = vpack.c.bf16 %v772, %v772
  %v775 = vunpack.c.l.b16 %v773
  %v776 = vpack.c.b16 %v775, %v775
  %777 = vrot.lane.b32.xlu0 %v776, 96
  %v778 = vpop.permute.xlu0 %777
  %s780 = scalar_lea.vmem %s5, 8
  %781 = vst.msk [vmem:[%s780] sm:$0xf] %vm308, %v778
  %v782 = vsel %vm770, %v759, 0.0
  %v783 = vpack.c.bf16 %v782, %v782
  %s784 = scalar_lea.vmem %s58, 20
  %785 = vst.msk [vmem:[%s784] sm:$0xf] %vm308, %v783
  %s786 = sadd.s32 %s73, 3
  %v787 = vstv %s786
  %vm788 = vcmp.lt.s32.totalorder %v787, %v69
  %s789 = sadd.s32 %s75, 4
  %v790 = vstv %s789
  %vm791 = vcmp.lt.s32.totalorder %v790, %v69
  %s792 = scalar_lea.vmem %s1, 48
  %v793 = vld [vmem:[%s792] sm:$0xff]
  %v794 = vpack.c.bf16 %v765, %v765
  %v795 = vld [vmem:[%s3] sm:$0xf]
  %v796 = vld [vmem:[%s3 + $0x4] sm:$0xf]
  %v797 = vld [vmem:[%s3 + $0x8] sm:$0xf]
  %v798 = vld [vmem:[%s3 + $0xc] sm:$0xf]
  %v799 = vld [vmem:[%s4] sm:$0x1]
  %v801 = vlaneseq
  %v802 = vshrl.u32 %v801, 7
  %v803 = vsub.s32 0, %v802
  %v804 = vrot.slane %v799, %v803
  %807 = vrot.lane.b32.xlu0 %v794, 96
  %v808 = vpop.permute.xlu0 %807
  %v813 = vunpack.c.l.b16 %v795
  %v814 = vunpack.c.l.b16 %v796
  %v815 = vunpack.c.l.b16 %v797
  %v816 = vunpack.c.l.b16 %v798
  %v817 = vpack.c.b16 %v814, %v813
  %v818 = vpack.c.b16 %v816, %v815
  %v822 = vsel %vm106, %v808, 0
  %824 = vmatprep.subr.bf16.mxu0 0
  %825 = vmatpush1.bf16.msra.mxu0 0
  %826 = vmatprep.subr.bf16.mxu0 0
  %827 = vmatpush1.bf16.msra.mxu0 0
  %828 = vmatprep.subr.bf16.mxu0 0
  %829 = vmatpush1.bf16.msra.mxu0 0
  %830 = vmatprep.subr.bf16.mxu0 0
  %831 = vmatpush1.bf16.msra.mxu0 0
  %832 = vmatprep.subr.bf16.mxu0 0
  %833 = vmatpush1.bf16.msra.mxu0 0
  %834 = vmatprep.subr.bf16.mxu0 0
  %835 = vmatpush1.bf16.msra.mxu0 0
  %836 = vmatprep.subr.bf16.mxu0 0
  %837 = vmatpush1.bf16.msra.mxu0 %v818
  %838 = vmatprep.subr.bf16.mxu0 0
  %839 = vmatpush1.bf16.msra.mxu0 %v817
  %840 = vmatprep.subr.bf16.mxu0 0
  %841 = vmatpush2.bf16.msra.mxu0 0
  %842 = vmatprep.subr.bf16.mxu0 0
  %843 = vmatpush2.bf16.msra.mxu0 0
  %844 = vmatprep.subr.bf16.mxu0 0
  %845 = vmatpush2.bf16.msra.mxu0 0
  %846 = vmatprep.subr.bf16.mxu0 0
  %847 = vmatpush2.bf16.msra.mxu0 0
  %848 = vmatprep.subr.bf16.mxu0 0
  %849 = vmatpush2.bf16.msra.mxu0 0
  %850 = vmatprep.subr.bf16.mxu0 0
  %851 = vmatpush2.bf16.msra.mxu0 0
  %852 = vmatprep.subr.bf16.mxu0 0
  %853 = vmatpush2.bf16.msra.mxu0 0
  %854 = vmatprep.subr.bf16.mxu0 0
  %855 = vmatpush2.bf16.msra.mxu0 0
  %856 = vmatprep.mubr.bf16.mxu0 0
  %857 = vmatmul.mubr.bf16.gmra.mxu0 %v822
  %v858 = vpop.f32.mrf.mxu0
  %v859 = vadd.f32 %v804, %v858
  %v860 = vpop.f32.mrf.mxu0
  %v861 = vpop.f32.mrf.mxu0
  %v862 = vpop.f32.mrf.mxu0
  %863 = vdwg.mxu0
  %v864 = vadd.f32 %v793, %v859
  %v865 = vxor.u32 %v864, 2147483648
  %v866 = vmul.f32 %v865, 1.442695
  %v867 = vpow.pop %v866
  %v868 = vadd.f32 %v867, 1.0
  %v869 = vrcp.pop %v868
  %v870 = vmul.f32 1.0, %v869
  %872 = vrot.lane.b32.xlu0 %v859, 64
  %v873 = vpop.permute.xlu0 %872
  %v875 = vmul.f32 %v870, %v873
  %877 = vrot.lane.b32.xlu0 %v875, 64
  %v878 = vpop.permute.xlu0 %877
  %v880 = vadd.f32 %v793, %v878
  %v881 = vtanh.pop %v880
  %v882 = vsub.f32 1.0, %v870
  %884 = vrot.lane.b32.xlu0 %v881, 96
  %v885 = vpop.permute.xlu0 %884
  %v887 = vmul.f32 %v882, %v885
  %v888 = vmul.f32 %v870, %v765
  %v889 = vadd.f32 %v887, %v888
  %s890 = scalar_lea.vmem %s50, 64
  %v891 = vld [vmem:[%s890] sm:$0xff]
  %v892 = vld [vmem:[%s890 + $0x8] sm:$0xff]
  %v893 = vpack.c.bf16 %v771, %v771
  %v894 = vld [vmem:[%s184] sm:$0xf]
  %v895 = vld [vmem:[%s184 + $0x4] sm:$0xf]
  %v896 = vld [vmem:[%s184 + $0x8] sm:$0xf]
  %v897 = vld [vmem:[%s184 + $0xc] sm:$0xf]
  %v898 = vld [vmem:[%s189] sm:$0x1]
  %v900 = vlaneseq
  %v901 = vshrl.u32 %v900, 7
  %v902 = vsub.s32 0, %v901
  %v903 = vrot.slane %v898, %v902
  %v909 = vunpack.c.l.b16 %v894
  %v910 = vunpack.c.l.b16 %v895
  %v911 = vunpack.c.l.b16 %v896
  %v912 = vunpack.c.l.b16 %v897
  %v913 = vpack.c.b16 %v910, %v909
  %v914 = vpack.c.b16 %v912, %v911
  %v918 = vsel %vm106, %v893, 0
  %920 = vmatprep.subr.bf16.mxu0 0
  %921 = vmatpush1.bf16.msra.mxu0 0
  %922 = vmatprep.subr.bf16.mxu0 0
  %923 = vmatpush1.bf16.msra.mxu0 0
  %924 = vmatprep.subr.bf16.mxu0 0
  %925 = vmatpush1.bf16.msra.mxu0 0
  %926 = vmatprep.subr.bf16.mxu0 0
  %927 = vmatpush1.bf16.msra.mxu0 0
  %928 = vmatprep.subr.bf16.mxu0 0
  %929 = vmatpush1.bf16.msra.mxu0 0
  %930 = vmatprep.subr.bf16.mxu0 0
  %931 = vmatpush1.bf16.msra.mxu0 0
  %932 = vmatprep.subr.bf16.mxu0 0
  %933 = vmatpush1.bf16.msra.mxu0 %v914
  %934 = vmatprep.subr.bf16.mxu0 0
  %935 = vmatpush1.bf16.msra.mxu0 %v913
  %936 = vmatprep.subr.bf16.mxu0 0
  %937 = vmatpush2.bf16.msra.mxu0 0
  %938 = vmatprep.subr.bf16.mxu0 0
  %939 = vmatpush2.bf16.msra.mxu0 0
  %940 = vmatprep.subr.bf16.mxu0 0
  %941 = vmatpush2.bf16.msra.mxu0 0
  %942 = vmatprep.subr.bf16.mxu0 0
  %943 = vmatpush2.bf16.msra.mxu0 0
  %944 = vmatprep.subr.bf16.mxu0 0
  %945 = vmatpush2.bf16.msra.mxu0 0
  %946 = vmatprep.subr.bf16.mxu0 0
  %947 = vmatpush2.bf16.msra.mxu0 0
  %948 = vmatprep.subr.bf16.mxu0 0
  %949 = vmatpush2.bf16.msra.mxu0 0
  %950 = vmatprep.subr.bf16.mxu0 0
  %951 = vmatpush2.bf16.msra.mxu0 0
  %952 = vmatprep.mubr.bf16.mxu0 0
  %953 = vmatmul.mubr.bf16.gmra.mxu0 %v918
  %v954 = vpop.f32.mrf.mxu0
  %v955 = vadd.f32 %v903, %v954
  %v956 = vpop.f32.mrf.mxu0
  %v957 = vpop.f32.mrf.mxu0
  %v958 = vpop.f32.mrf.mxu0
  %959 = vdwg.mxu0
  %961 = vrot.lane.b32.xlu0 %v955, 96
  %v962 = vpop.permute.xlu0 %961
  %v964 = vadd.f32 %v891, %v962
  %v965 = vxor.u32 %v964, 2147483648
  %v966 = vmul.f32 %v965, 1.442695
  %v967 = vpow.pop %v966
  %v968 = vadd.f32 %v967, 1.0
  %v969 = vrcp.pop %v968
  %v970 = vmul.f32 1.0, %v969
  %v971 = vadd.f32 %v892, %v962
  %v972 = vxor.u32 %v971, 2147483648
  %v973 = vmul.f32 %v972, 1.442695
  %v974 = vpow.pop %v973
  %v975 = vadd.f32 %v974, 1.0
  %v976 = vrcp.pop %v975
  %v977 = vmul.f32 1.0, %v976
  %978 = vrot.lane.b32.xlu0 %v955, 32
  %v979 = vpop.permute.xlu0 %978
  %v981 = vmul.f32 %v970, %v979
  %983 = vrot.lane.b32.xlu0 %v981, 64
  %v984 = vpop.permute.xlu0 %983
  %v986 = vadd.f32 %v892, %v984
  %v987 = vtanh.pop %v986
  %v988 = vsub.f32 1.0, %v977
  %990 = vrot.lane.b32.xlu0 %v987, 96
  %v991 = vpop.permute.xlu0 %990
  %v993 = vmul.f32 %v988, %v991
  %v994 = vmul.f32 %v977, %v771
  %v995 = vadd.f32 %v993, %v994
  %v996 = vsel %vm788, 1, 0
  %997 = vset.pattern.permute.xlu0 0
  %998 = vperm.xlu0 %997, %v996
  %v999 = vpop.permute.xlu0 %998
  %vm1000 = vcmp.eq.s32.totalorder %v999, 1
  %v1001 = vsel %vm1000, %v889, %v765
  %v1002 = vsel %vm791, 1, 0
  %1003 = vset.pattern.permute.xlu0 0
  %1004 = vperm.xlu0 %1003, %v1002
  %v1005 = vpop.permute.xlu0 %1004
  %vm1006 = vcmp.eq.s32.totalorder %v1005, 1
  %v1007 = vsel %vm1006, %v995, %v771
  %v1008 = vsel %vm1000, %v889, 0.0
  %v1009 = vpack.c.bf16 %v1008, %v1008
  %v1011 = vunpack.c.l.b16 %v1009
  %v1012 = vpack.c.b16 %v1011, %v1011
  %1013 = vrot.lane.b32.xlu0 %v1012, 96
  %v1014 = vpop.permute.xlu0 %1013
  %s1016 = scalar_lea.vmem %s5, 12
  %1017 = vst.msk [vmem:[%s1016] sm:$0xf] %vm308, %v1014
  %v1018 = vsel %vm1006, %v995, 0.0
  %v1019 = vpack.c.bf16 %v1018, %v1018
  %s1020 = scalar_lea.vmem %s58, 16
  %1021 = vst.msk [vmem:[%s1020] sm:$0xf] %vm308, %v1019
  %s1022 = sadd.s32 %s73, 4
  %v1023 = vstv %s1022
  %vm1024 = vcmp.lt.s32.totalorder %v1023, %v69
  %s1025 = sadd.s32 %s75, 3
  %v1026 = vstv %s1025
  %vm1027 = vcmp.lt.s32.totalorder %v1026, %v69
  %s1028 = scalar_lea.vmem %s1, 64
  %v1029 = vld [vmem:[%s1028] sm:$0xff]
  %v1030 = vpack.c.bf16 %v1001, %v1001
  %v1031 = vld [vmem:[%s3] sm:$0xf]
  %v1032 = vld [vmem:[%s3 + $0x4] sm:$0xf]
  %v1033 = vld [vmem:[%s3 + $0x8] sm:$0xf]
  %v1034 = vld [vmem:[%s3 + $0xc] sm:$0xf]
  %v1035 = vld [vmem:[%s4] sm:$0x1]
  %v1037 = vlaneseq
  %v1038 = vshrl.u32 %v1037, 7
  %v1039 = vsub.s32 0, %v1038
  %v1040 = vrot.slane %v1035, %v1039
  %1043 = vrot.lane.b32.xlu0 %v1030, 96
  %v1044 = vpop.permute.xlu0 %1043
  %v1049 = vunpack.c.l.b16 %v1031
  %v1050 = vunpack.c.l.b16 %v1032
  %v1051 = vunpack.c.l.b16 %v1033
  %v1052 = vunpack.c.l.b16 %v1034
  %v1053 = vpack.c.b16 %v1050, %v1049
  %v1054 = vpack.c.b16 %v1052, %v1051
  %v1058 = vsel %vm106, %v1044, 0
  %1060 = vmatprep.subr.bf16.mxu0 0
  %1061 = vmatpush1.bf16.msra.mxu0 0
  %1062 = vmatprep.subr.bf16.mxu0 0
  %1063 = vmatpush1.bf16.msra.mxu0 0
  %1064 = vmatprep.subr.bf16.mxu0 0
  %1065 = vmatpush1.bf16.msra.mxu0 0
  %1066 = vmatprep.subr.bf16.mxu0 0
  %1067 = vmatpush1.bf16.msra.mxu0 0
  %1068 = vmatprep.subr.bf16.mxu0 0
  %1069 = vmatpush1.bf16.msra.mxu0 0
  %1070 = vmatprep.subr.bf16.mxu0 0
  %1071 = vmatpush1.bf16.msra.mxu0 0
  %1072 = vmatprep.subr.bf16.mxu0 0
  %1073 = vmatpush1.bf16.msra.mxu0 %v1054
  %1074 = vmatprep.subr.bf16.mxu0 0
  %1075 = vmatpush1.bf16.msra.mxu0 %v1053
  %1076 = vmatprep.subr.bf16.mxu0 0
  %1077 = vmatpush2.bf16.msra.mxu0 0
  %1078 = vmatprep.subr.bf16.mxu0 0
  %1079 = vmatpush2.bf16.msra.mxu0 0
  %1080 = vmatprep.subr.bf16.mxu0 0
  %1081 = vmatpush2.bf16.msra.mxu0 0
  %1082 = vmatprep.subr.bf16.mxu0 0
  %1083 = vmatpush2.bf16.msra.mxu0 0
  %1084 = vmatprep.subr.bf16.mxu0 0
  %1085 = vmatpush2.bf16.msra.mxu0 0
  %1086 = vmatprep.subr.bf16.mxu0 0
  %1087 = vmatpush2.bf16.msra.mxu0 0
  %1088 = vmatprep.subr.bf16.mxu0 0
  %1089 = vmatpush2.bf16.msra.mxu0 0
  %1090 = vmatprep.subr.bf16.mxu0 0
  %1091 = vmatpush2.bf16.msra.mxu0 0
  %1092 = vmatprep.mubr.bf16.mxu0 0
  %1093 = vmatmul.mubr.bf16.gmra.mxu0 %v1058
  %v1094 = vpop.f32.mrf.mxu0
  %v1095 = vadd.f32 %v1040, %v1094
  %v1096 = vpop.f32.mrf.mxu0
  %v1097 = vpop.f32.mrf.mxu0
  %v1098 = vpop.f32.mrf.mxu0
  %1099 = vdwg.mxu0
  %v1100 = vadd.f32 %v1029, %v1095
  %v1101 = vxor.u32 %v1100, 2147483648
  %v1102 = vmul.f32 %v1101, 1.442695
  %v1103 = vpow.pop %v1102
  %v1104 = vadd.f32 %v1103, 1.0
  %v1105 = vrcp.pop %v1104
  %v1106 = vmul.f32 1.0, %v1105
  %1108 = vrot.lane.b32.xlu0 %v1095, 64
  %v1109 = vpop.permute.xlu0 %1108
  %v1111 = vmul.f32 %v1106, %v1109
  %1113 = vrot.lane.b32.xlu0 %v1111, 64
  %v1114 = vpop.permute.xlu0 %1113
  %v1116 = vadd.f32 %v1029, %v1114
  %v1117 = vtanh.pop %v1116
  %v1118 = vsub.f32 1.0, %v1106
  %1120 = vrot.lane.b32.xlu0 %v1117, 96
  %v1121 = vpop.permute.xlu0 %1120
  %v1123 = vmul.f32 %v1118, %v1121
  %v1124 = vmul.f32 %v1106, %v1001
  %v1125 = vadd.f32 %v1123, %v1124
  %s1126 = scalar_lea.vmem %s50, 48
  %v1127 = vld [vmem:[%s1126] sm:$0xff]
  %v1128 = vld [vmem:[%s1126 + $0x8] sm:$0xff]
  %v1129 = vpack.c.bf16 %v1007, %v1007
  %v1130 = vld [vmem:[%s184] sm:$0xf]
  %v1131 = vld [vmem:[%s184 + $0x4] sm:$0xf]
  %v1132 = vld [vmem:[%s184 + $0x8] sm:$0xf]
  %v1133 = vld [vmem:[%s184 + $0xc] sm:$0xf]
  %v1134 = vld [vmem:[%s189] sm:$0x1]
  %v1136 = vlaneseq
  %v1137 = vshrl.u32 %v1136, 7
  %v1138 = vsub.s32 0, %v1137
  %v1139 = vrot.slane %v1134, %v1138
  %v1145 = vunpack.c.l.b16 %v1130
  %v1146 = vunpack.c.l.b16 %v1131
  %v1147 = vunpack.c.l.b16 %v1132
  %v1148 = vunpack.c.l.b16 %v1133
  %v1149 = vpack.c.b16 %v1146, %v1145
  %v1150 = vpack.c.b16 %v1148, %v1147
  %v1154 = vsel %vm106, %v1129, 0
  %1156 = vmatprep.subr.bf16.mxu0 0
  %1157 = vmatpush1.bf16.msra.mxu0 0
  %1158 = vmatprep.subr.bf16.mxu0 0
  %1159 = vmatpush1.bf16.msra.mxu0 0
  %1160 = vmatprep.subr.bf16.mxu0 0
  %1161 = vmatpush1.bf16.msra.mxu0 0
  %1162 = vmatprep.subr.bf16.mxu0 0
  %1163 = vmatpush1.bf16.msra.mxu0 0
  %1164 = vmatprep.subr.bf16.mxu0 0
  %1165 = vmatpush1.bf16.msra.mxu0 0
  %1166 = vmatprep.subr.bf16.mxu0 0
  %1167 = vmatpush1.bf16.msra.mxu0 0
  %1168 = vmatprep.subr.bf16.mxu0 0
  %1169 = vmatpush1.bf16.msra.mxu0 %v1150
  %1170 = vmatprep.subr.bf16.mxu0 0
  %1171 = vmatpush1.bf16.msra.mxu0 %v1149
  %1172 = vmatprep.subr.bf16.mxu0 0
  %1173 = vmatpush2.bf16.msra.mxu0 0
  %1174 = vmatprep.subr.bf16.mxu0 0
  %1175 = vmatpush2.bf16.msra.mxu0 0
  %1176 = vmatprep.subr.bf16.mxu0 0
  %1177 = vmatpush2.bf16.msra.mxu0 0
  %1178 = vmatprep.subr.bf16.mxu0 0
  %1179 = vmatpush2.bf16.msra.mxu0 0
  %1180 = vmatprep.subr.bf16.mxu0 0
  %1181 = vmatpush2.bf16.msra.mxu0 0
  %1182 = vmatprep.subr.bf16.mxu0 0
  %1183 = vmatpush2.bf16.msra.mxu0 0
  %1184 = vmatprep.subr.bf16.mxu0 0
  %1185 = vmatpush2.bf16.msra.mxu0 0
  %1186 = vmatprep.subr.bf16.mxu0 0
  %1187 = vmatpush2.bf16.msra.mxu0 0
  %1188 = vmatprep.mubr.bf16.mxu0 0
  %1189 = vmatmul.mubr.bf16.gmra.mxu0 %v1154
  %v1190 = vpop.f32.mrf.mxu0
  %v1191 = vadd.f32 %v1139, %v1190
  %v1192 = vpop.f32.mrf.mxu0
  %v1193 = vpop.f32.mrf.mxu0
  %v1194 = vpop.f32.mrf.mxu0
  %1195 = vdwg.mxu0
  %1197 = vrot.lane.b32.xlu0 %v1191, 96
  %v1198 = vpop.permute.xlu0 %1197
  %v1200 = vadd.f32 %v1127, %v1198
  %v1201 = vxor.u32 %v1200, 2147483648
  %v1202 = vmul.f32 %v1201, 1.442695
  %v1203 = vpow.pop %v1202
  %v1204 = vadd.f32 %v1203, 1.0
  %v1205 = vrcp.pop %v1204
  %v1206 = vmul.f32 1.0, %v1205
  %v1207 = vadd.f32 %v1128, %v1198
  %v1208 = vxor.u32 %v1207, 2147483648
  %v1209 = vmul.f32 %v1208, 1.442695
  %v1210 = vpow.pop %v1209
  %v1211 = vadd.f32 %v1210, 1.0
  %v1212 = vrcp.pop %v1211
  %v1213 = vmul.f32 1.0, %v1212
  %1214 = vrot.lane.b32.xlu0 %v1191, 32
  %v1215 = vpop.permute.xlu0 %1214
  %v1217 = vmul.f32 %v1206, %v1215
  %1219 = vrot.lane.b32.xlu0 %v1217, 64
  %v1220 = vpop.permute.xlu0 %1219
  %v1222 = vadd.f32 %v1128, %v1220
  %v1223 = vtanh.pop %v1222
  %v1224 = vsub.f32 1.0, %v1213
  %1226 = vrot.lane.b32.xlu0 %v1223, 96
  %v1227 = vpop.permute.xlu0 %1226
  %v1229 = vmul.f32 %v1224, %v1227
  %v1230 = vmul.f32 %v1213, %v1007
  %v1231 = vadd.f32 %v1229, %v1230
  %v1232 = vsel %vm1024, 1, 0
  %1233 = vset.pattern.permute.xlu0 0
  %1234 = vperm.xlu0 %1233, %v1232
  %v1235 = vpop.permute.xlu0 %1234
  %vm1236 = vcmp.eq.s32.totalorder %v1235, 1
  %v1237 = vsel %vm1236, %v1125, %v1001
  %v1238 = vsel %vm1027, 1, 0
  %1239 = vset.pattern.permute.xlu0 0
  %1240 = vperm.xlu0 %1239, %v1238
  %v1241 = vpop.permute.xlu0 %1240
  %vm1242 = vcmp.eq.s32.totalorder %v1241, 1
  %v1243 = vsel %vm1242, %v1231, %v1007
  %v1244 = vsel %vm1236, %v1125, 0.0
  %v1245 = vpack.c.bf16 %v1244, %v1244
  %v1247 = vunpack.c.l.b16 %v1245
  %v1248 = vpack.c.b16 %v1247, %v1247
  %1249 = vrot.lane.b32.xlu0 %v1248, 96
  %v1250 = vpop.permute.xlu0 %1249
  %s1252 = scalar_lea.vmem %s5, 16
  %1253 = vst.msk [vmem:[%s1252] sm:$0xf] %vm308, %v1250
  %v1254 = vsel %vm1242, %v1231, 0.0
  %v1255 = vpack.c.bf16 %v1254, %v1254
  %s1256 = scalar_lea.vmem %s58, 12
  %1257 = vst.msk [vmem:[%s1256] sm:$0xf] %vm308, %v1255
  %s1258 = sadd.s32 %s73, 5
  %v1259 = vstv %s1258
  %vm1260 = vcmp.lt.s32.totalorder %v1259, %v69
  %s1261 = sadd.s32 %s75, 2
  %v1262 = vstv %s1261
  %vm1263 = vcmp.lt.s32.totalorder %v1262, %v69
  %s1264 = scalar_lea.vmem %s1, 80
  %v1265 = vld [vmem:[%s1264] sm:$0xff]
  %v1266 = vpack.c.bf16 %v1237, %v1237
  %v1267 = vld [vmem:[%s3] sm:$0xf]
  %v1268 = vld [vmem:[%s3 + $0x4] sm:$0xf]
  %v1269 = vld [vmem:[%s3 + $0x8] sm:$0xf]
  %v1270 = vld [vmem:[%s3 + $0xc] sm:$0xf]
  %v1271 = vld [vmem:[%s4] sm:$0x1]
  %v1273 = vlaneseq
  %v1274 = vshrl.u32 %v1273, 7
  %v1275 = vsub.s32 0, %v1274
  %v1276 = vrot.slane %v1271, %v1275
  %1279 = vrot.lane.b32.xlu0 %v1266, 96
  %v1280 = vpop.permute.xlu0 %1279
  %v1285 = vunpack.c.l.b16 %v1267
  %v1286 = vunpack.c.l.b16 %v1268
  %v1287 = vunpack.c.l.b16 %v1269
  %v1288 = vunpack.c.l.b16 %v1270
  %v1289 = vpack.c.b16 %v1286, %v1285
  %v1290 = vpack.c.b16 %v1288, %v1287
  %v1294 = vsel %vm106, %v1280, 0
  %1296 = vmatprep.subr.bf16.mxu0 0
  %1297 = vmatpush1.bf16.msra.mxu0 0
  %1298 = vmatprep.subr.bf16.mxu0 0
  %1299 = vmatpush1.bf16.msra.mxu0 0
  %1300 = vmatprep.subr.bf16.mxu0 0
  %1301 = vmatpush1.bf16.msra.mxu0 0
  %1302 = vmatprep.subr.bf16.mxu0 0
  %1303 = vmatpush1.bf16.msra.mxu0 0
  %1304 = vmatprep.subr.bf16.mxu0 0
  %1305 = vmatpush1.bf16.msra.mxu0 0
  %1306 = vmatprep.subr.bf16.mxu0 0
  %1307 = vmatpush1.bf16.msra.mxu0 0
  %1308 = vmatprep.subr.bf16.mxu0 0
  %1309 = vmatpush1.bf16.msra.mxu0 %v1290
  %1310 = vmatprep.subr.bf16.mxu0 0
  %1311 = vmatpush1.bf16.msra.mxu0 %v1289
  %1312 = vmatprep.subr.bf16.mxu0 0
  %1313 = vmatpush2.bf16.msra.mxu0 0
  %1314 = vmatprep.subr.bf16.mxu0 0
  %1315 = vmatpush2.bf16.msra.mxu0 0
  %1316 = vmatprep.subr.bf16.mxu0 0
  %1317 = vmatpush2.bf16.msra.mxu0 0
  %1318 = vmatprep.subr.bf16.mxu0 0
  %1319 = vmatpush2.bf16.msra.mxu0 0
  %1320 = vmatprep.subr.bf16.mxu0 0
  %1321 = vmatpush2.bf16.msra.mxu0 0
  %1322 = vmatprep.subr.bf16.mxu0 0
  %1323 = vmatpush2.bf16.msra.mxu0 0
  %1324 = vmatprep.subr.bf16.mxu0 0
  %1325 = vmatpush2.bf16.msra.mxu0 0
  %1326 = vmatprep.subr.bf16.mxu0 0
  %1327 = vmatpush2.bf16.msra.mxu0 0
  %1328 = vmatprep.mubr.bf16.mxu0 0
  %1329 = vmatmul.mubr.bf16.gmra.mxu0 %v1294
  %v1330 = vpop.f32.mrf.mxu0
  %v1331 = vadd.f32 %v1276, %v1330
  %v1332 = vpop.f32.mrf.mxu0
  %v1333 = vpop.f32.mrf.mxu0
  %v1334 = vpop.f32.mrf.mxu0
  %1335 = vdwg.mxu0
  %v1336 = vadd.f32 %v1265, %v1331
  %v1337 = vxor.u32 %v1336, 2147483648
  %v1338 = vmul.f32 %v1337, 1.442695
  %v1339 = vpow.pop %v1338
  %v1340 = vadd.f32 %v1339, 1.0
  %v1341 = vrcp.pop %v1340
  %v1342 = vmul.f32 1.0, %v1341
  %1344 = vrot.lane.b32.xlu0 %v1331, 64
  %v1345 = vpop.permute.xlu0 %1344
  %v1347 = vmul.f32 %v1342, %v1345
  %1349 = vrot.lane.b32.xlu0 %v1347, 64
  %v1350 = vpop.permute.xlu0 %1349
  %v1352 = vadd.f32 %v1265, %v1350
  %v1353 = vtanh.pop %v1352
  %v1354 = vsub.f32 1.0, %v1342
  %1356 = vrot.lane.b32.xlu0 %v1353, 96
  %v1357 = vpop.permute.xlu0 %1356
  %v1359 = vmul.f32 %v1354, %v1357
  %v1360 = vmul.f32 %v1342, %v1237
  %v1361 = vadd.f32 %v1359, %v1360
  %s1362 = scalar_lea.vmem %s50, 32
  %v1363 = vld [vmem:[%s1362] sm:$0xff]
  %v1364 = vld [vmem:[%s1362 + $0x8] sm:$0xff]
  %v1365 = vpack.c.bf16 %v1243, %v1243
  %v1366 = vld [vmem:[%s184] sm:$0xf]
  %v1367 = vld [vmem:[%s184 + $0x4] sm:$0xf]
  %v1368 = vld [vmem:[%s184 + $0x8] sm:$0xf]
  %v1369 = vld [vmem:[%s184 + $0xc] sm:$0xf]
  %v1370 = vld [vmem:[%s189] sm:$0x1]
  %v1372 = vlaneseq
  %v1373 = vshrl.u32 %v1372, 7
  %v1374 = vsub.s32 0, %v1373
  %v1375 = vrot.slane %v1370, %v1374
  %v1381 = vunpack.c.l.b16 %v1366
  %v1382 = vunpack.c.l.b16 %v1367
  %v1383 = vunpack.c.l.b16 %v1368
  %v1384 = vunpack.c.l.b16 %v1369
  %v1385 = vpack.c.b16 %v1382, %v1381
  %v1386 = vpack.c.b16 %v1384, %v1383
  %v1390 = vsel %vm106, %v1365, 0
  %1392 = vmatprep.subr.bf16.mxu0 0
  %1393 = vmatpush1.bf16.msra.mxu0 0
  %1394 = vmatprep.subr.bf16.mxu0 0
  %1395 = vmatpush1.bf16.msra.mxu0 0
  %1396 = vmatprep.subr.bf16.mxu0 0
  %1397 = vmatpush1.bf16.msra.mxu0 0
  %1398 = vmatprep.subr.bf16.mxu0 0
  %1399 = vmatpush1.bf16.msra.mxu0 0
  %1400 = vmatprep.subr.bf16.mxu0 0
  %1401 = vmatpush1.bf16.msra.mxu0 0
  %1402 = vmatprep.subr.bf16.mxu0 0
  %1403 = vmatpush1.bf16.msra.mxu0 0
  %1404 = vmatprep.subr.bf16.mxu0 0
  %1405 = vmatpush1.bf16.msra.mxu0 %v1386
  %1406 = vmatprep.subr.bf16.mxu0 0
  %1407 = vmatpush1.bf16.msra.mxu0 %v1385
  %1408 = vmatprep.subr.bf16.mxu0 0
  %1409 = vmatpush2.bf16.msra.mxu0 0
  %1410 = vmatprep.subr.bf16.mxu0 0
  %1411 = vmatpush2.bf16.msra.mxu0 0
  %1412 = vmatprep.subr.bf16.mxu0 0
  %1413 = vmatpush2.bf16.msra.mxu0 0
  %1414 = vmatprep.subr.bf16.mxu0 0
  %1415 = vmatpush2.bf16.msra.mxu0 0
  %1416 = vmatprep.subr.bf16.mxu0 0
  %1417 = vmatpush2.bf16.msra.mxu0 0
  %1418 = vmatprep.subr.bf16.mxu0 0
  %1419 = vmatpush2.bf16.msra.mxu0 0
  %1420 = vmatprep.subr.bf16.mxu0 0
  %1421 = vmatpush2.bf16.msra.mxu0 0
  %1422 = vmatprep.subr.bf16.mxu0 0
  %1423 = vmatpush2.bf16.msra.mxu0 0
  %1424 = vmatprep.mubr.bf16.mxu0 0
  %1425 = vmatmul.mubr.bf16.gmra.mxu0 %v1390
  %v1426 = vpop.f32.mrf.mxu0
  %v1427 = vadd.f32 %v1375, %v1426
  %v1428 = vpop.f32.mrf.mxu0
  %v1429 = vpop.f32.mrf.mxu0
  %v1430 = vpop.f32.mrf.mxu0
  %1431 = vdwg.mxu0
  %1433 = vrot.lane.b32.xlu0 %v1427, 96
  %v1434 = vpop.permute.xlu0 %1433
  %v1436 = vadd.f32 %v1363, %v1434
  %v1437 = vxor.u32 %v1436, 2147483648
  %v1438 = vmul.f32 %v1437, 1.442695
  %v1439 = vpow.pop %v1438
  %v1440 = vadd.f32 %v1439, 1.0
  %v1441 = vrcp.pop %v1440
  %v1442 = vmul.f32 1.0, %v1441
  %v1443 = vadd.f32 %v1364, %v1434
  %v1444 = vxor.u32 %v1443, 2147483648
  %v1445 = vmul.f32 %v1444, 1.442695
  %v1446 = vpow.pop %v1445
  %v1447 = vadd.f32 %v1446, 1.0
  %v1448 = vrcp.pop %v1447
  %v1449 = vmul.f32 1.0, %v1448
  %1450 = vrot.lane.b32.xlu0 %v1427, 32
  %v1451 = vpop.permute.xlu0 %1450
  %v1453 = vmul.f32 %v1442, %v1451
  %1455 = vrot.lane.b32.xlu0 %v1453, 64
  %v1456 = vpop.permute.xlu0 %1455
  %v1458 = vadd.f32 %v1364, %v1456
  %v1459 = vtanh.pop %v1458
  %v1460 = vsub.f32 1.0, %v1449
  %1462 = vrot.lane.b32.xlu0 %v1459, 96
  %v1463 = vpop.permute.xlu0 %1462
  %v1465 = vmul.f32 %v1460, %v1463
  %v1466 = vmul.f32 %v1449, %v1243
  %v1467 = vadd.f32 %v1465, %v1466
  %v1468 = vsel %vm1260, 1, 0
  %1469 = vset.pattern.permute.xlu0 0
  %1470 = vperm.xlu0 %1469, %v1468
  %v1471 = vpop.permute.xlu0 %1470
  %vm1472 = vcmp.eq.s32.totalorder %v1471, 1
  %v1473 = vsel %vm1472, %v1361, %v1237
  %v1474 = vsel %vm1263, 1, 0
  %1475 = vset.pattern.permute.xlu0 0
  %1476 = vperm.xlu0 %1475, %v1474
  %v1477 = vpop.permute.xlu0 %1476
  %vm1478 = vcmp.eq.s32.totalorder %v1477, 1
  %v1479 = vsel %vm1478, %v1467, %v1243
  %v1480 = vsel %vm1472, %v1361, 0.0
  %v1481 = vpack.c.bf16 %v1480, %v1480
  %v1483 = vunpack.c.l.b16 %v1481
  %v1484 = vpack.c.b16 %v1483, %v1483
  %1485 = vrot.lane.b32.xlu0 %v1484, 96
  %v1486 = vpop.permute.xlu0 %1485
  %s1488 = scalar_lea.vmem %s5, 20
  %1489 = vst.msk [vmem:[%s1488] sm:$0xf] %vm308, %v1486
  %v1490 = vsel %vm1478, %v1467, 0.0
  %v1491 = vpack.c.bf16 %v1490, %v1490
  %s1492 = scalar_lea.vmem %s58, 8
  %1493 = vst.msk [vmem:[%s1492] sm:$0xf] %vm308, %v1491
  %s1494 = sadd.s32 %s73, 6
  %v1495 = vstv %s1494
  %vm1496 = vcmp.lt.s32.totalorder %v1495, %v69
  %s1497 = sadd.s32 %s75, 1
  %v1498 = vstv %s1497
  %vm1499 = vcmp.lt.s32.totalorder %v1498, %v69
  %s1500 = scalar_lea.vmem %s1, 96
  %v1501 = vld [vmem:[%s1500] sm:$0xff]
  %v1502 = vpack.c.bf16 %v1473, %v1473
  %v1503 = vld [vmem:[%s3] sm:$0xf]
  %v1504 = vld [vmem:[%s3 + $0x4] sm:$0xf]
  %v1505 = vld [vmem:[%s3 + $0x8] sm:$0xf]
  %v1506 = vld [vmem:[%s3 + $0xc] sm:$0xf]
  %v1507 = vld [vmem:[%s4] sm:$0x1]
  %v1509 = vlaneseq
  %v1510 = vshrl.u32 %v1509, 7
  %v1511 = vsub.s32 0, %v1510
  %v1512 = vrot.slane %v1507, %v1511
  %1515 = vrot.lane.b32.xlu0 %v1502, 96
  %v1516 = vpop.permute.xlu0 %1515
  %v1521 = vunpack.c.l.b16 %v1503
  %v1522 = vunpack.c.l.b16 %v1504
  %v1523 = vunpack.c.l.b16 %v1505
  %v1524 = vunpack.c.l.b16 %v1506
  %v1525 = vpack.c.b16 %v1522, %v1521
  %v1526 = vpack.c.b16 %v1524, %v1523
  %v1530 = vsel %vm106, %v1516, 0
  %1532 = vmatprep.subr.bf16.mxu0 0
  %1533 = vmatpush1.bf16.msra.mxu0 0
  %1534 = vmatprep.subr.bf16.mxu0 0
  %1535 = vmatpush1.bf16.msra.mxu0 0
  %1536 = vmatprep.subr.bf16.mxu0 0
  %1537 = vmatpush1.bf16.msra.mxu0 0
  %1538 = vmatprep.subr.bf16.mxu0 0
  %1539 = vmatpush1.bf16.msra.mxu0 0
  %1540 = vmatprep.subr.bf16.mxu0 0
  %1541 = vmatpush1.bf16.msra.mxu0 0
  %1542 = vmatprep.subr.bf16.mxu0 0
  %1543 = vmatpush1.bf16.msra.mxu0 0
  %1544 = vmatprep.subr.bf16.mxu0 0
  %1545 = vmatpush1.bf16.msra.mxu0 %v1526
  %1546 = vmatprep.subr.bf16.mxu0 0
  %1547 = vmatpush1.bf16.msra.mxu0 %v1525
  %1548 = vmatprep.subr.bf16.mxu0 0
  %1549 = vmatpush2.bf16.msra.mxu0 0
  %1550 = vmatprep.subr.bf16.mxu0 0
  %1551 = vmatpush2.bf16.msra.mxu0 0
  %1552 = vmatprep.subr.bf16.mxu0 0
  %1553 = vmatpush2.bf16.msra.mxu0 0
  %1554 = vmatprep.subr.bf16.mxu0 0
  %1555 = vmatpush2.bf16.msra.mxu0 0
  %1556 = vmatprep.subr.bf16.mxu0 0
  %1557 = vmatpush2.bf16.msra.mxu0 0
  %1558 = vmatprep.subr.bf16.mxu0 0
  %1559 = vmatpush2.bf16.msra.mxu0 0
  %1560 = vmatprep.subr.bf16.mxu0 0
  %1561 = vmatpush2.bf16.msra.mxu0 0
  %1562 = vmatprep.subr.bf16.mxu0 0
  %1563 = vmatpush2.bf16.msra.mxu0 0
  %1564 = vmatprep.mubr.bf16.mxu0 0
  %1565 = vmatmul.mubr.bf16.gmra.mxu0 %v1530
  %v1566 = vpop.f32.mrf.mxu0
  %v1567 = vadd.f32 %v1512, %v1566
  %v1568 = vpop.f32.mrf.mxu0
  %v1569 = vpop.f32.mrf.mxu0
  %v1570 = vpop.f32.mrf.mxu0
  %1571 = vdwg.mxu0
  %v1572 = vadd.f32 %v1501, %v1567
  %v1573 = vxor.u32 %v1572, 2147483648
  %v1574 = vmul.f32 %v1573, 1.442695
  %v1575 = vpow.pop %v1574
  %v1576 = vadd.f32 %v1575, 1.0
  %v1577 = vrcp.pop %v1576
  %v1578 = vmul.f32 1.0, %v1577
  %1580 = vrot.lane.b32.xlu0 %v1567, 64
  %v1581 = vpop.permute.xlu0 %1580
  %v1583 = vmul.f32 %v1578, %v1581
  %1585 = vrot.lane.b32.xlu0 %v1583, 64
  %v1586 = vpop.permute.xlu0 %1585
  %v1588 = vadd.f32 %v1501, %v1586
  %v1589 = vtanh.pop %v1588
  %v1590 = vsub.f32 1.0, %v1578
  %1592 = vrot.lane.b32.xlu0 %v1589, 96
  %v1593 = vpop.permute.xlu0 %1592
  %v1595 = vmul.f32 %v1590, %v1593
  %v1596 = vmul.f32 %v1578, %v1473
  %v1597 = vadd.f32 %v1595, %v1596
  %s1598 = scalar_lea.vmem %s50, 16
  %v1599 = vld [vmem:[%s1598] sm:$0xff]
  %v1600 = vld [vmem:[%s1598 + $0x8] sm:$0xff]
  %v1601 = vpack.c.bf16 %v1479, %v1479
  %v1602 = vld [vmem:[%s184] sm:$0xf]
  %v1603 = vld [vmem:[%s184 + $0x4] sm:$0xf]
  %v1604 = vld [vmem:[%s184 + $0x8] sm:$0xf]
  %v1605 = vld [vmem:[%s184 + $0xc] sm:$0xf]
  %v1606 = vld [vmem:[%s189] sm:$0x1]
  %v1608 = vlaneseq
  %v1609 = vshrl.u32 %v1608, 7
  %v1610 = vsub.s32 0, %v1609
  %v1611 = vrot.slane %v1606, %v1610
  %v1617 = vunpack.c.l.b16 %v1602
  %v1618 = vunpack.c.l.b16 %v1603
  %v1619 = vunpack.c.l.b16 %v1604
  %v1620 = vunpack.c.l.b16 %v1605
  %v1621 = vpack.c.b16 %v1618, %v1617
  %v1622 = vpack.c.b16 %v1620, %v1619
  %v1626 = vsel %vm106, %v1601, 0
  %1628 = vmatprep.subr.bf16.mxu0 0
  %1629 = vmatpush1.bf16.msra.mxu0 0
  %1630 = vmatprep.subr.bf16.mxu0 0
  %1631 = vmatpush1.bf16.msra.mxu0 0
  %1632 = vmatprep.subr.bf16.mxu0 0
  %1633 = vmatpush1.bf16.msra.mxu0 0
  %1634 = vmatprep.subr.bf16.mxu0 0
  %1635 = vmatpush1.bf16.msra.mxu0 0
  %1636 = vmatprep.subr.bf16.mxu0 0
  %1637 = vmatpush1.bf16.msra.mxu0 0
  %1638 = vmatprep.subr.bf16.mxu0 0
  %1639 = vmatpush1.bf16.msra.mxu0 0
  %1640 = vmatprep.subr.bf16.mxu0 0
  %1641 = vmatpush1.bf16.msra.mxu0 %v1622
  %1642 = vmatprep.subr.bf16.mxu0 0
  %1643 = vmatpush1.bf16.msra.mxu0 %v1621
  %1644 = vmatprep.subr.bf16.mxu0 0
  %1645 = vmatpush2.bf16.msra.mxu0 0
  %1646 = vmatprep.subr.bf16.mxu0 0
  %1647 = vmatpush2.bf16.msra.mxu0 0
  %1648 = vmatprep.subr.bf16.mxu0 0
  %1649 = vmatpush2.bf16.msra.mxu0 0
  %1650 = vmatprep.subr.bf16.mxu0 0
  %1651 = vmatpush2.bf16.msra.mxu0 0
  %1652 = vmatprep.subr.bf16.mxu0 0
  %1653 = vmatpush2.bf16.msra.mxu0 0
  %1654 = vmatprep.subr.bf16.mxu0 0
  %1655 = vmatpush2.bf16.msra.mxu0 0
  %1656 = vmatprep.subr.bf16.mxu0 0
  %1657 = vmatpush2.bf16.msra.mxu0 0
  %1658 = vmatprep.subr.bf16.mxu0 0
  %1659 = vmatpush2.bf16.msra.mxu0 0
  %1660 = vmatprep.mubr.bf16.mxu0 0
  %1661 = vmatmul.mubr.bf16.gmra.mxu0 %v1626
  %v1662 = vpop.f32.mrf.mxu0
  %v1663 = vadd.f32 %v1611, %v1662
  %v1664 = vpop.f32.mrf.mxu0
  %v1665 = vpop.f32.mrf.mxu0
  %v1666 = vpop.f32.mrf.mxu0
  %1667 = vdwg.mxu0
  %1669 = vrot.lane.b32.xlu0 %v1663, 96
  %v1670 = vpop.permute.xlu0 %1669
  %v1672 = vadd.f32 %v1599, %v1670
  %v1673 = vxor.u32 %v1672, 2147483648
  %v1674 = vmul.f32 %v1673, 1.442695
  %v1675 = vpow.pop %v1674
  %v1676 = vadd.f32 %v1675, 1.0
  %v1677 = vrcp.pop %v1676
  %v1678 = vmul.f32 1.0, %v1677
  %v1679 = vadd.f32 %v1600, %v1670
  %v1680 = vxor.u32 %v1679, 2147483648
  %v1681 = vmul.f32 %v1680, 1.442695
  %v1682 = vpow.pop %v1681
  %v1683 = vadd.f32 %v1682, 1.0
  %v1684 = vrcp.pop %v1683
  %v1685 = vmul.f32 1.0, %v1684
  %1686 = vrot.lane.b32.xlu0 %v1663, 32
  %v1687 = vpop.permute.xlu0 %1686
  %v1689 = vmul.f32 %v1678, %v1687
  %1691 = vrot.lane.b32.xlu0 %v1689, 64
  %v1692 = vpop.permute.xlu0 %1691
  %v1694 = vadd.f32 %v1600, %v1692
  %v1695 = vtanh.pop %v1694
  %v1696 = vsub.f32 1.0, %v1685
  %1698 = vrot.lane.b32.xlu0 %v1695, 96
  %v1699 = vpop.permute.xlu0 %1698
  %v1701 = vmul.f32 %v1696, %v1699
  %v1702 = vmul.f32 %v1685, %v1479
  %v1703 = vadd.f32 %v1701, %v1702
  %v1704 = vsel %vm1496, 1, 0
  %1705 = vset.pattern.permute.xlu0 0
  %1706 = vperm.xlu0 %1705, %v1704
  %v1707 = vpop.permute.xlu0 %1706
  %vm1708 = vcmp.eq.s32.totalorder %v1707, 1
  %v1709 = vsel %vm1708, %v1597, %v1473
  %v1710 = vsel %vm1499, 1, 0
  %1711 = vset.pattern.permute.xlu0 0
  %1712 = vperm.xlu0 %1711, %v1710
  %v1713 = vpop.permute.xlu0 %1712
  %vm1714 = vcmp.eq.s32.totalorder %v1713, 1
  %v1715 = vsel %vm1714, %v1703, %v1479
  %v1716 = vsel %vm1708, %v1597, 0.0
  %v1717 = vpack.c.bf16 %v1716, %v1716
  %v1719 = vunpack.c.l.b16 %v1717
  %v1720 = vpack.c.b16 %v1719, %v1719
  %1721 = vrot.lane.b32.xlu0 %v1720, 96
  %v1722 = vpop.permute.xlu0 %1721
  %s1724 = scalar_lea.vmem %s5, 24
  %1725 = vst.msk [vmem:[%s1724] sm:$0xf] %vm308, %v1722
  %v1726 = vsel %vm1714, %v1703, 0.0
  %v1727 = vpack.c.bf16 %v1726, %v1726
  %s1728 = scalar_lea.vmem %s58, 4
  %1729 = vst.msk [vmem:[%s1728] sm:$0xf] %vm308, %v1727
  %s1730 = sadd.s32 %s73, 7
  %v1731 = vstv %s1730
  %vm1732 = vcmp.lt.s32.totalorder %v1731, %v69
  %v1733 = vstv %s75
  %vm1734 = vcmp.lt.s32.totalorder %v1733, %v69
  %s1735 = scalar_lea.vmem %s1, 112
  %v1736 = vld [vmem:[%s1735] sm:$0xff]
  %v1737 = vpack.c.bf16 %v1709, %v1709
  %v1738 = vld [vmem:[%s3] sm:$0xf]
  %v1739 = vld [vmem:[%s3 + $0x4] sm:$0xf]
  %v1740 = vld [vmem:[%s3 + $0x8] sm:$0xf]
  %v1741 = vld [vmem:[%s3 + $0xc] sm:$0xf]
  %v1742 = vld [vmem:[%s4] sm:$0x1]
  %v1744 = vlaneseq
  %v1745 = vshrl.u32 %v1744, 7
  %v1746 = vsub.s32 0, %v1745
  %v1747 = vrot.slane %v1742, %v1746
  %1750 = vrot.lane.b32.xlu0 %v1737, 96
  %v1751 = vpop.permute.xlu0 %1750
  %v1756 = vunpack.c.l.b16 %v1738
  %v1757 = vunpack.c.l.b16 %v1739
  %v1758 = vunpack.c.l.b16 %v1740
  %v1759 = vunpack.c.l.b16 %v1741
  %v1760 = vpack.c.b16 %v1757, %v1756
  %v1761 = vpack.c.b16 %v1759, %v1758
  %v1765 = vsel %vm106, %v1751, 0
  %1767 = vmatprep.subr.bf16.mxu0 0
  %1768 = vmatpush1.bf16.msra.mxu0 0
  %1769 = vmatprep.subr.bf16.mxu0 0
  %1770 = vmatpush1.bf16.msra.mxu0 0
  %1771 = vmatprep.subr.bf16.mxu0 0
  %1772 = vmatpush1.bf16.msra.mxu0 0
  %1773 = vmatprep.subr.bf16.mxu0 0
  %1774 = vmatpush1.bf16.msra.mxu0 0
  %1775 = vmatprep.subr.bf16.mxu0 0
  %1776 = vmatpush1.bf16.msra.mxu0 0
  %1777 = vmatprep.subr.bf16.mxu0 0
  %1778 = vmatpush1.bf16.msra.mxu0 0
  %1779 = vmatprep.subr.bf16.mxu0 0
  %1780 = vmatpush1.bf16.msra.mxu0 %v1761
  %1781 = vmatprep.subr.bf16.mxu0 0
  %1782 = vmatpush1.bf16.msra.mxu0 %v1760
  %1783 = vmatprep.subr.bf16.mxu0 0
  %1784 = vmatpush2.bf16.msra.mxu0 0
  %1785 = vmatprep.subr.bf16.mxu0 0
  %1786 = vmatpush2.bf16.msra.mxu0 0
  %1787 = vmatprep.subr.bf16.mxu0 0
  %1788 = vmatpush2.bf16.msra.mxu0 0
  %1789 = vmatprep.subr.bf16.mxu0 0
  %1790 = vmatpush2.bf16.msra.mxu0 0
  %1791 = vmatprep.subr.bf16.mxu0 0
  %1792 = vmatpush2.bf16.msra.mxu0 0
  %1793 = vmatprep.subr.bf16.mxu0 0
  %1794 = vmatpush2.bf16.msra.mxu0 0
  %1795 = vmatprep.subr.bf16.mxu0 0
  %1796 = vmatpush2.bf16.msra.mxu0 0
  %1797 = vmatprep.subr.bf16.mxu0 0
  %1798 = vmatpush2.bf16.msra.mxu0 0
  %1799 = vmatprep.mubr.bf16.mxu0 0
  %1800 = vmatmul.mubr.bf16.gmra.mxu0 %v1765
  %v1801 = vpop.f32.mrf.mxu0
  %v1802 = vadd.f32 %v1747, %v1801
  %v1803 = vpop.f32.mrf.mxu0
  %v1804 = vpop.f32.mrf.mxu0
  %v1805 = vpop.f32.mrf.mxu0
  %1806 = vdwg.mxu0
  %v1807 = vadd.f32 %v1736, %v1802
  %v1808 = vxor.u32 %v1807, 2147483648
  %v1809 = vmul.f32 %v1808, 1.442695
  %v1810 = vpow.pop %v1809
  %v1811 = vadd.f32 %v1810, 1.0
  %v1812 = vrcp.pop %v1811
  %v1813 = vmul.f32 1.0, %v1812
  %1815 = vrot.lane.b32.xlu0 %v1802, 64
  %v1816 = vpop.permute.xlu0 %1815
  %v1818 = vmul.f32 %v1813, %v1816
  %1820 = vrot.lane.b32.xlu0 %v1818, 64
  %v1821 = vpop.permute.xlu0 %1820
  %v1823 = vadd.f32 %v1736, %v1821
  %v1824 = vtanh.pop %v1823
  %v1825 = vsub.f32 1.0, %v1813
  %1827 = vrot.lane.b32.xlu0 %v1824, 96
  %v1828 = vpop.permute.xlu0 %1827
  %v1830 = vmul.f32 %v1825, %v1828
  %v1831 = vmul.f32 %v1813, %v1709
  %v1832 = vadd.f32 %v1830, %v1831
  %v1833 = vld [vmem:[%s50] sm:$0xff]
  %v1834 = vld [vmem:[%s50 + $0x8] sm:$0xff]
  %v1835 = vpack.c.bf16 %v1715, %v1715
  %v1836 = vld [vmem:[%s184] sm:$0xf]
  %v1837 = vld [vmem:[%s184 + $0x4] sm:$0xf]
  %v1838 = vld [vmem:[%s184 + $0x8] sm:$0xf]
  %v1839 = vld [vmem:[%s184 + $0xc] sm:$0xf]
  %v1840 = vld [vmem:[%s189] sm:$0x1]
  %v1842 = vlaneseq
  %v1843 = vshrl.u32 %v1842, 7
  %v1844 = vsub.s32 0, %v1843
  %v1845 = vrot.slane %v1840, %v1844
  %v1851 = vunpack.c.l.b16 %v1836
  %v1852 = vunpack.c.l.b16 %v1837
  %v1853 = vunpack.c.l.b16 %v1838
  %v1854 = vunpack.c.l.b16 %v1839
  %v1855 = vpack.c.b16 %v1852, %v1851
  %v1856 = vpack.c.b16 %v1854, %v1853
  %v1860 = vsel %vm106, %v1835, 0
  %1862 = vmatprep.subr.bf16.mxu0 0
  %1863 = vmatpush1.bf16.msra.mxu0 0
  %1864 = vmatprep.subr.bf16.mxu0 0
  %1865 = vmatpush1.bf16.msra.mxu0 0
  %1866 = vmatprep.subr.bf16.mxu0 0
  %1867 = vmatpush1.bf16.msra.mxu0 0
  %1868 = vmatprep.subr.bf16.mxu0 0
  %1869 = vmatpush1.bf16.msra.mxu0 0
  %1870 = vmatprep.subr.bf16.mxu0 0
  %1871 = vmatpush1.bf16.msra.mxu0 0
  %1872 = vmatprep.subr.bf16.mxu0 0
  %1873 = vmatpush1.bf16.msra.mxu0 0
  %1874 = vmatprep.subr.bf16.mxu0 0
  %1875 = vmatpush1.bf16.msra.mxu0 %v1856
  %1876 = vmatprep.subr.bf16.mxu0 0
  %1877 = vmatpush1.bf16.msra.mxu0 %v1855
  %1878 = vmatprep.subr.bf16.mxu0 0
  %1879 = vmatpush2.bf16.msra.mxu0 0
  %1880 = vmatprep.subr.bf16.mxu0 0
  %1881 = vmatpush2.bf16.msra.mxu0 0
  %1882 = vmatprep.subr.bf16.mxu0 0
  %1883 = vmatpush2.bf16.msra.mxu0 0
  %1884 = vmatprep.subr.bf16.mxu0 0
  %1885 = vmatpush2.bf16.msra.mxu0 0
  %1886 = vmatprep.subr.bf16.mxu0 0
  %1887 = vmatpush2.bf16.msra.mxu0 0
  %1888 = vmatprep.subr.bf16.mxu0 0
  %1889 = vmatpush2.bf16.msra.mxu0 0
  %1890 = vmatprep.subr.bf16.mxu0 0
  %1891 = vmatpush2.bf16.msra.mxu0 0
  %1892 = vmatprep.subr.bf16.mxu0 0
  %1893 = vmatpush2.bf16.msra.mxu0 0
  %1894 = vmatprep.mubr.bf16.mxu0 0
  %1895 = vmatmul.mubr.bf16.gmra.mxu0 %v1860
  %v1896 = vpop.f32.mrf.mxu0
  %v1897 = vadd.f32 %v1845, %v1896
  %v1898 = vpop.f32.mrf.mxu0
  %v1899 = vpop.f32.mrf.mxu0
  %v1900 = vpop.f32.mrf.mxu0
  %1901 = vdwg.mxu0
  %1903 = vrot.lane.b32.xlu0 %v1897, 96
  %v1904 = vpop.permute.xlu0 %1903
  %v1906 = vadd.f32 %v1833, %v1904
  %v1907 = vxor.u32 %v1906, 2147483648
  %v1908 = vmul.f32 %v1907, 1.442695
  %v1909 = vpow.pop %v1908
  %v1910 = vadd.f32 %v1909, 1.0
  %v1911 = vrcp.pop %v1910
  %v1912 = vmul.f32 1.0, %v1911
  %v1913 = vadd.f32 %v1834, %v1904
  %v1914 = vxor.u32 %v1913, 2147483648
  %v1915 = vmul.f32 %v1914, 1.442695
  %v1916 = vpow.pop %v1915
  %v1917 = vadd.f32 %v1916, 1.0
  %v1918 = vrcp.pop %v1917
  %v1919 = vmul.f32 1.0, %v1918
  %1920 = vrot.lane.b32.xlu0 %v1897, 32
  %v1921 = vpop.permute.xlu0 %1920
  %v1923 = vmul.f32 %v1912, %v1921
  %1925 = vrot.lane.b32.xlu0 %v1923, 64
  %v1926 = vpop.permute.xlu0 %1925
  %v1928 = vadd.f32 %v1834, %v1926
  %v1929 = vtanh.pop %v1928
  %v1930 = vsub.f32 1.0, %v1919
  %1932 = vrot.lane.b32.xlu0 %v1929, 96
  %v1933 = vpop.permute.xlu0 %1932
  %v1935 = vmul.f32 %v1930, %v1933
  %v1936 = vmul.f32 %v1919, %v1715
  %v1937 = vadd.f32 %v1935, %v1936
  %v1938 = vsel %vm1732, 1, 0
  %1939 = vset.pattern.permute.xlu0 0
  %1940 = vperm.xlu0 %1939, %v1938
  %v1941 = vpop.permute.xlu0 %1940
  %vm1942 = vcmp.eq.s32.totalorder %v1941, 1
  %v1943 = vsel %vm1942, %v1832, %v1709
  %v1944 = vsel %vm1734, 1, 0
  %1945 = vset.pattern.permute.xlu0 0
  %1946 = vperm.xlu0 %1945, %v1944
  %v1947 = vpop.permute.xlu0 %1946
  %vm1948 = vcmp.eq.s32.totalorder %v1947, 1
  %v1949 = vsel %vm1948, %v1937, %v1715
  %v1950 = vsel %vm1942, %v1832, 0.0
  %v1951 = vpack.c.bf16 %v1950, %v1950
  %v1953 = vunpack.c.l.b16 %v1951
  %v1954 = vpack.c.b16 %v1953, %v1953
  %1955 = vrot.lane.b32.xlu0 %v1954, 96
  %v1956 = vpop.permute.xlu0 %1955
  %s1958 = scalar_lea.vmem %s5, 28
  %1959 = vst.msk [vmem:[%s1958] sm:$0xf] %vm308, %v1956
  %v1960 = vsel %vm1948, %v1937, 0.0
  %v1961 = vpack.c.bf16 %v1960, %v1960
  %1962 = vst.msk [vmem:[%s58] sm:$0xf] %vm308, %v1961
  %1964 = vrot.lane.b32.xlu0 %v1943, 96
  %v1965 = vpop.permute.xlu0 %1964
  %1967 = vst.msk [vmem:[#allocation2] sm:$0xff] %vm106, %v1965
  %1968 = vst.msk [vmem:[%s71] sm:$0xff] %vm106, %v1949
  %s1969 = ssub.s32 0, 0
  %s1970 = smul.u32 8, %s1969
  %p1971 = scmp.lt.s32.totalorder %s1970, 7
  %s1972 = scalar_select %p1971, %s1970, 7
  %s1973 = smul.addr %s1972, 4
  %s1974 = scalar_lea.vmem %s6, %s1973
  // Predicated region
  $region26: #{deepspeech2_forward.10} parent=0 // pred_check
    _
  $region27: #{deepspeech2_forward.10} parent=0 // pred_check_branch
    %1976 = sbr.rel (0) target = $region29
  $region28: #{deepspeech2_forward.10} parent=0 // pred_region
    _
  $region29: #{deepspeech2_forward.10} parent=0 // pred_fallthru
    _
  // Predicated region
  $region30: #{deepspeech2_forward.10} parent=0 // pred_check
    _
  $region31: #{deepspeech2_forward.10} parent=0 // pred_check_branch
    %1978 = sbr.rel (0) target = $region33
  $region32: #{deepspeech2_forward.10} parent=0 // pred_region
    %s1979 = ssub.s32 0, 0
    %s1980 = smul.u32 8, %s1979
  $region33: #{deepspeech2_forward.10} parent=0 // pred_fallthru
    _
  // Predicated region
  $region34: #{deepspeech2_forward.10} parent=0 // pred_check
    _
  $region35: #{deepspeech2_forward.10} parent=0 // pred_check_branch
    %1982 = sbr.rel (0) target = $region37
  $region36: #{deepspeech2_forward.10} parent=0 // pred_region
    _
  $region37: #{deepspeech2_forward.10} parent=0 // pred_fallthru
    _
  // Predicated region
  $region38: #{deepspeech2_forward.10} parent=0 // pred_check
    _
  $region39: #{deepspeech2_forward.10} parent=0 // pred_check_branch
    %1984 = sbr.rel (0) target = $region41
  $region40: #{deepspeech2_forward.10} parent=0 // pred_region
    %s1985 = ssub.s32 0, 0
    %s1986 = smul.u32 8, %s1985
    %p1987 = scmp.lt.s32.totalorder %s1986, 7
    %s1988 = scalar_select %p1987, %s1986, 7
    %s1989 = smul.addr %s1988, 4
    %s1990 = scalar_lea.vmem %s6, %s1989
  $region41: #{deepspeech2_forward.10} parent=0 // pred_fallthru
    _

</llo_original>
